<compile_context>
chip_gen: v7x
topology: tpu7x:2x2x1
jax: 0.10.0
libtpu: 0.0.40
codegen_flags: <defaults>
</compile_context>

<pallas_src>
import math
from functools import partial

import jax
import jax.numpy as jnp
from jax import lax
from jax.experimental import pallas as pl
from jax.experimental.pallas import tpu as pltpu

EPS = 1e-5
MXU_DTYPE = jnp.bfloat16          # MXU-native operand dtype; accumulation stays float32
VMEM_LIMIT = 64 * 1024 * 1024


# ----------------------------------------------------------------------------
# helpers
# ----------------------------------------------------------------------------


def _cp(*sems):
    return pltpu.CompilerParams(dimension_semantics=sems,
                                vmem_limit_bytes=VMEM_LIMIT)


def _tile(m, max_tile):
    """Row tile: full extent when it fits, else a multiple-of-8 tile (ragged last block)."""
    return m if m <= max_tile else max_tile


def _wcast(w):
    return w.astype(MXU_DTYPE)


# ----------------------------------------------------------------------------
# generic tiled matmul + bias
# ----------------------------------------------------------------------------


def _matmul_bias_kernel(x_ref, w_ref, b_ref, o_ref):
    o_ref[...] = (
        jnp.dot(x_ref[...].astype(MXU_DTYPE), w_ref[...].astype(MXU_DTYPE),
                preferred_element_type=jnp.float32)
        + b_ref[...]
    )


def matmul_bias(x, w, b, max_tile=1024):
    """out = x @ w + b.  Row-tiled (ragged last block); weights/bias VMEM-resident."""
    M, K = x.shape
    N = w.shape[1]
    tm = _tile(M, max_tile)
    return pl.pallas_call(
        _matmul_bias_kernel,
        out_shape=jax.ShapeDtypeStruct((M, N), jnp.float32),
        grid=(pl.cdiv(M, tm),),
        in_specs=[
            pl.BlockSpec((tm, K), lambda i: (i, 0)),
            pl.BlockSpec((K, N), lambda i: (0, 0)),
            pl.BlockSpec((1, N), lambda i: (0, 0)),
        ],
        out_specs=pl.BlockSpec((tm, N), lambda i: (i, 0)),
        compiler_params=_cp("parallel"),
    )(x.astype(jnp.float32), _wcast(w), b.reshape(1, N).astype(jnp.float32))


# ----------------------------------------------------------------------------
# fused per-chunk LayerNorm + bidirectional LSTM input projection
# ----------------------------------------------------------------------------


def _ln_proj_kernel(x_ref, g_ref, b_ref, w_ref, bias_ref, o_ref, *, ks, C):
    x = x_ref[...]                       # (TM, ks*C)
    g = g_ref[...]                       # (1, C)
    bb = b_ref[...]
    chunks = []
    for j in range(ks):                  # static unroll over the ks C-chunks of each row
        xj = x[:, j * C:(j + 1) * C]
        mu = jnp.mean(xj, axis=-1, keepdims=True)
        var = jnp.mean(jnp.square(xj - mu), axis=-1, keepdims=True)
        chunks.append((xj - mu) * lax.rsqrt(var + EPS) * g + bb)
    xn = jnp.concatenate(chunks, axis=-1)
    o_ref[...] = (
        jnp.dot(xn.astype(MXU_DTYPE), w_ref[...].astype(MXU_DTYPE),
                preferred_element_type=jnp.float32)
        + bias_ref[...]
    )


def layernorm_lstm_inproj(x, gamma, beta, w_cat, b_cat, ks, C, max_tile=512):
    """x:(M, ks*C) -> (M, 8*hid) gate pre-activations [fwd gates | bwd gates]."""
    M, KC = x.shape
    N = w_cat.shape[1]
    tm = _tile(M, max_tile)
    return pl.pallas_call(
        partial(_ln_proj_kernel, ks=ks, C=C),
        out_shape=jax.ShapeDtypeStruct((M, N), jnp.float32),
        grid=(pl.cdiv(M, tm),),
        in_specs=[
            pl.BlockSpec((tm, KC), lambda i: (i, 0)),
            pl.BlockSpec((1, C), lambda i: (0, 0)),
            pl.BlockSpec((1, C), lambda i: (0, 0)),
            pl.BlockSpec((KC, N), lambda i: (0, 0)),
            pl.BlockSpec((1, N), lambda i: (0, 0)),
        ],
        out_specs=pl.BlockSpec((tm, N), lambda i: (i, 0)),
        compiler_params=_cp("parallel"),
    )(x, gamma.reshape(1, C).astype(jnp.float32),
      beta.reshape(1, C).astype(jnp.float32),
      _wcast(w_cat), b_cat.reshape(1, N).astype(jnp.float32))


# ----------------------------------------------------------------------------
# bidirectional LSTM recurrence (time-major, single fused matmul per step)
# ----------------------------------------------------------------------------


def _bilstm_kernel(xg_ref, whh_ref, of_ref, ob_ref, hcat, cf, cb, *, L, hid):
    hcat[...] = jnp.zeros_like(hcat)
    cf[...] = jnp.zeros_like(cf)
    cb[...] = jnp.zeros_like(cb)

    def gates(g, c):
        i = jax.nn.sigmoid(g[:, :hid])
        f = jax.nn.sigmoid(g[:, hid:2 * hid])
        gg = jnp.tanh(g[:, 2 * hid:3 * hid])
        o = jax.nn.sigmoid(g[:, 3 * hid:])
        c_new = f * c + i * gg
        return o * jnp.tanh(c_new), c_new

    def step(t, carry):
        # one block-diagonal matmul covers both directions' recurrent contributions
        rec = jnp.dot(hcat[...].astype(MXU_DTYPE), whh_ref[...].astype(MXU_DTYPE),
                      preferred_element_type=jnp.float32)       # (tn, 8*hid)
        row_f = xg_ref[t]                                        # (tn, 8*hid), lane-dense
        row_b = xg_ref[L - 1 - t]
        hf_new, cf_new = gates(rec[:, :4 * hid] + row_f[:, :4 * hid], cf[...])
        hb_new, cb_new = gates(rec[:, 4 * hid:] + row_b[:, 4 * hid:], cb[...])
        cf[...] = cf_new
        cb[...] = cb_new
        hcat[...] = jnp.concatenate([hf_new, hb_new], axis=-1)
        of_ref[t] = hf_new
        ob_ref[L - 1 - t] = hb_new
        return carry

    lax.fori_loop(0, L, step, 0)


def bilstm(xg, whh_cat, hid, max_tile=128):
    """xg:(L, N, 8*hid) time-major gate pre-activations -> (hs_fwd, hs_bwd), (L, N, hid)."""
    L, N, G = xg.shape
    tn = _tile(N, max_tile)
    return pl.pallas_call(
        partial(_bilstm_kernel, L=L, hid=hid),
        out_shape=(jax.ShapeDtypeStruct((L, N, hid), jnp.float32),
                   jax.ShapeDtypeStruct((L, N, hid), jnp.float32)),
        grid=(pl.cdiv(N, tn),),
        in_specs=[
            pl.BlockSpec((L, tn, G), lambda i: (0, i, 0)),
            pl.BlockSpec((2 * hid, 8 * hid), lambda i: (0, 0)),
        ],
        out_specs=(pl.BlockSpec((L, tn, hid), lambda i: (0, i, 0)),
                   pl.BlockSpec((L, tn, hid), lambda i: (0, i, 0))),
        scratch_shapes=[pltpu.VMEM((tn, 2 * hid), jnp.float32),
                        pltpu.VMEM((tn, hid), jnp.float32),
                        pltpu.VMEM((tn, hid), jnp.float32)],
        compiler_params=_cp("parallel"),
    )(xg, _wcast(whh_cat))


# ----------------------------------------------------------------------------
# LSTM output Linear + residual (fused, residual buffer aliased to the output)
# ----------------------------------------------------------------------------


def _lin_res_kernel(hf_ref, hb_ref, r_ref, wf_ref, wb_ref, b_ref, o_ref):
    o_ref[...] = (
        jnp.dot(hf_ref[...].astype(MXU_DTYPE), wf_ref[...].astype(MXU_DTYPE),
                preferred_element_type=jnp.float32)
        + jnp.dot(hb_ref[...].astype(MXU_DTYPE), wb_ref[...].astype(MXU_DTYPE),
                  preferred_element_type=jnp.float32)
        + b_ref[...] + r_ref[...]
    )


def linear_residual(hf, hb, res, wf, wb, b, max_tile=1024):
    M, hid = hf.shape
    N = wf.shape[1]
    tm = _tile(M, max_tile)
    return pl.pallas_call(
        _lin_res_kernel,
        out_shape=jax.ShapeDtypeStruct((M, N), jnp.float32),
        grid=(pl.cdiv(M, tm),),
        in_specs=[
            pl.BlockSpec((tm, hid), lambda i: (i, 0)),
            pl.BlockSpec((tm, hid), lambda i: (i, 0)),
            pl.BlockSpec((tm, N), lambda i: (i, 0)),
            pl.BlockSpec((hid, N), lambda i: (0, 0)),
            pl.BlockSpec((hid, N), lambda i: (0, 0)),
            pl.BlockSpec((1, N), lambda i: (0, 0)),
        ],
        out_specs=pl.BlockSpec((tm, N), lambda i: (i, 0)),
        input_output_aliases={2: 0},
        compiler_params=_cp("parallel"),
    )(hf, hb, res.astype(jnp.float32), _wcast(wf), _wcast(wb),
      b.reshape(1, N).astype(jnp.float32))


# ----------------------------------------------------------------------------
# GroupNorm(1) on channels-last input, two-pass tiled reduction
# ----------------------------------------------------------------------------


def _gn_stats_kernel(x_ref, s_ref, q_ref, *, T_total):
    t = pl.program_id(1)
    tt = x_ref.shape[1]
    x = x_ref[...]                                         # (1, tt, FC)
    row = t * tt + lax.broadcasted_iota(jnp.int32, x.shape, 1)
    xm = jnp.where(row < T_total, x, 0.0)                  # mask ragged last T tile

    @pl.when(t == 0)
    def _():
        s_ref[...] = jnp.zeros_like(s_ref)
        q_ref[...] = jnp.zeros_like(q_ref)

    s_ref[...] += jnp.sum(xm, axis=1, keepdims=True)
    q_ref[...] += jnp.sum(xm * xm, axis=1, keepdims=True)


def _gn_norm_kernel(x_ref, m_ref, r_ref, g_ref, b_ref, o_ref):
    o_ref[...] = (x_ref[...] - m_ref[...]) * r_ref[...] * g_ref[...] + b_ref[...]


def groupnorm1(x, gamma, beta, max_tile=256):
    """torch.nn.GroupNorm(num_groups=1) on channels-last x:(B,T,F,C)."""
    B, T, F, C = x.shape
    FC = F * C
    xr = x.reshape(B, T, FC)
    tt = _tile(T, max_tile)
    nT = pl.cdiv(T, tt)

    colsum, colsq = pl.pallas_call(
        partial(_gn_stats_kernel, T_total=T),
        out_shape=(jax.ShapeDtypeStruct((B, 1, FC), jnp.float32),
                   jax.ShapeDtypeStruct((B, 1, FC), jnp.float32)),
        grid=(B, nT),
        in_specs=[pl.BlockSpec((1, tt, FC), lambda i, j: (i, j, 0))],
        out_specs=(pl.BlockSpec((1, 1, FC), lambda i, j: (i, 0, 0)),
                   pl.BlockSpec((1, 1, FC), lambda i, j: (i, 0, 0))),
        compiler_params=_cp("parallel", "arbitrary"),
    )(xr)

    cnt = float(T * FC)
    mean = jnp.sum(colsum, axis=-1) / cnt                  # (B, 1)
    var = jnp.maximum(jnp.sum(colsq, axis=-1) / cnt - mean * mean, 0.0)
    rstd = lax.rsqrt(var + EPS)
    mean = mean.reshape(B, 1, 1)
    rstd = rstd.reshape(B, 1, 1)

    g = jnp.tile(gamma.astype(jnp.float32), F).reshape(1, 1, FC)
    b = jnp.tile(beta.astype(jnp.float32), F).reshape(1, 1, FC)

    out = pl.pallas_call(
        _gn_norm_kernel,
        out_shape=jax.ShapeDtypeStruct((B, T, FC), jnp.float32),
        grid=(B, nT),
        in_specs=[
            pl.BlockSpec((1, tt, FC), lambda i, j: (i, j, 0)),
            pl.BlockSpec((1, 1, 1), lambda i, j: (i, 0, 0)),
            pl.BlockSpec((1, 1, 1), lambda i, j: (i, 0, 0)),
            pl.BlockSpec((1, 1, FC), lambda i, j: (0, 0, 0)),
            pl.BlockSpec((1, 1, FC), lambda i, j: (0, 0, 0)),
        ],
        out_specs=pl.BlockSpec((1, tt, FC), lambda i, j: (i, j, 0)),
        compiler_params=_cp("parallel", "parallel"),
    )(xr, mean, rstd, g, b)
    return out.reshape(B, T, F, C)


# ----------------------------------------------------------------------------
# attn_concat_proj epilogue: PReLU + LayerNorm4DCF + residual (fused, T-tiled)
# ----------------------------------------------------------------------------


def _prelu_ln4dcf_res_kernel(x_ref, a_ref, g_ref, b_ref, r_ref, o_ref):
    x = x_ref[...]                                         # (1, TT, F*C)
    x = jnp.where(x >= 0.0, x, a_ref[...] * x)
    mu = jnp.mean(x, axis=-1, keepdims=True)
    var = jnp.mean(jnp.square(x - mu), axis=-1, keepdims=True)
    o_ref[...] = ((x - mu) * lax.rsqrt(var + EPS) * g_ref[...] + b_ref[...]
                  + r_ref[...])


def prelu_ln4dcf_residual(x, alpha, gamma, beta, res, max_tile=256):
    """x,res:(B,T,F,C) channels-last; gamma/beta are the torch (1,C,1,F) params."""
    B, T, F, C = x.shape
    FC = F * C
    tt = _tile(T, max_tile)
    xr = x.reshape(B, T, FC)
    rr = res.reshape(B, T, FC).astype(jnp.float32)
    g = gamma.reshape(C, F).T.reshape(1, 1, FC).astype(jnp.float32)
    b = beta.reshape(C, F).T.reshape(1, 1, FC).astype(jnp.float32)
    a = jnp.reshape(alpha, (1, 1, 1)).astype(jnp.float32)
    out = pl.pallas_call(
        _prelu_ln4dcf_res_kernel,
        out_shape=jax.ShapeDtypeStruct((B, T, FC), jnp.float32),
        grid=(B, pl.cdiv(T, tt)),
        in_specs=[
            pl.BlockSpec((1, tt, FC), lambda i, j: (i, j, 0)),
            pl.BlockSpec((1, 1, 1), lambda i, j: (0, 0, 0)),
            pl.BlockSpec((1, 1, FC), lambda i, j: (0, 0, 0)),
            pl.BlockSpec((1, 1, FC), lambda i, j: (0, 0, 0)),
            pl.BlockSpec((1, tt, FC), lambda i, j: (i, j, 0)),
        ],
        out_specs=pl.BlockSpec((1, tt, FC), lambda i, j: (i, j, 0)),
        input_output_aliases={4: 0},
        compiler_params=_cp("parallel", "parallel"),
    )(xr, a, g, b, rr)
    return out.reshape(B, T, F, C)


# ----------------------------------------------------------------------------
# flash-style attention with fused per-head PReLU + LayerNorm on Q/K/V
# ----------------------------------------------------------------------------


def _attention_kernel(q_ref, k_ref, v_ref, qp_ref, kp_ref, vp_ref, al_ref,
                      o_ref, qn, m_sc, l_sc, acc, *, n_keys):
    kvi = pl.program_id(2)
    tkv = k_ref.shape[1]

    def prelu_rownorm(x, a, g, b):
        x = jnp.where(x >= 0.0, x, a * x)
        mu = jnp.mean(x, axis=-1, keepdims=True)
        var = jnp.mean(jnp.square(x - mu), axis=-1, keepdims=True)
        return (x - mu) * lax.rsqrt(var + EPS) * g + b

    al = al_ref[...]                                       # (1, 1, 3): q/k/v PReLU slopes

    @pl.when(kvi == 0)
    def _():
        qpar = qp_ref[...]                                 # 1/sqrt(dq) pre-folded here
        qn[...] = prelu_rownorm(q_ref[0], al[0, :, 0:1],
                                qpar[0, 0:1, :], qpar[0, 1:2, :])
        m_sc[...] = jnp.full_like(m_sc, -jnp.inf)
        l_sc[...] = jnp.zeros_like(l_sc)
        acc[...] = jnp.zeros_like(acc)

    kpar = kp_ref[...]
    vpar = vp_ref[...]
    k = prelu_rownorm(k_ref[0], al[0, :, 1:2], kpar[0, 0:1, :], kpar[0, 1:2, :])
    v = prelu_rownorm(v_ref[0], al[0, :, 2:3], vpar[0, 0:1, :], vpar[0, 1:2, :])

    # contract over the feature dim of both (K is NOT pre-transposed in HBM)
    s = lax.dot_general(qn[...].astype(MXU_DTYPE), k.astype(MXU_DTYPE),
                        (((1,), (1,)), ((), ())),
                        preferred_element_type=jnp.float32)
    col = kvi * tkv + lax.broadcasted_iota(jnp.int32, s.shape, 1)
    s = jnp.where(col < n_keys, s, -jnp.inf)

    m_new = jnp.maximum(m_sc[...], jnp.max(s, axis=-1, keepdims=True))
    corr = jnp.exp(m_sc[...] - m_new)
    p = jnp.exp(s - m_new)
    l_sc[...] = corr * l_sc[...] + jnp.sum(p, axis=-1, keepdims=True)
    acc[...] = corr * acc[...] + jnp.dot(p.astype(MXU_DTYPE), v.astype(MXU_DTYPE),
                                         preferred_element_type=jnp.float32)
    m_sc[...] = m_new

    @pl.when(kvi == pl.num_programs(2) - 1)
    def _():
        o_ref[0] = acc[...] * pl.reciprocal(l_sc[...], approx=False)


def attention_qkv(q_raw, k_raw, v_raw, qp, kp, vp, alph, n_head,
                  max_tq=256, max_tkv=128):
    """softmax(norm(Q) norm(K)^T / sqrt(dq)) norm(V), per (batch*head) row.

    q_raw/k_raw:(BH,T,dq)  v_raw:(BH,T,dv); packed per-head params indexed by (b % H)."""
    BH, T, dq = q_raw.shape
    dv = v_raw.shape[-1]
    H = n_head

    tq = _tile(T, max_tq)
    if T <= max_tkv:
        tkv, tp = T, T
    else:
        tkv = max_tkv
        tp = pl.cdiv(T, tkv) * tkv
        # zero-pad K/V so the masked (p == 0) tail columns never touch garbage memory
        pad = ((0, 0), (0, tp - T), (0, 0))
        k_raw = jnp.pad(k_raw, pad)
        v_raw = jnp.pad(v_raw, pad)
    n_kv = tp // tkv
    n_q = pl.cdiv(T, tq)

    return pl.pallas_call(
        partial(_attention_kernel, n_keys=T),
        out_shape=jax.ShapeDtypeStruct((BH, T, dv), jnp.float32),
        grid=(BH, n_q, n_kv),
        in_specs=[
            pl.BlockSpec((1, tq, dq), lambda b, q, k: (b, q, 0)),
            pl.BlockSpec((1, tkv, dq), lambda b, q, k: (b, k, 0)),
            pl.BlockSpec((1, tkv, dv), lambda b, q, k: (b, k, 0)),
            pl.BlockSpec((1, 2, dq), lambda b, q, k: (b % H, 0, 0)),
            pl.BlockSpec((1, 2, dq), lambda b, q, k: (b % H, 0, 0)),
            pl.BlockSpec((1, 2, dv), lambda b, q, k: (b % H, 0, 0)),
            pl.BlockSpec((1, 1, 3), lambda b, q, k: (b % H, 0, 0)),
        ],
        out_specs=pl.BlockSpec((1, tq, dv), lambda b, q, k: (b, q, 0)),
        scratch_shapes=[
            pltpu.VMEM((tq, dq), jnp.float32),
            pltpu.VMEM((tq, 1), jnp.float32),
            pltpu.VMEM((tq, 1), jnp.float32),
            pltpu.VMEM((tq, dv), jnp.float32),
        ],
        compiler_params=_cp("parallel", "parallel", "arbitrary"),
    )(q_raw, k_raw, v_raw, qp, kp, vp, alph)


# ----------------------------------------------------------------------------
# 3x3 conv / conv-transpose (channels-last, Pallas matmuls + XLA shift glue)
# ----------------------------------------------------------------------------


def conv2d_3x3(x, w, b):
    """Channels-last conv, kernel (3,3)/stride1/pad1 (gather form; input channels small).
    x:(B,T,F,I) w:(O,I,3,3)."""
    # TODO(synk): the (cheap, 9*I-wide) im2col gather here is XLA glue; for wide inputs
    #             switch to the scatter form used by conv_transpose2d_3x3.
    B, T, F, I = x.shape
    O = w.shape[0]
    xp = jnp.pad(x, ((0, 0), (1, 1), (1, 1), (0, 0)))
    cols = [xp[:, kh:kh + T, kw:kw + F, :] for kh in range(3) for kw in range(3)]
    col = jnp.stack(cols, axis=-1).reshape(B * T * F, I * 9)
    wf = w.reshape(O, I * 9).T
    out = matmul_bias(col, wf, b)
    return out.reshape(B, T, F, O)


def conv_transpose2d_3x3(x, w, b):
    """ConvTranspose2d (3,3)/stride1/pad1 via one matmul to 9*O tap channels + shifted
    adds (scatter form; avoids the 9x im2col HBM blow-up on the wide input)."""
    B, T, F, I = x.shape
    O = w.shape[1]                                         # torch weight: (in, out, kh, kw)
    w_all = w.transpose(0, 2, 3, 1).reshape(I, 9 * O)      # columns ordered (kh, kw, o)
    y = matmul_bias(x.reshape(B * T * F, I), w_all, jnp.zeros((9 * O,), jnp.float32))
    y = y.reshape(B, T, F, 3, 3, O)
    out = jnp.zeros((B, T, F, O), jnp.float32) + b.astype(jnp.float32)
    # TODO(synk): the 9 shifted adds below are XLA glue; fold into the matmul output
    #             index_map if this op ever shows up in profiles.
    for kh in range(3):
        for kw in range(3):
            dt, df = 1 - kh, 1 - kw
            t0, t1 = max(0, -dt), T - max(0, dt)
            f0, f1 = max(0, -df), F - max(0, df)
            if t1 <= t0 or f1 <= f0:
                continue
            out = out.at[:, t0:t1, f0:f1, :].add(
                y[:, t0 + dt:t1 + dt, f0 + df:f1 + df, kh, kw, :])
    return out


# ----------------------------------------------------------------------------
# GridNetV2 block (emb_ks == emb_hs path), channels-last
# ----------------------------------------------------------------------------


def gridnet_block(x, p, cfg):
    """x: channels-last (B, T0, Q0, C)."""
    B, T0, Q0, C = x.shape
    ks, hs_ = cfg["emb_ks"], cfg["emb_hs"]
    assert ks == hs_, "only the emb_ks == emb_hs path is implemented"
    H, E = cfg["n_head"], cfg["E"]
    hid = cfg["hidden"]
    Dh = C // H
    olp = ks - hs_  # == 0
    Tp = math.ceil((T0 + 2 * olp - ks) / hs_) * hs_ + ks
    Qp = math.ceil((Q0 + 2 * olp - ks) / hs_) * hs_ + ks

    input_ = jnp.pad(x, ((0, 0), (olp, Tp - T0 - olp), (olp, Qp - Q0 - olp), (0, 0)))

    def rnn_path(inp, prefix):
        # inp: (Bn, S1, S2, C); the LSTM runs over S2 grouped into chunks of ks.
        Bn, S1, S2, _ = inp.shape
        L = S2 // ks
        Nb = Bn * S1
        rnn = p[prefix + "_rnn"]
        # time-major (l, n) rows: cheap transpose of the narrow (ks*C)-wide tensor so the
        # serial BiLSTM gets contiguous, lane-dense per-timestep tiles.
        rows = (inp.reshape(Nb, L, ks * C).transpose(1, 0, 2)
                .reshape(L * Nb, ks * C).astype(jnp.float32))
        w_cat = jnp.concatenate([rnn["w_ih_f"].T, rnn["w_ih_b"].T], axis=1)
        b_cat = jnp.concatenate([rnn["b_ih_f"] + rnn["b_hh_f"],
                                 rnn["b_ih_b"] + rnn["b_hh_b"]])
        xg = layernorm_lstm_inproj(rows, p[prefix + "_norm_g"], p[prefix + "_norm_b"],
                                   w_cat, b_cat, ks, C)
        xg = xg.reshape(L, Nb, 8 * hid)
        # block-diagonal [fwd | bwd] recurrent weight -> one MXU push per timestep
        whh = jnp.zeros((2 * hid, 8 * hid), jnp.float32)
        whh = whh.at[:hid, :4 * hid].set(rnn["w_hh_f"].T)
        whh = whh.at[hid:, 4 * hid:].set(rnn["w_hh_b"].T)
        hs_f, hs_b = bilstm(xg, whh, hid)
        wf = p[prefix + "_lin_w"][:, :hid].T
        wb = p[prefix + "_lin_w"][:, hid:].T
        y = linear_residual(hs_f.reshape(L * Nb, hid), hs_b.reshape(L * Nb, hid),
                            rows, wf, wb, p[prefix + "_lin_b"])
        return y.reshape(L, Nb, ks * C).transpose(1, 0, 2).reshape(Bn, S1, S2, C)

    # intra (frequency) path, then inter (time) path; residuals fused into the kernels
    y = rnn_path(input_, "intra")                     # (B, Tp, Qp, C)
    y = y.transpose(0, 2, 1, 3)                       # (B, Qp, Tp, C)
    y = rnn_path(y, "inter")                          # (B, Qp, Tp, C)
    inter_rnn = y.transpose(0, 2, 1, 3)[:, olp:olp + T0, olp:olp + Q0, :]  # (B,T0,Q0,C)

    # ---- full-band self-attention ----
    Fq = Q0
    HE = H * E
    flat = inter_rnn.reshape(B * T0 * Fq, C)
    w_qkv = jnp.concatenate([p["q_w"].T, p["k_w"].T, p["v_w"].T], axis=1)  # (C, 2HE+C)
    b_qkv = jnp.concatenate([p["q_b"], p["k_b"], p["v_b"]])
    qkv = matmul_bias(flat, w_qkv, b_qkv).reshape(B, T0, Fq, 2 * HE + C)

    # TODO(synk): these head-split transposes are full HBM copies; they could be folded
    #             into head-indexed BlockSpecs of the attention kernel.
    q_raw = qkv[..., :HE].reshape(B, T0, Fq, H, E)
    q_raw = q_raw.transpose(0, 3, 1, 4, 2).reshape(B * H, T0, E * Fq)
    k_raw = qkv[..., HE:2 * HE].reshape(B, T0, Fq, H, E)
    k_raw = k_raw.transpose(0, 3, 1, 4, 2).reshape(B * H, T0, E * Fq)
    v_raw = qkv[..., 2 * HE:].reshape(B, T0, Fq, H, Dh)
    v_raw = v_raw.transpose(0, 3, 1, 4, 2).reshape(B * H, T0, Dh * Fq)

    scale = 1.0 / math.sqrt(float(E * Fq))

    def pack(gamma, beta, width, mul=1.0):
        g = gamma.reshape(H, width).astype(jnp.float32) * mul
        bb = beta.reshape(H, width).astype(jnp.float32) * mul
        return jnp.stack([g, bb], axis=1)              # (H, 2, width)

    qp = pack(p["q_gamma"], p["q_beta"], E * Fq, scale)   # 1/sqrt(dq) folded into Q norm
    kp = pack(p["k_gamma"], p["k_beta"], E * Fq)
    vp = pack(p["v_gamma"], p["v_beta"], Dh * Fq)
    alph = jnp.stack([p["q_alpha"], p["k_alpha"], p["v_alpha"]],
                     axis=1).reshape(H, 1, 3).astype(jnp.float32)

    attn = attention_qkv(q_raw, k_raw, v_raw, qp, kp, vp, alph, H)
    # (B*H, T0, Dh*F) -> channels-last (B, T0, F, C) with channel = h*Dh + d
    attn = attn.reshape(B, H, T0, Dh, Fq).transpose(0, 2, 4, 1, 3).reshape(B, T0, Fq, C)

    # attn_concat_proj: 1x1 conv -> PReLU -> LayerNorm4DCF (+ residual, fused)
    proj = matmul_bias(attn.reshape(B * T0 * Fq, C), p["proj_w"].T, p["proj_b"])
    proj = proj.reshape(B, T0, Fq, C)
    out = prelu_ln4dcf_residual(proj, p["proj_alpha"], p["proj_gamma"],
                                p["proj_beta"], inter_rnn)
    return out


# ----------------------------------------------------------------------------
# TFGridNet forward (channels-last end-to-end)
# ----------------------------------------------------------------------------


def tfgridnet_forward(spec, params, cfg):
    """spec: complex (B, in_ch, n_freqs, n_frames) -> complex (B, out_ch, n_freqs, n_frames)."""
    B, in_ch, Fq, T = spec.shape
    xc = jnp.transpose(spec, (0, 3, 2, 1))                        # (B, T, F, in_ch)
    x = jnp.concatenate([jnp.real(xc), jnp.imag(xc)], axis=-1).astype(jnp.float32)

    x = conv2d_3x3(x, params["conv_w"], params["conv_b"])
    x = groupnorm1(x, params["gn_w"], params["gn_b"])

    for blk in params["blocks"]:
        x = gridnet_block(x, blk, cfg)

    x = conv_transpose2d_3x3(x, params["deconv_w"], params["deconv_b"])  # (B,T,F,2*oc)

    oc = cfg["out_ch"]
    x = x.reshape(B, T, Fq, oc, 2)
    out = lax.complex(x[..., 0], x[..., 1])                        # (B, T, F, oc)
    return jnp.transpose(out, (0, 3, 2, 1))                        # (B, oc, F, T)


# ----------------------------------------------------------------------------
# Deterministic parameter construction (PyTorch layouts)
# ----------------------------------------------------------------------------


def init_params(key, cfg):
    D, H, E = cfg["emb_dim"], cfg["n_head"], cfg["E"]
    F, hid, ks = cfg["n_freqs"], cfg["hidden"], cfg["emb_ks"]
    in_ch, oc = cfg["in_ch"], cfg["out_ch"]
    Dh = D // H

    keys = iter(jax.random.split(key, 512))

    def w(*shape, scale=0.1):
        return (scale * jax.random.normal(next(keys), shape)).astype(jnp.float32)

    def lstm_params(inp, h):
        return {
            "w_ih_f": w(4 * h, inp), "w_hh_f": w(4 * h, h),
            "b_ih_f": w(4 * h), "b_hh_f": w(4 * h),
            "w_ih_b": w(4 * h, inp), "w_hh_b": w(4 * h, h),
            "b_ih_b": w(4 * h), "b_hh_b": w(4 * h),
        }

    params = {
        "conv_w": w(D, 2 * in_ch, 3, 3), "conv_b": w(D),
        "gn_w": jnp.ones((D,), jnp.float32), "gn_b": jnp.zeros((D,), jnp.float32),
        "deconv_w": w(D, 2 * oc, 3, 3), "deconv_b": w(2 * oc),
        "blocks": [],
    }

    inC = D * ks
    for _ in range(cfg["layers"]):
        blk = {
            "intra_norm_g": jnp.ones((D,), jnp.float32),
            "intra_norm_b": jnp.zeros((D,), jnp.float32),
            "intra_rnn": lstm_params(inC, hid),
            "intra_lin_w": w(inC, 2 * hid), "intra_lin_b": w(inC),
            "inter_norm_g": jnp.ones((D,), jnp.float32),
            "inter_norm_b": jnp.zeros((D,), jnp.float32),
            "inter_rnn": lstm_params(inC, hid),
            "inter_lin_w": w(inC, 2 * hid), "inter_lin_b": w(inC),
            "q_w": w(H * E, D), "q_b": w(H * E),
            "q_alpha": jnp.full((H,), 0.25, jnp.float32),
            "q_gamma": jnp.ones((1, H, E, 1, F), jnp.float32),
            "q_beta": jnp.zeros((1, H, E, 1, F), jnp.float32),
            "k_w": w(H * E, D), "k_b": w(H * E),
            "k_alpha": jnp.full((H,), 0.25, jnp.float32),
            "k_gamma": jnp.ones((1, H, E, 1, F), jnp.float32),
            "k_beta": jnp.zeros((1, H, E, 1, F), jnp.float32),
            "v_w": w(D, D), "v_b": w(D),
            "v_alpha": jnp.full((H,), 0.25, jnp.float32),
            "v_gamma": jnp.ones((1, H, Dh, 1, F), jnp.float32),
            "v_beta": jnp.zeros((1, H, Dh, 1, F), jnp.float32),
            "proj_w": w(D, D), "proj_b": w(D),
            "proj_alpha": jnp.float32(0.25),
            "proj_gamma": jnp.ones((1, D, 1, F), jnp.float32),
            "proj_beta": jnp.zeros((1, D, 1, F), jnp.float32),
        }
        params["blocks"].append(blk)
    return params


# ----------------------------------------------------------------------------
# Main
# ----------------------------------------------------------------------------

if __name__ == "__main__":
    # Small, forward-consistent hyper-params:
    #   n_fft=16 -> n_freqs=9, emb_dim=8, heads=2, approx_qk_dim=16 -> E=ceil(16/9)=2,
    #   lstm hidden=8, emb_ks=emb_hs=4, 2 blocks; batch=2, frames=8.
    n_fft = 16
    n_freqs = n_fft // 2 + 1
    approx_qk_dim = 16
    cfg = dict(
        in_ch=1, out_ch=1, n_freqs=n_freqs,
        emb_dim=8, emb_ks=4, emb_hs=4,
        hidden=8, n_head=2,
        E=math.ceil(approx_qk_dim / n_freqs),
        layers=2,
    )
    B, n_frames = 2, 8

    key = jax.random.PRNGKey(0)
    kp_, kr, ki = jax.random.split(key, 3)
    params = init_params(kp_, cfg)

    spec = (jax.random.normal(kr, (B, cfg["in_ch"], n_freqs, n_frames))
            + 1j * jax.random.normal(ki, (B, cfg["in_ch"], n_freqs, n_frames)))
    spec = spec.astype(jnp.complex64)

    fwd = jax.jit(partial(tfgridnet_forward, cfg=cfg))
    out = fwd(spec, params)
    jax.block_until_ready(out)

    assert out.shape == (B, cfg["out_ch"], n_freqs, n_frames), out.shape
    assert out.dtype == jnp.complex64, out.dtype
    print("KERNEL_OK")
</pallas_src>

<mosaic_0001>
module attributes {stable_mosaic.version = 11 : i64} {
  func.func @_gn_stats_kernel(%arg0: i32, %arg1: i32, %arg2: memref<1x8x72xf32, #tpu.memory_space<vmem>>, %arg3: memref<1x1x72xf32, #tpu.memory_space<vmem>>, %arg4: memref<1x1x72xf32, #tpu.memory_space<vmem>>) attributes {dimension_semantics = [#tpu.dimension_semantics<parallel>, #tpu.dimension_semantics<arbitrary>], iteration_bounds = array<i64: 2, 1>, scalar_prefetch = 0 : i64, scratch_operands = 0 : i64, tpu.core_type = #tpu.core_type<tc>, window_params = [{transform_indices = @transform_0, window_bounds = array<i64: 1, 8, 72>}, {transform_indices = @transform_1, window_bounds = array<i64: 1, 1, 72>}, {transform_indices = @transform_2, window_bounds = array<i64: 1, 1, 72>}]} {
    %c0 = arith.constant 0 : index
    %c0_0 = arith.constant 0 : index
    %c0_1 = arith.constant 0 : index
    %0 = vector.load %arg2[%c0, %c0_0, %c0_1] : memref<1x8x72xf32, #tpu.memory_space<vmem>>, vector<1x8x72xf32>
    %c8_i32 = arith.constant 8 : i32
    %1 = arith.muli %arg1, %c8_i32 : i32
    %2 = tpu.iota {dimensions = array<i32: 1>} : vector<1x8x72xi32>
    %3 = vector.broadcast %1 : i32 to vector<1x8x72xi32>
    %4 = arith.addi %3, %2 : vector<1x8x72xi32>
    %c8_i32_2 = arith.constant 8 : i32
    %5 = vector.broadcast %c8_i32_2 : i32 to vector<1x8x72xi32>
    %6 = arith.cmpi slt, %4, %5 : vector<1x8x72xi32>
    %cst = arith.constant 0.000000e+00 : f32
    %7 = vector.broadcast %cst : f32 to vector<1x8x72xf32>
    %8 = arith.select %6, %0, %7 : vector<1x8x72xi1>, vector<1x8x72xf32>
    %c0_i32 = arith.constant 0 : i32
    %9 = arith.cmpi eq, %arg1, %c0_i32 : i32
    %10 = arith.extui %9 : i1 to i32
    %c0_i32_3 = arith.constant 0 : i32
    %11 = arith.cmpi ne, %10, %c0_i32_3 : i32
    scf.if %11 {
      %cst_18 = arith.constant 0.000000e+00 : f32
      %23 = vector.broadcast %cst_18 : f32 to vector<1x1x72xf32>
      %c0_19 = arith.constant 0 : index
      %c0_20 = arith.constant 0 : index
      %c0_21 = arith.constant 0 : index
      %24 = vector.load %arg3[%c0_19, %c0_20, %c0_21] : memref<1x1x72xf32, #tpu.memory_space<vmem>>, vector<1x1x72xf32>
      tpu.vector_store %arg3[%c0_19, %c0_20, %c0_21], %23 {strides = array<i32>} : memref<1x1x72xf32, #tpu.memory_space<vmem>>, vector<1x1x72xf32>,
      %cst_22 = arith.constant 0.000000e+00 : f32
      %25 = vector.broadcast %cst_22 : f32 to vector<1x1x72xf32>
      %c0_23 = arith.constant 0 : index
      %c0_24 = arith.constant 0 : index
      %c0_25 = arith.constant 0 : index
      %26 = vector.load %arg4[%c0_23, %c0_24, %c0_25] : memref<1x1x72xf32, #tpu.memory_space<vmem>>, vector<1x1x72xf32>
      tpu.vector_store %arg4[%c0_23, %c0_24, %c0_25], %25 {strides = array<i32>} : memref<1x1x72xf32, #tpu.memory_space<vmem>>, vector<1x1x72xf32>,
    } else {
    }
    %c0_4 = arith.constant 0 : index
    %c0_5 = arith.constant 0 : index
    %c0_6 = arith.constant 0 : index
    %12 = vector.load %arg3[%c0_4, %c0_5, %c0_6] : memref<1x1x72xf32, #tpu.memory_space<vmem>>, vector<1x1x72xf32>
    %cst_7 = arith.constant dense<0.000000e+00> : vector<1x72xf32>
    %13 = vector.multi_reduction <add>, %8, %cst_7 [1] : vector<1x8x72xf32> to vector<1x72xf32>
    %14 = vector.shape_cast %13 : vector<1x72xf32> to vector<1x1x72xf32>
    %15 = arith.addf %12, %14 : vector<1x1x72xf32>
    %c0_8 = arith.constant 0 : index
    %c0_9 = arith.constant 0 : index
    %c0_10 = arith.constant 0 : index
    %16 = vector.load %arg3[%c0_8, %c0_9, %c0_10] : memref<1x1x72xf32, #tpu.memory_space<vmem>>, vector<1x1x72xf32>
    tpu.vector_store %arg3[%c0_8, %c0_9, %c0_10], %15 {strides = array<i32>} : memref<1x1x72xf32, #tpu.memory_space<vmem>>, vector<1x1x72xf32>,
    %c0_11 = arith.constant 0 : index
    %c0_12 = arith.constant 0 : index
    %c0_13 = arith.constant 0 : index
    %17 = vector.load %arg4[%c0_11, %c0_12, %c0_13] : memref<1x1x72xf32, #tpu.memory_space<vmem>>, vector<1x1x72xf32>
    %18 = arith.mulf %8, %8 : vector<1x8x72xf32>
    %cst_14 = arith.constant dense<0.000000e+00> : vector<1x72xf32>
    %19 = vector.multi_reduction <add>, %18, %cst_14 [1] : vector<1x8x72xf32> to vector<1x72xf32>
    %20 = vector.shape_cast %19 : vector<1x72xf32> to vector<1x1x72xf32>
    %21 = arith.addf %17, %20 : vector<1x1x72xf32>
    %c0_15 = arith.constant 0 : index
    %c0_16 = arith.constant 0 : index
    %c0_17 = arith.constant 0 : index
    %22 = vector.load %arg4[%c0_15, %c0_16, %c0_17] : memref<1x1x72xf32, #tpu.memory_space<vmem>>, vector<1x1x72xf32>
    tpu.vector_store %arg4[%c0_15, %c0_16, %c0_17], %21 {strides = array<i32>} : memref<1x1x72xf32, #tpu.memory_space<vmem>>, vector<1x1x72xf32>,
    return
  }
  func.func @transform_0(%arg0: i32, %arg1: i32) -> (i32, i32, i32) {
    %c0_i32 = arith.constant 0 : i32
    %c0_i32_0 = arith.constant 0 : i32
    return %arg0, %arg1, %c0_i32 : i32, i32, i32
  }
  func.func @transform_1(%arg0: i32, %arg1: i32) -> (i32, i32, i32) {
    %c0_i32 = arith.constant 0 : i32
    %c0_i32_0 = arith.constant 0 : i32
    %c0_i32_1 = arith.constant 0 : i32
    return %arg0, %c0_i32, %c0_i32_0 : i32, i32, i32
  }
  func.func @transform_2(%arg0: i32, %arg1: i32) -> (i32, i32, i32) {
    %c0_i32 = arith.constant 0 : i32
    %c0_i32_0 = arith.constant 0 : i32
    %c0_i32_1 = arith.constant 0 : i32
    return %arg0, %c0_i32, %c0_i32_0 : i32, i32, i32
  }
}

module attributes {stable_mosaic.version = 11 : i64} {
  func.func @_matmul_bias_kernel(%arg0: i32, %arg1: memref<144x18xf32, #tpu.memory_space<vmem>>, %arg2: memref<18x8xbf16, #tpu.memory_space<vmem>>, %arg3: memref<1x8xf32, #tpu.memory_space<vmem>>, %arg4: memref<144x8xf32, #tpu.memory_space<vmem>>) attributes {dimension_semantics = [#tpu.dimension_semantics<parallel>], iteration_bounds = array<i64: 1>, scalar_prefetch = 0 : i64, scratch_operands = 0 : i64, tpu.core_type = #tpu.core_type<tc>, window_params = [{transform_indices = @transform_0, window_bounds = array<i64: 144, 18>}, {pipeline_mode = #tpu.pipeline_mode<synchronous>, transform_indices = @transform_1, window_bounds = array<i64: 18, 8>}, {pipeline_mode = #tpu.pipeline_mode<synchronous>, transform_indices = @transform_2, window_bounds = array<i64: 1, 8>}, {transform_indices = @transform_3, window_bounds = array<i64: 144, 8>}]} {
    %c0 = arith.constant 0 : index
    %c0_0 = arith.constant 0 : index
    %0 = vector.load %arg1[%c0, %c0_0] : memref<144x18xf32, #tpu.memory_space<vmem>>, vector<144x18xf32>
    %1 = arith.truncf %0 : vector<144x18xf32> to vector<144x18xbf16>
    %c0_1 = arith.constant 0 : index
    %c0_2 = arith.constant 0 : index
    %2 = vector.load %arg2[%c0_1, %c0_2] : memref<18x8xbf16, #tpu.memory_space<vmem>>, vector<18x8xbf16>
    %cst = arith.constant dense<0.000000e+00> : vector<144x8xf32>
    %3 = tpu.matmul %1, %2, %cst {dimension_numbers = #tpu.dot_dimension_numbers<[1], [0], [0], [1], [0, 0, 1, 1], [], []>} : vector<144x18xbf16>, vector<18x8xbf16>, vector<144x8xf32> -> vector<144x8xf32>
    %c0_3 = arith.constant 0 : index
    %c0_4 = arith.constant 0 : index
    %4 = vector.load %arg3[%c0_3, %c0_4] : memref<1x8xf32, #tpu.memory_space<vmem>>, vector<1x8xf32>
    %5 = vector.broadcast %4 : vector<1x8xf32> to vector<144x8xf32>
    %6 = arith.addf %3, %5 : vector<144x8xf32>
    %c0_5 = arith.constant 0 : index
    %c0_6 = arith.constant 0 : index
    %7 = vector.load %arg4[%c0_5, %c0_6] : memref<144x8xf32, #tpu.memory_space<vmem>>, vector<144x8xf32>
    tpu.vector_store %arg4[%c0_5, %c0_6], %6 {strides = array<i32>} : memref<144x8xf32, #tpu.memory_space<vmem>>, vector<144x8xf32>,
    return
  }
  func.func @transform_0(%arg0: i32) -> (i32, i32) {
    %c0_i32 = arith.constant 0 : i32
    %c0_i32_0 = arith.constant 0 : i32
    return %arg0, %c0_i32 : i32, i32
  }
  func.func @transform_1(%arg0: i32) -> (i32, i32) {
    %c0_i32 = arith.constant 0 : i32
    %c0_i32_0 = arith.constant 0 : i32
    %c0_i32_1 = arith.constant 0 : i32
    return %c0_i32, %c0_i32_0 : i32, i32
  }
  func.func @transform_2(%arg0: i32) -> (i32, i32) {
    %c0_i32 = arith.constant 0 : i32
    %c0_i32_0 = arith.constant 0 : i32
    %c0_i32_1 = arith.constant 0 : i32
    return %c0_i32, %c0_i32_0 : i32, i32
  }
  func.func @transform_3(%arg0: i32) -> (i32, i32) {
    %c0_i32 = arith.constant 0 : i32
    %c0_i32_0 = arith.constant 0 : i32
    return %arg0, %c0_i32 : i32, i32
  }
}

module attributes {stable_mosaic.version = 11 : i64} {
  func.func @_gn_norm_kernel(%arg0: i32, %arg1: i32, %arg2: memref<1x8x72xf32, #tpu.memory_space<vmem>>, %arg3: memref<1x1x1xf32, #tpu.memory_space<vmem>>, %arg4: memref<1x1x1xf32, #tpu.memory_space<vmem>>, %arg5: memref<1x1x72xf32, #tpu.memory_space<vmem>>, %arg6: memref<1x1x72xf32, #tpu.memory_space<vmem>>, %arg7: memref<1x8x72xf32, #tpu.memory_space<vmem>>) attributes {dimension_semantics = [#tpu.dimension_semantics<parallel>, #tpu.dimension_semantics<parallel>], iteration_bounds = array<i64: 2, 1>, scalar_prefetch = 0 : i64, scratch_operands = 0 : i64, tpu.core_type = #tpu.core_type<tc>, window_params = [{transform_indices = @transform_0, window_bounds = array<i64: 1, 8, 72>}, {transform_indices = @transform_1, window_bounds = array<i64: 1, 1, 1>}, {transform_indices = @transform_2, window_bounds = array<i64: 1, 1, 1>}, {pipeline_mode = #tpu.pipeline_mode<synchronous>, transform_indices = @transform_3, window_bounds = array<i64: 1, 1, 72>}, {pipeline_mode = #tpu.pipeline_mode<synchronous>, transform_indices = @transform_4, window_bounds = array<i64: 1, 1, 72>}, {transform_indices = @transform_5, window_bounds = array<i64: 1, 8, 72>}]} {
    %c0 = arith.constant 0 : index
    %c0_0 = arith.constant 0 : index
    %c0_1 = arith.constant 0 : index
    %0 = vector.load %arg2[%c0, %c0_0, %c0_1] : memref<1x8x72xf32, #tpu.memory_space<vmem>>, vector<1x8x72xf32>
    %c0_2 = arith.constant 0 : index
    %c0_3 = arith.constant 0 : index
    %c0_4 = arith.constant 0 : index
    %1 = vector.load %arg3[%c0_2, %c0_3, %c0_4] : memref<1x1x1xf32, #tpu.memory_space<vmem>>, vector<1x1x1xf32>
    %2 = vector.broadcast %1 : vector<1x1x1xf32> to vector<1x8x72xf32>
    %3 = arith.subf %0, %2 : vector<1x8x72xf32>
    %c0_5 = arith.constant 0 : index
    %c0_6 = arith.constant 0 : index
    %c0_7 = arith.constant 0 : index
    %4 = vector.load %arg4[%c0_5, %c0_6, %c0_7] : memref<1x1x1xf32, #tpu.memory_space<vmem>>, vector<1x1x1xf32>
    %5 = vector.broadcast %4 : vector<1x1x1xf32> to vector<1x8x72xf32>
    %6 = arith.mulf %3, %5 : vector<1x8x72xf32>
    %c0_8 = arith.constant 0 : index
    %c0_9 = arith.constant 0 : index
    %c0_10 = arith.constant 0 : index
    %7 = vector.load %arg5[%c0_8, %c0_9, %c0_10] : memref<1x1x72xf32, #tpu.memory_space<vmem>>, vector<1x1x72xf32>
    %8 = vector.broadcast %7 : vector<1x1x72xf32> to vector<1x8x72xf32>
    %9 = arith.mulf %6, %8 : vector<1x8x72xf32>
    %c0_11 = arith.constant 0 : index
    %c0_12 = arith.constant 0 : index
    %c0_13 = arith.constant 0 : index
    %10 = vector.load %arg6[%c0_11, %c0_12, %c0_13] : memref<1x1x72xf32, #tpu.memory_space<vmem>>, vector<1x1x72xf32>
    %11 = vector.broadcast %10 : vector<1x1x72xf32> to vector<1x8x72xf32>
    %12 = arith.addf %9, %11 : vector<1x8x72xf32>
    %c0_14 = arith.constant 0 : index
    %c0_15 = arith.constant 0 : index
    %c0_16 = arith.constant 0 : index
    %13 = vector.load %arg7[%c0_14, %c0_15, %c0_16] : memref<1x8x72xf32, #tpu.memory_space<vmem>>, vector<1x8x72xf32>
    tpu.vector_store %arg7[%c0_14, %c0_15, %c0_16], %12 {strides = array<i32>} : memref<1x8x72xf32, #tpu.memory_space<vmem>>, vector<1x8x72xf32>,
    return
  }
  func.func @transform_0(%arg0: i32, %arg1: i32) -> (i32, i32, i32) {
    %c0_i32 = arith.constant 0 : i32
    %c0_i32_0 = arith.constant 0 : i32
    return %arg0, %arg1, %c0_i32 : i32, i32, i32
  }
  func.func @transform_1(%arg0: i32, %arg1: i32) -> (i32, i32, i32) {
    %c0_i32 = arith.constant 0 : i32
    %c0_i32_0 = arith.constant 0 : i32
    %c0_i32_1 = arith.constant 0 : i32
    return %arg0, %c0_i32, %c0_i32_0 : i32, i32, i32
  }
  func.func @transform_2(%arg0: i32, %arg1: i32) -> (i32, i32, i32) {
    %c0_i32 = arith.constant 0 : i32
    %c0_i32_0 = arith.constant 0 : i32
    %c0_i32_1 = arith.constant 0 : i32
    return %arg0, %c0_i32, %c0_i32_0 : i32, i32, i32
  }
  func.func @transform_3(%arg0: i32, %arg1: i32) -> (i32, i32, i32) {
    %c0_i32 = arith.constant 0 : i32
    %c0_i32_0 = arith.constant 0 : i32
    %c0_i32_1 = arith.constant 0 : i32
    %c0_i32_2 = arith.constant 0 : i32
    return %c0_i32, %c0_i32_0, %c0_i32_1 : i32, i32, i32
  }
  func.func @transform_4(%arg0: i32, %arg1: i32) -> (i32, i32, i32) {
    %c0_i32 = arith.constant 0 : i32
    %c0_i32_0 = arith.constant 0 : i32
    %c0_i32_1 = arith.constant 0 : i32
    %c0_i32_2 = arith.constant 0 : i32
    return %c0_i32, %c0_i32_0, %c0_i32_1 : i32, i32, i32
  }
  func.func @transform_5(%arg0: i32, %arg1: i32) -> (i32, i32, i32) {
    %c0_i32 = arith.constant 0 : i32
    %c0_i32_0 = arith.constant 0 : i32
    return %arg0, %arg1, %c0_i32 : i32, i32, i32
  }
}

module attributes {stable_mosaic.version = 11 : i64} {
  func.func @_ln_proj_kernel(%arg0: i32, %arg1: memref<48x32xf32, #tpu.memory_space<vmem>>, %arg2: memref<1x8xf32, #tpu.memory_space<vmem>>, %arg3: memref<1x8xf32, #tpu.memory_space<vmem>>, %arg4: memref<32x64xbf16, #tpu.memory_space<vmem>>, %arg5: memref<1x64xf32, #tpu.memory_space<vmem>>, %arg6: memref<48x64xf32, #tpu.memory_space<vmem>>) attributes {dimension_semantics = [#tpu.dimension_semantics<parallel>], iteration_bounds = array<i64: 1>, scalar_prefetch = 0 : i64, scratch_operands = 0 : i64, tpu.core_type = #tpu.core_type<tc>, window_params = [{transform_indices = @transform_0, window_bounds = array<i64: 48, 32>}, {pipeline_mode = #tpu.pipeline_mode<synchronous>, transform_indices = @transform_1, window_bounds = array<i64: 1, 8>}, {pipeline_mode = #tpu.pipeline_mode<synchronous>, transform_indices = @transform_2, window_bounds = array<i64: 1, 8>}, {pipeline_mode = #tpu.pipeline_mode<synchronous>, transform_indices = @transform_3, window_bounds = array<i64: 32, 64>}, {pipeline_mode = #tpu.pipeline_mode<synchronous>, transform_indices = @transform_4, window_bounds = array<i64: 1, 64>}, {transform_indices = @transform_5, window_bounds = array<i64: 48, 64>}]} {
    %c0 = arith.constant 0 : index
    %c0_0 = arith.constant 0 : index
    %0 = vector.load %arg1[%c0, %c0_0] : memref<48x32xf32, #tpu.memory_space<vmem>>, vector<48x32xf32>
    %c0_1 = arith.constant 0 : index
    %c0_2 = arith.constant 0 : index
    %1 = vector.load %arg2[%c0_1, %c0_2] : memref<1x8xf32, #tpu.memory_space<vmem>>, vector<1x8xf32>
    %c0_3 = arith.constant 0 : index
    %c0_4 = arith.constant 0 : index
    %2 = vector.load %arg3[%c0_3, %c0_4] : memref<1x8xf32, #tpu.memory_space<vmem>>, vector<1x8xf32>
    %3 = vector.extract_strided_slice %0 {offsets = [0, 0], sizes = [48, 8], strides = [1, 1]} : vector<48x32xf32> to vector<48x8xf32>
    %cst = arith.constant dense<0.000000e+00> : vector<48xf32>
    %4 = vector.multi_reduction <add>, %3, %cst [1] : vector<48x8xf32> to vector<48xf32>
    %5 = vector.shape_cast %4 : vector<48xf32> to vector<48x1xf32>
    %cst_5 = arith.constant 8.000000e+00 : f32
    %6 = vector.broadcast %cst_5 : f32 to vector<48x1xf32>
    %7 = arith.divf %5, %6 : vector<48x1xf32>
    %8 = vector.broadcast %7 : vector<48x1xf32> to vector<48x8xf32>
    %9 = arith.subf %3, %8 : vector<48x8xf32>
    %10 = arith.mulf %9, %9 : vector<48x8xf32>
    %cst_6 = arith.constant dense<0.000000e+00> : vector<48xf32>
    %11 = vector.multi_reduction <add>, %10, %cst_6 [1] : vector<48x8xf32> to vector<48xf32>
    %12 = vector.shape_cast %11 : vector<48xf32> to vector<48x1xf32>
    %cst_7 = arith.constant 8.000000e+00 : f32
    %13 = vector.broadcast %cst_7 : f32 to vector<48x1xf32>
    %14 = arith.divf %12, %13 : vector<48x1xf32>
    %15 = vector.broadcast %7 : vector<48x1xf32> to vector<48x8xf32>
    %16 = arith.subf %3, %15 : vector<48x8xf32>
    %cst_8 = arith.constant 9.99999974E-6 : f32
    %17 = vector.broadcast %cst_8 : f32 to vector<48x1xf32>
    %18 = arith.addf %14, %17 : vector<48x1xf32>
    %19 = math.rsqrt %18 : vector<48x1xf32>
    %20 = vector.broadcast %19 : vector<48x1xf32> to vector<48x8xf32>
    %21 = arith.mulf %16, %20 : vector<48x8xf32>
    %22 = vector.broadcast %1 : vector<1x8xf32> to vector<48x8xf32>
    %23 = arith.mulf %21, %22 : vector<48x8xf32>
    %24 = vector.broadcast %2 : vector<1x8xf32> to vector<48x8xf32>
    %25 = arith.addf %23, %24 : vector<48x8xf32>
    %26 = vector.extract_strided_slice %0 {offsets = [0, 8], sizes = [48, 8], strides = [1, 1]} : vector<48x32xf32> to vector<48x8xf32>
    %cst_9 = arith.constant dense<0.000000e+00> : vector<48xf32>
    %27 = vector.multi_reduction <add>, %26, %cst_9 [1] : vector<48x8xf32> to vector<48xf32>
    %28 = vector.shape_cast %27 : vector<48xf32> to vector<48x1xf32>
    %cst_10 = arith.constant 8.000000e+00 : f32
    %29 = vector.broadcast %cst_10 : f32 to vector<48x1xf32>
    %30 = arith.divf %28, %29 : vector<48x1xf32>
    %31 = vector.broadcast %30 : vector<48x1xf32> to vector<48x8xf32>
    %32 = arith.subf %26, %31 : vector<48x8xf32>
    %33 = arith.mulf %32, %32 : vector<48x8xf32>
    %cst_11 = arith.constant dense<0.000000e+00> : vector<48xf32>
    %34 = vector.multi_reduction <add>, %33, %cst_11 [1] : vector<48x8xf32> to vector<48xf32>
    %35 = vector.shape_cast %34 : vector<48xf32> to vector<48x1xf32>
    %cst_12 = arith.constant 8.000000e+00 : f32
    %36 = vector.broadcast %cst_12 : f32 to vector<48x1xf32>
    %37 = arith.divf %35, %36 : vector<48x1xf32>
    %38 = vector.broadcast %30 : vector<48x1xf32> to vector<48x8xf32>
    %39 = arith.subf %26, %38 : vector<48x8xf32>
    %cst_13 = arith.constant 9.99999974E-6 : f32
    %40 = vector.broadcast %cst_13 : f32 to vector<48x1xf32>
    %41 = arith.addf %37, %40 : vector<48x1xf32>
    %42 = math.rsqrt %41 : vector<48x1xf32>
    %43 = vector.broadcast %42 : vector<48x1xf32> to vector<48x8xf32>
    %44 = arith.mulf %39, %43 : vector<48x8xf32>
    %45 = vector.broadcast %1 : vector<1x8xf32> to vector<48x8xf32>
    %46 = arith.mulf %44, %45 : vector<48x8xf32>
    %47 = vector.broadcast %2 : vector<1x8xf32> to vector<48x8xf32>
    %48 = arith.addf %46, %47 : vector<48x8xf32>
    %49 = vector.extract_strided_slice %0 {offsets = [0, 16], sizes = [48, 8], strides = [1, 1]} : vector<48x32xf32> to vector<48x8xf32>
    %cst_14 = arith.constant dense<0.000000e+00> : vector<48xf32>
    %50 = vector.multi_reduction <add>, %49, %cst_14 [1] : vector<48x8xf32> to vector<48xf32>
    %51 = vector.shape_cast %50 : vector<48xf32> to vector<48x1xf32>
    %cst_15 = arith.constant 8.000000e+00 : f32
    %52 = vector.broadcast %cst_15 : f32 to vector<48x1xf32>
    %53 = arith.divf %51, %52 : vector<48x1xf32>
    %54 = vector.broadcast %53 : vector<48x1xf32> to vector<48x8xf32>
    %55 = arith.subf %49, %54 : vector<48x8xf32>
    %56 = arith.mulf %55, %55 : vector<48x8xf32>
    %cst_16 = arith.constant dense<0.000000e+00> : vector<48xf32>
    %57 = vector.multi_reduction <add>, %56, %cst_16 [1] : vector<48x8xf32> to vector<48xf32>
    %58 = vector.shape_cast %57 : vector<48xf32> to vector<48x1xf32>
    %cst_17 = arith.constant 8.000000e+00 : f32
    %59 = vector.broadcast %cst_17 : f32 to vector<48x1xf32>
    %60 = arith.divf %58, %59 : vector<48x1xf32>
    %61 = vector.broadcast %53 : vector<48x1xf32> to vector<48x8xf32>
    %62 = arith.subf %49, %61 : vector<48x8xf32>
    %cst_18 = arith.constant 9.99999974E-6 : f32
    %63 = vector.broadcast %cst_18 : f32 to vector<48x1xf32>
    %64 = arith.addf %60, %63 : vector<48x1xf32>
    %65 = math.rsqrt %64 : vector<48x1xf32>
    %66 = vector.broadcast %65 : vector<48x1xf32> to vector<48x8xf32>
    %67 = arith.mulf %62, %66 : vector<48x8xf32>
    %68 = vector.broadcast %1 : vector<1x8xf32> to vector<48x8xf32>
    %69 = arith.mulf %67, %68 : vector<48x8xf32>
    %70 = vector.broadcast %2 : vector<1x8xf32> to vector<48x8xf32>
    %71 = arith.addf %69, %70 : vector<48x8xf32>
    %72 = vector.extract_strided_slice %0 {offsets = [0, 24], sizes = [48, 8], strides = [1, 1]} : vector<48x32xf32> to vector<48x8xf32>
    %cst_19 = arith.constant dense<0.000000e+00> : vector<48xf32>
    %73 = vector.multi_reduction <add>, %72, %cst_19 [1] : vector<48x8xf32> to vector<48xf32>
    %74 = vector.shape_cast %73 : vector<48xf32> to vector<48x1xf32>
    %cst_20 = arith.constant 8.000000e+00 : f32
    %75 = vector.broadcast %cst_20 : f32 to vector<48x1xf32>
    %76 = arith.divf %74, %75 : vector<48x1xf32>
    %77 = vector.broadcast %76 : vector<48x1xf32> to vector<48x8xf32>
    %78 = arith.subf %72, %77 : vector<48x8xf32>
    %79 = arith.mulf %78, %78 : vector<48x8xf32>
    %cst_21 = arith.constant dense<0.000000e+00> : vector<48xf32>
    %80 = vector.multi_reduction <add>, %79, %cst_21 [1] : vector<48x8xf32> to vector<48xf32>
    %81 = vector.shape_cast %80 : vector<48xf32> to vector<48x1xf32>
    %cst_22 = arith.constant 8.000000e+00 : f32
    %82 = vector.broadcast %cst_22 : f32 to vector<48x1xf32>
    %83 = arith.divf %81, %82 : vector<48x1xf32>
    %84 = vector.broadcast %76 : vector<48x1xf32> to vector<48x8xf32>
    %85 = arith.subf %72, %84 : vector<48x8xf32>
    %cst_23 = arith.constant 9.99999974E-6 : f32
    %86 = vector.broadcast %cst_23 : f32 to vector<48x1xf32>
    %87 = arith.addf %83, %86 : vector<48x1xf32>
    %88 = math.rsqrt %87 : vector<48x1xf32>
    %89 = vector.broadcast %88 : vector<48x1xf32> to vector<48x8xf32>
    %90 = arith.mulf %85, %89 : vector<48x8xf32>
    %91 = vector.broadcast %1 : vector<1x8xf32> to vector<48x8xf32>
    %92 = arith.mulf %90, %91 : vector<48x8xf32>
    %93 = vector.broadcast %2 : vector<1x8xf32> to vector<48x8xf32>
    %94 = arith.addf %92, %93 : vector<48x8xf32>
    %95 = tpu.concatenate %25, %48, %71, %94 in 1 : vector<48x8xf32>, vector<48x8xf32>, vector<48x8xf32>, vector<48x8xf32> -> vector<48x32xf32>
    %96 = arith.truncf %95 : vector<48x32xf32> to vector<48x32xbf16>
    %c0_24 = arith.constant 0 : index
    %c0_25 = arith.constant 0 : index
    %97 = vector.load %arg4[%c0_24, %c0_25] : memref<32x64xbf16, #tpu.memory_space<vmem>>, vector<32x64xbf16>
    %cst_26 = arith.constant dense<0.000000e+00> : vector<48x64xf32>
    %98 = tpu.matmul %96, %97, %cst_26 {dimension_numbers = #tpu.dot_dimension_numbers<[1], [0], [0], [1], [0, 0, 1, 1], [], []>} : vector<48x32xbf16>, vector<32x64xbf16>, vector<48x64xf32> -> vector<48x64xf32>
    %c0_27 = arith.constant 0 : index
    %c0_28 = arith.constant 0 : index
    %99 = vector.load %arg5[%c0_27, %c0_28] : memref<1x64xf32, #tpu.memory_space<vmem>>, vector<1x64xf32>
    %100 = vector.broadcast %99 : vector<1x64xf32> to vector<48x64xf32>
    %101 = arith.addf %98, %100 : vector<48x64xf32>
    %c0_29 = arith.constant 0 : index
    %c0_30 = arith.constant 0 : index
    %102 = vector.load %arg6[%c0_29, %c0_30] : memref<48x64xf32, #tpu.memory_space<vmem>>, vector<48x64xf32>
    tpu.vector_store %arg6[%c0_29, %c0_30], %101 {strides = array<i32>} : memref<48x64xf32, #tpu.memory_space<vmem>>, vector<48x64xf32>,
    return
  }
  func.func @transform_0(%arg0: i32) -> (i32, i32) {
    %c0_i32 = arith.constant 0 : i32
    %c0_i32_0 = arith.constant 0 : i32
    return %arg0, %c0_i32 : i32, i32
  }
  func.func @transform_1(%arg0: i32) -> (i32, i32) {
    %c0_i32 = arith.constant 0 : i32
    %c0_i32_0 = arith.constant 0 : i32
    %c0_i32_1 = arith.constant 0 : i32
    return %c0_i32, %c0_i32_0 : i32, i32
  }
  func.func @transform_2(%arg0: i32) -> (i32, i32) {
    %c0_i32 = arith.constant 0 : i32
    %c0_i32_0 = arith.constant 0 : i32
    %c0_i32_1 = arith.constant 0 : i32
    return %c0_i32, %c0_i32_0 : i32, i32
  }
  func.func @transform_3(%arg0: i32) -> (i32, i32) {
    %c0_i32 = arith.constant 0 : i32
    %c0_i32_0 = arith.constant 0 : i32
    %c0_i32_1 = arith.constant 0 : i32
    return %c0_i32, %c0_i32_0 : i32, i32
  }
  func.func @transform_4(%arg0: i32) -> (i32, i32) {
    %c0_i32 = arith.constant 0 : i32
    %c0_i32_0 = arith.constant 0 : i32
    %c0_i32_1 = arith.constant 0 : i32
    return %c0_i32, %c0_i32_0 : i32, i32
  }
  func.func @transform_5(%arg0: i32) -> (i32, i32) {
    %c0_i32 = arith.constant 0 : i32
    %c0_i32_0 = arith.constant 0 : i32
    return %arg0, %c0_i32 : i32, i32
  }
}

module attributes {stable_mosaic.version = 11 : i64} {
  func.func @_bilstm_kernel(%arg0: i32, %arg1: memref<3x16x64xf32, #tpu.memory_space<vmem>>, %arg2: memref<16x64xbf16, #tpu.memory_space<vmem>>, %arg3: memref<3x16x8xf32, #tpu.memory_space<vmem>>, %arg4: memref<3x16x8xf32, #tpu.memory_space<vmem>>, %arg5: memref<16x16xf32, #tpu.memory_space<vmem>>, %arg6: memref<16x8xf32, #tpu.memory_space<vmem>>, %arg7: memref<16x8xf32, #tpu.memory_space<vmem>>) attributes {dimension_semantics = [#tpu.dimension_semantics<parallel>], iteration_bounds = array<i64: 1>, scalar_prefetch = 0 : i64, scratch_operands = 3 : i64, tpu.core_type = #tpu.core_type<tc>, window_params = [{transform_indices = @transform_0, window_bounds = array<i64: 3, 16, 64>}, {pipeline_mode = #tpu.pipeline_mode<synchronous>, transform_indices = @transform_1, window_bounds = array<i64: 16, 64>}, {transform_indices = @transform_2, window_bounds = array<i64: 3, 16, 8>}, {transform_indices = @transform_3, window_bounds = array<i64: 3, 16, 8>}]} {
    %cst = arith.constant 0.000000e+00 : f32
    %0 = vector.broadcast %cst : f32 to vector<16x16xf32>
    %c0 = arith.constant 0 : index
    %c0_0 = arith.constant 0 : index
    %1 = vector.load %arg5[%c0, %c0_0] : memref<16x16xf32, #tpu.memory_space<vmem>>, vector<16x16xf32>
    tpu.vector_store %arg5[%c0, %c0_0], %0 {strides = array<i32>} : memref<16x16xf32, #tpu.memory_space<vmem>>, vector<16x16xf32>,
    %cst_1 = arith.constant 0.000000e+00 : f32
    %2 = vector.broadcast %cst_1 : f32 to vector<16x8xf32>
    %c0_2 = arith.constant 0 : index
    %c0_3 = arith.constant 0 : index
    %3 = vector.load %arg6[%c0_2, %c0_3] : memref<16x8xf32, #tpu.memory_space<vmem>>, vector<16x8xf32>
    tpu.vector_store %arg6[%c0_2, %c0_3], %2 {strides = array<i32>} : memref<16x8xf32, #tpu.memory_space<vmem>>, vector<16x8xf32>,
    %cst_4 = arith.constant 0.000000e+00 : f32
    %4 = vector.broadcast %cst_4 : f32 to vector<16x8xf32>
    %c0_5 = arith.constant 0 : index
    %c0_6 = arith.constant 0 : index
    %5 = vector.load %arg7[%c0_5, %c0_6] : memref<16x8xf32, #tpu.memory_space<vmem>>, vector<16x8xf32>
    tpu.vector_store %arg7[%c0_5, %c0_6], %4 {strides = array<i32>} : memref<16x8xf32, #tpu.memory_space<vmem>>, vector<16x8xf32>,
    %c0_i32 = arith.constant 0 : i32
    %c3_i32 = arith.constant 3 : i32
    %6 = arith.addi %c0_i32, %c3_i32 : i32
    %c1_i32 = arith.constant 1 : i32
    scf.for %arg8 = %c0_i32 to %6 step %c1_i32  : i32 {
      %c0_8 = arith.constant 0 : index
      %c0_9 = arith.constant 0 : index
      %7 = vector.load %arg5[%c0_8, %c0_9] : memref<16x16xf32, #tpu.memory_space<vmem>>, vector<16x16xf32>
      %8 = arith.truncf %7 : vector<16x16xf32> to vector<16x16xbf16>
      %c0_10 = arith.constant 0 : index
      %c0_11 = arith.constant 0 : index
      %9 = vector.load %arg2[%c0_10, %c0_11] : memref<16x64xbf16, #tpu.memory_space<vmem>>, vector<16x64xbf16>
      %cst_12 = arith.constant dense<0.000000e+00> : vector<16x64xf32>
      %10 = tpu.matmul %8, %9, %cst_12 {dimension_numbers = #tpu.dot_dimension_numbers<[1], [0], [0], [1], [0, 0, 1, 1], [], []>} : vector<16x16xbf16>, vector<16x64xbf16>, vector<16x64xf32> -> vector<16x64xf32>
      %11 = arith.index_cast %arg8 : i32 to index
      %c0_13 = arith.constant 0 : index
      %c0_14 = arith.constant 0 : index
      %12 = vector.load %arg1[%11, %c0_13, %c0_14] : memref<3x16x64xf32, #tpu.memory_space<vmem>>, vector<1x16x64xf32>
      %13 = vector.shape_cast %12 : vector<1x16x64xf32> to vector<16x64xf32>
      %c2_i32 = arith.constant 2 : i32
      %14 = arith.subi %c2_i32, %arg8 : i32
      %15 = arith.index_cast %14 : i32 to index
      %c0_15 = arith.constant 0 : index
      %c0_16 = arith.constant 0 : index
      %16 = vector.load %arg1[%15, %c0_15, %c0_16] : memref<3x16x64xf32, #tpu.memory_space<vmem>>, vector<1x16x64xf32>
      %17 = vector.shape_cast %16 : vector<1x16x64xf32> to vector<16x64xf32>
      %18 = vector.extract_strided_slice %10 {offsets = [0, 0], sizes = [16, 32], strides = [1, 1]} : vector<16x64xf32> to vector<16x32xf32>
      %19 = vector.extract_strided_slice %13 {offsets = [0, 0], sizes = [16, 32], strides = [1, 1]} : vector<16x64xf32> to vector<16x32xf32>
      %20 = arith.addf %18, %19 : vector<16x32xf32>
      %c0_17 = arith.constant 0 : index
      %c0_18 = arith.constant 0 : index
      %21 = vector.load %arg6[%c0_17, %c0_18] : memref<16x8xf32, #tpu.memory_space<vmem>>, vector<16x8xf32>
      %22 = vector.extract_strided_slice %20 {offsets = [0, 0], sizes = [16, 8], strides = [1, 1]} : vector<16x32xf32> to vector<16x8xf32>
      %23 = arith.negf %22 : vector<16x8xf32>
      %24 = math.exp %23 : vector<16x8xf32>
      %cst_19 = arith.constant 1.000000e+00 : f32
      %25 = vector.broadcast %cst_19 : f32 to vector<16x8xf32>
      %26 = arith.addf %25, %24 : vector<16x8xf32>
      %27 = arith.divf %25, %26 : vector<16x8xf32>
      %28 = vector.extract_strided_slice %20 {offsets = [0, 8], sizes = [16, 8], strides = [1, 1]} : vector<16x32xf32> to vector<16x8xf32>
      %29 = arith.negf %28 : vector<16x8xf32>
      %30 = math.exp %29 : vector<16x8xf32>
      %cst_20 = arith.constant 1.000000e+00 : f32
      %31 = vector.broadcast %cst_20 : f32 to vector<16x8xf32>
      %32 = arith.addf %31, %30 : vector<16x8xf32>
      %33 = arith.divf %31, %32 : vector<16x8xf32>
      %34 = vector.extract_strided_slice %20 {offsets = [0, 16], sizes = [16, 8], strides = [1, 1]} : vector<16x32xf32> to vector<16x8xf32>
      %35 = math.tanh %34 : vector<16x8xf32>
      %36 = vector.extract_strided_slice %20 {offsets = [0, 24], sizes = [16, 8], strides = [1, 1]} : vector<16x32xf32> to vector<16x8xf32>
      %37 = arith.negf %36 : vector<16x8xf32>
      %38 = math.exp %37 : vector<16x8xf32>
      %cst_21 = arith.constant 1.000000e+00 : f32
      %39 = vector.broadcast %cst_21 : f32 to vector<16x8xf32>
      %40 = arith.addf %39, %38 : vector<16x8xf32>
      %41 = arith.divf %39, %40 : vector<16x8xf32>
      %42 = arith.mulf %33, %21 : vector<16x8xf32>
      %43 = arith.mulf %27, %35 : vector<16x8xf32>
      %44 = arith.addf %42, %43 : vector<16x8xf32>
      %45 = math.tanh %44 : vector<16x8xf32>
      %46 = arith.mulf %41, %45 : vector<16x8xf32>
      %47 = vector.extract_strided_slice %10 {offsets = [0, 32], sizes = [16, 32], strides = [1, 1]} : vector<16x64xf32> to vector<16x32xf32>
      %48 = vector.extract_strided_slice %17 {offsets = [0, 32], sizes = [16, 32], strides = [1, 1]} : vector<16x64xf32> to vector<16x32xf32>
      %49 = arith.addf %47, %48 : vector<16x32xf32>
      %c0_22 = arith.constant 0 : index
      %c0_23 = arith.constant 0 : index
      %50 = vector.load %arg7[%c0_22, %c0_23] : memref<16x8xf32, #tpu.memory_space<vmem>>, vector<16x8xf32>
      %51 = vector.extract_strided_slice %49 {offsets = [0, 0], sizes = [16, 8], strides = [1, 1]} : vector<16x32xf32> to vector<16x8xf32>
      %52 = arith.negf %51 : vector<16x8xf32>
      %53 = math.exp %52 : vector<16x8xf32>
      %cst_24 = arith.constant 1.000000e+00 : f32
      %54 = vector.broadcast %cst_24 : f32 to vector<16x8xf32>
      %55 = arith.addf %54, %53 : vector<16x8xf32>
      %56 = arith.divf %54, %55 : vector<16x8xf32>
      %57 = vector.extract_strided_slice %49 {offsets = [0, 8], sizes = [16, 8], strides = [1, 1]} : vector<16x32xf32> to vector<16x8xf32>
      %58 = arith.negf %57 : vector<16x8xf32>
      %59 = math.exp %58 : vector<16x8xf32>
      %cst_25 = arith.constant 1.000000e+00 : f32
      %60 = vector.broadcast %cst_25 : f32 to vector<16x8xf32>
      %61 = arith.addf %60, %59 : vector<16x8xf32>
      %62 = arith.divf %60, %61 : vector<16x8xf32>
      %63 = vector.extract_strided_slice %49 {offsets = [0, 16], sizes = [16, 8], strides = [1, 1]} : vector<16x32xf32> to vector<16x8xf32>
      %64 = math.tanh %63 : vector<16x8xf32>
      %65 = vector.extract_strided_slice %49 {offsets = [0, 24], sizes = [16, 8], strides = [1, 1]} : vector<16x32xf32> to vector<16x8xf32>
      %66 = arith.negf %65 : vector<16x8xf32>
      %67 = math.exp %66 : vector<16x8xf32>
      %cst_26 = arith.constant 1.000000e+00 : f32
      %68 = vector.broadcast %cst_26 : f32 to vector<16x8xf32>
      %69 = arith.addf %68, %67 : vector<16x8xf32>
      %70 = arith.divf %68, %69 : vector<16x8xf32>
      %71 = arith.mulf %62, %50 : vector<16x8xf32>
      %72 = arith.mulf %56, %64 : vector<16x8xf32>
      %73 = arith.addf %71, %72 : vector<16x8xf32>
      %74 = math.tanh %73 : vector<16x8xf32>
      %75 = arith.mulf %70, %74 : vector<16x8xf32>
      %c0_27 = arith.constant 0 : index
      %c0_28 = arith.constant 0 : index
      %76 = vector.load %arg6[%c0_27, %c0_28] : memref<16x8xf32, #tpu.memory_space<vmem>>, vector<16x8xf32>
      tpu.vector_store %arg6[%c0_27, %c0_28], %44 {strides = array<i32>} : memref<16x8xf32, #tpu.memory_space<vmem>>, vector<16x8xf32>,
      %c0_29 = arith.constant 0 : index
      %c0_30 = arith.constant 0 : index
      %77 = vector.load %arg7[%c0_29, %c0_30] : memref<16x8xf32, #tpu.memory_space<vmem>>, vector<16x8xf32>
      tpu.vector_store %arg7[%c0_29, %c0_30], %73 {strides = array<i32>} : memref<16x8xf32, #tpu.memory_space<vmem>>, vector<16x8xf32>,
      %78 = tpu.concatenate %46, %75 in 1 : vector<16x8xf32>, vector<16x8xf32> -> vector<16x16xf32>
      %c0_31 = arith.constant 0 : index
      %c0_32 = arith.constant 0 : index
      %79 = vector.load %arg5[%c0_31, %c0_32] : memref<16x16xf32, #tpu.memory_space<vmem>>, vector<16x16xf32>
      tpu.vector_store %arg5[%c0_31, %c0_32], %78 {strides = array<i32>} : memref<16x16xf32, #tpu.memory_space<vmem>>, vector<16x16xf32>,
      %80 = arith.index_cast %arg8 : i32 to index
      %c0_33 = arith.constant 0 : index
      %c0_34 = arith.constant 0 : index
      %81 = vector.load %arg3[%80, %c0_33, %c0_34] : memref<3x16x8xf32, #tpu.memory_space<vmem>>, vector<1x16x8xf32>
      %82 = vector.shape_cast %81 : vector<1x16x8xf32> to vector<16x8xf32>
      %83 = vector.shape_cast %46 : vector<16x8xf32> to vector<1x16x8xf32>
      tpu.vector_store %arg3[%80, %c0_33, %c0_34], %83 {strides = array<i32>} : memref<3x16x8xf32, #tpu.memory_space<vmem>>, vector<1x16x8xf32>,
      %c2_i32_35 = arith.constant 2 : i32
      %84 = arith.subi %c2_i32_35, %arg8 : i32
      %85 = arith.index_cast %84 : i32 to index
      %c0_36 = arith.constant 0 : index
      %c0_37 = arith.constant 0 : index
      %86 = vector.load %arg4[%85, %c0_36, %c0_37] : memref<3x16x8xf32, #tpu.memory_space<vmem>>, vector<1x16x8xf32>
      %87 = vector.shape_cast %86 : vector<1x16x8xf32> to vector<16x8xf32>
      %88 = vector.shape_cast %75 : vector<16x8xf32> to vector<1x16x8xf32>
      tpu.vector_store %arg4[%85, %c0_36, %c0_37], %88 {strides = array<i32>} : memref<3x16x8xf32, #tpu.memory_space<vmem>>, vector<1x16x8xf32>,
    }
    %c3_i32_7 = arith.constant 3 : i32
    return
  }
  func.func @transform_0(%arg0: i32) -> (i32, i32, i32) {
    %c0_i32 = arith.constant 0 : i32
    %c0_i32_0 = arith.constant 0 : i32
    %c0_i32_1 = arith.constant 0 : i32
    return %c0_i32, %arg0, %c0_i32_0 : i32, i32, i32
  }
  func.func @transform_1(%arg0: i32) -> (i32, i32) {
    %c0_i32 = arith.constant 0 : i32
    %c0_i32_0 = arith.constant 0 : i32
    %c0_i32_1 = arith.constant 0 : i32
    return %c0_i32, %c0_i32_0 : i32, i32
  }
  func.func @transform_2(%arg0: i32) -> (i32, i32, i32) {
    %c0_i32 = arith.constant 0 : i32
    %c0_i32_0 = arith.constant 0 : i32
    %c0_i32_1 = arith.constant 0 : i32
    return %c0_i32, %arg0, %c0_i32_0 : i32, i32, i32
  }
  func.func @transform_3(%arg0: i32) -> (i32, i32, i32) {
    %c0_i32 = arith.constant 0 : i32
    %c0_i32_0 = arith.constant 0 : i32
    %c0_i32_1 = arith.constant 0 : i32
    return %c0_i32, %arg0, %c0_i32_0 : i32, i32, i32
  }
}

module attributes {stable_mosaic.version = 11 : i64} {
  func.func @_lin_res_kernel(%arg0: i32, %arg1: memref<48x8xf32, #tpu.memory_space<vmem>>, %arg2: memref<48x8xf32, #tpu.memory_space<vmem>>, %arg3: memref<48x32xf32, #tpu.memory_space<vmem>>, %arg4: memref<8x32xbf16, #tpu.memory_space<vmem>>, %arg5: memref<8x32xbf16, #tpu.memory_space<vmem>>, %arg6: memref<1x32xf32, #tpu.memory_space<vmem>>, %arg7: memref<48x32xf32, #tpu.memory_space<vmem>>) attributes {dimension_semantics = [#tpu.dimension_semantics<parallel>], iteration_bounds = array<i64: 1>, scalar_prefetch = 0 : i64, scratch_operands = 0 : i64, tpu.core_type = #tpu.core_type<tc>, window_params = [{transform_indices = @transform_0, window_bounds = array<i64: 48, 8>}, {transform_indices = @transform_1, window_bounds = array<i64: 48, 8>}, {transform_indices = @transform_2, window_bounds = array<i64: 48, 32>}, {pipeline_mode = #tpu.pipeline_mode<synchronous>, transform_indices = @transform_3, window_bounds = array<i64: 8, 32>}, {pipeline_mode = #tpu.pipeline_mode<synchronous>, transform_indices = @transform_4, window_bounds = array<i64: 8, 32>}, {pipeline_mode = #tpu.pipeline_mode<synchronous>, transform_indices = @transform_5, window_bounds = array<i64: 1, 32>}, {transform_indices = @transform_6, window_bounds = array<i64: 48, 32>}]} {
    %c0 = arith.constant 0 : index
    %c0_0 = arith.constant 0 : index
    %0 = vector.load %arg1[%c0, %c0_0] : memref<48x8xf32, #tpu.memory_space<vmem>>, vector<48x8xf32>
    %1 = arith.truncf %0 : vector<48x8xf32> to vector<48x8xbf16>
    %c0_1 = arith.constant 0 : index
    %c0_2 = arith.constant 0 : index
    %2 = vector.load %arg4[%c0_1, %c0_2] : memref<8x32xbf16, #tpu.memory_space<vmem>>, vector<8x32xbf16>
    %cst = arith.constant dense<0.000000e+00> : vector<48x32xf32>
    %3 = tpu.matmul %1, %2, %cst {dimension_numbers = #tpu.dot_dimension_numbers<[1], [0], [0], [1], [0, 0, 1, 1], [], []>} : vector<48x8xbf16>, vector<8x32xbf16>, vector<48x32xf32> -> vector<48x32xf32>
    %c0_3 = arith.constant 0 : index
    %c0_4 = arith.constant 0 : index
    %4 = vector.load %arg2[%c0_3, %c0_4] : memref<48x8xf32, #tpu.memory_space<vmem>>, vector<48x8xf32>
    %5 = arith.truncf %4 : vector<48x8xf32> to vector<48x8xbf16>
    %c0_5 = arith.constant 0 : index
    %c0_6 = arith.constant 0 : index
    %6 = vector.load %arg5[%c0_5, %c0_6] : memref<8x32xbf16, #tpu.memory_space<vmem>>, vector<8x32xbf16>
    %cst_7 = arith.constant dense<0.000000e+00> : vector<48x32xf32>
    %7 = tpu.matmul %5, %6, %cst_7 {dimension_numbers = #tpu.dot_dimension_numbers<[1], [0], [0], [1], [0, 0, 1, 1], [], []>} : vector<48x8xbf16>, vector<8x32xbf16>, vector<48x32xf32> -> vector<48x32xf32>
    %8 = arith.addf %3, %7 : vector<48x32xf32>
    %c0_8 = arith.constant 0 : index
    %c0_9 = arith.constant 0 : index
    %9 = vector.load %arg6[%c0_8, %c0_9] : memref<1x32xf32, #tpu.memory_space<vmem>>, vector<1x32xf32>
    %10 = vector.broadcast %9 : vector<1x32xf32> to vector<48x32xf32>
    %11 = arith.addf %8, %10 : vector<48x32xf32>
    %c0_10 = arith.constant 0 : index
    %c0_11 = arith.constant 0 : index
    %12 = vector.load %arg3[%c0_10, %c0_11] : memref<48x32xf32, #tpu.memory_space<vmem>>, vector<48x32xf32>
    %13 = arith.addf %11, %12 : vector<48x32xf32>
    %c0_12 = arith.constant 0 : index
    %c0_13 = arith.constant 0 : index
    %14 = vector.load %arg7[%c0_12, %c0_13] : memref<48x32xf32, #tpu.memory_space<vmem>>, vector<48x32xf32>
    tpu.vector_store %arg7[%c0_12, %c0_13], %13 {strides = array<i32>} : memref<48x32xf32, #tpu.memory_space<vmem>>, vector<48x32xf32>,
    return
  }
  func.func @transform_0(%arg0: i32) -> (i32, i32) {
    %c0_i32 = arith.constant 0 : i32
    %c0_i32_0 = arith.constant 0 : i32
    return %arg0, %c0_i32 : i32, i32
  }
  func.func @transform_1(%arg0: i32) -> (i32, i32) {
    %c0_i32 = arith.constant 0 : i32
    %c0_i32_0 = arith.constant 0 : i32
    return %arg0, %c0_i32 : i32, i32
  }
  func.func @transform_2(%arg0: i32) -> (i32, i32) {
    %c0_i32 = arith.constant 0 : i32
    %c0_i32_0 = arith.constant 0 : i32
    return %arg0, %c0_i32 : i32, i32
  }
  func.func @transform_3(%arg0: i32) -> (i32, i32) {
    %c0_i32 = arith.constant 0 : i32
    %c0_i32_0 = arith.constant 0 : i32
    %c0_i32_1 = arith.constant 0 : i32
    return %c0_i32, %c0_i32_0 : i32, i32
  }
  func.func @transform_4(%arg0: i32) -> (i32, i32) {
    %c0_i32 = arith.constant 0 : i32
    %c0_i32_0 = arith.constant 0 : i32
    %c0_i32_1 = arith.constant 0 : i32
    return %c0_i32, %c0_i32_0 : i32, i32
  }
  func.func @transform_5(%arg0: i32) -> (i32, i32) {
    %c0_i32 = arith.constant 0 : i32
    %c0_i32_0 = arith.constant 0 : i32
    %c0_i32_1 = arith.constant 0 : i32
    return %c0_i32, %c0_i32_0 : i32, i32
  }
  func.func @transform_6(%arg0: i32) -> (i32, i32) {
    %c0_i32 = arith.constant 0 : i32
    %c0_i32_0 = arith.constant 0 : i32
    return %arg0, %c0_i32 : i32, i32
  }
}

module attributes {stable_mosaic.version = 11 : i64} {
  func.func @_bilstm_kernel(%arg0: i32, %arg1: memref<2x24x64xf32, #tpu.memory_space<vmem>>, %arg2: memref<16x64xbf16, #tpu.memory_space<vmem>>, %arg3: memref<2x24x8xf32, #tpu.memory_space<vmem>>, %arg4: memref<2x24x8xf32, #tpu.memory_space<vmem>>, %arg5: memref<24x16xf32, #tpu.memory_space<vmem>>, %arg6: memref<24x8xf32, #tpu.memory_space<vmem>>, %arg7: memref<24x8xf32, #tpu.memory_space<vmem>>) attributes {dimension_semantics = [#tpu.dimension_semantics<parallel>], iteration_bounds = array<i64: 1>, scalar_prefetch = 0 : i64, scratch_operands = 3 : i64, tpu.core_type = #tpu.core_type<tc>, window_params = [{transform_indices = @transform_0, window_bounds = array<i64: 2, 24, 64>}, {pipeline_mode = #tpu.pipeline_mode<synchronous>, transform_indices = @transform_1, window_bounds = array<i64: 16, 64>}, {transform_indices = @transform_2, window_bounds = array<i64: 2, 24, 8>}, {transform_indices = @transform_3, window_bounds = array<i64: 2, 24, 8>}]} {
    %cst = arith.constant 0.000000e+00 : f32
    %0 = vector.broadcast %cst : f32 to vector<24x16xf32>
    %c0 = arith.constant 0 : index
    %c0_0 = arith.constant 0 : index
    %1 = vector.load %arg5[%c0, %c0_0] : memref<24x16xf32, #tpu.memory_space<vmem>>, vector<24x16xf32>
    tpu.vector_store %arg5[%c0, %c0_0], %0 {strides = array<i32>} : memref<24x16xf32, #tpu.memory_space<vmem>>, vector<24x16xf32>,
    %cst_1 = arith.constant 0.000000e+00 : f32
    %2 = vector.broadcast %cst_1 : f32 to vector<24x8xf32>
    %c0_2 = arith.constant 0 : index
    %c0_3 = arith.constant 0 : index
    %3 = vector.load %arg6[%c0_2, %c0_3] : memref<24x8xf32, #tpu.memory_space<vmem>>, vector<24x8xf32>
    tpu.vector_store %arg6[%c0_2, %c0_3], %2 {strides = array<i32>} : memref<24x8xf32, #tpu.memory_space<vmem>>, vector<24x8xf32>,
    %cst_4 = arith.constant 0.000000e+00 : f32
    %4 = vector.broadcast %cst_4 : f32 to vector<24x8xf32>
    %c0_5 = arith.constant 0 : index
    %c0_6 = arith.constant 0 : index
    %5 = vector.load %arg7[%c0_5, %c0_6] : memref<24x8xf32, #tpu.memory_space<vmem>>, vector<24x8xf32>
    tpu.vector_store %arg7[%c0_5, %c0_6], %4 {strides = array<i32>} : memref<24x8xf32, #tpu.memory_space<vmem>>, vector<24x8xf32>,
    %c0_i32 = arith.constant 0 : i32
    %c2_i32 = arith.constant 2 : i32
    %6 = arith.addi %c0_i32, %c2_i32 : i32
    %c1_i32 = arith.constant 1 : i32
    scf.for %arg8 = %c0_i32 to %6 step %c1_i32  : i32 {
      %c0_8 = arith.constant 0 : index
      %c0_9 = arith.constant 0 : index
      %7 = vector.load %arg5[%c0_8, %c0_9] : memref<24x16xf32, #tpu.memory_space<vmem>>, vector<24x16xf32>
      %8 = arith.truncf %7 : vector<24x16xf32> to vector<24x16xbf16>
      %c0_10 = arith.constant 0 : index
      %c0_11 = arith.constant 0 : index
      %9 = vector.load %arg2[%c0_10, %c0_11] : memref<16x64xbf16, #tpu.memory_space<vmem>>, vector<16x64xbf16>
      %cst_12 = arith.constant dense<0.000000e+00> : vector<24x64xf32>
      %10 = tpu.matmul %8, %9, %cst_12 {dimension_numbers = #tpu.dot_dimension_numbers<[1], [0], [0], [1], [0, 0, 1, 1], [], []>} : vector<24x16xbf16>, vector<16x64xbf16>, vector<24x64xf32> -> vector<24x64xf32>
      %11 = arith.index_cast %arg8 : i32 to index
      %c0_13 = arith.constant 0 : index
      %c0_14 = arith.constant 0 : index
      %12 = vector.load %arg1[%11, %c0_13, %c0_14] : memref<2x24x64xf32, #tpu.memory_space<vmem>>, vector<1x24x64xf32>
      %13 = vector.shape_cast %12 : vector<1x24x64xf32> to vector<24x64xf32>
      %c1_i32_15 = arith.constant 1 : i32
      %14 = arith.subi %c1_i32_15, %arg8 : i32
      %15 = arith.index_cast %14 : i32 to index
      %c0_16 = arith.constant 0 : index
      %c0_17 = arith.constant 0 : index
      %16 = vector.load %arg1[%15, %c0_16, %c0_17] : memref<2x24x64xf32, #tpu.memory_space<vmem>>, vector<1x24x64xf32>
      %17 = vector.shape_cast %16 : vector<1x24x64xf32> to vector<24x64xf32>
      %18 = vector.extract_strided_slice %10 {offsets = [0, 0], sizes = [24, 32], strides = [1, 1]} : vector<24x64xf32> to vector<24x32xf32>
      %19 = vector.extract_strided_slice %13 {offsets = [0, 0], sizes = [24, 32], strides = [1, 1]} : vector<24x64xf32> to vector<24x32xf32>
      %20 = arith.addf %18, %19 : vector<24x32xf32>
      %c0_18 = arith.constant 0 : index
      %c0_19 = arith.constant 0 : index
      %21 = vector.load %arg6[%c0_18, %c0_19] : memref<24x8xf32, #tpu.memory_space<vmem>>, vector<24x8xf32>
      %22 = vector.extract_strided_slice %20 {offsets = [0, 0], sizes = [24, 8], strides = [1, 1]} : vector<24x32xf32> to vector<24x8xf32>
      %23 = arith.negf %22 : vector<24x8xf32>
      %24 = math.exp %23 : vector<24x8xf32>
      %cst_20 = arith.constant 1.000000e+00 : f32
      %25 = vector.broadcast %cst_20 : f32 to vector<24x8xf32>
      %26 = arith.addf %25, %24 : vector<24x8xf32>
      %27 = arith.divf %25, %26 : vector<24x8xf32>
      %28 = vector.extract_strided_slice %20 {offsets = [0, 8], sizes = [24, 8], strides = [1, 1]} : vector<24x32xf32> to vector<24x8xf32>
      %29 = arith.negf %28 : vector<24x8xf32>
      %30 = math.exp %29 : vector<24x8xf32>
      %cst_21 = arith.constant 1.000000e+00 : f32
      %31 = vector.broadcast %cst_21 : f32 to vector<24x8xf32>
      %32 = arith.addf %31, %30 : vector<24x8xf32>
      %33 = arith.divf %31, %32 : vector<24x8xf32>
      %34 = vector.extract_strided_slice %20 {offsets = [0, 16], sizes = [24, 8], strides = [1, 1]} : vector<24x32xf32> to vector<24x8xf32>
      %35 = math.tanh %34 : vector<24x8xf32>
      %36 = vector.extract_strided_slice %20 {offsets = [0, 24], sizes = [24, 8], strides = [1, 1]} : vector<24x32xf32> to vector<24x8xf32>
      %37 = arith.negf %36 : vector<24x8xf32>
      %38 = math.exp %37 : vector<24x8xf32>
      %cst_22 = arith.constant 1.000000e+00 : f32
      %39 = vector.broadcast %cst_22 : f32 to vector<24x8xf32>
      %40 = arith.addf %39, %38 : vector<24x8xf32>
      %41 = arith.divf %39, %40 : vector<24x8xf32>
      %42 = arith.mulf %33, %21 : vector<24x8xf32>
      %43 = arith.mulf %27, %35 : vector<24x8xf32>
      %44 = arith.addf %42, %43 : vector<24x8xf32>
      %45 = math.tanh %44 : vector<24x8xf32>
      %46 = arith.mulf %41, %45 : vector<24x8xf32>
      %47 = vector.extract_strided_slice %10 {offsets = [0, 32], sizes = [24, 32], strides = [1, 1]} : vector<24x64xf32> to vector<24x32xf32>
      %48 = vector.extract_strided_slice %17 {offsets = [0, 32], sizes = [24, 32], strides = [1, 1]} : vector<24x64xf32> to vector<24x32xf32>
      %49 = arith.addf %47, %48 : vector<24x32xf32>
      %c0_23 = arith.constant 0 : index
      %c0_24 = arith.constant 0 : index
      %50 = vector.load %arg7[%c0_23, %c0_24] : memref<24x8xf32, #tpu.memory_space<vmem>>, vector<24x8xf32>
      %51 = vector.extract_strided_slice %49 {offsets = [0, 0], sizes = [24, 8], strides = [1, 1]} : vector<24x32xf32> to vector<24x8xf32>
      %52 = arith.negf %51 : vector<24x8xf32>
      %53 = math.exp %52 : vector<24x8xf32>
      %cst_25 = arith.constant 1.000000e+00 : f32
      %54 = vector.broadcast %cst_25 : f32 to vector<24x8xf32>
      %55 = arith.addf %54, %53 : vector<24x8xf32>
      %56 = arith.divf %54, %55 : vector<24x8xf32>
      %57 = vector.extract_strided_slice %49 {offsets = [0, 8], sizes = [24, 8], strides = [1, 1]} : vector<24x32xf32> to vector<24x8xf32>
      %58 = arith.negf %57 : vector<24x8xf32>
      %59 = math.exp %58 : vector<24x8xf32>
      %cst_26 = arith.constant 1.000000e+00 : f32
      %60 = vector.broadcast %cst_26 : f32 to vector<24x8xf32>
      %61 = arith.addf %60, %59 : vector<24x8xf32>
      %62 = arith.divf %60, %61 : vector<24x8xf32>
      %63 = vector.extract_strided_slice %49 {offsets = [0, 16], sizes = [24, 8], strides = [1, 1]} : vector<24x32xf32> to vector<24x8xf32>
      %64 = math.tanh %63 : vector<24x8xf32>
      %65 = vector.extract_strided_slice %49 {offsets = [0, 24], sizes = [24, 8], strides = [1, 1]} : vector<24x32xf32> to vector<24x8xf32>
      %66 = arith.negf %65 : vector<24x8xf32>
      %67 = math.exp %66 : vector<24x8xf32>
      %cst_27 = arith.constant 1.000000e+00 : f32
      %68 = vector.broadcast %cst_27 : f32 to vector<24x8xf32>
      %69 = arith.addf %68, %67 : vector<24x8xf32>
      %70 = arith.divf %68, %69 : vector<24x8xf32>
      %71 = arith.mulf %62, %50 : vector<24x8xf32>
      %72 = arith.mulf %56, %64 : vector<24x8xf32>
      %73 = arith.addf %71, %72 : vector<24x8xf32>
      %74 = math.tanh %73 : vector<24x8xf32>
      %75 = arith.mulf %70, %74 : vector<24x8xf32>
      %c0_28 = arith.constant 0 : index
      %c0_29 = arith.constant 0 : index
      %76 = vector.load %arg6[%c0_28, %c0_29] : memref<24x8xf32, #tpu.memory_space<vmem>>, vector<24x8xf32>
      tpu.vector_store %arg6[%c0_28, %c0_29], %44 {strides = array<i32>} : memref<24x8xf32, #tpu.memory_space<vmem>>, vector<24x8xf32>,
      %c0_30 = arith.constant 0 : index
      %c0_31 = arith.constant 0 : index
      %77 = vector.load %arg7[%c0_30, %c0_31] : memref<24x8xf32, #tpu.memory_space<vmem>>, vector<24x8xf32>
      tpu.vector_store %arg7[%c0_30, %c0_31], %73 {strides = array<i32>} : memref<24x8xf32, #tpu.memory_space<vmem>>, vector<24x8xf32>,
      %78 = tpu.concatenate %46, %75 in 1 : vector<24x8xf32>, vector<24x8xf32> -> vector<24x16xf32>
      %c0_32 = arith.constant 0 : index
      %c0_33 = arith.constant 0 : index
      %79 = vector.load %arg5[%c0_32, %c0_33] : memref<24x16xf32, #tpu.memory_space<vmem>>, vector<24x16xf32>
      tpu.vector_store %arg5[%c0_32, %c0_33], %78 {strides = array<i32>} : memref<24x16xf32, #tpu.memory_space<vmem>>, vector<24x16xf32>,
      %80 = arith.index_cast %arg8 : i32 to index
      %c0_34 = arith.constant 0 : index
      %c0_35 = arith.constant 0 : index
      %81 = vector.load %arg3[%80, %c0_34, %c0_35] : memref<2x24x8xf32, #tpu.memory_space<vmem>>, vector<1x24x8xf32>
      %82 = vector.shape_cast %81 : vector<1x24x8xf32> to vector<24x8xf32>
      %83 = vector.shape_cast %46 : vector<24x8xf32> to vector<1x24x8xf32>
      tpu.vector_store %arg3[%80, %c0_34, %c0_35], %83 {strides = array<i32>} : memref<2x24x8xf32, #tpu.memory_space<vmem>>, vector<1x24x8xf32>,
      %c1_i32_36 = arith.constant 1 : i32
      %84 = arith.subi %c1_i32_36, %arg8 : i32
      %85 = arith.index_cast %84 : i32 to index
      %c0_37 = arith.constant 0 : index
      %c0_38 = arith.constant 0 : index
      %86 = vector.load %arg4[%85, %c0_37, %c0_38] : memref<2x24x8xf32, #tpu.memory_space<vmem>>, vector<1x24x8xf32>
      %87 = vector.shape_cast %86 : vector<1x24x8xf32> to vector<24x8xf32>
      %88 = vector.shape_cast %75 : vector<24x8xf32> to vector<1x24x8xf32>
      tpu.vector_store %arg4[%85, %c0_37, %c0_38], %88 {strides = array<i32>} : memref<2x24x8xf32, #tpu.memory_space<vmem>>, vector<1x24x8xf32>,
    }
    %c2_i32_7 = arith.constant 2 : i32
    return
  }
  func.func @transform_0(%arg0: i32) -> (i32, i32, i32) {
    %c0_i32 = arith.constant 0 : i32
    %c0_i32_0 = arith.constant 0 : i32
    %c0_i32_1 = arith.constant 0 : i32
    return %c0_i32, %arg0, %c0_i32_0 : i32, i32, i32
  }
  func.func @transform_1(%arg0: i32) -> (i32, i32) {
    %c0_i32 = arith.constant 0 : i32
    %c0_i32_0 = arith.constant 0 : i32
    %c0_i32_1 = arith.constant 0 : i32
    return %c0_i32, %c0_i32_0 : i32, i32
  }
  func.func @transform_2(%arg0: i32) -> (i32, i32, i32) {
    %c0_i32 = arith.constant 0 : i32
    %c0_i32_0 = arith.constant 0 : i32
    %c0_i32_1 = arith.constant 0 : i32
    return %c0_i32, %arg0, %c0_i32_0 : i32, i32, i32
  }
  func.func @transform_3(%arg0: i32) -> (i32, i32, i32) {
    %c0_i32 = arith.constant 0 : i32
    %c0_i32_0 = arith.constant 0 : i32
    %c0_i32_1 = arith.constant 0 : i32
    return %c0_i32, %arg0, %c0_i32_0 : i32, i32, i32
  }
}

module attributes {stable_mosaic.version = 11 : i64} {
  func.func @_matmul_bias_kernel(%arg0: i32, %arg1: memref<144x8xf32, #tpu.memory_space<vmem>>, %arg2: memref<8x16xbf16, #tpu.memory_space<vmem>>, %arg3: memref<1x16xf32, #tpu.memory_space<vmem>>, %arg4: memref<144x16xf32, #tpu.memory_space<vmem>>) attributes {dimension_semantics = [#tpu.dimension_semantics<parallel>], iteration_bounds = array<i64: 1>, scalar_prefetch = 0 : i64, scratch_operands = 0 : i64, tpu.core_type = #tpu.core_type<tc>, window_params = [{transform_indices = @transform_0, window_bounds = array<i64: 144, 8>}, {pipeline_mode = #tpu.pipeline_mode<synchronous>, transform_indices = @transform_1, window_bounds = array<i64: 8, 16>}, {pipeline_mode = #tpu.pipeline_mode<synchronous>, transform_indices = @transform_2, window_bounds = array<i64: 1, 16>}, {transform_indices = @transform_3, window_bounds = array<i64: 144, 16>}]} {
    %c0 = arith.constant 0 : index
    %c0_0 = arith.constant 0 : index
    %0 = vector.load %arg1[%c0, %c0_0] : memref<144x8xf32, #tpu.memory_space<vmem>>, vector<144x8xf32>
    %1 = arith.truncf %0 : vector<144x8xf32> to vector<144x8xbf16>
    %c0_1 = arith.constant 0 : index
    %c0_2 = arith.constant 0 : index
    %2 = vector.load %arg2[%c0_1, %c0_2] : memref<8x16xbf16, #tpu.memory_space<vmem>>, vector<8x16xbf16>
    %cst = arith.constant dense<0.000000e+00> : vector<144x16xf32>
    %3 = tpu.matmul %1, %2, %cst {dimension_numbers = #tpu.dot_dimension_numbers<[1], [0], [0], [1], [0, 0, 1, 1], [], []>} : vector<144x8xbf16>, vector<8x16xbf16>, vector<144x16xf32> -> vector<144x16xf32>
    %c0_3 = arith.constant 0 : index
    %c0_4 = arith.constant 0 : index
    %4 = vector.load %arg3[%c0_3, %c0_4] : memref<1x16xf32, #tpu.memory_space<vmem>>, vector<1x16xf32>
    %5 = vector.broadcast %4 : vector<1x16xf32> to vector<144x16xf32>
    %6 = arith.addf %3, %5 : vector<144x16xf32>
    %c0_5 = arith.constant 0 : index
    %c0_6 = arith.constant 0 : index
    %7 = vector.load %arg4[%c0_5, %c0_6] : memref<144x16xf32, #tpu.memory_space<vmem>>, vector<144x16xf32>
    tpu.vector_store %arg4[%c0_5, %c0_6], %6 {strides = array<i32>} : memref<144x16xf32, #tpu.memory_space<vmem>>, vector<144x16xf32>,
    return
  }
  func.func @transform_0(%arg0: i32) -> (i32, i32) {
    %c0_i32 = arith.constant 0 : i32
    %c0_i32_0 = arith.constant 0 : i32
    return %arg0, %c0_i32 : i32, i32
  }
  func.func @transform_1(%arg0: i32) -> (i32, i32) {
    %c0_i32 = arith.constant 0 : i32
    %c0_i32_0 = arith.constant 0 : i32
    %c0_i32_1 = arith.constant 0 : i32
    return %c0_i32, %c0_i32_0 : i32, i32
  }
  func.func @transform_2(%arg0: i32) -> (i32, i32) {
    %c0_i32 = arith.constant 0 : i32
    %c0_i32_0 = arith.constant 0 : i32
    %c0_i32_1 = arith.constant 0 : i32
    return %c0_i32, %c0_i32_0 : i32, i32
  }
  func.func @transform_3(%arg0: i32) -> (i32, i32) {
    %c0_i32 = arith.constant 0 : i32
    %c0_i32_0 = arith.constant 0 : i32
    return %arg0, %c0_i32 : i32, i32
  }
}

module attributes {stable_mosaic.version = 11 : i64} {
  func.func @_matmul_bias_kernel(%arg0: i32, %arg1: memref<144x8xf32, #tpu.memory_space<vmem>>, %arg2: memref<8x8xbf16, #tpu.memory_space<vmem>>, %arg3: memref<1x8xf32, #tpu.memory_space<vmem>>, %arg4: memref<144x8xf32, #tpu.memory_space<vmem>>) attributes {dimension_semantics = [#tpu.dimension_semantics<parallel>], iteration_bounds = array<i64: 1>, scalar_prefetch = 0 : i64, scratch_operands = 0 : i64, tpu.core_type = #tpu.core_type<tc>, window_params = [{transform_indices = @transform_0, window_bounds = array<i64: 144, 8>}, {pipeline_mode = #tpu.pipeline_mode<synchronous>, transform_indices = @transform_1, window_bounds = array<i64: 8, 8>}, {pipeline_mode = #tpu.pipeline_mode<synchronous>, transform_indices = @transform_2, window_bounds = array<i64: 1, 8>}, {transform_indices = @transform_3, window_bounds = array<i64: 144, 8>}]} {
    %c0 = arith.constant 0 : index
    %c0_0 = arith.constant 0 : index
    %0 = vector.load %arg1[%c0, %c0_0] : memref<144x8xf32, #tpu.memory_space<vmem>>, vector<144x8xf32>
    %1 = arith.truncf %0 : vector<144x8xf32> to vector<144x8xbf16>
    %c0_1 = arith.constant 0 : index
    %c0_2 = arith.constant 0 : index
    %2 = vector.load %arg2[%c0_1, %c0_2] : memref<8x8xbf16, #tpu.memory_space<vmem>>, vector<8x8xbf16>
    %cst = arith.constant dense<0.000000e+00> : vector<144x8xf32>
    %3 = tpu.matmul %1, %2, %cst {dimension_numbers = #tpu.dot_dimension_numbers<[1], [0], [0], [1], [0, 0, 1, 1], [], []>} : vector<144x8xbf16>, vector<8x8xbf16>, vector<144x8xf32> -> vector<144x8xf32>
    %c0_3 = arith.constant 0 : index
    %c0_4 = arith.constant 0 : index
    %4 = vector.load %arg3[%c0_3, %c0_4] : memref<1x8xf32, #tpu.memory_space<vmem>>, vector<1x8xf32>
    %5 = vector.broadcast %4 : vector<1x8xf32> to vector<144x8xf32>
    %6 = arith.addf %3, %5 : vector<144x8xf32>
    %c0_5 = arith.constant 0 : index
    %c0_6 = arith.constant 0 : index
    %7 = vector.load %arg4[%c0_5, %c0_6] : memref<144x8xf32, #tpu.memory_space<vmem>>, vector<144x8xf32>
    tpu.vector_store %arg4[%c0_5, %c0_6], %6 {strides = array<i32>} : memref<144x8xf32, #tpu.memory_space<vmem>>, vector<144x8xf32>,
    return
  }
  func.func @transform_0(%arg0: i32) -> (i32, i32) {
    %c0_i32 = arith.constant 0 : i32
    %c0_i32_0 = arith.constant 0 : i32
    return %arg0, %c0_i32 : i32, i32
  }
  func.func @transform_1(%arg0: i32) -> (i32, i32) {
    %c0_i32 = arith.constant 0 : i32
    %c0_i32_0 = arith.constant 0 : i32
    %c0_i32_1 = arith.constant 0 : i32
    return %c0_i32, %c0_i32_0 : i32, i32
  }
  func.func @transform_2(%arg0: i32) -> (i32, i32) {
    %c0_i32 = arith.constant 0 : i32
    %c0_i32_0 = arith.constant 0 : i32
    %c0_i32_1 = arith.constant 0 : i32
    return %c0_i32, %c0_i32_0 : i32, i32
  }
  func.func @transform_3(%arg0: i32) -> (i32, i32) {
    %c0_i32 = arith.constant 0 : i32
    %c0_i32_0 = arith.constant 0 : i32
    return %arg0, %c0_i32 : i32, i32
  }
}

module attributes {stable_mosaic.version = 11 : i64} {
  func.func @_attention_kernel(%arg0: i32, %arg1: i32, %arg2: i32, %arg3: memref<1x8x18xf32, #tpu.memory_space<vmem>>, %arg4: memref<1x8x18xf32, #tpu.memory_space<vmem>>, %arg5: memref<1x8x36xf32, #tpu.memory_space<vmem>>, %arg6: memref<1x2x18xf32, #tpu.memory_space<vmem>>, %arg7: memref<1x2x18xf32, #tpu.memory_space<vmem>>, %arg8: memref<1x2x36xf32, #tpu.memory_space<vmem>>, %arg9: memref<1x1x3xf32, #tpu.memory_space<vmem>>, %arg10: memref<1x8x36xf32, #tpu.memory_space<vmem>>, %arg11: memref<8x18xf32, #tpu.memory_space<vmem>>, %arg12: memref<8x1xf32, #tpu.memory_space<vmem>>, %arg13: memref<8x1xf32, #tpu.memory_space<vmem>>, %arg14: memref<8x36xf32, #tpu.memory_space<vmem>>) attributes {dimension_semantics = [#tpu.dimension_semantics<parallel>, #tpu.dimension_semantics<parallel>, #tpu.dimension_semantics<arbitrary>], iteration_bounds = array<i64: 4, 1, 1>, scalar_prefetch = 0 : i64, scratch_operands = 4 : i64, tpu.core_type = #tpu.core_type<tc>, window_params = [{transform_indices = @transform_0, window_bounds = array<i64: 1, 8, 18>}, {transform_indices = @transform_1, window_bounds = array<i64: 1, 8, 18>}, {transform_indices = @transform_2, window_bounds = array<i64: 1, 8, 36>}, {transform_indices = @transform_3, window_bounds = array<i64: 1, 2, 18>}, {transform_indices = @transform_4, window_bounds = array<i64: 1, 2, 18>}, {transform_indices = @transform_5, window_bounds = array<i64: 1, 2, 36>}, {transform_indices = @transform_6, window_bounds = array<i64: 1, 1, 3>}, {transform_indices = @transform_7, window_bounds = array<i64: 1, 8, 36>}]} {
    %c0 = arith.constant 0 : index
    %c0_0 = arith.constant 0 : index
    %c0_1 = arith.constant 0 : index
    %0 = vector.load %arg9[%c0, %c0_0, %c0_1] : memref<1x1x3xf32, #tpu.memory_space<vmem>>, vector<1x1x3xf32>
    %c0_i32 = arith.constant 0 : i32
    %1 = arith.cmpi eq, %arg2, %c0_i32 : i32
    %2 = arith.extui %1 : i1 to i32
    %c0_i32_2 = arith.constant 0 : i32
    %3 = arith.cmpi ne, %2, %c0_i32_2 : i32
    scf.if %3 {
      %c0_50 = arith.constant 0 : index
      %c0_51 = arith.constant 0 : index
      %c0_52 = arith.constant 0 : index
      %116 = vector.load %arg6[%c0_50, %c0_51, %c0_52] : memref<1x2x18xf32, #tpu.memory_space<vmem>>, vector<1x2x18xf32>
      %c0_53 = arith.constant 0 : index
      %c0_54 = arith.constant 0 : index
      %c0_55 = arith.constant 0 : index
      %117 = vector.load %arg3[%c0_53, %c0_54, %c0_55] : memref<1x8x18xf32, #tpu.memory_space<vmem>>, vector<1x8x18xf32>
      %118 = vector.shape_cast %117 : vector<1x8x18xf32> to vector<8x18xf32>
      %119 = vector.extract_strided_slice %0 {offsets = [0, 0, 0], sizes = [1, 1, 1], strides = [1, 1, 1]} : vector<1x1x3xf32> to vector<1x1x1xf32>
      %120 = vector.shape_cast %119 : vector<1x1x1xf32> to vector<1x1xf32>
      %121 = vector.extract_strided_slice %116 {offsets = [0, 0, 0], sizes = [1, 1, 18], strides = [1, 1, 1]} : vector<1x2x18xf32> to vector<1x1x18xf32>
      %122 = vector.shape_cast %121 : vector<1x1x18xf32> to vector<1x18xf32>
      %123 = vector.extract_strided_slice %116 {offsets = [0, 1, 0], sizes = [1, 1, 18], strides = [1, 1, 1]} : vector<1x2x18xf32> to vector<1x1x18xf32>
      %124 = vector.shape_cast %123 : vector<1x1x18xf32> to vector<1x18xf32>
      %cst_56 = arith.constant 0.000000e+00 : f32
      %125 = vector.broadcast %cst_56 : f32 to vector<8x18xf32>
      %126 = arith.cmpf oge, %118, %125 : vector<8x18xf32>
      %127 = vector.broadcast %120 : vector<1x1xf32> to vector<8x18xf32>
      %128 = arith.mulf %127, %118 : vector<8x18xf32>
      %129 = arith.select %126, %118, %128 : vector<8x18xi1>, vector<8x18xf32>
      %cst_57 = arith.constant dense<0.000000e+00> : vector<8xf32>
      %130 = vector.multi_reduction <add>, %129, %cst_57 [1] : vector<8x18xf32> to vector<8xf32>
      %131 = vector.shape_cast %130 : vector<8xf32> to vector<8x1xf32>
      %cst_58 = arith.constant 1.800000e+01 : f32
      %132 = vector.broadcast %cst_58 : f32 to vector<8x1xf32>
      %133 = arith.divf %131, %132 : vector<8x1xf32>
      %134 = vector.broadcast %133 : vector<8x1xf32> to vector<8x18xf32>
      %135 = arith.subf %129, %134 : vector<8x18xf32>
      %136 = arith.mulf %135, %135 : vector<8x18xf32>
      %cst_59 = arith.constant dense<0.000000e+00> : vector<8xf32>
      %137 = vector.multi_reduction <add>, %136, %cst_59 [1] : vector<8x18xf32> to vector<8xf32>
      %138 = vector.shape_cast %137 : vector<8xf32> to vector<8x1xf32>
      %cst_60 = arith.constant 1.800000e+01 : f32
      %139 = vector.broadcast %cst_60 : f32 to vector<8x1xf32>
      %140 = arith.divf %138, %139 : vector<8x1xf32>
      %141 = vector.broadcast %133 : vector<8x1xf32> to vector<8x18xf32>
      %142 = arith.subf %129, %141 : vector<8x18xf32>
      %cst_61 = arith.constant 9.99999974E-6 : f32
      %143 = vector.broadcast %cst_61 : f32 to vector<8x1xf32>
      %144 = arith.addf %140, %143 : vector<8x1xf32>
      %145 = math.rsqrt %144 : vector<8x1xf32>
      %146 = vector.broadcast %145 : vector<8x1xf32> to vector<8x18xf32>
      %147 = arith.mulf %142, %146 : vector<8x18xf32>
      %148 = vector.broadcast %122 : vector<1x18xf32> to vector<8x18xf32>
      %149 = arith.mulf %147, %148 : vector<8x18xf32>
      %150 = vector.broadcast %124 : vector<1x18xf32> to vector<8x18xf32>
      %151 = arith.addf %149, %150 : vector<8x18xf32>
      %c0_62 = arith.constant 0 : index
      %c0_63 = arith.constant 0 : index
      %152 = vector.load %arg11[%c0_62, %c0_63] : memref<8x18xf32, #tpu.memory_space<vmem>>, vector<8x18xf32>
      tpu.vector_store %arg11[%c0_62, %c0_63], %151 {strides = array<i32>} : memref<8x18xf32, #tpu.memory_space<vmem>>, vector<8x18xf32>,
      %cst_64 = arith.constant 0xFF800000 : f32
      %153 = vector.broadcast %cst_64 : f32 to vector<8x1xf32>
      %c0_65 = arith.constant 0 : index
      %c0_66 = arith.constant 0 : index
      %154 = vector.load %arg12[%c0_65, %c0_66] : memref<8x1xf32, #tpu.memory_space<vmem>>, vector<8x1xf32>
      tpu.vector_store %arg12[%c0_65, %c0_66], %153 {strides = array<i32>} : memref<8x1xf32, #tpu.memory_space<vmem>>, vector<8x1xf32>,
      %cst_67 = arith.constant 0.000000e+00 : f32
      %155 = vector.broadcast %cst_67 : f32 to vector<8x1xf32>
      %c0_68 = arith.constant 0 : index
      %c0_69 = arith.constant 0 : index
      %156 = vector.load %arg13[%c0_68, %c0_69] : memref<8x1xf32, #tpu.memory_space<vmem>>, vector<8x1xf32>
      tpu.vector_store %arg13[%c0_68, %c0_69], %155 {strides = array<i32>} : memref<8x1xf32, #tpu.memory_space<vmem>>, vector<8x1xf32>,
      %cst_70 = arith.constant 0.000000e+00 : f32
      %157 = vector.broadcast %cst_70 : f32 to vector<8x36xf32>
      %c0_71 = arith.constant 0 : index
      %c0_72 = arith.constant 0 : index
      %158 = vector.load %arg14[%c0_71, %c0_72] : memref<8x36xf32, #tpu.memory_space<vmem>>, vector<8x36xf32>
      tpu.vector_store %arg14[%c0_71, %c0_72], %157 {strides = array<i32>} : memref<8x36xf32, #tpu.memory_space<vmem>>, vector<8x36xf32>,
    } else {
    }
    %c0_3 = arith.constant 0 : index
    %c0_4 = arith.constant 0 : index
    %c0_5 = arith.constant 0 : index
    %4 = vector.load %arg7[%c0_3, %c0_4, %c0_5] : memref<1x2x18xf32, #tpu.memory_space<vmem>>, vector<1x2x18xf32>
    %c0_6 = arith.constant 0 : index
    %c0_7 = arith.constant 0 : index
    %c0_8 = arith.constant 0 : index
    %5 = vector.load %arg8[%c0_6, %c0_7, %c0_8] : memref<1x2x36xf32, #tpu.memory_space<vmem>>, vector<1x2x36xf32>
    %c0_9 = arith.constant 0 : index
    %c0_10 = arith.constant 0 : index
    %c0_11 = arith.constant 0 : index
    %6 = vector.load %arg4[%c0_9, %c0_10, %c0_11] : memref<1x8x18xf32, #tpu.memory_space<vmem>>, vector<1x8x18xf32>
    %7 = vector.shape_cast %6 : vector<1x8x18xf32> to vector<8x18xf32>
    %8 = vector.extract_strided_slice %0 {offsets = [0, 0, 1], sizes = [1, 1, 1], strides = [1, 1, 1]} : vector<1x1x3xf32> to vector<1x1x1xf32>
    %9 = vector.shape_cast %8 : vector<1x1x1xf32> to vector<1x1xf32>
    %10 = vector.extract_strided_slice %4 {offsets = [0, 0, 0], sizes = [1, 1, 18], strides = [1, 1, 1]} : vector<1x2x18xf32> to vector<1x1x18xf32>
    %11 = vector.shape_cast %10 : vector<1x1x18xf32> to vector<1x18xf32>
    %12 = vector.extract_strided_slice %4 {offsets = [0, 1, 0], sizes = [1, 1, 18], strides = [1, 1, 1]} : vector<1x2x18xf32> to vector<1x1x18xf32>
    %13 = vector.shape_cast %12 : vector<1x1x18xf32> to vector<1x18xf32>
    %cst = arith.constant 0.000000e+00 : f32
    %14 = vector.broadcast %cst : f32 to vector<8x18xf32>
    %15 = arith.cmpf oge, %7, %14 : vector<8x18xf32>
    %16 = vector.broadcast %9 : vector<1x1xf32> to vector<8x18xf32>
    %17 = arith.mulf %16, %7 : vector<8x18xf32>
    %18 = arith.select %15, %7, %17 : vector<8x18xi1>, vector<8x18xf32>
    %cst_12 = arith.constant dense<0.000000e+00> : vector<8xf32>
    %19 = vector.multi_reduction <add>, %18, %cst_12 [1] : vector<8x18xf32> to vector<8xf32>
    %20 = vector.shape_cast %19 : vector<8xf32> to vector<8x1xf32>
    %cst_13 = arith.constant 1.800000e+01 : f32
    %21 = vector.broadcast %cst_13 : f32 to vector<8x1xf32>
    %22 = arith.divf %20, %21 : vector<8x1xf32>
    %23 = vector.broadcast %22 : vector<8x1xf32> to vector<8x18xf32>
    %24 = arith.subf %18, %23 : vector<8x18xf32>
    %25 = arith.mulf %24, %24 : vector<8x18xf32>
    %cst_14 = arith.constant dense<0.000000e+00> : vector<8xf32>
    %26 = vector.multi_reduction <add>, %25, %cst_14 [1] : vector<8x18xf32> to vector<8xf32>
    %27 = vector.shape_cast %26 : vector<8xf32> to vector<8x1xf32>
    %cst_15 = arith.constant 1.800000e+01 : f32
    %28 = vector.broadcast %cst_15 : f32 to vector<8x1xf32>
    %29 = arith.divf %27, %28 : vector<8x1xf32>
    %30 = vector.broadcast %22 : vector<8x1xf32> to vector<8x18xf32>
    %31 = arith.subf %18, %30 : vector<8x18xf32>
    %cst_16 = arith.constant 9.99999974E-6 : f32
    %32 = vector.broadcast %cst_16 : f32 to vector<8x1xf32>
    %33 = arith.addf %29, %32 : vector<8x1xf32>
    %34 = math.rsqrt %33 : vector<8x1xf32>
    %35 = vector.broadcast %34 : vector<8x1xf32> to vector<8x18xf32>
    %36 = arith.mulf %31, %35 : vector<8x18xf32>
    %37 = vector.broadcast %11 : vector<1x18xf32> to vector<8x18xf32>
    %38 = arith.mulf %36, %37 : vector<8x18xf32>
    %39 = vector.broadcast %13 : vector<1x18xf32> to vector<8x18xf32>
    %40 = arith.addf %38, %39 : vector<8x18xf32>
    %c0_17 = arith.constant 0 : index
    %c0_18 = arith.constant 0 : index
    %c0_19 = arith.constant 0 : index
    %41 = vector.load %arg5[%c0_17, %c0_18, %c0_19] : memref<1x8x36xf32, #tpu.memory_space<vmem>>, vector<1x8x36xf32>
    %42 = vector.shape_cast %41 : vector<1x8x36xf32> to vector<8x36xf32>
    %43 = vector.extract_strided_slice %0 {offsets = [0, 0, 2], sizes = [1, 1, 1], strides = [1, 1, 1]} : vector<1x1x3xf32> to vector<1x1x1xf32>
    %44 = vector.shape_cast %43 : vector<1x1x1xf32> to vector<1x1xf32>
    %45 = vector.extract_strided_slice %5 {offsets = [0, 0, 0], sizes = [1, 1, 36], strides = [1, 1, 1]} : vector<1x2x36xf32> to vector<1x1x36xf32>
    %46 = vector.shape_cast %45 : vector<1x1x36xf32> to vector<1x36xf32>
    %47 = vector.extract_strided_slice %5 {offsets = [0, 1, 0], sizes = [1, 1, 36], strides = [1, 1, 1]} : vector<1x2x36xf32> to vector<1x1x36xf32>
    %48 = vector.shape_cast %47 : vector<1x1x36xf32> to vector<1x36xf32>
    %cst_20 = arith.constant 0.000000e+00 : f32
    %49 = vector.broadcast %cst_20 : f32 to vector<8x36xf32>
    %50 = arith.cmpf oge, %42, %49 : vector<8x36xf32>
    %51 = vector.broadcast %44 : vector<1x1xf32> to vector<8x36xf32>
    %52 = arith.mulf %51, %42 : vector<8x36xf32>
    %53 = arith.select %50, %42, %52 : vector<8x36xi1>, vector<8x36xf32>
    %cst_21 = arith.constant dense<0.000000e+00> : vector<8xf32>
    %54 = vector.multi_reduction <add>, %53, %cst_21 [1] : vector<8x36xf32> to vector<8xf32>
    %55 = vector.shape_cast %54 : vector<8xf32> to vector<8x1xf32>
    %cst_22 = arith.constant 3.600000e+01 : f32
    %56 = vector.broadcast %cst_22 : f32 to vector<8x1xf32>
    %57 = arith.divf %55, %56 : vector<8x1xf32>
    %58 = vector.broadcast %57 : vector<8x1xf32> to vector<8x36xf32>
    %59 = arith.subf %53, %58 : vector<8x36xf32>
    %60 = arith.mulf %59, %59 : vector<8x36xf32>
    %cst_23 = arith.constant dense<0.000000e+00> : vector<8xf32>
    %61 = vector.multi_reduction <add>, %60, %cst_23 [1] : vector<8x36xf32> to vector<8xf32>
    %62 = vector.shape_cast %61 : vector<8xf32> to vector<8x1xf32>
    %cst_24 = arith.constant 3.600000e+01 : f32
    %63 = vector.broadcast %cst_24 : f32 to vector<8x1xf32>
    %64 = arith.divf %62, %63 : vector<8x1xf32>
    %65 = vector.broadcast %57 : vector<8x1xf32> to vector<8x36xf32>
    %66 = arith.subf %53, %65 : vector<8x36xf32>
    %cst_25 = arith.constant 9.99999974E-6 : f32
    %67 = vector.broadcast %cst_25 : f32 to vector<8x1xf32>
    %68 = arith.addf %64, %67 : vector<8x1xf32>
    %69 = math.rsqrt %68 : vector<8x1xf32>
    %70 = vector.broadcast %69 : vector<8x1xf32> to vector<8x36xf32>
    %71 = arith.mulf %66, %70 : vector<8x36xf32>
    %72 = vector.broadcast %46 : vector<1x36xf32> to vector<8x36xf32>
    %73 = arith.mulf %71, %72 : vector<8x36xf32>
    %74 = vector.broadcast %48 : vector<1x36xf32> to vector<8x36xf32>
    %75 = arith.addf %73, %74 : vector<8x36xf32>
    %c0_26 = arith.constant 0 : index
    %c0_27 = arith.constant 0 : index
    %76 = vector.load %arg11[%c0_26, %c0_27] : memref<8x18xf32, #tpu.memory_space<vmem>>, vector<8x18xf32>
    %77 = arith.truncf %76 : vector<8x18xf32> to vector<8x18xbf16>
    %78 = arith.truncf %40 : vector<8x18xf32> to vector<8x18xbf16>
    %cst_28 = arith.constant dense<0.000000e+00> : vector<8x8xf32>
    %79 = tpu.matmul %77, %78, %cst_28 {dimension_numbers = #tpu.dot_dimension_numbers<[1], [1], [0], [0], [0, 0, 1, 0], [], []>} : vector<8x18xbf16>, vector<8x18xbf16>, vector<8x8xf32> -> vector<8x8xf32>
    %c8_i32 = arith.constant 8 : i32
    %80 = arith.muli %arg2, %c8_i32 : i32
    %81 = tpu.iota {dimensions = array<i32: 1>} : vector<8x8xi32>
    %82 = vector.broadcast %80 : i32 to vector<8x8xi32>
    %83 = arith.addi %82, %81 : vector<8x8xi32>
    %c8_i32_29 = arith.constant 8 : i32
    %84 = vector.broadcast %c8_i32_29 : i32 to vector<8x8xi32>
    %85 = arith.cmpi slt, %83, %84 : vector<8x8xi32>
    %cst_30 = arith.constant 0xFF800000 : f32
    %86 = vector.broadcast %cst_30 : f32 to vector<8x8xf32>
    %87 = arith.select %85, %79, %86 : vector<8x8xi1>, vector<8x8xf32>
    %c0_31 = arith.constant 0 : index
    %c0_32 = arith.constant 0 : index
    %88 = vector.load %arg12[%c0_31, %c0_32] : memref<8x1xf32, #tpu.memory_space<vmem>>, vector<8x1xf32>
    %cst_33 = arith.constant dense<0xFF800000> : vector<8xf32>
    %89 = vector.multi_reduction <maximumf>, %87, %cst_33 [1] : vector<8x8xf32> to vector<8xf32>
    %90 = vector.shape_cast %89 : vector<8xf32> to vector<8x1xf32>
    %91 = arith.maximumf %88, %90 : vector<8x1xf32>
    %c0_34 = arith.constant 0 : index
    %c0_35 = arith.constant 0 : index
    %92 = vector.load %arg12[%c0_34, %c0_35] : memref<8x1xf32, #tpu.memory_space<vmem>>, vector<8x1xf32>
    %93 = arith.subf %92, %91 : vector<8x1xf32>
    %94 = math.exp %93 : vector<8x1xf32>
    %95 = vector.broadcast %91 : vector<8x1xf32> to vector<8x8xf32>
    %96 = arith.subf %87, %95 : vector<8x8xf32>
    %97 = math.exp %96 : vector<8x8xf32>
    %c0_36 = arith.constant 0 : index
    %c0_37 = arith.constant 0 : index
    %98 = vector.load %arg13[%c0_36, %c0_37] : memref<8x1xf32, #tpu.memory_space<vmem>>, vector<8x1xf32>
    %99 = arith.mulf %94, %98 : vector<8x1xf32>
    %cst_38 = arith.constant dense<0.000000e+00> : vector<8xf32>
    %100 = vector.multi_reduction <add>, %97, %cst_38 [1] : vector<8x8xf32> to vector<8xf32>
    %101 = vector.shape_cast %100 : vector<8xf32> to vector<8x1xf32>
    %102 = arith.addf %99, %101 : vector<8x1xf32>
    %c0_39 = arith.constant 0 : index
    %c0_40 = arith.constant 0 : index
    %103 = vector.load %arg13[%c0_39, %c0_40] : memref<8x1xf32, #tpu.memory_space<vmem>>, vector<8x1xf32>
    tpu.vector_store %arg13[%c0_39, %c0_40], %102 {strides = array<i32>} : memref<8x1xf32, #tpu.memory_space<vmem>>, vector<8x1xf32>,
    %c0_41 = arith.constant 0 : index
    %c0_42 = arith.constant 0 : index
    %104 = vector.load %arg14[%c0_41, %c0_42] : memref<8x36xf32, #tpu.memory_space<vmem>>, vector<8x36xf32>
    %105 = vector.broadcast %94 : vector<8x1xf32> to vector<8x36xf32>
    %106 = arith.mulf %105, %104 : vector<8x36xf32>
    %107 = arith.truncf %97 : vector<8x8xf32> to vector<8x8xbf16>
    %108 = arith.truncf %75 : vector<8x36xf32> to vector<8x36xbf16>
    %cst_43 = arith.constant dense<0.000000e+00> : vector<8x36xf32>
    %109 = tpu.matmul %107, %108, %cst_43 {dimension_numbers = #tpu.dot_dimension_numbers<[1], [0], [0], [1], [0, 0, 1, 1], [], []>} : vector<8x8xbf16>, vector<8x36xbf16>, vector<8x36xf32> -> vector<8x36xf32>
    %110 = arith.addf %106, %109 : vector<8x36xf32>
    %c0_44 = arith.constant 0 : index
    %c0_45 = arith.constant 0 : index
    %111 = vector.load %arg14[%c0_44, %c0_45] : memref<8x36xf32, #tpu.memory_space<vmem>>, vector<8x36xf32>
    tpu.vector_store %arg14[%c0_44, %c0_45], %110 {strides = array<i32>} : memref<8x36xf32, #tpu.memory_space<vmem>>, vector<8x36xf32>,
    %c0_46 = arith.constant 0 : index
    %c0_47 = arith.constant 0 : index
    %112 = vector.load %arg12[%c0_46, %c0_47] : memref<8x1xf32, #tpu.memory_space<vmem>>, vector<8x1xf32>
    tpu.vector_store %arg12[%c0_46, %c0_47], %91 {strides = array<i32>} : memref<8x1xf32, #tpu.memory_space<vmem>>, vector<8x1xf32>,
    %c0_i32_48 = arith.constant 0 : i32
    %113 = arith.cmpi eq, %arg2, %c0_i32_48 : i32
    %114 = arith.extui %113 : i1 to i32
    %c0_i32_49 = arith.constant 0 : i32
    %115 = arith.cmpi ne, %114, %c0_i32_49 : i32
    scf.if %115 {
      %c0_50 = arith.constant 0 : index
      %c0_51 = arith.constant 0 : index
      %116 = vector.load %arg14[%c0_50, %c0_51] : memref<8x36xf32, #tpu.memory_space<vmem>>, vector<8x36xf32>
      %c0_52 = arith.constant 0 : index
      %c0_53 = arith.constant 0 : index
      %117 = vector.load %arg13[%c0_52, %c0_53] : memref<8x1xf32, #tpu.memory_space<vmem>>, vector<8x1xf32>
      %118 = tpu.reciprocal %117 : vector<8x1xf32> -> vector<8x1xf32>
      %119 = vector.broadcast %118 : vector<8x1xf32> to vector<8x36xf32>
      %120 = arith.mulf %116, %119 : vector<8x36xf32>
      %c0_54 = arith.constant 0 : index
      %c0_55 = arith.constant 0 : index
      %c0_56 = arith.constant 0 : index
      %121 = vector.load %arg10[%c0_54, %c0_55, %c0_56] : memref<1x8x36xf32, #tpu.memory_space<vmem>>, vector<1x8x36xf32>
      %122 = vector.shape_cast %121 : vector<1x8x36xf32> to vector<8x36xf32>
      %123 = vector.shape_cast %120 : vector<8x36xf32> to vector<1x8x36xf32>
      tpu.vector_store %arg10[%c0_54, %c0_55, %c0_56], %123 {strides = array<i32>} : memref<1x8x36xf32, #tpu.memory_space<vmem>>, vector<1x8x36xf32>,
    } else {
    }
    return
  }
  func.func @transform_0(%arg0: i32, %arg1: i32, %arg2: i32) -> (i32, i32, i32) {
    %c0_i32 = arith.constant 0 : i32
    %c0_i32_0 = arith.constant 0 : i32
    return %arg0, %arg1, %c0_i32 : i32, i32, i32
  }
  func.func @transform_1(%arg0: i32, %arg1: i32, %arg2: i32) -> (i32, i32, i32) {
    %c0_i32 = arith.constant 0 : i32
    %c0_i32_0 = arith.constant 0 : i32
    return %arg0, %arg2, %c0_i32 : i32, i32, i32
  }
  func.func @transform_2(%arg0: i32, %arg1: i32, %arg2: i32) -> (i32, i32, i32) {
    %c0_i32 = arith.constant 0 : i32
    %c0_i32_0 = arith.constant 0 : i32
    return %arg0, %arg2, %c0_i32 : i32, i32, i32
  }
  func.func @transform_3(%arg0: i32, %arg1: i32, %arg2: i32) -> (i32, i32, i32) {
    %c2_i32 = arith.constant 2 : i32
    %c0_i32 = arith.constant 0 : i32
    %0 = arith.cmpi eq, %c2_i32, %c0_i32 : i32
    %c1_i32 = arith.constant 1 : i32
    %1 = arith.select %0, %c1_i32, %c2_i32 : i32
    %2 = arith.remsi %arg0, %1 : i32
    %c0_i32_0 = arith.constant 0 : i32
    %3 = arith.cmpi ne, %2, %c0_i32_0 : i32
    %c0_i32_1 = arith.constant 0 : i32
    %4 = arith.cmpi slt, %2, %c0_i32_1 : i32
    %c0_i32_2 = arith.constant 0 : i32
    %5 = arith.cmpi slt, %1, %c0_i32_2 : i32
    %6 = arith.xori %4, %5 : i1
    %7 = arith.andi %6, %3 : i1
    %8 = arith.addi %2, %1 : i32
    %9 = arith.select %7, %8, %2 : i32
    %c0_i32_3 = arith.constant 0 : i32
    %c0_i32_4 = arith.constant 0 : i32
    %c0_i32_5 = arith.constant 0 : i32
    return %9, %c0_i32_3, %c0_i32_4 : i32, i32, i32
  }
  func.func @transform_4(%arg0: i32, %arg1: i32, %arg2: i32) -> (i32, i32, i32) {
    %c2_i32 = arith.constant 2 : i32
    %c0_i32 = arith.constant 0 : i32
    %0 = arith.cmpi eq, %c2_i32, %c0_i32 : i32
    %c1_i32 = arith.constant 1 : i32
    %1 = arith.select %0, %c1_i32, %c2_i32 : i32
    %2 = arith.remsi %arg0, %1 : i32
    %c0_i32_0 = arith.constant 0 : i32
    %3 = arith.cmpi ne, %2, %c0_i32_0 : i32
    %c0_i32_1 = arith.constant 0 : i32
    %4 = arith.cmpi slt, %2, %c0_i32_1 : i32
    %c0_i32_2 = arith.constant 0 : i32
    %5 = arith.cmpi slt, %1, %c0_i32_2 : i32
    %6 = arith.xori %4, %5 : i1
    %7 = arith.andi %6, %3 : i1
    %8 = arith.addi %2, %1 : i32
    %9 = arith.select %7, %8, %2 : i32
    %c0_i32_3 = arith.constant 0 : i32
    %c0_i32_4 = arith.constant 0 : i32
    %c0_i32_5 = arith.constant 0 : i32
    return %9, %c0_i32_3, %c0_i32_4 : i32, i32, i32
  }
  func.func @transform_5(%arg0: i32, %arg1: i32, %arg2: i32) -> (i32, i32, i32) {
    %c2_i32 = arith.constant 2 : i32
    %c0_i32 = arith.constant 0 : i32
    %0 = arith.cmpi eq, %c2_i32, %c0_i32 : i32
    %c1_i32 = arith.constant 1 : i32
    %1 = arith.select %0, %c1_i32, %c2_i32 : i32
    %2 = arith.remsi %arg0, %1 : i32
    %c0_i32_0 = arith.constant 0 : i32
    %3 = arith.cmpi ne, %2, %c0_i32_0 : i32
    %c0_i32_1 = arith.constant 0 : i32
    %4 = arith.cmpi slt, %2, %c0_i32_1 : i32
    %c0_i32_2 = arith.constant 0 : i32
    %5 = arith.cmpi slt, %1, %c0_i32_2 : i32
    %6 = arith.xori %4, %5 : i1
    %7 = arith.andi %6, %3 : i1
    %8 = arith.addi %2, %1 : i32
    %9 = arith.select %7, %8, %2 : i32
    %c0_i32_3 = arith.constant 0 : i32
    %c0_i32_4 = arith.constant 0 : i32
    %c0_i32_5 = arith.constant 0 : i32
    return %9, %c0_i32_3, %c0_i32_4 : i32, i32, i32
  }
  func.func @transform_6(%arg0: i32, %arg1: i32, %arg2: i32) -> (i32, i32, i32) {
    %c2_i32 = arith.constant 2 : i32
    %c0_i32 = arith.constant 0 : i32
    %0 = arith.cmpi eq, %c2_i32, %c0_i32 : i32
    %c1_i32 = arith.constant 1 : i32
    %1 = arith.select %0, %c1_i32, %c2_i32 : i32
    %2 = arith.remsi %arg0, %1 : i32
    %c0_i32_0 = arith.constant 0 : i32
    %3 = arith.cmpi ne, %2, %c0_i32_0 : i32
    %c0_i32_1 = arith.constant 0 : i32
    %4 = arith.cmpi slt, %2, %c0_i32_1 : i32
    %c0_i32_2 = arith.constant 0 : i32
    %5 = arith.cmpi slt, %1, %c0_i32_2 : i32
    %6 = arith.xori %4, %5 : i1
    %7 = arith.andi %6, %3 : i1
    %8 = arith.addi %2, %1 : i32
    %9 = arith.select %7, %8, %2 : i32
    %c0_i32_3 = arith.constant 0 : i32
    %c0_i32_4 = arith.constant 0 : i32
    %c0_i32_5 = arith.constant 0 : i32
    return %9, %c0_i32_3, %c0_i32_4 : i32, i32, i32
  }
  func.func @transform_7(%arg0: i32, %arg1: i32, %arg2: i32) -> (i32, i32, i32) {
    %c0_i32 = arith.constant 0 : i32
    %c0_i32_0 = arith.constant 0 : i32
    return %arg0, %arg1, %c0_i32 : i32, i32, i32
  }
}

module attributes {stable_mosaic.version = 11 : i64} {
  func.func @_prelu_ln4dcf_res_kernel(%arg0: i32, %arg1: i32, %arg2: memref<1x8x72xf32, #tpu.memory_space<vmem>>, %arg3: memref<1x1x1xf32, #tpu.memory_space<vmem>>, %arg4: memref<1x1x72xf32, #tpu.memory_space<vmem>>, %arg5: memref<1x1x72xf32, #tpu.memory_space<vmem>>, %arg6: memref<1x8x72xf32, #tpu.memory_space<vmem>>, %arg7: memref<1x8x72xf32, #tpu.memory_space<vmem>>) attributes {dimension_semantics = [#tpu.dimension_semantics<parallel>, #tpu.dimension_semantics<parallel>], iteration_bounds = array<i64: 2, 1>, scalar_prefetch = 0 : i64, scratch_operands = 0 : i64, tpu.core_type = #tpu.core_type<tc>, window_params = [{transform_indices = @transform_0, window_bounds = array<i64: 1, 8, 72>}, {pipeline_mode = #tpu.pipeline_mode<synchronous>, transform_indices = @transform_1, window_bounds = array<i64: 1, 1, 1>}, {pipeline_mode = #tpu.pipeline_mode<synchronous>, transform_indices = @transform_2, window_bounds = array<i64: 1, 1, 72>}, {pipeline_mode = #tpu.pipeline_mode<synchronous>, transform_indices = @transform_3, window_bounds = array<i64: 1, 1, 72>}, {transform_indices = @transform_4, window_bounds = array<i64: 1, 8, 72>}, {transform_indices = @transform_5, window_bounds = array<i64: 1, 8, 72>}]} {
    %c0 = arith.constant 0 : index
    %c0_0 = arith.constant 0 : index
    %c0_1 = arith.constant 0 : index
    %0 = vector.load %arg2[%c0, %c0_0, %c0_1] : memref<1x8x72xf32, #tpu.memory_space<vmem>>, vector<1x8x72xf32>
    %cst = arith.constant 0.000000e+00 : f32
    %1 = vector.broadcast %cst : f32 to vector<1x8x72xf32>
    %2 = arith.cmpf oge, %0, %1 : vector<1x8x72xf32>
    %c0_2 = arith.constant 0 : index
    %c0_3 = arith.constant 0 : index
    %c0_4 = arith.constant 0 : index
    %3 = vector.load %arg3[%c0_2, %c0_3, %c0_4] : memref<1x1x1xf32, #tpu.memory_space<vmem>>, vector<1x1x1xf32>
    %4 = vector.broadcast %3 : vector<1x1x1xf32> to vector<1x8x72xf32>
    %5 = arith.mulf %4, %0 : vector<1x8x72xf32>
    %6 = arith.select %2, %0, %5 : vector<1x8x72xi1>, vector<1x8x72xf32>
    %cst_5 = arith.constant dense<0.000000e+00> : vector<1x8xf32>
    %7 = vector.multi_reduction <add>, %6, %cst_5 [2] : vector<1x8x72xf32> to vector<1x8xf32>
    %8 = vector.shape_cast %7 : vector<1x8xf32> to vector<1x8x1xf32>
    %cst_6 = arith.constant 7.200000e+01 : f32
    %9 = vector.broadcast %cst_6 : f32 to vector<1x8x1xf32>
    %10 = arith.divf %8, %9 : vector<1x8x1xf32>
    %11 = vector.broadcast %10 : vector<1x8x1xf32> to vector<1x8x72xf32>
    %12 = arith.subf %6, %11 : vector<1x8x72xf32>
    %13 = arith.mulf %12, %12 : vector<1x8x72xf32>
    %cst_7 = arith.constant dense<0.000000e+00> : vector<1x8xf32>
    %14 = vector.multi_reduction <add>, %13, %cst_7 [2] : vector<1x8x72xf32> to vector<1x8xf32>
    %15 = vector.shape_cast %14 : vector<1x8xf32> to vector<1x8x1xf32>
    %cst_8 = arith.constant 7.200000e+01 : f32
    %16 = vector.broadcast %cst_8 : f32 to vector<1x8x1xf32>
    %17 = arith.divf %15, %16 : vector<1x8x1xf32>
    %18 = vector.broadcast %10 : vector<1x8x1xf32> to vector<1x8x72xf32>
    %19 = arith.subf %6, %18 : vector<1x8x72xf32>
    %cst_9 = arith.constant 9.99999974E-6 : f32
    %20 = vector.broadcast %cst_9 : f32 to vector<1x8x1xf32>
    %21 = arith.addf %17, %20 : vector<1x8x1xf32>
    %22 = math.rsqrt %21 : vector<1x8x1xf32>
    %23 = vector.broadcast %22 : vector<1x8x1xf32> to vector<1x8x72xf32>
    %24 = arith.mulf %19, %23 : vector<1x8x72xf32>
    %c0_10 = arith.constant 0 : index
    %c0_11 = arith.constant 0 : index
    %c0_12 = arith.constant 0 : index
    %25 = vector.load %arg4[%c0_10, %c0_11, %c0_12] : memref<1x1x72xf32, #tpu.memory_space<vmem>>, vector<1x1x72xf32>
    %26 = vector.broadcast %25 : vector<1x1x72xf32> to vector<1x8x72xf32>
    %27 = arith.mulf %24, %26 : vector<1x8x72xf32>
    %c0_13 = arith.constant 0 : index
    %c0_14 = arith.constant 0 : index
    %c0_15 = arith.constant 0 : index
    %28 = vector.load %arg5[%c0_13, %c0_14, %c0_15] : memref<1x1x72xf32, #tpu.memory_space<vmem>>, vector<1x1x72xf32>
    %29 = vector.broadcast %28 : vector<1x1x72xf32> to vector<1x8x72xf32>
    %30 = arith.addf %27, %29 : vector<1x8x72xf32>
    %c0_16 = arith.constant 0 : index
    %c0_17 = arith.constant 0 : index
    %c0_18 = arith.constant 0 : index
    %31 = vector.load %arg6[%c0_16, %c0_17, %c0_18] : memref<1x8x72xf32, #tpu.memory_space<vmem>>, vector<1x8x72xf32>
    %32 = arith.addf %30, %31 : vector<1x8x72xf32>
    %c0_19 = arith.constant 0 : index
    %c0_20 = arith.constant 0 : index
    %c0_21 = arith.constant 0 : index
    %33 = vector.load %arg7[%c0_19, %c0_20, %c0_21] : memref<1x8x72xf32, #tpu.memory_space<vmem>>, vector<1x8x72xf32>
    tpu.vector_store %arg7[%c0_19, %c0_20, %c0_21], %32 {strides = array<i32>} : memref<1x8x72xf32, #tpu.memory_space<vmem>>, vector<1x8x72xf32>,
    return
  }
  func.func @transform_0(%arg0: i32, %arg1: i32) -> (i32, i32, i32) {
    %c0_i32 = arith.constant 0 : i32
    %c0_i32_0 = arith.constant 0 : i32
    return %arg0, %arg1, %c0_i32 : i32, i32, i32
  }
  func.func @transform_1(%arg0: i32, %arg1: i32) -> (i32, i32, i32) {
    %c0_i32 = arith.constant 0 : i32
    %c0_i32_0 = arith.constant 0 : i32
    %c0_i32_1 = arith.constant 0 : i32
    %c0_i32_2 = arith.constant 0 : i32
    return %c0_i32, %c0_i32_0, %c0_i32_1 : i32, i32, i32
  }
  func.func @transform_2(%arg0: i32, %arg1: i32) -> (i32, i32, i32) {
    %c0_i32 = arith.constant 0 : i32
    %c0_i32_0 = arith.constant 0 : i32
    %c0_i32_1 = arith.constant 0 : i32
    %c0_i32_2 = arith.constant 0 : i32
    return %c0_i32, %c0_i32_0, %c0_i32_1 : i32, i32, i32
  }
  func.func @transform_3(%arg0: i32, %arg1: i32) -> (i32, i32, i32) {
    %c0_i32 = arith.constant 0 : i32
    %c0_i32_0 = arith.constant 0 : i32
    %c0_i32_1 = arith.constant 0 : i32
    %c0_i32_2 = arith.constant 0 : i32
    return %c0_i32, %c0_i32_0, %c0_i32_1 : i32, i32, i32
  }
  func.func @transform_4(%arg0: i32, %arg1: i32) -> (i32, i32, i32) {
    %c0_i32 = arith.constant 0 : i32
    %c0_i32_0 = arith.constant 0 : i32
    return %arg0, %arg1, %c0_i32 : i32, i32, i32
  }
  func.func @transform_5(%arg0: i32, %arg1: i32) -> (i32, i32, i32) {
    %c0_i32 = arith.constant 0 : i32
    %c0_i32_0 = arith.constant 0 : i32
    return %arg0, %arg1, %c0_i32 : i32, i32, i32
  }
}

module attributes {stable_mosaic.version = 11 : i64} {
  func.func @_matmul_bias_kernel(%arg0: i32, %arg1: memref<144x8xf32, #tpu.memory_space<vmem>>, %arg2: memref<8x18xbf16, #tpu.memory_space<vmem>>, %arg3: memref<1x18xf32, #tpu.memory_space<vmem>>, %arg4: memref<144x18xf32, #tpu.memory_space<vmem>>) attributes {dimension_semantics = [#tpu.dimension_semantics<parallel>], iteration_bounds = array<i64: 1>, scalar_prefetch = 0 : i64, scratch_operands = 0 : i64, tpu.core_type = #tpu.core_type<tc>, window_params = [{transform_indices = @transform_0, window_bounds = array<i64: 144, 8>}, {pipeline_mode = #tpu.pipeline_mode<synchronous>, transform_indices = @transform_1, window_bounds = array<i64: 8, 18>}, {pipeline_mode = #tpu.pipeline_mode<synchronous>, transform_indices = @transform_2, window_bounds = array<i64: 1, 18>}, {transform_indices = @transform_3, window_bounds = array<i64: 144, 18>}]} {
    %c0 = arith.constant 0 : index
    %c0_0 = arith.constant 0 : index
    %0 = vector.load %arg1[%c0, %c0_0] : memref<144x8xf32, #tpu.memory_space<vmem>>, vector<144x8xf32>
    %1 = arith.truncf %0 : vector<144x8xf32> to vector<144x8xbf16>
    %c0_1 = arith.constant 0 : index
    %c0_2 = arith.constant 0 : index
    %2 = vector.load %arg2[%c0_1, %c0_2] : memref<8x18xbf16, #tpu.memory_space<vmem>>, vector<8x18xbf16>
    %cst = arith.constant dense<0.000000e+00> : vector<144x18xf32>
    %3 = tpu.matmul %1, %2, %cst {dimension_numbers = #tpu.dot_dimension_numbers<[1], [0], [0], [1], [0, 0, 1, 1], [], []>} : vector<144x8xbf16>, vector<8x18xbf16>, vector<144x18xf32> -> vector<144x18xf32>
    %c0_3 = arith.constant 0 : index
    %c0_4 = arith.constant 0 : index
    %4 = vector.load %arg3[%c0_3, %c0_4] : memref<1x18xf32, #tpu.memory_space<vmem>>, vector<1x18xf32>
    %5 = vector.broadcast %4 : vector<1x18xf32> to vector<144x18xf32>
    %6 = arith.addf %3, %5 : vector<144x18xf32>
    %c0_5 = arith.constant 0 : index
    %c0_6 = arith.constant 0 : index
    %7 = vector.load %arg4[%c0_5, %c0_6] : memref<144x18xf32, #tpu.memory_space<vmem>>, vector<144x18xf32>
    tpu.vector_store %arg4[%c0_5, %c0_6], %6 {strides = array<i32>} : memref<144x18xf32, #tpu.memory_space<vmem>>, vector<144x18xf32>,
    return
  }
  func.func @transform_0(%arg0: i32) -> (i32, i32) {
    %c0_i32 = arith.constant 0 : i32
    %c0_i32_0 = arith.constant 0 : i32
    return %arg0, %c0_i32 : i32, i32
  }
  func.func @transform_1(%arg0: i32) -> (i32, i32) {
    %c0_i32 = arith.constant 0 : i32
    %c0_i32_0 = arith.constant 0 : i32
    %c0_i32_1 = arith.constant 0 : i32
    return %c0_i32, %c0_i32_0 : i32, i32
  }
  func.func @transform_2(%arg0: i32) -> (i32, i32) {
    %c0_i32 = arith.constant 0 : i32
    %c0_i32_0 = arith.constant 0 : i32
    %c0_i32_1 = arith.constant 0 : i32
    return %c0_i32, %c0_i32_0 : i32, i32
  }
  func.func @transform_3(%arg0: i32) -> (i32, i32) {
    %c0_i32 = arith.constant 0 : i32
    %c0_i32_0 = arith.constant 0 : i32
    return %arg0, %c0_i32 : i32, i32
  }
}

</mosaic_0001>

<llo_original>
// kernel: custom-call.1
$region0: #{custom-call.1}
  %s0 = inlined_call_operand.hbm [shape: c64[2,1,9,8], index: 0, kind: input, shape index: {}]
  %s1 = inlined_call_operand.vmem [shape: f32[2,1,9,8], index: 1, kind: output, shape index: {}]
  %s2 = scalar_lea.hbm %s0, 256
  $region1: #{custom-call.1} parent=0
    #allocation0 [shape = 's32[1]{0}', space=sflag, size = 0x4, scoped, tag = 'scoped memory for custom-call.1']
    %3 = vsyncpa [#allocation0], 0
    %s4 = sshll.u32 %s1, 4
    %s5 = int_to_ptr.vmem [resolvable:$true] %s4
    %7 = dma.hbm_to_vmem [thread:$0]  %s2, 256, %s5, [#allocation0]
    %8 = dma.done [#allocation0], 256
    %9 = vsyncpa [#allocation0], 1

// kernel: custom-call
$region0: #{custom-call}
  %s0 = inlined_call_operand.hbm [shape: c64[2,1,9,8], index: 0, kind: input, shape index: {}]
  %s1 = inlined_call_operand.vmem [shape: f32[2,1,9,8], index: 1, kind: output, shape index: {}]
  $region1: #{custom-call} parent=0
    #allocation0 [shape = 's32[1]{0}', space=sflag, size = 0x4, scoped, tag = 'scoped memory for custom-call']
    %2 = vsyncpa [#allocation0], 0
    %s3 = sshll.u32 %s1, 4
    %s4 = int_to_ptr.vmem [resolvable:$true] %s3
    %6 = dma.hbm_to_vmem [thread:$0]  %s0, 256, %s4, [#allocation0]
    %7 = dma.done [#allocation0], 256
    %8 = vsyncpa [#allocation0], 1

// kernel: tile.13
$region0: #{tile.13}
  #allocation0 [shape = 's32[1]{0}', space=sflag, size = 0x4, scoped, tag = 'scoped memory for tile.13']
  %s0 = inlined_call_operand.vmem [shape: f32[8], index: 0, kind: input, shape index: {}]
  %s1 = inlined_call_operand.vmem [shape: f32[9,8], index: 1, kind: output, shape index: {}]
  // Predicated region
  $region2: #{tile.13} parent=0 // pred_check
    _
  $region3: #{tile.13} parent=0 // pred_check_branch
    %3 = sbr.rel (0) target = $region5
  $region4: #{tile.13} parent=0 // pred_region
    _
  $region5: #{tile.13} parent=0 // pred_fallthru
    _
  %v4 = vld [vmem:[%s0] ss:$0 sm:$0xff]
  %5 = vst [vmem:[%s1] sm:$0xff] %v4
  %s6 = scalar_lea.vmem %s1, 8
  %7 = vst [vmem:[%s6] sm:$0xff] %v4

// kernel: tile.14
$region0: #{tile.14}
  %s0 = inlined_call_operand.vmem [shape: f32[9,8], index: 0, kind: input, shape index: {}]
  %s1 = inlined_call_operand.hbm [shape: f32[1,1,72], index: 1, kind: output, shape index: {}]
  $region1: #{tile.14} parent=0
    #allocation0 [shape = 'u8[512]{0}', space=vmem, size = 0x400, scoped, tag = 'operand span for operand 1']
    #allocation1 [shape = 's32[1]{0}', space=sflag, size = 0x4, scoped, tag = 'scoped memory for tile.14']
    #allocation2 [shape = 'u8[4096]{0}', space=vmem, size = 0x1000, scoped, tag = 'scoped mem for output reshape']
    %2 = vsyncpa [#allocation1], 0
    %v3 = vld [vmem:[%s0] sm:$0x1]
    %vm4 = vcmask 64512
    %5 = vst.msk [vmem:[#allocation2] sm:$0x1] %vm4, %v3
    %s6 = scalar_lea.vmem %s0, 8
    %v7 = vld [vmem:[%s6] sm:$0x1]
    %8 = vrot.lane.b32.xlu0 %v7, 64
    %v9 = vpop.permute.xlu0 %8
    %vm10 = vcmask 589312
    %11 = vst.msk [vmem:[#allocation2] sm:$0x1] %vm10, %v9
    %s12 = scalar_lea.vmem %s0, 7
    %v13 = vld [vmem:[%s12] sm:$0x1]
    %14 = vrot.lane.b32.xlu0 %v13, 56
    %v15 = vpop.permute.xlu0 %14
    %vm16 = vcmask 523712
    %17 = vst.msk [vmem:[#allocation2] sm:$0x1] %vm16, %v15
    %s18 = scalar_lea.vmem %s0, 6
    %v19 = vld [vmem:[%s18] sm:$0x1]
    %20 = vrot.lane.b32.xlu0 %v19, 48
    %v21 = vpop.permute.xlu0 %20
    %vm22 = vcmask 458112
    %23 = vst.msk [vmem:[#allocation2] sm:$0x1] %vm22, %v21
    %s24 = scalar_lea.vmem %s0, 5
    %v25 = vld [vmem:[%s24] sm:$0x1]
    %26 = vrot.lane.b32.xlu0 %v25, 40
    %v27 = vpop.permute.xlu0 %26
    %vm28 = vcmask 392512
    %29 = vst.msk [vmem:[#allocation2] sm:$0x1] %vm28, %v27
    %s30 = scalar_lea.vmem %s0, 4
    %v31 = vld [vmem:[%s30] sm:$0x1]
    %32 = vrot.lane.b32.xlu0 %v31, 32
    %v33 = vpop.permute.xlu0 %32
    %vm34 = vcmask 326912
    %35 = vst.msk [vmem:[#allocation2] sm:$0x1] %vm34, %v33
    %s36 = scalar_lea.vmem %s0, 3
    %v37 = vld [vmem:[%s36] sm:$0x1]
    %38 = vrot.lane.b32.xlu0 %v37, 24
    %v39 = vpop.permute.xlu0 %38
    %vm40 = vcmask 261312
    %41 = vst.msk [vmem:[#allocation2] sm:$0x1] %vm40, %v39
    %s42 = scalar_lea.vmem %s0, 2
    %v43 = vld [vmem:[%s42] sm:$0x1]
    %44 = vrot.lane.b32.xlu0 %v43, 16
    %v45 = vpop.permute.xlu0 %44
    %vm46 = vcmask 195712
    %47 = vst.msk [vmem:[#allocation2] sm:$0x1] %vm46, %v45
    %s48 = scalar_lea.vmem %s0, 1
    %v49 = vld [vmem:[%s48] sm:$0x1]
    %50 = vrot.lane.b32.xlu0 %v49, 8
    %v51 = vpop.permute.xlu0 %50
    %vm52 = vcmask 130112
    %53 = vst.msk [vmem:[#allocation2] sm:$0x1] %vm52, %v51
    %s55 = sshllo.u32 0, 1
    %v57 = vld [vmem:[#allocation2] sm:%s55]
    %s58 = sshllo.u32 0, 1
    %59 = vst [vmem:[#allocation0] sm:%s58] %v57
    %s61 = ssub.s32 16, 16
    %62 = vsyncadd [#allocation1], %s61
    %s64 = sshll.u32 [#allocation0], 4
    %s65 = int_to_ptr.vmem [resolvable:$true] %s64
    %67 = dma.vmem_to_hbm [thread:$0]  %s65, 16, %s1, [#allocation1]
    %68 = dma.done [#allocation1], 16
    %69 = vsyncpa [#allocation1], 1

// kernel: tfgridnet_forward.25
$region0: #{tfgridnet_forward.25}
  #allocation0 [shape = 'u32[]', space=smem, size = 0x4, offset = 0x4, fixed_abs, tag = 'smem constant byte address 0x4 - core index']
  #allocation1 [shape = 'u32[144,128]{1,0:T(1,128)}', space=vmem, size = 0x12000, scoped, tag = 'internal scratch']
  %s0 = inlined_call_operand.hbm [shape: f32[2,8,72], index: 0, kind: input, shape index: {}]
  %s1 = inlined_call_operand.hbm [shape: f32[2,1,72], index: 1, kind: output, shape index: {0}]
  %s2 = inlined_call_operand.hbm [shape: f32[2,1,72], index: 2, kind: output, shape index: {1}]
  %3 = xla_tuple %s1, %s2
  %s4 = sld [smem:[#allocation0]]
  $region53: #{tfgridnet_forward.25} parent=0
    _
  %s6 = ssub.s32 1, %s4
  %s7 = scalar_select 0, %s6, %s4
  $region1: #{tfgridnet_forward.25} parent=0
    #allocation2 [shape = 'u8[8192]{0}', space=vmem, size = 0x2000, scoped, tag = 'input window, operand 0']
    #allocation3 [shape = 's32[2]{0}', space=sflag, size = 0x8, scoped, tag = 'scoped memory for tfgridnet_forward.25']
    #allocation4 [shape = 's32[2]{0}', space=sflag, size = 0x8, scoped, tag = 'scoped memory for tfgridnet_forward.25']
    #allocation5 [shape = 'u8[1024]{0}', space=vmem, size = 0x400, scoped, tag = 'output window, operand 0']
    #allocation6 [shape = 'u8[1024]{0}', space=vmem, size = 0x400, scoped, tag = 'output window, operand 1']
    #allocation7 [shape = 's32[2]{0}', space=sflag, size = 0x8, scoped, tag = 'scoped memory for tfgridnet_forward.25']
    %8 = vsyncpa [#allocation3], 0
    %s9 = scalar_lea.sflag [#allocation3], 1
    %10 = vsyncpa %s9, 0
    %11 = vsyncpa [#allocation4], 0
    %s12 = scalar_lea.sflag [#allocation4], 1
    %13 = vsyncpa %s12, 0
    %14 = vsyncpa [#allocation7], 0
    %s15 = scalar_lea.sflag [#allocation7], 1
    %16 = vsyncpa %s15, 0
    loop: start=0, step=1, limit=4
    $region2: #{tfgridnet_forward.25} parent=1 // loop_pre_header
      _
    $region3: #{tfgridnet_forward.25} parent=1 // loop_header
      %s18 = sphi 0, %s22
      %p19 = scmp.ge.s32.totalorder %s18, 4
      %s25 = sphi 0, %s37
      %s26 = sphi 0, %s33
      %s27 = sphi 0, %s25
      %s28 = sphi 0, %s26
      %s29 = sphi 0, %s27
      %s30 = sphi 0, %s28
      %s42 = sphi 0, %s44
      %s45 = sphi 0, %s42
      %s46 = sphi 0, %s45
      %s62 = sphi 0, %s46
      %s68 = sphi 0, %s70
      %s71 = sphi 0, %s68
      %s72 = sphi 0, %s71
      %s88 = sphi 0, %s72
      %s94 = sphi 0, %s96
      %s97 = sphi 0, %s94
      %s98 = sphi 0, %s97
      %s114 = sphi 0, %s98
    $region4: #{tfgridnet_forward.25} parent=1 // loop_header_branch
      %21 = sbr.rel (%p19) target = $region8
    $region5: #{tfgridnet_forward.25} parent=1 // loop_body
      %s23 = ssub.s32 %s18, 1
      %s24 = ssub.s32 %s18, 2
      %s31 = sadd.s32 1, %s26
      %p32 = scmp.ge.s32.totalorder %s31, 1
      %s33 = scalar_select %p32, 0, %s31
      %s34 = sadd.s32 1, %s25
      %s35 = scalar_select %p32, %s34, %s25
      %p36 = scmp.ge.s32.totalorder %s35, 2
      %s37 = scalar_select %p36, 0, %s35
      %s38 = ssub.s32 %s25, %s37
      %s39 = ssub.s32 %s26, %s33
      %s40 = sor.u32 %s38, %s39
      %p41 = scmp.eq.s32.totalorder %s40, 0
      %s43 = sadd.s32 %s42, 1
      %s44 = scalar_select %p41, %s42, %s43
      %p47 = pneg %p41
      %p48 = scmp.eq.s32.totalorder %s18, 1
      %p49 = por %p47, %p48
      %p50 = scmp.ne.s32.totalorder %s42, %s45
      %p51 = scmp.eq.s32.totalorder %s18, 0
      %p52 = por %p50, %p51
      %p53 = scmp.ne.s32.totalorder %s42, %s45
      %p54 = scmp.eq.s32.totalorder %s23, 1
      %p55 = por %p53, %p54
      %p56 = scmp.ne.s32.totalorder %s45, %s46
      %p57 = scmp.eq.s32.totalorder %s23, 0
      %p58 = por %p56, %p57
      %p59 = scmp.ne.s32.totalorder %s45, %s46
      %p60 = scmp.eq.s32.totalorder %s24, 1
      %p61 = por %p59, %p60
      %p63 = scmp.ne.s32.totalorder %s46, %s62
      %p64 = scmp.eq.s32.totalorder %s24, 0
      %p65 = por %p63, %p64
      %s66 = ssub.s32 %s25, %s37
      %p67 = scmp.eq.s32.totalorder %s66, 0
      %s69 = sadd.s32 %s68, 1
      %s70 = scalar_select %p67, %s68, %s69
      %p73 = pneg %p67
      %p74 = scmp.eq.s32.totalorder %s18, 1
      %p75 = por %p73, %p74
      %p76 = scmp.ne.s32.totalorder %s68, %s71
      %p77 = scmp.eq.s32.totalorder %s18, 0
      %p78 = por %p76, %p77
      %p79 = scmp.ne.s32.totalorder %s68, %s71
      %p80 = scmp.eq.s32.totalorder %s23, 1
      %p81 = por %p79, %p80
      %p82 = scmp.ne.s32.totalorder %s71, %s72
      %p83 = scmp.eq.s32.totalorder %s23, 0
      %p84 = por %p82, %p83
      %p85 = scmp.ne.s32.totalorder %s71, %s72
      %p86 = scmp.eq.s32.totalorder %s24, 1
      %p87 = por %p85, %p86
      %p89 = scmp.ne.s32.totalorder %s72, %s88
      %p90 = scmp.eq.s32.totalorder %s24, 0
      %p91 = por %p89, %p90
      %s92 = ssub.s32 %s25, %s37
      %p93 = scmp.eq.s32.totalorder %s92, 0
      %s95 = sadd.s32 %s94, 1
      %s96 = scalar_select %p93, %s94, %s95
      %p99 = pneg %p93
      %p100 = scmp.eq.s32.totalorder %s18, 1
      %p101 = por %p99, %p100
      %p102 = scmp.ne.s32.totalorder %s94, %s97
      %p103 = scmp.eq.s32.totalorder %s18, 0
      %p104 = por %p102, %p103
      %p105 = scmp.ne.s32.totalorder %s94, %s97
      %p106 = scmp.eq.s32.totalorder %s23, 1
      %p107 = por %p105, %p106
      %p108 = scmp.ne.s32.totalorder %s97, %s98
      %p109 = scmp.eq.s32.totalorder %s23, 0
      %p110 = por %p108, %p109
      %p111 = scmp.ne.s32.totalorder %s97, %s98
      %p112 = scmp.eq.s32.totalorder %s24, 1
      %p113 = por %p111, %p112
      %p115 = scmp.ne.s32.totalorder %s98, %s114
      %p116 = scmp.eq.s32.totalorder %s24, 0
      %p117 = por %p115, %p116
      %p118 = scmp.le.s32.totalorder 1, %s18
      %p119 = scmp.lt.s32.totalorder %s18, 3
      %p120 = pnand %p118, %p119
      %p121 = pneg %p120
      // Predicated region
      $region9: #{tfgridnet_forward.25} parent=5 // pred_check
        _
      $region10: #{tfgridnet_forward.25} parent=5 // pred_check_branch
        %123 = sbr.rel (%p120) target = $region12
      $region11: #{tfgridnet_forward.25} parent=5 // pred_region
        %s124 = ssub.s32 %s18, 1
      $region12: #{tfgridnet_forward.25} parent=5 // pred_fallthru
        _
      %p125 = scmp.lt.s32.totalorder %s18, 2
      // Predicated region
      $region13: #{tfgridnet_forward.25} parent=5 // pred_check
        %p126 = pneg %p125
      $region14: #{tfgridnet_forward.25} parent=5 // pred_check_branch
        %128 = sbr.rel (%p126) target = $region16
      $region15: #{tfgridnet_forward.25} parent=5 // pred_region
        // Predicated region
        $region17: #{tfgridnet_forward.25} parent=15 // pred_check
          %p129 = pneg %p52
        $region18: #{tfgridnet_forward.25} parent=15 // pred_check_branch
          %131 = sbr.rel (%p129) target = $region20
        $region19: #{tfgridnet_forward.25} parent=15 // pred_region
          %s132 = sand.u32 %s42, 1
          %s133 = scalar_lea.sflag [#allocation3], %s132
          %s134 = sand.u32 %s42, 1
          %s135 = smul.addr %s134, 8
          %s136 = scalar_lea.vmem [#allocation2], %s135
          %s138 = ssub.s32 128, 128
          %139 = vsyncadd %s133, %s138
          %s140 = sadd.s32 %s26, %s25
          %s141 = smul.addr %s140, 128
          %s142 = scalar_lea.hbm %s0, %s141
          %s144 = sshll.u32 %s136, 4
          %s145 = int_to_ptr.vmem [resolvable:$true] %s144
          %147 = dma.hbm_to_vmem [thread:$0]  %s142, 128, %s145, %s133
        $region20: #{tfgridnet_forward.25} parent=15 // pred_fallthru
          _
      $region16: #{tfgridnet_forward.25} parent=5 // pred_fallthru
        _
      %p148 = scmp.le.s32.totalorder 1, %s18
      %p149 = scmp.lt.s32.totalorder %s18, 3
      %p150 = pnand %p148, %p149
      %p151 = pneg %p150
      // Predicated region
      $region21: #{tfgridnet_forward.25} parent=5 // pred_check
        _
      $region22: #{tfgridnet_forward.25} parent=5 // pred_check_branch
        %153 = sbr.rel (%p150) target = $region24
      $region23: #{tfgridnet_forward.25} parent=5 // pred_region
        %s154 = ssub.s32 %s18, 1
        %s155 = sand.u32 %s45, 1
        %s156 = scalar_lea.sflag [#allocation3], %s155
        %s157 = sand.u32 %s45, 1
        %s158 = smul.addr %s157, 8
        %s159 = scalar_lea.vmem [#allocation2], %s158
        // Predicated region
        $region25: #{tfgridnet_forward.25} parent=23 // pred_check
          %p160 = pneg %p58
        $region26: #{tfgridnet_forward.25} parent=23 // pred_check_branch
          %162 = sbr.rel (%p160) target = $region28
        $region27: #{tfgridnet_forward.25} parent=23 // pred_region
          %163 = dma.done %s156, 128
        $region28: #{tfgridnet_forward.25} parent=23 // pred_fallthru
          _
        %s164 = sand.u32 %s45, 1
        %s165 = scalar_lea.sflag [#allocation3], %s164
        %s166 = sand.u32 %s45, 1
        %s167 = smul.addr %s166, 8
        %s168 = scalar_lea.vmem [#allocation2], %s167
        %p169 = pneg %p58
        %p170 = pneg %p55
        %p171 = pneg %p84
        %p172 = pneg %p81
        %s173 = sand.u32 %s71, 1
        %s174 = scalar_lea.sflag [#allocation4], %s173
        %s175 = sand.u32 %s71, 1
        %s176 = scalar_lea.vmem [#allocation5], %s175
        %p177 = pneg %p110
        %p178 = pneg %p107
        %s179 = sand.u32 %s97, 1
        %s180 = scalar_lea.sflag [#allocation7], %s179
        %s181 = sand.u32 %s97, 1
        %s182 = scalar_lea.vmem [#allocation6], %s181
        %v183 = vld [vmem:[%s159] sm:$0xff]
        %s184 = smul.u32 %s28, 8
        %v185 = vlaneseq
        %v186 = vshrl.u32 %v185, 7
        %v187 = vstv %s184
        %v188 = vadd.s32 %v187, %v186
        %vm189 = vcmp.lt.s32.totalorder %v188, 8
        %v190 = vsel %vm189, %v183, 0.0
        %p191 = scmp.eq.s32.totalorder %s28, 0
        // Predicated region
        $region29: #{tfgridnet_forward.25} parent=23 // pred_check
          %p192 = pneg %p191
        $region30: #{tfgridnet_forward.25} parent=23 // pred_check_branch
          %194 = sbr.rel (%p192) target = $region32
        $region31: #{tfgridnet_forward.25} parent=23 // pred_region
          %vm195 = vcmask 581632
          %196 = vst.msk [vmem:[%s176] sm:$0x1] %vm195, 0.0
          %197 = vst.msk [vmem:[%s182] sm:$0x1] %vm195, 0.0
        $region32: #{tfgridnet_forward.25} parent=23 // pred_fallthru
          _
        %v198 = vld [vmem:[%s176] sm:$0x1]
        %vm199 = vcmask 588800
        %v200 = vsel %vm199, %v190, 0.0
        %v201 = vrot.slane %v200, 4
        %v202 = vadd.f32 %v200, %v201
        %v203 = vrot.slane %v202, 2
        %v204 = vadd.f32 %v202, %v203
        %v205 = vrot.slane %v204, 1
        %v206 = vadd.f32 %v204, %v205
        %v207 = vadd.f32 %v198, %v206
        %vm208 = vcmask 581632
        %209 = vst.msk [vmem:[%s176] sm:$0x1] %vm208, %v207
        %v210 = vld [vmem:[%s182] sm:$0x1]
        %v211 = vmul.f32 %v190, %v190
        %v212 = vsel %vm199, %v211, 0.0
        %v213 = vrot.slane %v212, 4
        %v214 = vadd.f32 %v212, %v213
        %v215 = vrot.slane %v214, 2
        %v216 = vadd.f32 %v214, %v215
        %v217 = vrot.slane %v216, 1
        %v218 = vadd.f32 %v216, %v217
        %v219 = vadd.f32 %v210, %v218
        %220 = vst.msk [vmem:[%s182] sm:$0x1] %vm208, %v219
        %s221 = sand.u32 %s71, 1
        %s222 = scalar_lea.sflag [#allocation4], %s221
        %s223 = sand.u32 %s71, 1
        %s224 = scalar_lea.vmem [#allocation5], %s223
        %s225 = sand.u32 %s97, 1
        %s226 = scalar_lea.sflag [#allocation7], %s225
        %s227 = sand.u32 %s97, 1
        %s228 = scalar_lea.vmem [#allocation6], %s227
        // Predicated region
        $region33: #{tfgridnet_forward.25} parent=23 // pred_check
          %p229 = pneg %p81
        $region34: #{tfgridnet_forward.25} parent=23 // pred_check_branch
          %231 = sbr.rel (%p229) target = $region36
        $region35: #{tfgridnet_forward.25} parent=23 // pred_region
          %s233 = ssub.s32 16, 16
          %234 = vsyncadd %s222, %s233
          %s235 = smul.addr %s27, 16
          %s236 = scalar_lea.hbm %s1, %s235
          %s238 = sshll.u32 %s224, 4
          %s239 = int_to_ptr.vmem [resolvable:$true] %s238
          %241 = dma.vmem_to_hbm [thread:$0]  %s239, 16, %s236, %s222
        $region36: #{tfgridnet_forward.25} parent=23 // pred_fallthru
          _
        // Predicated region
        $region37: #{tfgridnet_forward.25} parent=23 // pred_check
          %p242 = pneg %p107
        $region38: #{tfgridnet_forward.25} parent=23 // pred_check_branch
          %244 = sbr.rel (%p242) target = $region40
        $region39: #{tfgridnet_forward.25} parent=23 // pred_region
          %s246 = ssub.s32 16, 16
          %247 = vsyncadd %s226, %s246
          %s248 = smul.addr %s27, 16
          %s249 = scalar_lea.hbm %s2, %s248
          %s251 = sshll.u32 %s228, 4
          %s252 = int_to_ptr.vmem [resolvable:$true] %s251
          %254 = dma.vmem_to_hbm [thread:$0]  %s252, 16, %s249, %s226
        $region40: #{tfgridnet_forward.25} parent=23 // pred_fallthru
          _
      $region24: #{tfgridnet_forward.25} parent=5 // pred_fallthru
        _
      %p255 = scmp.le.s32.totalorder 2, %s18
      // Predicated region
      $region41: #{tfgridnet_forward.25} parent=5 // pred_check
        %p256 = pneg %p255
      $region42: #{tfgridnet_forward.25} parent=5 // pred_check_branch
        %258 = sbr.rel (%p256) target = $region44
      $region43: #{tfgridnet_forward.25} parent=5 // pred_region
        %s259 = ssub.s32 %s18, 2
        // Predicated region
        $region45: #{tfgridnet_forward.25} parent=43 // pred_check
          %p260 = pneg %p87
        $region46: #{tfgridnet_forward.25} parent=43 // pred_check_branch
          %262 = sbr.rel (%p260) target = $region48
        $region47: #{tfgridnet_forward.25} parent=43 // pred_region
          %s263 = sand.u32 %s72, 1
          %s264 = scalar_lea.sflag [#allocation4], %s263
          %s265 = sand.u32 %s72, 1
          %s266 = scalar_lea.vmem [#allocation5], %s265
          %267 = dma.done %s264, 16
        $region48: #{tfgridnet_forward.25} parent=43 // pred_fallthru
          _
        // Predicated region
        $region49: #{tfgridnet_forward.25} parent=43 // pred_check
          %p268 = pneg %p113
        $region50: #{tfgridnet_forward.25} parent=43 // pred_check_branch
          %270 = sbr.rel (%p268) target = $region52
        $region51: #{tfgridnet_forward.25} parent=43 // pred_region
          %s271 = sand.u32 %s98, 1
          %s272 = scalar_lea.sflag [#allocation7], %s271
          %s273 = sand.u32 %s98, 1
          %s274 = scalar_lea.vmem [#allocation6], %s273
          %275 = dma.done %s272, 16
        $region52: #{tfgridnet_forward.25} parent=43 // pred_fallthru
          _
      $region44: #{tfgridnet_forward.25} parent=5 // pred_fallthru
        _
    $region6: #{tfgridnet_forward.25} parent=1 // loop_footer
      %s22 = sadd.s32 1, %s18
    $region7: #{tfgridnet_forward.25} parent=1 // loop_footer_branch
      %17 = sbr.rel target = $region3
    $region8: #{tfgridnet_forward.25} parent=1 // loop_exit
      _
    %276 = vsyncpa [#allocation3], 1
    %s277 = scalar_lea.sflag [#allocation3], 1
    %278 = vsyncpa %s277, 1
    %279 = vsyncpa [#allocation4], 1
    %s280 = scalar_lea.sflag [#allocation4], 1
    %281 = vsyncpa %s280, 1
    %282 = vsyncpa [#allocation7], 1
    %s283 = scalar_lea.sflag [#allocation7], 1
    %284 = vsyncpa %s283, 1

// kernel: tfgridnet_forward.24
$region0: #{tfgridnet_forward.24}
  #allocation0 [shape = 'u32[]', space=smem, size = 0x4, offset = 0x4, fixed_abs, tag = 'smem constant byte address 0x4 - core index']
  #allocation1 [shape = 'u32[144,128]{1,0:T(1,128)}', space=vmem, size = 0x12000, scoped, tag = 'internal scratch']
  %s0 = inlined_call_operand.hbm [shape: f32[144,18], index: 0, kind: input, shape index: {}]
  %s1 = inlined_call_operand.hbm [shape: bf16[18,8], index: 1, kind: input, shape index: {}]
  %s2 = inlined_call_operand.hbm [shape: f32[1,8], index: 2, kind: input, shape index: {}]
  %s3 = inlined_call_operand.hbm [shape: f32[144,8], index: 3, kind: output, shape index: {}]
  %s4 = sld [smem:[#allocation0]]
  $region34: #{tfgridnet_forward.24} parent=0
    _
  %s6 = ssub.s32 1, %s4
  %s7 = scalar_select 0, %s6, %s4
  $region1: #{tfgridnet_forward.24} parent=0
    #allocation2 [shape = 'u8[73728]{0}', space=vmem, size = 0x12000, scoped, tag = 'input window, operand 0, single buffered']
    #allocation3 [shape = 's32[1]{0}', space=sflag, size = 0x4, scoped, tag = 'scoped memory for tfgridnet_forward.24']
    #allocation4 [shape = 's32[1]{0}', space=sflag, size = 0x4, scoped, tag = 'scoped memory for tfgridnet_forward.24']
    #allocation5 [shape = 'u8[6144]{0}', space=vmem, size = 0x1800, scoped, tag = 'input window, operand 1, single buffered']
    #allocation6 [shape = 's32[1]{0}', space=sflag, size = 0x4, scoped, tag = 'scoped memory for tfgridnet_forward.24']
    #allocation7 [shape = 'u8[512]{0}', space=vmem, size = 0x400, scoped, tag = 'input window, operand 2, single buffered']
    #allocation8 [shape = 'u8[73728]{0}', space=vmem, size = 0x12000, scoped, tag = 'output window, operand 0, single buffered']
    %8 = vsyncpa [#allocation3], 0
    %9 = vsyncpa [#allocation6], 0
    %10 = vsyncpa [#allocation4], 0
    // Predicated region
    $region2: #{tfgridnet_forward.24} parent=1 // pred_check
      _
    $region3: #{tfgridnet_forward.24} parent=1 // pred_check_branch
      %12 = sbr.rel (0) target = $region5
    $region4: #{tfgridnet_forward.24} parent=1 // pred_region
      %s14 = ssub.s32 2304, 2304
      %15 = vsyncadd [#allocation3], %s14
      %s16 = sshll.u32 [#allocation2], 4
      %s17 = int_to_ptr.vmem [resolvable:$true] %s16
      %22 = dma.hbm_to_vmem [thread:$0]  %s0, 2304, %s17, [#allocation3], 128, 128, 8
    $region5: #{tfgridnet_forward.24} parent=1 // pred_fallthru
      _
    // Predicated region
    $region6: #{tfgridnet_forward.24} parent=1 // pred_check
      _
    $region7: #{tfgridnet_forward.24} parent=1 // pred_check_branch
      %24 = sbr.rel (0) target = $region9
    $region8: #{tfgridnet_forward.24} parent=1 // pred_region
      %s26 = ssub.s32 192, 192
      %27 = vsyncadd [#allocation6], %s26
      %s28 = sshll.u32 [#allocation5], 4
      %s29 = int_to_ptr.vmem [resolvable:$true] %s28
      %34 = dma.hbm_to_vmem [thread:$0]  %s1, 192, %s29, [#allocation6], 64, 64, 4
    $region9: #{tfgridnet_forward.24} parent=1 // pred_fallthru
      _
    // Predicated region
    $region10: #{tfgridnet_forward.24} parent=1 // pred_check
      _
    $region11: #{tfgridnet_forward.24} parent=1 // pred_check_branch
      %36 = sbr.rel (0) target = $region13
    $region12: #{tfgridnet_forward.24} parent=1 // pred_region
      %s38 = ssub.s32 16, 16
      %39 = vsyncadd [#allocation6], %s38
      %s41 = sshll.u32 [#allocation7], 4
      %s42 = int_to_ptr.vmem [resolvable:$true] %s41
      %44 = dma.hbm_to_vmem [thread:$0]  %s2, 16, %s42, [#allocation6]
    $region13: #{tfgridnet_forward.24} parent=1 // pred_fallthru
      _
    // Predicated region
    $region14: #{tfgridnet_forward.24} parent=1 // pred_check
      _
    $region15: #{tfgridnet_forward.24} parent=1 // pred_check_branch
      %46 = sbr.rel (0) target = $region17
    $region16: #{tfgridnet_forward.24} parent=1 // pred_region
      %47 = dma.done [#allocation3], 2304
    $region17: #{tfgridnet_forward.24} parent=1 // pred_fallthru
      _
    // Predicated region
    $region18: #{tfgridnet_forward.24} parent=1 // pred_check
      _
    $region19: #{tfgridnet_forward.24} parent=1 // pred_check_branch
      %49 = sbr.rel (0) target = $region21
    $region20: #{tfgridnet_forward.24} parent=1 // pred_region
      %50 = dma.done [#allocation6], 192
    $region21: #{tfgridnet_forward.24} parent=1 // pred_fallthru
      _
    // Predicated region
    $region22: #{tfgridnet_forward.24} parent=1 // pred_check
      _
    $region23: #{tfgridnet_forward.24} parent=1 // pred_check_branch
      %52 = sbr.rel (0) target = $region25
    $region24: #{tfgridnet_forward.24} parent=1 // pred_region
      %53 = dma.done [#allocation6], 16
    $region25: #{tfgridnet_forward.24} parent=1 // pred_fallthru
      _
    %v55 = vld [vmem:[#allocation2] sm:$0xff]
    %v56 = vld [vmem:[#allocation2 + $0x8] sm:$0xff]
    %v57 = vld [vmem:[#allocation2 + $0x10] sm:$0xff]
    %v58 = vld [vmem:[#allocation2 + $0x18] sm:$0xff]
    %v59 = vld [vmem:[#allocation2 + $0x20] sm:$0xff]
    %v60 = vld [vmem:[#allocation2 + $0x28] sm:$0xff]
    %v61 = vld [vmem:[#allocation2 + $0x30] sm:$0xff]
    %v62 = vld [vmem:[#allocation2 + $0x38] sm:$0xff]
    %v63 = vld [vmem:[#allocation2 + $0x40] sm:$0xff]
    %v64 = vld [vmem:[#allocation2 + $0x48] sm:$0xff]
    %v65 = vld [vmem:[#allocation2 + $0x50] sm:$0xff]
    %v66 = vld [vmem:[#allocation2 + $0x58] sm:$0xff]
    %v67 = vld [vmem:[#allocation2 + $0x60] sm:$0xff]
    %v68 = vld [vmem:[#allocation2 + $0x68] sm:$0xff]
    %v69 = vld [vmem:[#allocation2 + $0x70] sm:$0xff]
    %v70 = vld [vmem:[#allocation2 + $0x78] sm:$0xff]
    %v71 = vld [vmem:[#allocation2 + $0x80] sm:$0xff]
    %v72 = vld [vmem:[#allocation2 + $0x88] sm:$0xff]
    %v73 = vpack.c.bf16 %v56, %v55
    %v74 = vpack.c.bf16 %v58, %v57
    %v75 = vpack.c.bf16 %v60, %v59
    %v76 = vpack.c.bf16 %v62, %v61
    %v77 = vpack.c.bf16 %v64, %v63
    %v78 = vpack.c.bf16 %v66, %v65
    %v79 = vpack.c.bf16 %v68, %v67
    %v80 = vpack.c.bf16 %v70, %v69
    %v81 = vpack.c.bf16 %v72, %v71
    %v82 = vld [vmem:[#allocation5] sm:$0xf]
    %v83 = vld [vmem:[#allocation5 + $0x4] sm:$0xf]
    %v84 = vld [vmem:[#allocation5 + $0x8] sm:$0x1]
    %v85 = vld [vmem:[#allocation7] sm:$0x1]
    %v87 = vlaneseq
    %v88 = vshrl.u32 %v87, 7
    %v89 = vsub.s32 0, %v88
    %v90 = vrot.slane %v85, %v89
    %v95 = vunpack.c.l.b16 %v82
    %v96 = vunpack.c.l.b16 %v83
    %v97 = vunpack.c.l.b16 %v84
    %v98 = vpack.c.b16 %v96, %v95
    %v99 = vpack.c.b16 %v97, %v97
    %vm101 = vcmask 146432
    %v103 = vsel %vm101, %v73, 0
    %v106 = vsel %vm101, %v74, 0
    %v109 = vsel %vm101, %v75, 0
    %v112 = vsel %vm101, %v76, 0
    %v115 = vsel %vm101, %v77, 0
    %v118 = vsel %vm101, %v78, 0
    %v121 = vsel %vm101, %v79, 0
    %v124 = vsel %vm101, %v80, 0
    %v127 = vsel %vm101, %v81, 0
    %vm129 = vcmask 1040384
    %v131 = vsel %vm129, %v99, 0
    %133 = vmatprep.subr.bf16.mxu0 0
    %134 = vmatpush1.bf16.msra.mxu0 %v98
    %135 = vmatprep.subr.bf16.mxu0 0
    %136 = vmatpush1.bf16.msra.mxu0 %v131
    %137 = vmatprep.subr.bf16.mxu0 0
    %138 = vmatpush1.bf16.msra.mxu0 0
    %139 = vmatprep.subr.bf16.mxu0 0
    %140 = vmatpush1.bf16.msra.mxu0 0
    %141 = vmatprep.subr.bf16.mxu0 0
    %142 = vmatpush1.bf16.msra.mxu0 0
    %143 = vmatprep.subr.bf16.mxu0 0
    %144 = vmatpush1.bf16.msra.mxu0 0
    %145 = vmatprep.subr.bf16.mxu0 0
    %146 = vmatpush1.bf16.msra.mxu0 0
    %147 = vmatprep.subr.bf16.mxu0 0
    %148 = vmatpush1.bf16.msra.mxu0 0
    %149 = vmatprep.subr.bf16.mxu0 0
    %150 = vmatpush1.bf16.msra.mxu0 0
    %151 = vmatprep.subr.bf16.mxu0 0
    %152 = vmatpush1.bf16.msra.mxu0 0
    %153 = vmatprep.subr.bf16.mxu0 0
    %154 = vmatpush1.bf16.msra.mxu0 0
    %155 = vmatprep.subr.bf16.mxu0 0
    %156 = vmatpush1.bf16.msra.mxu0 0
    %157 = vmatprep.subr.bf16.mxu0 0
    %158 = vmatpush1.bf16.msra.mxu0 0
    %159 = vmatprep.subr.bf16.mxu0 0
    %160 = vmatpush1.bf16.msra.mxu0 0
    %161 = vmatprep.subr.bf16.mxu0 0
    %162 = vmatpush1.bf16.msra.mxu0 0
    %163 = vmatprep.subr.bf16.mxu0 0
    %164 = vmatpush1.bf16.msra.mxu0 0
    %165 = vmatprep.mubr.bf16.mxu0 0
    %166 = vmatmul.mubr.bf16.gmra.mrb[0].mxu0 %v103
    %v167 = vpop.f32.mrb[0].mxu0
    %v168 = vadd.f32 %v90, %v167
    %v169 = vpop.f32.mrb[0].mxu0
    %v170 = vpop.f32.mrb[0].mxu0
    %v171 = vadd.f32 %v90, %v170
    %v172 = vpop.f32.mrb[0].mxu0
    %173 = vmatprep.mubr.bf16.mxu0 0
    %174 = vmatmul.mubr.bf16.gmra.mrb[0].mxu0 %v106
    %v175 = vpop.f32.mrb[0].mxu0
    %v176 = vadd.f32 %v90, %v175
    %v177 = vpop.f32.mrb[0].mxu0
    %v178 = vpop.f32.mrb[0].mxu0
    %v179 = vadd.f32 %v90, %v178
    %v180 = vpop.f32.mrb[0].mxu0
    %181 = vmatprep.mubr.bf16.mxu0 0
    %182 = vmatmul.mubr.bf16.gmra.mrb[0].mxu0 %v109
    %v183 = vpop.f32.mrb[0].mxu0
    %v184 = vadd.f32 %v90, %v183
    %v185 = vpop.f32.mrb[0].mxu0
    %v186 = vpop.f32.mrb[0].mxu0
    %v187 = vadd.f32 %v90, %v186
    %v188 = vpop.f32.mrb[0].mxu0
    %189 = vmatprep.mubr.bf16.mxu0 0
    %190 = vmatmul.mubr.bf16.gmra.mrb[0].mxu0 %v112
    %v191 = vpop.f32.mrb[0].mxu0
    %v192 = vadd.f32 %v90, %v191
    %v193 = vpop.f32.mrb[0].mxu0
    %v194 = vpop.f32.mrb[0].mxu0
    %v195 = vadd.f32 %v90, %v194
    %v196 = vpop.f32.mrb[0].mxu0
    %197 = vmatprep.mubr.bf16.mxu0 0
    %198 = vmatmul.mubr.bf16.gmra.mrb[0].mxu0 %v115
    %v199 = vpop.f32.mrb[0].mxu0
    %v200 = vadd.f32 %v90, %v199
    %v201 = vpop.f32.mrb[0].mxu0
    %v202 = vpop.f32.mrb[0].mxu0
    %v203 = vadd.f32 %v90, %v202
    %v204 = vpop.f32.mrb[0].mxu0
    %205 = vmatprep.mubr.bf16.mxu0 0
    %206 = vmatmul.mubr.bf16.gmra.mrb[0].mxu0 %v118
    %v207 = vpop.f32.mrb[0].mxu0
    %v208 = vadd.f32 %v90, %v207
    %v209 = vpop.f32.mrb[0].mxu0
    %v210 = vpop.f32.mrb[0].mxu0
    %v211 = vadd.f32 %v90, %v210
    %v212 = vpop.f32.mrb[0].mxu0
    %213 = vmatprep.mubr.bf16.mxu0 0
    %214 = vmatmul.mubr.bf16.gmra.mrb[0].mxu0 %v121
    %v215 = vpop.f32.mrb[0].mxu0
    %v216 = vadd.f32 %v90, %v215
    %v217 = vpop.f32.mrb[0].mxu0
    %v218 = vpop.f32.mrb[0].mxu0
    %v219 = vadd.f32 %v90, %v218
    %v220 = vpop.f32.mrb[0].mxu0
    %221 = vmatprep.mubr.bf16.mxu0 0
    %222 = vmatmul.mubr.bf16.gmra.mrb[0].mxu0 %v124
    %v223 = vpop.f32.mrb[0].mxu0
    %v224 = vadd.f32 %v90, %v223
    %v225 = vpop.f32.mrb[0].mxu0
    %v226 = vpop.f32.mrb[0].mxu0
    %v227 = vadd.f32 %v90, %v226
    %v228 = vpop.f32.mrb[0].mxu0
    %229 = vmatprep.mubr.bf16.mxu0 0
    %230 = vmatmul.mubr.bf16.gmra.mrb[0].mxu0 %v127
    %v231 = vpop.f32.mrb[0].mxu0
    %v232 = vadd.f32 %v90, %v231
    %v233 = vpop.f32.mrb[0].mxu0
    %v234 = vpop.f32.mrb[0].mxu0
    %v235 = vadd.f32 %v90, %v234
    %v236 = vpop.f32.mrb[0].mxu0
    %237 = vdwg.mxu0
    %vm238 = vcmask 64512
    %239 = vst.msk [vmem:[#allocation8] sm:$0xff] %vm238, %v168
    %240 = vst.msk [vmem:[#allocation8 + $0x8] sm:$0xff] %vm238, %v171
    %241 = vst.msk [vmem:[#allocation8 + $0x10] sm:$0xff] %vm238, %v176
    %242 = vst.msk [vmem:[#allocation8 + $0x18] sm:$0xff] %vm238, %v179
    %243 = vst.msk [vmem:[#allocation8 + $0x20] sm:$0xff] %vm238, %v184
    %244 = vst.msk [vmem:[#allocation8 + $0x28] sm:$0xff] %vm238, %v187
    %245 = vst.msk [vmem:[#allocation8 + $0x30] sm:$0xff] %vm238, %v192
    %246 = vst.msk [vmem:[#allocation8 + $0x38] sm:$0xff] %vm238, %v195
    %247 = vst.msk [vmem:[#allocation8 + $0x40] sm:$0xff] %vm238, %v200
    %248 = vst.msk [vmem:[#allocation8 + $0x48] sm:$0xff] %vm238, %v203
    %249 = vst.msk [vmem:[#allocation8 + $0x50] sm:$0xff] %vm238, %v208
    %250 = vst.msk [vmem:[#allocation8 + $0x58] sm:$0xff] %vm238, %v211
    %251 = vst.msk [vmem:[#allocation8 + $0x60] sm:$0xff] %vm238, %v216
    %252 = vst.msk [vmem:[#allocation8 + $0x68] sm:$0xff] %vm238, %v219
    %253 = vst.msk [vmem:[#allocation8 + $0x70] sm:$0xff] %vm238, %v224
    %254 = vst.msk [vmem:[#allocation8 + $0x78] sm:$0xff] %vm238, %v227
    %255 = vst.msk [vmem:[#allocation8 + $0x80] sm:$0xff] %vm238, %v232
    %256 = vst.msk [vmem:[#allocation8 + $0x88] sm:$0xff] %vm238, %v235
    // Predicated region
    $region26: #{tfgridnet_forward.24} parent=1 // pred_check
      _
    $region27: #{tfgridnet_forward.24} parent=1 // pred_check_branch
      %258 = sbr.rel (0) target = $region29
    $region28: #{tfgridnet_forward.24} parent=1 // pred_region
      %s260 = ssub.s32 2304, 2304
      %261 = vsyncadd [#allocation4], %s260
      %s262 = sshll.u32 [#allocation8], 4
      %s263 = int_to_ptr.vmem [resolvable:$true] %s262
      %268 = dma.vmem_to_hbm [thread:$0]  %s263, 2304, %s3, [#allocation4], 128, 128, 8
    $region29: #{tfgridnet_forward.24} parent=1 // pred_fallthru
      _
    // Predicated region
    $region30: #{tfgridnet_forward.24} parent=1 // pred_check
      _
    $region31: #{tfgridnet_forward.24} parent=1 // pred_check_branch
      %270 = sbr.rel (0) target = $region33
    $region32: #{tfgridnet_forward.24} parent=1 // pred_region
      %271 = dma.done [#allocation4], 2304
    $region33: #{tfgridnet_forward.24} parent=1 // pred_fallthru
      _
    %272 = vsyncpa [#allocation3], 1
    %273 = vsyncpa [#allocation6], 1
    %274 = vsyncpa [#allocation4], 1

// kernel: tfgridnet_forward.26
$region0: #{tfgridnet_forward.26}
  #allocation0 [shape = 'u32[]', space=smem, size = 0x4, offset = 0x4, fixed_abs, tag = 'smem constant byte address 0x4 - core index']
  #allocation1 [shape = 'u32[144,128]{1,0:T(1,128)}', space=vmem, size = 0x12000, scoped, tag = 'internal scratch']
  %s0 = inlined_call_operand.hbm [shape: f32[2,8,72], index: 0, kind: input, shape index: {}]
  %s1 = inlined_call_operand.hbm [shape: f32[2,1,1], index: 1, kind: input, shape index: {}]
  %s2 = inlined_call_operand.hbm [shape: f32[2,1,1], index: 2, kind: input, shape index: {}]
  %s3 = inlined_call_operand.hbm [shape: f32[1,1,72], index: 3, kind: input, shape index: {}]
  %s4 = inlined_call_operand.hbm [shape: f32[1,1,72], index: 4, kind: input, shape index: {}]
  %s5 = inlined_call_operand.hbm [shape: f32[2,8,72], index: 5, kind: output, shape index: {}]
  %s6 = sld [smem:[#allocation0]]
  $region73: #{tfgridnet_forward.26} parent=0
    _
  %s8 = ssub.s32 1, %s6
  %s9 = scalar_select 0, %s8, %s6
  $region1: #{tfgridnet_forward.26} parent=0
    #allocation2 [shape = 'u8[8192]{0}', space=vmem, size = 0x2000, scoped, tag = 'input window, operand 0']
    #allocation3 [shape = 's32[2]{0}', space=sflag, size = 0x8, scoped, tag = 'scoped memory for tfgridnet_forward.26']
    #allocation4 [shape = 's32[2]{0}', space=sflag, size = 0x8, scoped, tag = 'scoped memory for tfgridnet_forward.26']
    #allocation5 [shape = 'u8[1024]{0}', space=vmem, size = 0x400, scoped, tag = 'input window, operand 1']
    #allocation6 [shape = 's32[2]{0}', space=sflag, size = 0x8, scoped, tag = 'scoped memory for tfgridnet_forward.26']
    #allocation7 [shape = 'u8[1024]{0}', space=vmem, size = 0x400, scoped, tag = 'input window, operand 2']
    #allocation8 [shape = 'u8[512]{0}', space=vmem, size = 0x400, scoped, tag = 'input window, operand 3, single buffered']
    #allocation9 [shape = 's32[1]{0}', space=sflag, size = 0x4, scoped, tag = 'scoped memory for tfgridnet_forward.26']
    #allocation10 [shape = 'u8[512]{0}', space=vmem, size = 0x400, scoped, tag = 'input window, operand 4, single buffered']
    #allocation11 [shape = 'u8[8192]{0}', space=vmem, size = 0x2000, scoped, tag = 'output window, operand 0']
    %10 = vsyncpa [#allocation3], 0
    %s11 = scalar_lea.sflag [#allocation3], 1
    %12 = vsyncpa %s11, 0
    %13 = vsyncpa [#allocation6], 0
    %s14 = scalar_lea.sflag [#allocation6], 1
    %15 = vsyncpa %s14, 0
    %16 = vsyncpa [#allocation9], 0
    %17 = vsyncpa [#allocation4], 0
    %s18 = scalar_lea.sflag [#allocation4], 1
    %19 = vsyncpa %s18, 0
    loop: start=0, step=1, limit=4
    $region2: #{tfgridnet_forward.26} parent=1 // loop_pre_header
      _
    $region3: #{tfgridnet_forward.26} parent=1 // loop_header
      %s21 = sphi 0, %s25
      %p22 = scmp.ge.s32.totalorder %s21, 4
      %s28 = sphi 0, %s40
      %s29 = sphi 0, %s36
      %s30 = sphi 0, %s28
      %s31 = sphi 0, %s29
      %s32 = sphi 0, %s30
      %s33 = sphi 0, %s31
      %s45 = sphi 0, %s47
      %s48 = sphi 0, %s45
      %s49 = sphi 0, %s48
      %s65 = sphi 0, %s49
      %s71 = sphi 0, %s73
      %s74 = sphi 0, %s71
      %s75 = sphi 0, %s74
      %s91 = sphi 0, %s75
      %s97 = sphi 0, %s99
      %s100 = sphi 0, %s97
      %s101 = sphi 0, %s100
      %s117 = sphi 0, %s101
      %s121 = sphi 0, %s121
      %s123 = sphi 0, %s121
      %s124 = sphi 0, %s123
      %s138 = sphi 0, %s124
      %s142 = sphi 0, %s142
      %s144 = sphi 0, %s142
      %s145 = sphi 0, %s144
      %s159 = sphi 0, %s145
      %s167 = sphi 0, %s169
      %s170 = sphi 0, %s167
      %s171 = sphi 0, %s170
      %s187 = sphi 0, %s171
    $region4: #{tfgridnet_forward.26} parent=1 // loop_header_branch
      %24 = sbr.rel (%p22) target = $region8
    $region5: #{tfgridnet_forward.26} parent=1 // loop_body
      %s26 = ssub.s32 %s21, 1
      %s27 = ssub.s32 %s21, 2
      %s34 = sadd.s32 1, %s29
      %p35 = scmp.ge.s32.totalorder %s34, 1
      %s36 = scalar_select %p35, 0, %s34
      %s37 = sadd.s32 1, %s28
      %s38 = scalar_select %p35, %s37, %s28
      %p39 = scmp.ge.s32.totalorder %s38, 2
      %s40 = scalar_select %p39, 0, %s38
      %s41 = ssub.s32 %s28, %s40
      %s42 = ssub.s32 %s29, %s36
      %s43 = sor.u32 %s41, %s42
      %p44 = scmp.eq.s32.totalorder %s43, 0
      %s46 = sadd.s32 %s45, 1
      %s47 = scalar_select %p44, %s45, %s46
      %p50 = pneg %p44
      %p51 = scmp.eq.s32.totalorder %s21, 1
      %p52 = por %p50, %p51
      %p53 = scmp.ne.s32.totalorder %s45, %s48
      %p54 = scmp.eq.s32.totalorder %s21, 0
      %p55 = por %p53, %p54
      %p56 = scmp.ne.s32.totalorder %s45, %s48
      %p57 = scmp.eq.s32.totalorder %s26, 1
      %p58 = por %p56, %p57
      %p59 = scmp.ne.s32.totalorder %s48, %s49
      %p60 = scmp.eq.s32.totalorder %s26, 0
      %p61 = por %p59, %p60
      %p62 = scmp.ne.s32.totalorder %s48, %s49
      %p63 = scmp.eq.s32.totalorder %s27, 1
      %p64 = por %p62, %p63
      %p66 = scmp.ne.s32.totalorder %s49, %s65
      %p67 = scmp.eq.s32.totalorder %s27, 0
      %p68 = por %p66, %p67
      %s69 = ssub.s32 %s28, %s40
      %p70 = scmp.eq.s32.totalorder %s69, 0
      %s72 = sadd.s32 %s71, 1
      %s73 = scalar_select %p70, %s71, %s72
      %p76 = pneg %p70
      %p77 = scmp.eq.s32.totalorder %s21, 1
      %p78 = por %p76, %p77
      %p79 = scmp.ne.s32.totalorder %s71, %s74
      %p80 = scmp.eq.s32.totalorder %s21, 0
      %p81 = por %p79, %p80
      %p82 = scmp.ne.s32.totalorder %s71, %s74
      %p83 = scmp.eq.s32.totalorder %s26, 1
      %p84 = por %p82, %p83
      %p85 = scmp.ne.s32.totalorder %s74, %s75
      %p86 = scmp.eq.s32.totalorder %s26, 0
      %p87 = por %p85, %p86
      %p88 = scmp.ne.s32.totalorder %s74, %s75
      %p89 = scmp.eq.s32.totalorder %s27, 1
      %p90 = por %p88, %p89
      %p92 = scmp.ne.s32.totalorder %s75, %s91
      %p93 = scmp.eq.s32.totalorder %s27, 0
      %p94 = por %p92, %p93
      %s95 = ssub.s32 %s28, %s40
      %p96 = scmp.eq.s32.totalorder %s95, 0
      %s98 = sadd.s32 %s97, 1
      %s99 = scalar_select %p96, %s97, %s98
      %p102 = pneg %p96
      %p103 = scmp.eq.s32.totalorder %s21, 1
      %p104 = por %p102, %p103
      %p105 = scmp.ne.s32.totalorder %s97, %s100
      %p106 = scmp.eq.s32.totalorder %s21, 0
      %p107 = por %p105, %p106
      %p108 = scmp.ne.s32.totalorder %s97, %s100
      %p109 = scmp.eq.s32.totalorder %s26, 1
      %p110 = por %p108, %p109
      %p111 = scmp.ne.s32.totalorder %s100, %s101
      %p112 = scmp.eq.s32.totalorder %s26, 0
      %p113 = por %p111, %p112
      %p114 = scmp.ne.s32.totalorder %s100, %s101
      %p115 = scmp.eq.s32.totalorder %s27, 1
      %p116 = por %p114, %p115
      %p118 = scmp.ne.s32.totalorder %s101, %s117
      %p119 = scmp.eq.s32.totalorder %s27, 0
      %p120 = por %p118, %p119
      %s122 = sadd.s32 %s121, 1
      %p125 = scmp.eq.s32.totalorder %s21, 1
      %p126 = scmp.ne.s32.totalorder %s121, %s123
      %p127 = scmp.eq.s32.totalorder %s21, 0
      %p128 = por %p126, %p127
      %p129 = scmp.ne.s32.totalorder %s121, %s123
      %p130 = scmp.eq.s32.totalorder %s26, 1
      %p131 = por %p129, %p130
      %p132 = scmp.ne.s32.totalorder %s123, %s124
      %p133 = scmp.eq.s32.totalorder %s26, 0
      %p134 = por %p132, %p133
      %p135 = scmp.ne.s32.totalorder %s123, %s124
      %p136 = scmp.eq.s32.totalorder %s27, 1
      %p137 = por %p135, %p136
      %p139 = scmp.ne.s32.totalorder %s124, %s138
      %p140 = scmp.eq.s32.totalorder %s27, 0
      %p141 = por %p139, %p140
      %s143 = sadd.s32 %s142, 1
      %p146 = scmp.eq.s32.totalorder %s21, 1
      %p147 = scmp.ne.s32.totalorder %s142, %s144
      %p148 = scmp.eq.s32.totalorder %s21, 0
      %p149 = por %p147, %p148
      %p150 = scmp.ne.s32.totalorder %s142, %s144
      %p151 = scmp.eq.s32.totalorder %s26, 1
      %p152 = por %p150, %p151
      %p153 = scmp.ne.s32.totalorder %s144, %s145
      %p154 = scmp.eq.s32.totalorder %s26, 0
      %p155 = por %p153, %p154
      %p156 = scmp.ne.s32.totalorder %s144, %s145
      %p157 = scmp.eq.s32.totalorder %s27, 1
      %p158 = por %p156, %p157
      %p160 = scmp.ne.s32.totalorder %s145, %s159
      %p161 = scmp.eq.s32.totalorder %s27, 0
      %p162 = por %p160, %p161
      %s163 = ssub.s32 %s28, %s40
      %s164 = ssub.s32 %s29, %s36
      %s165 = sor.u32 %s163, %s164
      %p166 = scmp.eq.s32.totalorder %s165, 0
      %s168 = sadd.s32 %s167, 1
      %s169 = scalar_select %p166, %s167, %s168
      %p172 = pneg %p166
      %p173 = scmp.eq.s32.totalorder %s21, 1
      %p174 = por %p172, %p173
      %p175 = scmp.ne.s32.totalorder %s167, %s170
      %p176 = scmp.eq.s32.totalorder %s21, 0
      %p177 = por %p175, %p176
      %p178 = scmp.ne.s32.totalorder %s167, %s170
      %p179 = scmp.eq.s32.totalorder %s26, 1
      %p180 = por %p178, %p179
      %p181 = scmp.ne.s32.totalorder %s170, %s171
      %p182 = scmp.eq.s32.totalorder %s26, 0
      %p183 = por %p181, %p182
      %p184 = scmp.ne.s32.totalorder %s170, %s171
      %p185 = scmp.eq.s32.totalorder %s27, 1
      %p186 = por %p184, %p185
      %p188 = scmp.ne.s32.totalorder %s171, %s187
      %p189 = scmp.eq.s32.totalorder %s27, 0
      %p190 = por %p188, %p189
      %p191 = scmp.le.s32.totalorder 1, %s21
      %p192 = scmp.lt.s32.totalorder %s21, 3
      %p193 = pnand %p191, %p192
      %p194 = pneg %p193
      // Predicated region
      $region9: #{tfgridnet_forward.26} parent=5 // pred_check
        _
      $region10: #{tfgridnet_forward.26} parent=5 // pred_check_branch
        %196 = sbr.rel (%p193) target = $region12
      $region11: #{tfgridnet_forward.26} parent=5 // pred_region
        %s197 = ssub.s32 %s21, 1
        // Predicated region
        $region13: #{tfgridnet_forward.26} parent=11 // pred_check
          %p198 = pneg %p134
        $region14: #{tfgridnet_forward.26} parent=11 // pred_check_branch
          %200 = sbr.rel (%p198) target = $region16
        $region15: #{tfgridnet_forward.26} parent=11 // pred_region
          %s202 = ssub.s32 16, 16
          %203 = vsyncadd [#allocation9], %s202
          %s205 = sshll.u32 [#allocation8], 4
          %s206 = int_to_ptr.vmem [resolvable:$true] %s205
          %208 = dma.hbm_to_vmem [thread:$0]  %s3, 16, %s206, [#allocation9]
        $region16: #{tfgridnet_forward.26} parent=11 // pred_fallthru
          _
        // Predicated region
        $region17: #{tfgridnet_forward.26} parent=11 // pred_check
          %p209 = pneg %p155
        $region18: #{tfgridnet_forward.26} parent=11 // pred_check_branch
          %211 = sbr.rel (%p209) target = $region20
        $region19: #{tfgridnet_forward.26} parent=11 // pred_region
          %s213 = ssub.s32 16, 16
          %214 = vsyncadd [#allocation9], %s213
          %s216 = sshll.u32 [#allocation10], 4
          %s217 = int_to_ptr.vmem [resolvable:$true] %s216
          %219 = dma.hbm_to_vmem [thread:$0]  %s4, 16, %s217, [#allocation9]
        $region20: #{tfgridnet_forward.26} parent=11 // pred_fallthru
          _
      $region12: #{tfgridnet_forward.26} parent=5 // pred_fallthru
        _
      %p220 = scmp.lt.s32.totalorder %s21, 2
      // Predicated region
      $region21: #{tfgridnet_forward.26} parent=5 // pred_check
        %p221 = pneg %p220
      $region22: #{tfgridnet_forward.26} parent=5 // pred_check_branch
        %223 = sbr.rel (%p221) target = $region24
      $region23: #{tfgridnet_forward.26} parent=5 // pred_region
        // Predicated region
        $region25: #{tfgridnet_forward.26} parent=23 // pred_check
          %p224 = pneg %p55
        $region26: #{tfgridnet_forward.26} parent=23 // pred_check_branch
          %226 = sbr.rel (%p224) target = $region28
        $region27: #{tfgridnet_forward.26} parent=23 // pred_region
          %s227 = sand.u32 %s45, 1
          %s228 = scalar_lea.sflag [#allocation3], %s227
          %s229 = sand.u32 %s45, 1
          %s230 = smul.addr %s229, 8
          %s231 = scalar_lea.vmem [#allocation2], %s230
          %s233 = ssub.s32 128, 128
          %234 = vsyncadd %s228, %s233
          %s235 = sadd.s32 %s29, %s28
          %s236 = smul.addr %s235, 128
          %s237 = scalar_lea.hbm %s0, %s236
          %s239 = sshll.u32 %s231, 4
          %s240 = int_to_ptr.vmem [resolvable:$true] %s239
          %242 = dma.hbm_to_vmem [thread:$0]  %s237, 128, %s240, %s228
        $region28: #{tfgridnet_forward.26} parent=23 // pred_fallthru
          _
        // Predicated region
        $region29: #{tfgridnet_forward.26} parent=23 // pred_check
          %p243 = pneg %p81
        $region30: #{tfgridnet_forward.26} parent=23 // pred_check_branch
          %245 = sbr.rel (%p243) target = $region32
        $region31: #{tfgridnet_forward.26} parent=23 // pred_region
          %s246 = sand.u32 %s21, 1
          %s247 = scalar_lea.sflag [#allocation6], %s246
          %s248 = sand.u32 %s71, 1
          %s249 = scalar_lea.vmem [#allocation5], %s248
          %s251 = ssub.s32 16, 16
          %252 = vsyncadd %s247, %s251
          %s253 = smul.addr %s28, 16
          %s254 = scalar_lea.hbm %s1, %s253
          %s256 = sshll.u32 %s249, 4
          %s257 = int_to_ptr.vmem [resolvable:$true] %s256
          %259 = dma.hbm_to_vmem [thread:$0]  %s254, 16, %s257, %s247
        $region32: #{tfgridnet_forward.26} parent=23 // pred_fallthru
          _
        // Predicated region
        $region33: #{tfgridnet_forward.26} parent=23 // pred_check
          %p260 = pneg %p107
        $region34: #{tfgridnet_forward.26} parent=23 // pred_check_branch
          %262 = sbr.rel (%p260) target = $region36
        $region35: #{tfgridnet_forward.26} parent=23 // pred_region
          %s263 = sand.u32 %s21, 1
          %s264 = scalar_lea.sflag [#allocation6], %s263
          %s265 = sand.u32 %s97, 1
          %s266 = scalar_lea.vmem [#allocation7], %s265
          %s268 = ssub.s32 16, 16
          %269 = vsyncadd %s264, %s268
          %s270 = smul.addr %s28, 16
          %s271 = scalar_lea.hbm %s2, %s270
          %s273 = sshll.u32 %s266, 4
          %s274 = int_to_ptr.vmem [resolvable:$true] %s273
          %276 = dma.hbm_to_vmem [thread:$0]  %s271, 16, %s274, %s264
        $region36: #{tfgridnet_forward.26} parent=23 // pred_fallthru
          _
      $region24: #{tfgridnet_forward.26} parent=5 // pred_fallthru
        _
      %p277 = scmp.le.s32.totalorder 1, %s21
      %p278 = scmp.lt.s32.totalorder %s21, 3
      %p279 = pnand %p277, %p278
      %p280 = pneg %p279
      // Predicated region
      $region37: #{tfgridnet_forward.26} parent=5 // pred_check
        _
      $region38: #{tfgridnet_forward.26} parent=5 // pred_check_branch
        %282 = sbr.rel (%p279) target = $region40
      $region39: #{tfgridnet_forward.26} parent=5 // pred_region
        %s283 = ssub.s32 %s21, 1
        %s284 = sand.u32 %s48, 1
        %s285 = scalar_lea.sflag [#allocation3], %s284
        %s286 = sand.u32 %s48, 1
        %s287 = smul.addr %s286, 8
        %s288 = scalar_lea.vmem [#allocation2], %s287
        // Predicated region
        $region41: #{tfgridnet_forward.26} parent=39 // pred_check
          %p289 = pneg %p61
        $region42: #{tfgridnet_forward.26} parent=39 // pred_check_branch
          %291 = sbr.rel (%p289) target = $region44
        $region43: #{tfgridnet_forward.26} parent=39 // pred_region
          %292 = dma.done %s285, 128
        $region44: #{tfgridnet_forward.26} parent=39 // pred_fallthru
          _
        %s293 = sand.u32 %s26, 1
        %s294 = scalar_lea.sflag [#allocation6], %s293
        %s295 = sand.u32 %s74, 1
        %s296 = scalar_lea.vmem [#allocation5], %s295
        // Predicated region
        $region45: #{tfgridnet_forward.26} parent=39 // pred_check
          %p297 = pneg %p87
        $region46: #{tfgridnet_forward.26} parent=39 // pred_check_branch
          %299 = sbr.rel (%p297) target = $region48
        $region47: #{tfgridnet_forward.26} parent=39 // pred_region
          %300 = dma.done %s294, 16
        $region48: #{tfgridnet_forward.26} parent=39 // pred_fallthru
          _
        %s301 = sand.u32 %s26, 1
        %s302 = scalar_lea.sflag [#allocation6], %s301
        %s303 = sand.u32 %s100, 1
        %s304 = scalar_lea.vmem [#allocation7], %s303
        // Predicated region
        $region49: #{tfgridnet_forward.26} parent=39 // pred_check
          %p305 = pneg %p113
        $region50: #{tfgridnet_forward.26} parent=39 // pred_check_branch
          %307 = sbr.rel (%p305) target = $region52
        $region51: #{tfgridnet_forward.26} parent=39 // pred_region
          %308 = dma.done %s302, 16
        $region52: #{tfgridnet_forward.26} parent=39 // pred_fallthru
          _
        // Predicated region
        $region53: #{tfgridnet_forward.26} parent=39 // pred_check
          %p309 = pneg %p134
        $region54: #{tfgridnet_forward.26} parent=39 // pred_check_branch
          %311 = sbr.rel (%p309) target = $region56
        $region55: #{tfgridnet_forward.26} parent=39 // pred_region
          %312 = dma.done [#allocation9], 16
        $region56: #{tfgridnet_forward.26} parent=39 // pred_fallthru
          _
        // Predicated region
        $region57: #{tfgridnet_forward.26} parent=39 // pred_check
          %p313 = pneg %p155
        $region58: #{tfgridnet_forward.26} parent=39 // pred_check_branch
          %315 = sbr.rel (%p313) target = $region60
        $region59: #{tfgridnet_forward.26} parent=39 // pred_region
          %316 = dma.done [#allocation9], 16
        $region60: #{tfgridnet_forward.26} parent=39 // pred_fallthru
          _
        %s317 = sand.u32 %s48, 1
        %s318 = scalar_lea.sflag [#allocation3], %s317
        %s319 = sand.u32 %s48, 1
        %s320 = smul.addr %s319, 8
        %s321 = scalar_lea.vmem [#allocation2], %s320
        %p322 = pneg %p61
        %p323 = pneg %p58
        %s324 = sand.u32 %s26, 1
        %s325 = scalar_lea.sflag [#allocation6], %s324
        %s326 = sand.u32 %s74, 1
        %s327 = scalar_lea.vmem [#allocation5], %s326
        %p328 = pneg %p87
        %p329 = pneg %p84
        %s330 = sand.u32 %s26, 1
        %s331 = scalar_lea.sflag [#allocation6], %s330
        %s332 = sand.u32 %s100, 1
        %s333 = scalar_lea.vmem [#allocation7], %s332
        %p334 = pneg %p113
        %p335 = pneg %p110
        %p336 = pneg %p134
        %p337 = pneg %p131
        %p338 = pneg %p155
        %p339 = pneg %p152
        %p340 = pneg %p183
        %p341 = pneg %p180
        %s342 = sand.u32 %s170, 1
        %s343 = scalar_lea.sflag [#allocation4], %s342
        %s344 = sand.u32 %s170, 1
        %s345 = smul.addr %s344, 8
        %s346 = scalar_lea.vmem [#allocation11], %s345
        %v347 = vld [vmem:[%s288] sm:$0xff]
        %v348 = vld [vmem:[%s296] sm:$0x1]
        %v350 = vlaneseq
        %v351 = vshrl.u32 %v350, 7
        %v352 = vsub.s32 0, %v351
        %v353 = vrot.slane %v348, %v352
        %354 = vset.pattern.permute.xlu0 0
        %355 = vperm.xlu0 %354, %v353
        %v356 = vpop.permute.xlu0 %355
        %v358 = vsub.f32 %v347, %v356
        %v359 = vld [vmem:[%s304] sm:$0x1]
        %v361 = vlaneseq
        %v362 = vshrl.u32 %v361, 7
        %v363 = vsub.s32 0, %v362
        %v364 = vrot.slane %v359, %v363
        %365 = vset.pattern.permute.xlu0 0
        %366 = vperm.xlu0 %365, %v364
        %v367 = vpop.permute.xlu0 %366
        %v369 = vmul.f32 %v358, %v367
        %v370 = vld [vmem:[#allocation8] sm:$0x1]
        %v372 = vlaneseq
        %v373 = vshrl.u32 %v372, 7
        %v374 = vsub.s32 0, %v373
        %v375 = vrot.slane %v370, %v374
        %v377 = vmul.f32 %v369, %v375
        %v378 = vld [vmem:[#allocation10] sm:$0x1]
        %v380 = vlaneseq
        %v381 = vshrl.u32 %v380, 7
        %v382 = vsub.s32 0, %v381
        %v383 = vrot.slane %v378, %v382
        %v385 = vadd.f32 %v377, %v383
        %vm386 = vcmask 588800
        %387 = vst.msk [vmem:[%s346] sm:$0xff] %vm386, %v385
        %s388 = sand.u32 %s170, 1
        %s389 = scalar_lea.sflag [#allocation4], %s388
        %s390 = sand.u32 %s170, 1
        %s391 = smul.addr %s390, 8
        %s392 = scalar_lea.vmem [#allocation11], %s391
        // Predicated region
        $region61: #{tfgridnet_forward.26} parent=39 // pred_check
          %p393 = pneg %p180
        $region62: #{tfgridnet_forward.26} parent=39 // pred_check_branch
          %395 = sbr.rel (%p393) target = $region64
        $region63: #{tfgridnet_forward.26} parent=39 // pred_region
          %s397 = ssub.s32 128, 128
          %398 = vsyncadd %s389, %s397
          %s399 = sadd.s32 %s31, %s30
          %s400 = smul.addr %s399, 128
          %s401 = scalar_lea.hbm %s5, %s400
          %s403 = sshll.u32 %s392, 4
          %s404 = int_to_ptr.vmem [resolvable:$true] %s403
          %406 = dma.vmem_to_hbm [thread:$0]  %s404, 128, %s401, %s389
        $region64: #{tfgridnet_forward.26} parent=39 // pred_fallthru
          _
      $region40: #{tfgridnet_forward.26} parent=5 // pred_fallthru
        _
      %p407 = scmp.le.s32.totalorder 2, %s21
      // Predicated region
      $region65: #{tfgridnet_forward.26} parent=5 // pred_check
        %p408 = pneg %p407
      $region66: #{tfgridnet_forward.26} parent=5 // pred_check_branch
        %410 = sbr.rel (%p408) target = $region68
      $region67: #{tfgridnet_forward.26} parent=5 // pred_region
        %s411 = ssub.s32 %s21, 2
        // Predicated region
        $region69: #{tfgridnet_forward.26} parent=67 // pred_check
          %p412 = pneg %p186
        $region70: #{tfgridnet_forward.26} parent=67 // pred_check_branch
          %414 = sbr.rel (%p412) target = $region72
        $region71: #{tfgridnet_forward.26} parent=67 // pred_region
          %s415 = sand.u32 %s171, 1
          %s416 = scalar_lea.sflag [#allocation4], %s415
          %s417 = sand.u32 %s171, 1
          %s418 = smul.addr %s417, 8
          %s419 = scalar_lea.vmem [#allocation11], %s418
          %420 = dma.done %s416, 128
        $region72: #{tfgridnet_forward.26} parent=67 // pred_fallthru
          _
      $region68: #{tfgridnet_forward.26} parent=5 // pred_fallthru
        _
    $region6: #{tfgridnet_forward.26} parent=1 // loop_footer
      %s25 = sadd.s32 1, %s21
    $region7: #{tfgridnet_forward.26} parent=1 // loop_footer_branch
      %20 = sbr.rel target = $region3
    $region8: #{tfgridnet_forward.26} parent=1 // loop_exit
      _
    %421 = vsyncpa [#allocation3], 1
    %s422 = scalar_lea.sflag [#allocation3], 1
    %423 = vsyncpa %s422, 1
    %424 = vsyncpa [#allocation6], 1
    %s425 = scalar_lea.sflag [#allocation6], 1
    %426 = vsyncpa %s425, 1
    %427 = vsyncpa [#allocation9], 1
    %428 = vsyncpa [#allocation4], 1
    %s429 = scalar_lea.sflag [#allocation4], 1
    %430 = vsyncpa %s429, 1

// kernel: tfgridnet_forward.27
$region0: #{tfgridnet_forward.27}
  #allocation0 [shape = 'u32[]', space=smem, size = 0x4, offset = 0x4, fixed_abs, tag = 'smem constant byte address 0x4 - core index']
  #allocation1 [shape = 'u32[144,128]{1,0:T(1,128)}', space=vmem, size = 0x12000, scoped, tag = 'internal scratch']
  %s0 = inlined_call_operand.hbm [shape: f32[48,32], index: 0, kind: input, shape index: {}]
  %s1 = inlined_call_operand.hbm [shape: f32[1,8], index: 1, kind: input, shape index: {}]
  %s2 = inlined_call_operand.hbm [shape: f32[1,8], index: 2, kind: input, shape index: {}]
  %s3 = inlined_call_operand.hbm [shape: bf16[32,64], index: 3, kind: input, shape index: {}]
  %s4 = inlined_call_operand.hbm [shape: f32[1,64], index: 4, kind: input, shape index: {}]
  %s5 = inlined_call_operand.hbm [shape: f32[48,64], index: 5, kind: output, shape index: {}]
  %s6 = sld [smem:[#allocation0]]
  $region50: #{tfgridnet_forward.27} parent=0
    _
  %s8 = ssub.s32 1, %s6
  %s9 = scalar_select 0, %s8, %s6
  $region1: #{tfgridnet_forward.27} parent=0
    #allocation2 [shape = 'u8[24576]{0}', space=vmem, size = 0x6000, scoped, tag = 'input window, operand 0, single buffered']
    #allocation3 [shape = 's32[1]{0}', space=sflag, size = 0x4, scoped, tag = 'scoped memory for tfgridnet_forward.27']
    #allocation4 [shape = 's32[1]{0}', space=sflag, size = 0x4, scoped, tag = 'scoped memory for tfgridnet_forward.27']
    #allocation5 [shape = 'u8[512]{0}', space=vmem, size = 0x400, scoped, tag = 'input window, operand 1, single buffered']
    #allocation6 [shape = 's32[1]{0}', space=sflag, size = 0x4, scoped, tag = 'scoped memory for tfgridnet_forward.27']
    #allocation7 [shape = 'u8[512]{0}', space=vmem, size = 0x400, scoped, tag = 'input window, operand 2, single buffered']
    #allocation8 [shape = 'u8[8192]{0}', space=vmem, size = 0x2000, scoped, tag = 'input window, operand 3, single buffered']
    #allocation9 [shape = 's32[1]{0}', space=sflag, size = 0x4, scoped, tag = 'scoped memory for tfgridnet_forward.27']
    #allocation10 [shape = 'u8[512]{0}', space=vmem, size = 0x400, scoped, tag = 'input window, operand 4, single buffered']
    #allocation11 [shape = 'u8[24576]{0}', space=vmem, size = 0x6000, scoped, tag = 'output window, operand 0, single buffered']
    %10 = vsyncpa [#allocation3], 0
    %11 = vsyncpa [#allocation6], 0
    %12 = vsyncpa [#allocation9], 0
    %13 = vsyncpa [#allocation4], 0
    // Predicated region
    $region2: #{tfgridnet_forward.27} parent=1 // pred_check
      _
    $region3: #{tfgridnet_forward.27} parent=1 // pred_check_branch
      %15 = sbr.rel (0) target = $region5
    $region4: #{tfgridnet_forward.27} parent=1 // pred_region
      %s17 = ssub.s32 768, 768
      %18 = vsyncadd [#allocation3], %s17
      %s19 = sshll.u32 [#allocation2], 4
      %s20 = int_to_ptr.vmem [resolvable:$true] %s19
      %25 = dma.hbm_to_vmem [thread:$0]  %s0, 768, %s20, [#allocation3], 128, 128, 8
    $region5: #{tfgridnet_forward.27} parent=1 // pred_fallthru
      _
    // Predicated region
    $region6: #{tfgridnet_forward.27} parent=1 // pred_check
      _
    $region7: #{tfgridnet_forward.27} parent=1 // pred_check_branch
      %27 = sbr.rel (0) target = $region9
    $region8: #{tfgridnet_forward.27} parent=1 // pred_region
      %s29 = ssub.s32 16, 16
      %30 = vsyncadd [#allocation6], %s29
      %s32 = sshll.u32 [#allocation5], 4
      %s33 = int_to_ptr.vmem [resolvable:$true] %s32
      %35 = dma.hbm_to_vmem [thread:$0]  %s1, 16, %s33, [#allocation6]
    $region9: #{tfgridnet_forward.27} parent=1 // pred_fallthru
      _
    // Predicated region
    $region10: #{tfgridnet_forward.27} parent=1 // pred_check
      _
    $region11: #{tfgridnet_forward.27} parent=1 // pred_check_branch
      %37 = sbr.rel (0) target = $region13
    $region12: #{tfgridnet_forward.27} parent=1 // pred_region
      %s39 = ssub.s32 16, 16
      %40 = vsyncadd [#allocation6], %s39
      %s42 = sshll.u32 [#allocation7], 4
      %s43 = int_to_ptr.vmem [resolvable:$true] %s42
      %45 = dma.hbm_to_vmem [thread:$0]  %s2, 16, %s43, [#allocation6]
    $region13: #{tfgridnet_forward.27} parent=1 // pred_fallthru
      _
    // Predicated region
    $region14: #{tfgridnet_forward.27} parent=1 // pred_check
      _
    $region15: #{tfgridnet_forward.27} parent=1 // pred_check_branch
      %47 = sbr.rel (0) target = $region17
    $region16: #{tfgridnet_forward.27} parent=1 // pred_region
      %s49 = ssub.s32 256, 256
      %50 = vsyncadd [#allocation9], %s49
      %s51 = sshll.u32 [#allocation8], 4
      %s52 = int_to_ptr.vmem [resolvable:$true] %s51
      %57 = dma.hbm_to_vmem [thread:$0]  %s3, 256, %s52, [#allocation9], 64, 64, 4
    $region17: #{tfgridnet_forward.27} parent=1 // pred_fallthru
      _
    // Predicated region
    $region18: #{tfgridnet_forward.27} parent=1 // pred_check
      _
    $region19: #{tfgridnet_forward.27} parent=1 // pred_check_branch
      %59 = sbr.rel (0) target = $region21
    $region20: #{tfgridnet_forward.27} parent=1 // pred_region
      %s61 = ssub.s32 16, 16
      %62 = vsyncadd [#allocation9], %s61
      %s64 = sshll.u32 [#allocation10], 4
      %s65 = int_to_ptr.vmem [resolvable:$true] %s64
      %67 = dma.hbm_to_vmem [thread:$0]  %s4, 16, %s65, [#allocation9]
    $region21: #{tfgridnet_forward.27} parent=1 // pred_fallthru
      _
    // Predicated region
    $region22: #{tfgridnet_forward.27} parent=1 // pred_check
      _
    $region23: #{tfgridnet_forward.27} parent=1 // pred_check_branch
      %69 = sbr.rel (0) target = $region25
    $region24: #{tfgridnet_forward.27} parent=1 // pred_region
      %70 = dma.done [#allocation3], 768
    $region25: #{tfgridnet_forward.27} parent=1 // pred_fallthru
      _
    // Predicated region
    $region26: #{tfgridnet_forward.27} parent=1 // pred_check
      _
    $region27: #{tfgridnet_forward.27} parent=1 // pred_check_branch
      %72 = sbr.rel (0) target = $region29
    $region28: #{tfgridnet_forward.27} parent=1 // pred_region
      %73 = dma.done [#allocation6], 16
    $region29: #{tfgridnet_forward.27} parent=1 // pred_fallthru
      _
    // Predicated region
    $region30: #{tfgridnet_forward.27} parent=1 // pred_check
      _
    $region31: #{tfgridnet_forward.27} parent=1 // pred_check_branch
      %75 = sbr.rel (0) target = $region33
    $region32: #{tfgridnet_forward.27} parent=1 // pred_region
      %76 = dma.done [#allocation6], 16
    $region33: #{tfgridnet_forward.27} parent=1 // pred_fallthru
      _
    // Predicated region
    $region34: #{tfgridnet_forward.27} parent=1 // pred_check
      _
    $region35: #{tfgridnet_forward.27} parent=1 // pred_check_branch
      %78 = sbr.rel (0) target = $region37
    $region36: #{tfgridnet_forward.27} parent=1 // pred_region
      %79 = dma.done [#allocation9], 256
    $region37: #{tfgridnet_forward.27} parent=1 // pred_fallthru
      _
    // Predicated region
    $region38: #{tfgridnet_forward.27} parent=1 // pred_check
      _
    $region39: #{tfgridnet_forward.27} parent=1 // pred_check_branch
      %81 = sbr.rel (0) target = $region41
    $region40: #{tfgridnet_forward.27} parent=1 // pred_region
      %82 = dma.done [#allocation9], 16
    $region41: #{tfgridnet_forward.27} parent=1 // pred_fallthru
      _
    %v84 = vld [vmem:[#allocation2] sm:$0xff]
    %v85 = vld [vmem:[#allocation2 + $0x8] sm:$0xff]
    %v86 = vld [vmem:[#allocation2 + $0x10] sm:$0xff]
    %v87 = vld [vmem:[#allocation2 + $0x18] sm:$0xff]
    %v88 = vld [vmem:[#allocation2 + $0x20] sm:$0xff]
    %v89 = vld [vmem:[#allocation2 + $0x28] sm:$0xff]
    %v90 = vld [vmem:[#allocation5] sm:$0x1]
    %v91 = vld [vmem:[#allocation7] sm:$0x1]
    %vm92 = vcmask 64512
    %v93 = vsel %vm92, %v84, 0.0
    %94 = vadd.xlane.f32.xlu0 %v93
    %v95 = vpop.xlane.xlu0 %94
    %v96 = vsel %vm92, %v85, 0.0
    %97 = vadd.xlane.f32.xlu0 %v96
    %v98 = vpop.xlane.xlu0 %97
    %v99 = vsel %vm92, %v86, 0.0
    %100 = vadd.xlane.f32.xlu0 %v99
    %v101 = vpop.xlane.xlu0 %100
    %v102 = vsel %vm92, %v87, 0.0
    %103 = vadd.xlane.f32.xlu0 %v102
    %v104 = vpop.xlane.xlu0 %103
    %v105 = vsel %vm92, %v88, 0.0
    %106 = vadd.xlane.f32.xlu0 %v105
    %v107 = vpop.xlane.xlu0 %106
    %v108 = vsel %vm92, %v89, 0.0
    %109 = vadd.xlane.f32.xlu0 %v108
    %v110 = vpop.xlane.xlu0 %109
    %v111 = vrcp.pop 8.0
    %v112 = vmul.f32 %v95, %v111
    %v113 = vmul.f32 %v98, %v111
    %v114 = vmul.f32 %v101, %v111
    %v115 = vmul.f32 %v104, %v111
    %v116 = vmul.f32 %v107, %v111
    %v117 = vmul.f32 %v110, %v111
    %v118 = vsub.f32 %v84, %v112
    %v119 = vsub.f32 %v85, %v113
    %v120 = vsub.f32 %v86, %v114
    %v121 = vsub.f32 %v87, %v115
    %v122 = vsub.f32 %v88, %v116
    %v123 = vsub.f32 %v89, %v117
    %v124 = vmul.f32 %v118, %v118
    %v125 = vmul.f32 %v119, %v119
    %v126 = vmul.f32 %v120, %v120
    %v127 = vmul.f32 %v121, %v121
    %v128 = vmul.f32 %v122, %v122
    %v129 = vmul.f32 %v123, %v123
    %v130 = vsel %vm92, %v124, 0.0
    %131 = vadd.xlane.f32.xlu0 %v130
    %v132 = vpop.xlane.xlu0 %131
    %v133 = vsel %vm92, %v125, 0.0
    %134 = vadd.xlane.f32.xlu0 %v133
    %v135 = vpop.xlane.xlu0 %134
    %v136 = vsel %vm92, %v126, 0.0
    %137 = vadd.xlane.f32.xlu0 %v136
    %v138 = vpop.xlane.xlu0 %137
    %v139 = vsel %vm92, %v127, 0.0
    %140 = vadd.xlane.f32.xlu0 %v139
    %v141 = vpop.xlane.xlu0 %140
    %v142 = vsel %vm92, %v128, 0.0
    %143 = vadd.xlane.f32.xlu0 %v142
    %v144 = vpop.xlane.xlu0 %143
    %v145 = vsel %vm92, %v129, 0.0
    %146 = vadd.xlane.f32.xlu0 %v145
    %v147 = vpop.xlane.xlu0 %146
    %v148 = vmul.f32 %v132, %v111
    %v149 = vmul.f32 %v135, %v111
    %v150 = vmul.f32 %v138, %v111
    %v151 = vmul.f32 %v141, %v111
    %v152 = vmul.f32 %v144, %v111
    %v153 = vmul.f32 %v147, %v111
    %v154 = vadd.f32 %v148, 1e-05
    %v155 = vadd.f32 %v149, 1e-05
    %v156 = vadd.f32 %v150, 1e-05
    %v157 = vadd.f32 %v151, 1e-05
    %v158 = vadd.f32 %v152, 1e-05
    %v159 = vadd.f32 %v153, 1e-05
    %v160 = vrsqrt.pop %v154
    %v161 = vrsqrt.pop %v155
    %v162 = vrsqrt.pop %v156
    %v163 = vrsqrt.pop %v157
    %v164 = vrsqrt.pop %v158
    %v165 = vrsqrt.pop %v159
    %v166 = vmul.f32 %v118, %v160
    %v167 = vmul.f32 %v119, %v161
    %v168 = vmul.f32 %v120, %v162
    %v169 = vmul.f32 %v121, %v163
    %v170 = vmul.f32 %v122, %v164
    %v171 = vmul.f32 %v123, %v165
    %v173 = vlaneseq
    %v174 = vshrl.u32 %v173, 7
    %v175 = vsub.s32 0, %v174
    %v176 = vrot.slane %v90, %v175
    %v178 = vmul.f32 %v166, %v176
    %v179 = vmul.f32 %v167, %v176
    %v180 = vmul.f32 %v168, %v176
    %v181 = vmul.f32 %v169, %v176
    %v182 = vmul.f32 %v170, %v176
    %v183 = vmul.f32 %v171, %v176
    %v185 = vlaneseq
    %v186 = vshrl.u32 %v185, 7
    %v187 = vsub.s32 0, %v186
    %v188 = vrot.slane %v91, %v187
    %v190 = vadd.f32 %v178, %v188
    %v191 = vadd.f32 %v179, %v188
    %v192 = vadd.f32 %v180, %v188
    %v193 = vadd.f32 %v181, %v188
    %v194 = vadd.f32 %v182, %v188
    %v195 = vadd.f32 %v183, %v188
    %202 = vrot.lane.b32.xlu0 %v84, 120
    %v203 = vpop.permute.xlu0 %202
    %204 = vrot.lane.b32.xlu0 %v85, 120
    %v205 = vpop.permute.xlu0 %204
    %206 = vrot.lane.b32.xlu0 %v86, 120
    %v207 = vpop.permute.xlu0 %206
    %208 = vrot.lane.b32.xlu0 %v87, 120
    %v209 = vpop.permute.xlu0 %208
    %210 = vrot.lane.b32.xlu0 %v88, 120
    %v211 = vpop.permute.xlu0 %210
    %212 = vrot.lane.b32.xlu0 %v89, 120
    %v213 = vpop.permute.xlu0 %212
    %v220 = vsel %vm92, %v203, 0.0
    %221 = vadd.xlane.f32.xlu0 %v220
    %v222 = vpop.xlane.xlu0 %221
    %v223 = vsel %vm92, %v205, 0.0
    %224 = vadd.xlane.f32.xlu0 %v223
    %v225 = vpop.xlane.xlu0 %224
    %v226 = vsel %vm92, %v207, 0.0
    %227 = vadd.xlane.f32.xlu0 %v226
    %v228 = vpop.xlane.xlu0 %227
    %v229 = vsel %vm92, %v209, 0.0
    %230 = vadd.xlane.f32.xlu0 %v229
    %v231 = vpop.xlane.xlu0 %230
    %v232 = vsel %vm92, %v211, 0.0
    %233 = vadd.xlane.f32.xlu0 %v232
    %v234 = vpop.xlane.xlu0 %233
    %v235 = vsel %vm92, %v213, 0.0
    %236 = vadd.xlane.f32.xlu0 %v235
    %v237 = vpop.xlane.xlu0 %236
    %v238 = vmul.f32 %v222, %v111
    %v239 = vmul.f32 %v225, %v111
    %v240 = vmul.f32 %v228, %v111
    %v241 = vmul.f32 %v231, %v111
    %v242 = vmul.f32 %v234, %v111
    %v243 = vmul.f32 %v237, %v111
    %v244 = vsub.f32 %v84, %v238
    %v245 = vsub.f32 %v85, %v239
    %v246 = vsub.f32 %v86, %v240
    %v247 = vsub.f32 %v87, %v241
    %v248 = vsub.f32 %v88, %v242
    %v249 = vsub.f32 %v89, %v243
    %v250 = vmul.f32 %v244, %v244
    %v251 = vmul.f32 %v245, %v245
    %v252 = vmul.f32 %v246, %v246
    %v253 = vmul.f32 %v247, %v247
    %v254 = vmul.f32 %v248, %v248
    %v255 = vmul.f32 %v249, %v249
    %262 = vrot.lane.b32.xlu0 %v250, 120
    %v263 = vpop.permute.xlu0 %262
    %264 = vrot.lane.b32.xlu0 %v251, 120
    %v265 = vpop.permute.xlu0 %264
    %266 = vrot.lane.b32.xlu0 %v252, 120
    %v267 = vpop.permute.xlu0 %266
    %268 = vrot.lane.b32.xlu0 %v253, 120
    %v269 = vpop.permute.xlu0 %268
    %270 = vrot.lane.b32.xlu0 %v254, 120
    %v271 = vpop.permute.xlu0 %270
    %272 = vrot.lane.b32.xlu0 %v255, 120
    %v273 = vpop.permute.xlu0 %272
    %v280 = vsel %vm92, %v263, 0.0
    %281 = vadd.xlane.f32.xlu0 %v280
    %v282 = vpop.xlane.xlu0 %281
    %v283 = vsel %vm92, %v265, 0.0
    %284 = vadd.xlane.f32.xlu0 %v283
    %v285 = vpop.xlane.xlu0 %284
    %v286 = vsel %vm92, %v267, 0.0
    %287 = vadd.xlane.f32.xlu0 %v286
    %v288 = vpop.xlane.xlu0 %287
    %v289 = vsel %vm92, %v269, 0.0
    %290 = vadd.xlane.f32.xlu0 %v289
    %v291 = vpop.xlane.xlu0 %290
    %v292 = vsel %vm92, %v271, 0.0
    %293 = vadd.xlane.f32.xlu0 %v292
    %v294 = vpop.xlane.xlu0 %293
    %v295 = vsel %vm92, %v273, 0.0
    %296 = vadd.xlane.f32.xlu0 %v295
    %v297 = vpop.xlane.xlu0 %296
    %v298 = vmul.f32 %v282, %v111
    %v299 = vmul.f32 %v285, %v111
    %v300 = vmul.f32 %v288, %v111
    %v301 = vmul.f32 %v291, %v111
    %v302 = vmul.f32 %v294, %v111
    %v303 = vmul.f32 %v297, %v111
    %v304 = vadd.f32 %v298, 1e-05
    %v305 = vadd.f32 %v299, 1e-05
    %v306 = vadd.f32 %v300, 1e-05
    %v307 = vadd.f32 %v301, 1e-05
    %v308 = vadd.f32 %v302, 1e-05
    %v309 = vadd.f32 %v303, 1e-05
    %v310 = vrsqrt.pop %v304
    %v311 = vrsqrt.pop %v305
    %v312 = vrsqrt.pop %v306
    %v313 = vrsqrt.pop %v307
    %v314 = vrsqrt.pop %v308
    %v315 = vrsqrt.pop %v309
    %v316 = vmul.f32 %v244, %v310
    %v317 = vmul.f32 %v245, %v311
    %v318 = vmul.f32 %v246, %v312
    %v319 = vmul.f32 %v247, %v313
    %v320 = vmul.f32 %v248, %v314
    %v321 = vmul.f32 %v249, %v315
    %322 = vrot.lane.b32.xlu0 %v176, 8
    %v323 = vpop.permute.xlu0 %322
    %v325 = vmul.f32 %v316, %v323
    %v326 = vmul.f32 %v317, %v323
    %v327 = vmul.f32 %v318, %v323
    %v328 = vmul.f32 %v319, %v323
    %v329 = vmul.f32 %v320, %v323
    %v330 = vmul.f32 %v321, %v323
    %331 = vrot.lane.b32.xlu0 %v188, 8
    %v332 = vpop.permute.xlu0 %331
    %v334 = vadd.f32 %v325, %v332
    %v335 = vadd.f32 %v326, %v332
    %v336 = vadd.f32 %v327, %v332
    %v337 = vadd.f32 %v328, %v332
    %v338 = vadd.f32 %v329, %v332
    %v339 = vadd.f32 %v330, %v332
    %340 = vrot.lane.b32.xlu0 %v84, 112
    %v341 = vpop.permute.xlu0 %340
    %342 = vrot.lane.b32.xlu0 %v85, 112
    %v343 = vpop.permute.xlu0 %342
    %344 = vrot.lane.b32.xlu0 %v86, 112
    %v345 = vpop.permute.xlu0 %344
    %346 = vrot.lane.b32.xlu0 %v87, 112
    %v347 = vpop.permute.xlu0 %346
    %348 = vrot.lane.b32.xlu0 %v88, 112
    %v349 = vpop.permute.xlu0 %348
    %350 = vrot.lane.b32.xlu0 %v89, 112
    %v351 = vpop.permute.xlu0 %350
    %v358 = vsel %vm92, %v341, 0.0
    %359 = vadd.xlane.f32.xlu0 %v358
    %v360 = vpop.xlane.xlu0 %359
    %v361 = vsel %vm92, %v343, 0.0
    %362 = vadd.xlane.f32.xlu0 %v361
    %v363 = vpop.xlane.xlu0 %362
    %v364 = vsel %vm92, %v345, 0.0
    %365 = vadd.xlane.f32.xlu0 %v364
    %v366 = vpop.xlane.xlu0 %365
    %v367 = vsel %vm92, %v347, 0.0
    %368 = vadd.xlane.f32.xlu0 %v367
    %v369 = vpop.xlane.xlu0 %368
    %v370 = vsel %vm92, %v349, 0.0
    %371 = vadd.xlane.f32.xlu0 %v370
    %v372 = vpop.xlane.xlu0 %371
    %v373 = vsel %vm92, %v351, 0.0
    %374 = vadd.xlane.f32.xlu0 %v373
    %v375 = vpop.xlane.xlu0 %374
    %v376 = vmul.f32 %v360, %v111
    %v377 = vmul.f32 %v363, %v111
    %v378 = vmul.f32 %v366, %v111
    %v379 = vmul.f32 %v369, %v111
    %v380 = vmul.f32 %v372, %v111
    %v381 = vmul.f32 %v375, %v111
    %v382 = vsub.f32 %v84, %v376
    %v383 = vsub.f32 %v85, %v377
    %v384 = vsub.f32 %v86, %v378
    %v385 = vsub.f32 %v87, %v379
    %v386 = vsub.f32 %v88, %v380
    %v387 = vsub.f32 %v89, %v381
    %v388 = vmul.f32 %v382, %v382
    %v389 = vmul.f32 %v383, %v383
    %v390 = vmul.f32 %v384, %v384
    %v391 = vmul.f32 %v385, %v385
    %v392 = vmul.f32 %v386, %v386
    %v393 = vmul.f32 %v387, %v387
    %400 = vrot.lane.b32.xlu0 %v388, 112
    %v401 = vpop.permute.xlu0 %400
    %402 = vrot.lane.b32.xlu0 %v389, 112
    %v403 = vpop.permute.xlu0 %402
    %404 = vrot.lane.b32.xlu0 %v390, 112
    %v405 = vpop.permute.xlu0 %404
    %406 = vrot.lane.b32.xlu0 %v391, 112
    %v407 = vpop.permute.xlu0 %406
    %408 = vrot.lane.b32.xlu0 %v392, 112
    %v409 = vpop.permute.xlu0 %408
    %410 = vrot.lane.b32.xlu0 %v393, 112
    %v411 = vpop.permute.xlu0 %410
    %v418 = vsel %vm92, %v401, 0.0
    %419 = vadd.xlane.f32.xlu0 %v418
    %v420 = vpop.xlane.xlu0 %419
    %v421 = vsel %vm92, %v403, 0.0
    %422 = vadd.xlane.f32.xlu0 %v421
    %v423 = vpop.xlane.xlu0 %422
    %v424 = vsel %vm92, %v405, 0.0
    %425 = vadd.xlane.f32.xlu0 %v424
    %v426 = vpop.xlane.xlu0 %425
    %v427 = vsel %vm92, %v407, 0.0
    %428 = vadd.xlane.f32.xlu0 %v427
    %v429 = vpop.xlane.xlu0 %428
    %v430 = vsel %vm92, %v409, 0.0
    %431 = vadd.xlane.f32.xlu0 %v430
    %v432 = vpop.xlane.xlu0 %431
    %v433 = vsel %vm92, %v411, 0.0
    %434 = vadd.xlane.f32.xlu0 %v433
    %v435 = vpop.xlane.xlu0 %434
    %v436 = vmul.f32 %v420, %v111
    %v437 = vmul.f32 %v423, %v111
    %v438 = vmul.f32 %v426, %v111
    %v439 = vmul.f32 %v429, %v111
    %v440 = vmul.f32 %v432, %v111
    %v441 = vmul.f32 %v435, %v111
    %v442 = vadd.f32 %v436, 1e-05
    %v443 = vadd.f32 %v437, 1e-05
    %v444 = vadd.f32 %v438, 1e-05
    %v445 = vadd.f32 %v439, 1e-05
    %v446 = vadd.f32 %v440, 1e-05
    %v447 = vadd.f32 %v441, 1e-05
    %v448 = vrsqrt.pop %v442
    %v449 = vrsqrt.pop %v443
    %v450 = vrsqrt.pop %v444
    %v451 = vrsqrt.pop %v445
    %v452 = vrsqrt.pop %v446
    %v453 = vrsqrt.pop %v447
    %v454 = vmul.f32 %v382, %v448
    %v455 = vmul.f32 %v383, %v449
    %v456 = vmul.f32 %v384, %v450
    %v457 = vmul.f32 %v385, %v451
    %v458 = vmul.f32 %v386, %v452
    %v459 = vmul.f32 %v387, %v453
    %460 = vrot.lane.b32.xlu0 %v176, 16
    %v461 = vpop.permute.xlu0 %460
    %v463 = vmul.f32 %v454, %v461
    %v464 = vmul.f32 %v455, %v461
    %v465 = vmul.f32 %v456, %v461
    %v466 = vmul.f32 %v457, %v461
    %v467 = vmul.f32 %v458, %v461
    %v468 = vmul.f32 %v459, %v461
    %469 = vrot.lane.b32.xlu0 %v188, 16
    %v470 = vpop.permute.xlu0 %469
    %v472 = vadd.f32 %v463, %v470
    %v473 = vadd.f32 %v464, %v470
    %v474 = vadd.f32 %v465, %v470
    %v475 = vadd.f32 %v466, %v470
    %v476 = vadd.f32 %v467, %v470
    %v477 = vadd.f32 %v468, %v470
    %478 = vrot.lane.b32.xlu0 %v84, 104
    %v479 = vpop.permute.xlu0 %478
    %480 = vrot.lane.b32.xlu0 %v85, 104
    %v481 = vpop.permute.xlu0 %480
    %482 = vrot.lane.b32.xlu0 %v86, 104
    %v483 = vpop.permute.xlu0 %482
    %484 = vrot.lane.b32.xlu0 %v87, 104
    %v485 = vpop.permute.xlu0 %484
    %486 = vrot.lane.b32.xlu0 %v88, 104
    %v487 = vpop.permute.xlu0 %486
    %488 = vrot.lane.b32.xlu0 %v89, 104
    %v489 = vpop.permute.xlu0 %488
    %v496 = vsel %vm92, %v479, 0.0
    %497 = vadd.xlane.f32.xlu0 %v496
    %v498 = vpop.xlane.xlu0 %497
    %v499 = vsel %vm92, %v481, 0.0
    %500 = vadd.xlane.f32.xlu0 %v499
    %v501 = vpop.xlane.xlu0 %500
    %v502 = vsel %vm92, %v483, 0.0
    %503 = vadd.xlane.f32.xlu0 %v502
    %v504 = vpop.xlane.xlu0 %503
    %v505 = vsel %vm92, %v485, 0.0
    %506 = vadd.xlane.f32.xlu0 %v505
    %v507 = vpop.xlane.xlu0 %506
    %v508 = vsel %vm92, %v487, 0.0
    %509 = vadd.xlane.f32.xlu0 %v508
    %v510 = vpop.xlane.xlu0 %509
    %v511 = vsel %vm92, %v489, 0.0
    %512 = vadd.xlane.f32.xlu0 %v511
    %v513 = vpop.xlane.xlu0 %512
    %v514 = vmul.f32 %v498, %v111
    %v515 = vmul.f32 %v501, %v111
    %v516 = vmul.f32 %v504, %v111
    %v517 = vmul.f32 %v507, %v111
    %v518 = vmul.f32 %v510, %v111
    %v519 = vmul.f32 %v513, %v111
    %v520 = vsub.f32 %v84, %v514
    %v521 = vsub.f32 %v85, %v515
    %v522 = vsub.f32 %v86, %v516
    %v523 = vsub.f32 %v87, %v517
    %v524 = vsub.f32 %v88, %v518
    %v525 = vsub.f32 %v89, %v519
    %v526 = vmul.f32 %v520, %v520
    %v527 = vmul.f32 %v521, %v521
    %v528 = vmul.f32 %v522, %v522
    %v529 = vmul.f32 %v523, %v523
    %v530 = vmul.f32 %v524, %v524
    %v531 = vmul.f32 %v525, %v525
    %538 = vrot.lane.b32.xlu0 %v526, 104
    %v539 = vpop.permute.xlu0 %538
    %540 = vrot.lane.b32.xlu0 %v527, 104
    %v541 = vpop.permute.xlu0 %540
    %542 = vrot.lane.b32.xlu0 %v528, 104
    %v543 = vpop.permute.xlu0 %542
    %544 = vrot.lane.b32.xlu0 %v529, 104
    %v545 = vpop.permute.xlu0 %544
    %546 = vrot.lane.b32.xlu0 %v530, 104
    %v547 = vpop.permute.xlu0 %546
    %548 = vrot.lane.b32.xlu0 %v531, 104
    %v549 = vpop.permute.xlu0 %548
    %v556 = vsel %vm92, %v539, 0.0
    %557 = vadd.xlane.f32.xlu0 %v556
    %v558 = vpop.xlane.xlu0 %557
    %v559 = vsel %vm92, %v541, 0.0
    %560 = vadd.xlane.f32.xlu0 %v559
    %v561 = vpop.xlane.xlu0 %560
    %v562 = vsel %vm92, %v543, 0.0
    %563 = vadd.xlane.f32.xlu0 %v562
    %v564 = vpop.xlane.xlu0 %563
    %v565 = vsel %vm92, %v545, 0.0
    %566 = vadd.xlane.f32.xlu0 %v565
    %v567 = vpop.xlane.xlu0 %566
    %v568 = vsel %vm92, %v547, 0.0
    %569 = vadd.xlane.f32.xlu0 %v568
    %v570 = vpop.xlane.xlu0 %569
    %v571 = vsel %vm92, %v549, 0.0
    %572 = vadd.xlane.f32.xlu0 %v571
    %v573 = vpop.xlane.xlu0 %572
    %v574 = vmul.f32 %v558, %v111
    %v575 = vmul.f32 %v561, %v111
    %v576 = vmul.f32 %v564, %v111
    %v577 = vmul.f32 %v567, %v111
    %v578 = vmul.f32 %v570, %v111
    %v579 = vmul.f32 %v573, %v111
    %v580 = vadd.f32 %v574, 1e-05
    %v581 = vadd.f32 %v575, 1e-05
    %v582 = vadd.f32 %v576, 1e-05
    %v583 = vadd.f32 %v577, 1e-05
    %v584 = vadd.f32 %v578, 1e-05
    %v585 = vadd.f32 %v579, 1e-05
    %v586 = vrsqrt.pop %v580
    %v587 = vrsqrt.pop %v581
    %v588 = vrsqrt.pop %v582
    %v589 = vrsqrt.pop %v583
    %v590 = vrsqrt.pop %v584
    %v591 = vrsqrt.pop %v585
    %v592 = vmul.f32 %v520, %v586
    %v593 = vmul.f32 %v521, %v587
    %v594 = vmul.f32 %v522, %v588
    %v595 = vmul.f32 %v523, %v589
    %v596 = vmul.f32 %v524, %v590
    %v597 = vmul.f32 %v525, %v591
    %598 = vrot.lane.b32.xlu0 %v176, 24
    %v599 = vpop.permute.xlu0 %598
    %v601 = vmul.f32 %v592, %v599
    %v602 = vmul.f32 %v593, %v599
    %v603 = vmul.f32 %v594, %v599
    %v604 = vmul.f32 %v595, %v599
    %v605 = vmul.f32 %v596, %v599
    %v606 = vmul.f32 %v597, %v599
    %607 = vrot.lane.b32.xlu0 %v188, 24
    %v608 = vpop.permute.xlu0 %607
    %v610 = vadd.f32 %v601, %v608
    %v611 = vadd.f32 %v602, %v608
    %v612 = vadd.f32 %v603, %v608
    %v613 = vadd.f32 %v604, %v608
    %v614 = vadd.f32 %v605, %v608
    %v615 = vadd.f32 %v606, %v608
    %v616 = vsel %vm92, %v190, %v334
    %v617 = vsel %vm92, %v191, %v335
    %v618 = vsel %vm92, %v192, %v336
    %v619 = vsel %vm92, %v193, %v337
    %v620 = vsel %vm92, %v194, %v338
    %v621 = vsel %vm92, %v195, %v339
    %vm622 = vcmask 130048
    %v623 = vsel %vm622, %v616, %v472
    %v624 = vsel %vm622, %v617, %v473
    %v625 = vsel %vm622, %v618, %v474
    %v626 = vsel %vm622, %v619, %v475
    %v627 = vsel %vm622, %v620, %v476
    %v628 = vsel %vm622, %v621, %v477
    %vm629 = vcmask 195584
    %v630 = vsel %vm629, %v623, %v610
    %v631 = vsel %vm629, %v624, %v611
    %v632 = vsel %vm629, %v625, %v612
    %v633 = vsel %vm629, %v626, %v613
    %v634 = vsel %vm629, %v627, %v614
    %v635 = vsel %vm629, %v628, %v615
    %v636 = vpack.c.bf16 %v631, %v630
    %v637 = vpack.c.bf16 %v633, %v632
    %v638 = vpack.c.bf16 %v635, %v634
    %v639 = vld [vmem:[#allocation8] sm:$0xf]
    %v640 = vld [vmem:[#allocation8 + $0x4] sm:$0xf]
    %v641 = vld [vmem:[#allocation8 + $0x8] sm:$0xf]
    %v642 = vld [vmem:[#allocation8 + $0xc] sm:$0xf]
    %v643 = vld [vmem:[#allocation10] sm:$0x1]
    %v645 = vlaneseq
    %v646 = vshrl.u32 %v645, 7
    %v647 = vsub.s32 0, %v646
    %v648 = vrot.slane %v643, %v647
    %v654 = vunpack.c.l.b16 %v639
    %v655 = vunpack.c.l.b16 %v640
    %v656 = vunpack.c.l.b16 %v641
    %v657 = vunpack.c.l.b16 %v642
    %v658 = vpack.c.b16 %v655, %v654
    %v659 = vpack.c.b16 %v657, %v656
    %vm662 = vcmask 261120
    %v664 = vsel %vm662, %v636, 0
    %v667 = vsel %vm662, %v637, 0
    %v670 = vsel %vm662, %v638, 0
    %672 = vmatprep.subr.bf16.mxu0 0
    %673 = vmatpush1.bf16.msra.mxu0 %v658
    %674 = vmatprep.subr.bf16.mxu0 0
    %675 = vmatpush1.bf16.msra.mxu0 %v659
    %676 = vmatprep.subr.bf16.mxu0 0
    %677 = vmatpush1.bf16.msra.mxu0 0
    %678 = vmatprep.subr.bf16.mxu0 0
    %679 = vmatpush1.bf16.msra.mxu0 0
    %680 = vmatprep.subr.bf16.mxu0 0
    %681 = vmatpush1.bf16.msra.mxu0 0
    %682 = vmatprep.subr.bf16.mxu0 0
    %683 = vmatpush1.bf16.msra.mxu0 0
    %684 = vmatprep.subr.bf16.mxu0 0
    %685 = vmatpush1.bf16.msra.mxu0 0
    %686 = vmatprep.subr.bf16.mxu0 0
    %687 = vmatpush1.bf16.msra.mxu0 0
    %688 = vmatprep.subr.bf16.mxu0 0
    %689 = vmatpush1.bf16.msra.mxu0 0
    %690 = vmatprep.subr.bf16.mxu0 0
    %691 = vmatpush1.bf16.msra.mxu0 0
    %692 = vmatprep.subr.bf16.mxu0 0
    %693 = vmatpush1.bf16.msra.mxu0 0
    %694 = vmatprep.subr.bf16.mxu0 0
    %695 = vmatpush1.bf16.msra.mxu0 0
    %696 = vmatprep.subr.bf16.mxu0 0
    %697 = vmatpush1.bf16.msra.mxu0 0
    %698 = vmatprep.subr.bf16.mxu0 0
    %699 = vmatpush1.bf16.msra.mxu0 0
    %700 = vmatprep.subr.bf16.mxu0 0
    %701 = vmatpush1.bf16.msra.mxu0 0
    %702 = vmatprep.subr.bf16.mxu0 0
    %703 = vmatpush1.bf16.msra.mxu0 0
    %704 = vmatprep.mubr.bf16.mxu0 0
    %705 = vmatmul.mubr.bf16.gmra.mrb[0].mxu0 %v664
    %v706 = vpop.f32.mrb[0].mxu0
    %v707 = vadd.f32 %v648, %v706
    %v708 = vpop.f32.mrb[0].mxu0
    %v709 = vpop.f32.mrb[0].mxu0
    %v710 = vadd.f32 %v648, %v709
    %v711 = vpop.f32.mrb[0].mxu0
    %712 = vmatprep.mubr.bf16.mxu0 0
    %713 = vmatmul.mubr.bf16.gmra.mrb[0].mxu0 %v667
    %v714 = vpop.f32.mrb[0].mxu0
    %v715 = vadd.f32 %v648, %v714
    %v716 = vpop.f32.mrb[0].mxu0
    %v717 = vpop.f32.mrb[0].mxu0
    %v718 = vadd.f32 %v648, %v717
    %v719 = vpop.f32.mrb[0].mxu0
    %720 = vmatprep.mubr.bf16.mxu0 0
    %721 = vmatmul.mubr.bf16.gmra.mrb[0].mxu0 %v670
    %v722 = vpop.f32.mrb[0].mxu0
    %v723 = vadd.f32 %v648, %v722
    %v724 = vpop.f32.mrb[0].mxu0
    %v725 = vpop.f32.mrb[0].mxu0
    %v726 = vadd.f32 %v648, %v725
    %v727 = vpop.f32.mrb[0].mxu0
    %728 = vdwg.mxu0
    %vm729 = vcmask 523264
    %730 = vst.msk [vmem:[#allocation11] sm:$0xff] %vm729, %v707
    %731 = vst.msk [vmem:[#allocation11 + $0x8] sm:$0xff] %vm729, %v710
    %732 = vst.msk [vmem:[#allocation11 + $0x10] sm:$0xff] %vm729, %v715
    %733 = vst.msk [vmem:[#allocation11 + $0x18] sm:$0xff] %vm729, %v718
    %734 = vst.msk [vmem:[#allocation11 + $0x20] sm:$0xff] %vm729, %v723
    %735 = vst.msk [vmem:[#allocation11 + $0x28] sm:$0xff] %vm729, %v726
    // Predicated region
    $region42: #{tfgridnet_forward.27} parent=1 // pred_check
      _
    $region43: #{tfgridnet_forward.27} parent=1 // pred_check_branch
      %737 = sbr.rel (0) target = $region45
    $region44: #{tfgridnet_forward.27} parent=1 // pred_region
      %s739 = ssub.s32 768, 768
      %740 = vsyncadd [#allocation4], %s739
      %s741 = sshll.u32 [#allocation11], 4
      %s742 = int_to_ptr.vmem [resolvable:$true] %s741
      %747 = dma.vmem_to_hbm [thread:$0]  %s742, 768, %s5, [#allocation4], 128, 128, 8
    $region45: #{tfgridnet_forward.27} parent=1 // pred_fallthru
      _
    // Predicated region
    $region46: #{tfgridnet_forward.27} parent=1 // pred_check
      _
    $region47: #{tfgridnet_forward.27} parent=1 // pred_check_branch
      %749 = sbr.rel (0) target = $region49
    $region48: #{tfgridnet_forward.27} parent=1 // pred_region
      %750 = dma.done [#allocation4], 768
    $region49: #{tfgridnet_forward.27} parent=1 // pred_fallthru
      _
    %751 = vsyncpa [#allocation3], 1
    %752 = vsyncpa [#allocation6], 1
    %753 = vsyncpa [#allocation9], 1
    %754 = vsyncpa [#allocation4], 1

// kernel: tfgridnet_forward.28
$region0: #{tfgridnet_forward.28}
  #allocation0 [shape = 'u32[]', space=smem, size = 0x4, offset = 0x4, fixed_abs, tag = 'smem constant byte address 0x4 - core index']
  #allocation1 [shape = 'u32[144,128]{1,0:T(1,128)}', space=vmem, size = 0x12000, scoped, tag = 'internal scratch']
  #allocation2 [shape = 'f32[16,16]{1,0:T(8,128)}', space=vmem, size = 0x2000, scoped, tag = 'scratch operand']
  #allocation3 [shape = 'f32[16,8]{1,0:T(8,128)}', space=vmem, size = 0x2000, scoped, tag = 'scratch operand']
  #allocation4 [shape = 'f32[16,8]{1,0:T(8,128)}', space=vmem, size = 0x2000, scoped, tag = 'scratch operand']
  %s0 = inlined_call_operand.hbm [shape: f32[3,16,64], index: 0, kind: input, shape index: {}]
  %s1 = inlined_call_operand.hbm [shape: bf16[16,64], index: 1, kind: input, shape index: {}]
  %s2 = inlined_call_operand.hbm [shape: f32[3,16,8], index: 2, kind: output, shape index: {0}]
  %s3 = inlined_call_operand.hbm [shape: f32[3,16,8], index: 3, kind: output, shape index: {1}]
  %4 = xla_tuple %s2, %s3
  %s5 = sld [smem:[#allocation0]]
  $region41: #{tfgridnet_forward.28} parent=0
    _
  %s7 = ssub.s32 1, %s5
  %s8 = scalar_select 0, %s7, %s5
  $region1: #{tfgridnet_forward.28} parent=0
    #allocation5 [shape = 'u8[24576]{0}', space=vmem, size = 0x6000, scoped, tag = 'input window, operand 0, single buffered']
    #allocation6 [shape = 's32[1]{0}', space=sflag, size = 0x4, scoped, tag = 'scoped memory for tfgridnet_forward.28']
    #allocation7 [shape = 's32[1]{0}', space=sflag, size = 0x4, scoped, tag = 'scoped memory for tfgridnet_forward.28']
    #allocation8 [shape = 'u8[4096]{0}', space=vmem, size = 0x1000, scoped, tag = 'input window, operand 1, single buffered']
    #allocation9 [shape = 's32[1]{0}', space=sflag, size = 0x4, scoped, tag = 'scoped memory for tfgridnet_forward.28']
    #allocation10 [shape = 'u8[24576]{0}', space=vmem, size = 0x6000, scoped, tag = 'output window, operand 0, single buffered']
    #allocation11 [shape = 'u8[24576]{0}', space=vmem, size = 0x6000, scoped, tag = 'output window, operand 1, single buffered']
    #allocation12 [shape = 's32[1]{0}', space=sflag, size = 0x4, scoped, tag = 'scoped memory for tfgridnet_forward.28']
    %9 = vsyncpa [#allocation6], 0
    %10 = vsyncpa [#allocation9], 0
    %11 = vsyncpa [#allocation7], 0
    %12 = vsyncpa [#allocation12], 0
    // Predicated region
    $region2: #{tfgridnet_forward.28} parent=1 // pred_check
      _
    $region3: #{tfgridnet_forward.28} parent=1 // pred_check_branch
      %14 = sbr.rel (0) target = $region5
    $region4: #{tfgridnet_forward.28} parent=1 // pred_region
      %s16 = ssub.s32 768, 768
      %17 = vsyncadd [#allocation6], %s16
      %s18 = sshll.u32 [#allocation5], 4
      %s19 = int_to_ptr.vmem [resolvable:$true] %s18
      %24 = dma.hbm_to_vmem [thread:$0]  %s0, 768, %s19, [#allocation6], 128, 128, 8
    $region5: #{tfgridnet_forward.28} parent=1 // pred_fallthru
      _
    // Predicated region
    $region6: #{tfgridnet_forward.28} parent=1 // pred_check
      _
    $region7: #{tfgridnet_forward.28} parent=1 // pred_check_branch
      %26 = sbr.rel (0) target = $region9
    $region8: #{tfgridnet_forward.28} parent=1 // pred_region
      %s28 = ssub.s32 128, 128
      %29 = vsyncadd [#allocation9], %s28
      %s30 = sshll.u32 [#allocation8], 4
      %s31 = int_to_ptr.vmem [resolvable:$true] %s30
      %36 = dma.hbm_to_vmem [thread:$0]  %s1, 128, %s31, [#allocation9], 64, 64, 4
    $region9: #{tfgridnet_forward.28} parent=1 // pred_fallthru
      _
    // Predicated region
    $region10: #{tfgridnet_forward.28} parent=1 // pred_check
      _
    $region11: #{tfgridnet_forward.28} parent=1 // pred_check_branch
      %38 = sbr.rel (0) target = $region13
    $region12: #{tfgridnet_forward.28} parent=1 // pred_region
      %39 = dma.done [#allocation6], 768
    $region13: #{tfgridnet_forward.28} parent=1 // pred_fallthru
      _
    // Predicated region
    $region14: #{tfgridnet_forward.28} parent=1 // pred_check
      _
    $region15: #{tfgridnet_forward.28} parent=1 // pred_check_branch
      %41 = sbr.rel (0) target = $region17
    $region16: #{tfgridnet_forward.28} parent=1 // pred_region
      %42 = dma.done [#allocation9], 128
    $region17: #{tfgridnet_forward.28} parent=1 // pred_fallthru
      _
    %vm44 = vcmask 130048
    %45 = vst.msk [vmem:[#allocation2] sm:$0xff] %vm44, 0.0
    %46 = vst.msk [vmem:[#allocation2 + $0x8] sm:$0xff] %vm44, 0.0
    %vm47 = vcmask 64512
    %48 = vst.msk [vmem:[#allocation3] sm:$0xff] %vm47, 0.0
    %49 = vst.msk [vmem:[#allocation3 + $0x8] sm:$0xff] %vm47, 0.0
    %50 = vst.msk [vmem:[#allocation4] sm:$0xff] %vm47, 0.0
    %51 = vst.msk [vmem:[#allocation4 + $0x8] sm:$0xff] %vm47, 0.0
    loop: start=0, step=1, limit=3
    $region18: #{tfgridnet_forward.28} parent=1 // loop_pre_header
      _
    $region19: #{tfgridnet_forward.28} parent=1 // loop_header
      %s53 = sphi 0, %s57
      %p54 = scmp.ge.s32.totalorder %s53, 3
    $region20: #{tfgridnet_forward.28} parent=1 // loop_header_branch
      %56 = sbr.rel (%p54) target = $region24
    $region21: #{tfgridnet_forward.28} parent=1 // loop_body
      %v58 = vld [vmem:[#allocation2] sm:$0xff]
      %v59 = vld [vmem:[#allocation2 + $0x8] sm:$0xff]
      %v60 = vpack.c.bf16 %v59, %v58
      %v61 = vld [vmem:[#allocation8] sm:$0xf]
      %v62 = vld [vmem:[#allocation8 + $0x4] sm:$0xf]
      %v65 = vunpack.c.l.b16 %v61
      %v66 = vunpack.c.l.b16 %v62
      %v67 = vpack.c.b16 %v66, %v65
      %v70 = vsel %vm44, %v60, 0
      %72 = vmatprep.subr.bf16.mxu0 0
      %73 = vmatpush1.bf16.msra.mxu0 %v67
      %74 = vmatprep.subr.bf16.mxu0 0
      %75 = vmatpush1.bf16.msra.mxu0 0
      %76 = vmatprep.subr.bf16.mxu0 0
      %77 = vmatpush1.bf16.msra.mxu0 0
      %78 = vmatprep.subr.bf16.mxu0 0
      %79 = vmatpush1.bf16.msra.mxu0 0
      %80 = vmatprep.subr.bf16.mxu0 0
      %81 = vmatpush1.bf16.msra.mxu0 0
      %82 = vmatprep.subr.bf16.mxu0 0
      %83 = vmatpush1.bf16.msra.mxu0 0
      %84 = vmatprep.subr.bf16.mxu0 0
      %85 = vmatpush1.bf16.msra.mxu0 0
      %86 = vmatprep.subr.bf16.mxu0 0
      %87 = vmatpush1.bf16.msra.mxu0 0
      %88 = vmatprep.subr.bf16.mxu0 0
      %89 = vmatpush1.bf16.msra.mxu0 0
      %90 = vmatprep.subr.bf16.mxu0 0
      %91 = vmatpush1.bf16.msra.mxu0 0
      %92 = vmatprep.subr.bf16.mxu0 0
      %93 = vmatpush1.bf16.msra.mxu0 0
      %94 = vmatprep.subr.bf16.mxu0 0
      %95 = vmatpush1.bf16.msra.mxu0 0
      %96 = vmatprep.subr.bf16.mxu0 0
      %97 = vmatpush1.bf16.msra.mxu0 0
      %98 = vmatprep.subr.bf16.mxu0 0
      %99 = vmatpush1.bf16.msra.mxu0 0
      %100 = vmatprep.subr.bf16.mxu0 0
      %101 = vmatpush1.bf16.msra.mxu0 0
      %102 = vmatprep.subr.bf16.mxu0 0
      %103 = vmatpush1.bf16.msra.mxu0 0
      %104 = vmatprep.mubr.bf16.mxu0 0
      %105 = vmatmul.mubr.bf16.gmra.mrb[0].mxu0 %v70
      %v106 = vpop.f32.mrb[0].mxu0
      %v107 = vadd.f32 0.0, %v106
      %v108 = vpop.f32.mrb[0].mxu0
      %v109 = vpop.f32.mrb[0].mxu0
      %v110 = vadd.f32 0.0, %v109
      %v111 = vpop.f32.mrb[0].mxu0
      %112 = vdwg.mxu0
      %s113 = smul.u32 %s53, 16
      %s114 = scalar_lea.vmem [#allocation5], %s113
      %v115 = vld [vmem:[%s114] sm:$0xff]
      %v116 = vld [vmem:[%s114 + $0x8] sm:$0xff]
      %s117 = ssub.s32 2, %s53
      %s118 = smul.u32 %s117, 16
      %s119 = scalar_lea.vmem [#allocation5], %s118
      %v120 = vld [vmem:[%s119] sm:$0xff]
      %v121 = vld [vmem:[%s119 + $0x8] sm:$0xff]
      %v122 = vadd.f32 %v107, %v115
      %v123 = vadd.f32 %v110, %v116
      %v124 = vld [vmem:[#allocation3] sm:$0xff]
      %v125 = vld [vmem:[#allocation3 + $0x8] sm:$0xff]
      %v126 = vxor.u32 %v122, 2147483648
      %v127 = vxor.u32 %v123, 2147483648
      %v128 = vmul.f32 %v126, 1.442695
      %v129 = vpow.pop %v128
      %v130 = vmul.f32 %v127, 1.442695
      %v131 = vpow.pop %v130
      %v132 = vadd.f32 %v129, 1.0
      %v133 = vadd.f32 %v131, 1.0
      %v134 = vrcp.pop %v132
      %v135 = vmul.f32 1.0, %v134
      %v136 = vrcp.pop %v133
      %v137 = vmul.f32 1.0, %v136
      %v138 = vtanh.pop %v122
      %v139 = vtanh.pop %v123
      %142 = vrot.lane.b32.xlu0 %v124, 8
      %v143 = vpop.permute.xlu0 %142
      %144 = vrot.lane.b32.xlu0 %v125, 8
      %v145 = vpop.permute.xlu0 %144
      %v148 = vmul.f32 %v135, %v143
      %v149 = vmul.f32 %v137, %v145
      %152 = vrot.lane.b32.xlu0 %v138, 112
      %v153 = vpop.permute.xlu0 %152
      %154 = vrot.lane.b32.xlu0 %v139, 112
      %v155 = vpop.permute.xlu0 %154
      %v158 = vmul.f32 %v135, %v153
      %v159 = vmul.f32 %v137, %v155
      %162 = vrot.lane.b32.xlu0 %v158, 8
      %v163 = vpop.permute.xlu0 %162
      %164 = vrot.lane.b32.xlu0 %v159, 8
      %v165 = vpop.permute.xlu0 %164
      %v168 = vadd.f32 %v148, %v163
      %v169 = vadd.f32 %v149, %v165
      %v170 = vtanh.pop %v168
      %v171 = vtanh.pop %v169
      %174 = vrot.lane.b32.xlu0 %v170, 16
      %v175 = vpop.permute.xlu0 %174
      %176 = vrot.lane.b32.xlu0 %v171, 16
      %v177 = vpop.permute.xlu0 %176
      %v180 = vmul.f32 %v135, %v175
      %v181 = vmul.f32 %v137, %v177
      %v182 = vadd.f32 %v107, %v120
      %v183 = vadd.f32 %v110, %v121
      %v184 = vld [vmem:[#allocation4] sm:$0xff]
      %v185 = vld [vmem:[#allocation4 + $0x8] sm:$0xff]
      %v186 = vxor.u32 %v182, 2147483648
      %v187 = vxor.u32 %v183, 2147483648
      %v188 = vmul.f32 %v186, 1.442695
      %v189 = vpow.pop %v188
      %v190 = vmul.f32 %v187, 1.442695
      %v191 = vpow.pop %v190
      %v192 = vadd.f32 %v189, 1.0
      %v193 = vadd.f32 %v191, 1.0
      %v194 = vrcp.pop %v192
      %v195 = vmul.f32 1.0, %v194
      %v196 = vrcp.pop %v193
      %v197 = vmul.f32 1.0, %v196
      %v198 = vtanh.pop %v182
      %v199 = vtanh.pop %v183
      %202 = vrot.lane.b32.xlu0 %v184, 40
      %v203 = vpop.permute.xlu0 %202
      %204 = vrot.lane.b32.xlu0 %v185, 40
      %v205 = vpop.permute.xlu0 %204
      %v208 = vmul.f32 %v195, %v203
      %v209 = vmul.f32 %v197, %v205
      %212 = vrot.lane.b32.xlu0 %v198, 112
      %v213 = vpop.permute.xlu0 %212
      %214 = vrot.lane.b32.xlu0 %v199, 112
      %v215 = vpop.permute.xlu0 %214
      %v218 = vmul.f32 %v195, %v213
      %v219 = vmul.f32 %v197, %v215
      %222 = vrot.lane.b32.xlu0 %v218, 8
      %v223 = vpop.permute.xlu0 %222
      %224 = vrot.lane.b32.xlu0 %v219, 8
      %v225 = vpop.permute.xlu0 %224
      %v228 = vadd.f32 %v208, %v223
      %v229 = vadd.f32 %v209, %v225
      %v230 = vtanh.pop %v228
      %v231 = vtanh.pop %v229
      %234 = vrot.lane.b32.xlu0 %v230, 16
      %v235 = vpop.permute.xlu0 %234
      %236 = vrot.lane.b32.xlu0 %v231, 16
      %v237 = vpop.permute.xlu0 %236
      %v240 = vmul.f32 %v195, %v235
      %v241 = vmul.f32 %v197, %v237
      %244 = vrot.lane.b32.xlu0 %v168, 120
      %v245 = vpop.permute.xlu0 %244
      %246 = vrot.lane.b32.xlu0 %v169, 120
      %v247 = vpop.permute.xlu0 %246
      %250 = vst.msk [vmem:[#allocation3] sm:$0xff] %vm47, %v245
      %251 = vst.msk [vmem:[#allocation3 + $0x8] sm:$0xff] %vm47, %v247
      %254 = vrot.lane.b32.xlu0 %v228, 88
      %v255 = vpop.permute.xlu0 %254
      %256 = vrot.lane.b32.xlu0 %v229, 88
      %v257 = vpop.permute.xlu0 %256
      %260 = vst.msk [vmem:[#allocation4] sm:$0xff] %vm47, %v255
      %261 = vst.msk [vmem:[#allocation4 + $0x8] sm:$0xff] %vm47, %v257
      %264 = vrot.lane.b32.xlu0 %v180, 104
      %v265 = vpop.permute.xlu0 %264
      %266 = vrot.lane.b32.xlu0 %v181, 104
      %v267 = vpop.permute.xlu0 %266
      %272 = vrot.lane.b32.xlu0 %v240, 80
      %v273 = vpop.permute.xlu0 %272
      %274 = vrot.lane.b32.xlu0 %v241, 80
      %v275 = vpop.permute.xlu0 %274
      %v278 = vsel %vm47, %v265, %v273
      %v279 = vsel %vm47, %v267, %v275
      %280 = vst.msk [vmem:[#allocation2] sm:$0xff] %vm44, %v278
      %281 = vst.msk [vmem:[#allocation2 + $0x8] sm:$0xff] %vm44, %v279
      %s282 = scalar_lea.vmem [#allocation10], %s113
      %283 = vst.msk [vmem:[%s282] sm:$0xff] %vm47, %v265
      %284 = vst.msk [vmem:[%s282 + $0x8] sm:$0xff] %vm47, %v267
      %285 = vrot.lane.b32.xlu0 %v240, 72
      %v286 = vpop.permute.xlu0 %285
      %287 = vrot.lane.b32.xlu0 %v241, 72
      %v288 = vpop.permute.xlu0 %287
      %s291 = scalar_lea.vmem [#allocation11], %s118
      %292 = vst.msk [vmem:[%s291] sm:$0xff] %vm47, %v286
      %293 = vst.msk [vmem:[%s291 + $0x8] sm:$0xff] %vm47, %v288
    $region22: #{tfgridnet_forward.28} parent=1 // loop_footer
      %s57 = sadd.s32 1, %s53
    $region23: #{tfgridnet_forward.28} parent=1 // loop_footer_branch
      %52 = sbr.rel target = $region19
    $region24: #{tfgridnet_forward.28} parent=1 // loop_exit
      _
    // Predicated region
    $region25: #{tfgridnet_forward.28} parent=1 // pred_check
      _
    $region26: #{tfgridnet_forward.28} parent=1 // pred_check_branch
      %295 = sbr.rel (0) target = $region28
    $region27: #{tfgridnet_forward.28} parent=1 // pred_region
      %s297 = ssub.s32 768, 768
      %298 = vsyncadd [#allocation7], %s297
      %s299 = sshll.u32 [#allocation10], 4
      %s300 = int_to_ptr.vmem [resolvable:$true] %s299
      %305 = dma.vmem_to_hbm [thread:$0]  %s300, 768, %s2, [#allocation7], 128, 128, 8
    $region28: #{tfgridnet_forward.28} parent=1 // pred_fallthru
      _
    // Predicated region
    $region29: #{tfgridnet_forward.28} parent=1 // pred_check
      _
    $region30: #{tfgridnet_forward.28} parent=1 // pred_check_branch
      %307 = sbr.rel (0) target = $region32
    $region31: #{tfgridnet_forward.28} parent=1 // pred_region
      %s309 = ssub.s32 768, 768
      %310 = vsyncadd [#allocation12], %s309
      %s311 = sshll.u32 [#allocation11], 4
      %s312 = int_to_ptr.vmem [resolvable:$true] %s311
      %317 = dma.vmem_to_hbm [thread:$0]  %s312, 768, %s3, [#allocation12], 128, 128, 8
    $region32: #{tfgridnet_forward.28} parent=1 // pred_fallthru
      _
    // Predicated region
    $region33: #{tfgridnet_forward.28} parent=1 // pred_check
      _
    $region34: #{tfgridnet_forward.28} parent=1 // pred_check_branch
      %319 = sbr.rel (0) target = $region36
    $region35: #{tfgridnet_forward.28} parent=1 // pred_region
      %320 = dma.done [#allocation7], 768
    $region36: #{tfgridnet_forward.28} parent=1 // pred_fallthru
      _
    // Predicated region
    $region37: #{tfgridnet_forward.28} parent=1 // pred_check
      _
    $region38: #{tfgridnet_forward.28} parent=1 // pred_check_branch
      %322 = sbr.rel (0) target = $region40
    $region39: #{tfgridnet_forward.28} parent=1 // pred_region
      %323 = dma.done [#allocation12], 768
    $region40: #{tfgridnet_forward.28} parent=1 // pred_fallthru
      _
    %324 = vsyncpa [#allocation6], 1
    %325 = vsyncpa [#allocation9], 1
    %326 = vsyncpa [#allocation7], 1
    %327 = vsyncpa [#allocation12], 1

// kernel: tfgridnet_forward.29
$region0: #{tfgridnet_forward.29}
  #allocation0 [shape = 'u32[]', space=smem, size = 0x4, offset = 0x4, fixed_abs, tag = 'smem constant byte address 0x4 - core index']
  #allocation1 [shape = 'u32[144,128]{1,0:T(1,128)}', space=vmem, size = 0x12000, scoped, tag = 'internal scratch']
  %s0 = inlined_call_operand.hbm [shape: f32[48,8], index: 0, kind: input, shape index: {}]
  %s1 = inlined_call_operand.hbm [shape: f32[48,8], index: 1, kind: input, shape index: {}]
  %s2 = inlined_call_operand.hbm [shape: f32[48,32], index: 2, kind: input, shape index: {}, may-alias: {2,6}]
  %s3 = inlined_call_operand.hbm [shape: bf16[8,32], index: 3, kind: input, shape index: {}]
  %s4 = inlined_call_operand.hbm [shape: bf16[8,32], index: 4, kind: input, shape index: {}]
  %s5 = inlined_call_operand.hbm [shape: f32[1,32], index: 5, kind: input, shape index: {}]
  %s6 = inlined_call_operand.hbm [shape: f32[48,32], index: 6, kind: output, shape index: {}, may-alias: {2,6}]
  %s7 = sld [smem:[#allocation0]]
  $region58: #{tfgridnet_forward.29} parent=0
    _
  %s9 = ssub.s32 1, %s7
  %s10 = scalar_select 0, %s9, %s7
  $region1: #{tfgridnet_forward.29} parent=0
    #allocation2 [shape = 'u8[24576]{0}', space=vmem, size = 0x6000, scoped, tag = 'input window, operand 0, single buffered']
    #allocation3 [shape = 's32[1]{0}', space=sflag, size = 0x4, scoped, tag = 'scoped memory for tfgridnet_forward.29']
    #allocation4 [shape = 's32[1]{0}', space=sflag, size = 0x4, scoped, tag = 'scoped memory for tfgridnet_forward.29']
    #allocation5 [shape = 'u8[24576]{0}', space=vmem, size = 0x6000, scoped, tag = 'input window, operand 1, single buffered']
    #allocation6 [shape = 's32[1]{0}', space=sflag, size = 0x4, scoped, tag = 'scoped memory for tfgridnet_forward.29']
    #allocation7 [shape = 'u8[24576]{0}', space=vmem, size = 0x6000, scoped, tag = 'input window, operand 2, single buffered']
    #allocation8 [shape = 'u8[2048]{0}', space=vmem, size = 0x800, scoped, tag = 'input window, operand 3, single buffered']
    #allocation9 [shape = 's32[1]{0}', space=sflag, size = 0x4, scoped, tag = 'scoped memory for tfgridnet_forward.29']
    #allocation10 [shape = 'u8[2048]{0}', space=vmem, size = 0x800, scoped, tag = 'input window, operand 4, single buffered']
    #allocation11 [shape = 'u8[512]{0}', space=vmem, size = 0x400, scoped, tag = 'input window, operand 5, single buffered']
    #allocation12 [shape = 's32[1]{0}', space=sflag, size = 0x4, scoped, tag = 'scoped memory for tfgridnet_forward.29']
    #allocation13 [shape = 'u8[24576]{0}', space=vmem, size = 0x6000, scoped, tag = 'output window, operand 0, single buffered']
    %11 = vsyncpa [#allocation3], 0
    %12 = vsyncpa [#allocation6], 0
    %13 = vsyncpa [#allocation9], 0
    %14 = vsyncpa [#allocation12], 0
    %15 = vsyncpa [#allocation4], 0
    // Predicated region
    $region2: #{tfgridnet_forward.29} parent=1 // pred_check
      _
    $region3: #{tfgridnet_forward.29} parent=1 // pred_check_branch
      %17 = sbr.rel (0) target = $region5
    $region4: #{tfgridnet_forward.29} parent=1 // pred_region
      %s19 = ssub.s32 768, 768
      %20 = vsyncadd [#allocation3], %s19
      %s21 = sshll.u32 [#allocation2], 4
      %s22 = int_to_ptr.vmem [resolvable:$true] %s21
      %27 = dma.hbm_to_vmem [thread:$0]  %s0, 768, %s22, [#allocation3], 128, 128, 8
    $region5: #{tfgridnet_forward.29} parent=1 // pred_fallthru
      _
    // Predicated region
    $region6: #{tfgridnet_forward.29} parent=1 // pred_check
      _
    $region7: #{tfgridnet_forward.29} parent=1 // pred_check_branch
      %29 = sbr.rel (0) target = $region9
    $region8: #{tfgridnet_forward.29} parent=1 // pred_region
      %s31 = ssub.s32 768, 768
      %32 = vsyncadd [#allocation6], %s31
      %s33 = sshll.u32 [#allocation5], 4
      %s34 = int_to_ptr.vmem [resolvable:$true] %s33
      %39 = dma.hbm_to_vmem [thread:$0]  %s1, 768, %s34, [#allocation6], 128, 128, 8
    $region9: #{tfgridnet_forward.29} parent=1 // pred_fallthru
      _
    // Predicated region
    $region10: #{tfgridnet_forward.29} parent=1 // pred_check
      _
    $region11: #{tfgridnet_forward.29} parent=1 // pred_check_branch
      %41 = sbr.rel (0) target = $region13
    $region12: #{tfgridnet_forward.29} parent=1 // pred_region
      %s43 = ssub.s32 768, 768
      %44 = vsyncadd [#allocation6], %s43
      %s45 = sshll.u32 [#allocation7], 4
      %s46 = int_to_ptr.vmem [resolvable:$true] %s45
      %51 = dma.hbm_to_vmem [thread:$0]  %s2, 768, %s46, [#allocation6], 128, 128, 8
    $region13: #{tfgridnet_forward.29} parent=1 // pred_fallthru
      _
    // Predicated region
    $region14: #{tfgridnet_forward.29} parent=1 // pred_check
      _
    $region15: #{tfgridnet_forward.29} parent=1 // pred_check_branch
      %53 = sbr.rel (0) target = $region17
    $region16: #{tfgridnet_forward.29} parent=1 // pred_region
      %s55 = ssub.s32 64, 64
      %56 = vsyncadd [#allocation9], %s55
      %s58 = sshll.u32 [#allocation8], 4
      %s59 = int_to_ptr.vmem [resolvable:$true] %s58
      %61 = dma.hbm_to_vmem [thread:$0]  %s3, 64, %s59, [#allocation9]
    $region17: #{tfgridnet_forward.29} parent=1 // pred_fallthru
      _
    // Predicated region
    $region18: #{tfgridnet_forward.29} parent=1 // pred_check
      _
    $region19: #{tfgridnet_forward.29} parent=1 // pred_check_branch
      %63 = sbr.rel (0) target = $region21
    $region20: #{tfgridnet_forward.29} parent=1 // pred_region
      %s65 = ssub.s32 64, 64
      %66 = vsyncadd [#allocation9], %s65
      %s68 = sshll.u32 [#allocation10], 4
      %s69 = int_to_ptr.vmem [resolvable:$true] %s68
      %71 = dma.hbm_to_vmem [thread:$0]  %s4, 64, %s69, [#allocation9]
    $region21: #{tfgridnet_forward.29} parent=1 // pred_fallthru
      _
    // Predicated region
    $region22: #{tfgridnet_forward.29} parent=1 // pred_check
      _
    $region23: #{tfgridnet_forward.29} parent=1 // pred_check_branch
      %73 = sbr.rel (0) target = $region25
    $region24: #{tfgridnet_forward.29} parent=1 // pred_region
      %s75 = ssub.s32 16, 16
      %76 = vsyncadd [#allocation12], %s75
      %s78 = sshll.u32 [#allocation11], 4
      %s79 = int_to_ptr.vmem [resolvable:$true] %s78
      %81 = dma.hbm_to_vmem [thread:$0]  %s5, 16, %s79, [#allocation12]
    $region25: #{tfgridnet_forward.29} parent=1 // pred_fallthru
      _
    // Predicated region
    $region26: #{tfgridnet_forward.29} parent=1 // pred_check
      _
    $region27: #{tfgridnet_forward.29} parent=1 // pred_check_branch
      %83 = sbr.rel (0) target = $region29
    $region28: #{tfgridnet_forward.29} parent=1 // pred_region
      %84 = dma.done [#allocation3], 768
    $region29: #{tfgridnet_forward.29} parent=1 // pred_fallthru
      _
    // Predicated region
    $region30: #{tfgridnet_forward.29} parent=1 // pred_check
      _
    $region31: #{tfgridnet_forward.29} parent=1 // pred_check_branch
      %86 = sbr.rel (0) target = $region33
    $region32: #{tfgridnet_forward.29} parent=1 // pred_region
      %87 = dma.done [#allocation6], 768
    $region33: #{tfgridnet_forward.29} parent=1 // pred_fallthru
      _
    // Predicated region
    $region34: #{tfgridnet_forward.29} parent=1 // pred_check
      _
    $region35: #{tfgridnet_forward.29} parent=1 // pred_check_branch
      %89 = sbr.rel (0) target = $region37
    $region36: #{tfgridnet_forward.29} parent=1 // pred_region
      %90 = dma.done [#allocation6], 768
    $region37: #{tfgridnet_forward.29} parent=1 // pred_fallthru
      _
    // Predicated region
    $region38: #{tfgridnet_forward.29} parent=1 // pred_check
      _
    $region39: #{tfgridnet_forward.29} parent=1 // pred_check_branch
      %92 = sbr.rel (0) target = $region41
    $region40: #{tfgridnet_forward.29} parent=1 // pred_region
      %93 = dma.done [#allocation9], 64
    $region41: #{tfgridnet_forward.29} parent=1 // pred_fallthru
      _
    // Predicated region
    $region42: #{tfgridnet_forward.29} parent=1 // pred_check
      _
    $region43: #{tfgridnet_forward.29} parent=1 // pred_check_branch
      %95 = sbr.rel (0) target = $region45
    $region44: #{tfgridnet_forward.29} parent=1 // pred_region
      %96 = dma.done [#allocation9], 64
    $region45: #{tfgridnet_forward.29} parent=1 // pred_fallthru
      _
    // Predicated region
    $region46: #{tfgridnet_forward.29} parent=1 // pred_check
      _
    $region47: #{tfgridnet_forward.29} parent=1 // pred_check_branch
      %98 = sbr.rel (0) target = $region49
    $region48: #{tfgridnet_forward.29} parent=1 // pred_region
      %99 = dma.done [#allocation12], 16
    $region49: #{tfgridnet_forward.29} parent=1 // pred_fallthru
      _
    %v101 = vld [vmem:[#allocation2] sm:$0xff]
    %v102 = vld [vmem:[#allocation2 + $0x8] sm:$0xff]
    %v103 = vld [vmem:[#allocation2 + $0x10] sm:$0xff]
    %v104 = vld [vmem:[#allocation2 + $0x18] sm:$0xff]
    %v105 = vld [vmem:[#allocation2 + $0x20] sm:$0xff]
    %v106 = vld [vmem:[#allocation2 + $0x28] sm:$0xff]
    %v107 = vpack.c.bf16 %v102, %v101
    %v108 = vpack.c.bf16 %v104, %v103
    %v109 = vpack.c.bf16 %v106, %v105
    %v110 = vld [vmem:[#allocation8] sm:$0xf]
    %v111 = vld [vmem:[#allocation5] sm:$0xff]
    %v112 = vld [vmem:[#allocation5 + $0x8] sm:$0xff]
    %v113 = vld [vmem:[#allocation5 + $0x10] sm:$0xff]
    %v114 = vld [vmem:[#allocation5 + $0x18] sm:$0xff]
    %v115 = vld [vmem:[#allocation5 + $0x20] sm:$0xff]
    %v116 = vld [vmem:[#allocation5 + $0x28] sm:$0xff]
    %v117 = vpack.c.bf16 %v112, %v111
    %v118 = vpack.c.bf16 %v114, %v113
    %v119 = vpack.c.bf16 %v116, %v115
    %v120 = vld [vmem:[#allocation10] sm:$0xf]
    %vm121 = vcmask 64512
    %v123 = vsel %vm121, %v117, 0
    %v126 = vsel %vm121, %v118, 0
    %v129 = vsel %vm121, %v119, 0
    %vm131 = vcmask 1043456
    %v133 = vsel %vm131, %v120, 0
    %135 = vmatprep.subr.bf16.mxu0 0
    %136 = vmatpush1.bf16.msra.mxu0 %v133
    %137 = vmatprep.subr.bf16.mxu0 0
    %138 = vmatpush1.bf16.msra.mxu0 0
    %139 = vmatprep.subr.bf16.mxu0 0
    %140 = vmatpush1.bf16.msra.mxu0 0
    %141 = vmatprep.subr.bf16.mxu0 0
    %142 = vmatpush1.bf16.msra.mxu0 0
    %143 = vmatprep.subr.bf16.mxu0 0
    %144 = vmatpush1.bf16.msra.mxu0 0
    %145 = vmatprep.subr.bf16.mxu0 0
    %146 = vmatpush1.bf16.msra.mxu0 0
    %147 = vmatprep.subr.bf16.mxu0 0
    %148 = vmatpush1.bf16.msra.mxu0 0
    %149 = vmatprep.subr.bf16.mxu0 0
    %150 = vmatpush1.bf16.msra.mxu0 0
    %151 = vmatprep.subr.bf16.mxu0 0
    %152 = vmatpush1.bf16.msra.mxu0 0
    %153 = vmatprep.subr.bf16.mxu0 0
    %154 = vmatpush1.bf16.msra.mxu0 0
    %155 = vmatprep.subr.bf16.mxu0 0
    %156 = vmatpush1.bf16.msra.mxu0 0
    %157 = vmatprep.subr.bf16.mxu0 0
    %158 = vmatpush1.bf16.msra.mxu0 0
    %159 = vmatprep.subr.bf16.mxu0 0
    %160 = vmatpush1.bf16.msra.mxu0 0
    %161 = vmatprep.subr.bf16.mxu0 0
    %162 = vmatpush1.bf16.msra.mxu0 0
    %163 = vmatprep.subr.bf16.mxu0 0
    %164 = vmatpush1.bf16.msra.mxu0 0
    %165 = vmatprep.subr.bf16.mxu0 0
    %166 = vmatpush1.bf16.msra.mxu0 0
    %167 = vmatprep.mubr.bf16.mxu0 0
    %168 = vmatmul.mubr.bf16.gmra.mrb[0].mxu0 %v123
    %v169 = vpop.f32.mrb[0].mxu0
    %v170 = vadd.f32 0.0, %v169
    %v171 = vpop.f32.mrb[0].mxu0
    %v172 = vpop.f32.mrb[0].mxu0
    %v173 = vadd.f32 0.0, %v172
    %v174 = vpop.f32.mrb[0].mxu0
    %175 = vmatprep.mubr.bf16.mxu0 0
    %176 = vmatmul.mubr.bf16.gmra.mrb[0].mxu0 %v126
    %v177 = vpop.f32.mrb[0].mxu0
    %v178 = vadd.f32 0.0, %v177
    %v179 = vpop.f32.mrb[0].mxu0
    %v180 = vpop.f32.mrb[0].mxu0
    %v181 = vadd.f32 0.0, %v180
    %v182 = vpop.f32.mrb[0].mxu0
    %183 = vmatprep.mubr.bf16.mxu0 0
    %184 = vmatmul.mubr.bf16.gmra.mrb[0].mxu0 %v129
    %v185 = vpop.f32.mrb[0].mxu0
    %v186 = vadd.f32 0.0, %v185
    %v187 = vpop.f32.mrb[0].mxu0
    %v188 = vpop.f32.mrb[0].mxu0
    %v189 = vadd.f32 0.0, %v188
    %v190 = vpop.f32.mrb[0].mxu0
    %191 = vdwg.mxu0
    %v193 = vsel %vm121, %v107, 0
    %v196 = vsel %vm121, %v108, 0
    %v199 = vsel %vm121, %v109, 0
    %v202 = vsel %vm131, %v110, 0
    %204 = vmatprep.subr.bf16.mxu0 0
    %205 = vmatpush1.bf16.msra.mxu0 %v202
    %206 = vmatprep.subr.bf16.mxu0 0
    %207 = vmatpush1.bf16.msra.mxu0 0
    %208 = vmatprep.subr.bf16.mxu0 0
    %209 = vmatpush1.bf16.msra.mxu0 0
    %210 = vmatprep.subr.bf16.mxu0 0
    %211 = vmatpush1.bf16.msra.mxu0 0
    %212 = vmatprep.subr.bf16.mxu0 0
    %213 = vmatpush1.bf16.msra.mxu0 0
    %214 = vmatprep.subr.bf16.mxu0 0
    %215 = vmatpush1.bf16.msra.mxu0 0
    %216 = vmatprep.subr.bf16.mxu0 0
    %217 = vmatpush1.bf16.msra.mxu0 0
    %218 = vmatprep.subr.bf16.mxu0 0
    %219 = vmatpush1.bf16.msra.mxu0 0
    %220 = vmatprep.subr.bf16.mxu0 0
    %221 = vmatpush1.bf16.msra.mxu0 0
    %222 = vmatprep.subr.bf16.mxu0 0
    %223 = vmatpush1.bf16.msra.mxu0 0
    %224 = vmatprep.subr.bf16.mxu0 0
    %225 = vmatpush1.bf16.msra.mxu0 0
    %226 = vmatprep.subr.bf16.mxu0 0
    %227 = vmatpush1.bf16.msra.mxu0 0
    %228 = vmatprep.subr.bf16.mxu0 0
    %229 = vmatpush1.bf16.msra.mxu0 0
    %230 = vmatprep.subr.bf16.mxu0 0
    %231 = vmatpush1.bf16.msra.mxu0 0
    %232 = vmatprep.subr.bf16.mxu0 0
    %233 = vmatpush1.bf16.msra.mxu0 0
    %234 = vmatprep.subr.bf16.mxu0 0
    %235 = vmatpush1.bf16.msra.mxu0 0
    %236 = vmatprep.mubr.bf16.mxu0 0
    %237 = vmatmul.mubr.bf16.gmra.mrb[0].mxu0 %v193
    %v238 = vpop.f32.mrb[0].mxu0
    %v239 = vadd.f32 %v170, %v238
    %v240 = vpop.f32.mrb[0].mxu0
    %v241 = vpop.f32.mrb[0].mxu0
    %v242 = vadd.f32 %v173, %v241
    %v243 = vpop.f32.mrb[0].mxu0
    %244 = vmatprep.mubr.bf16.mxu0 0
    %245 = vmatmul.mubr.bf16.gmra.mrb[0].mxu0 %v196
    %v246 = vpop.f32.mrb[0].mxu0
    %v247 = vadd.f32 %v178, %v246
    %v248 = vpop.f32.mrb[0].mxu0
    %v249 = vpop.f32.mrb[0].mxu0
    %v250 = vadd.f32 %v181, %v249
    %v251 = vpop.f32.mrb[0].mxu0
    %252 = vmatprep.mubr.bf16.mxu0 0
    %253 = vmatmul.mubr.bf16.gmra.mrb[0].mxu0 %v199
    %v254 = vpop.f32.mrb[0].mxu0
    %v255 = vadd.f32 %v186, %v254
    %v256 = vpop.f32.mrb[0].mxu0
    %v257 = vpop.f32.mrb[0].mxu0
    %v258 = vadd.f32 %v189, %v257
    %v259 = vpop.f32.mrb[0].mxu0
    %260 = vdwg.mxu0
    %v261 = vld [vmem:[#allocation11] sm:$0x1]
    %v263 = vlaneseq
    %v264 = vshrl.u32 %v263, 7
    %v265 = vsub.s32 0, %v264
    %v266 = vrot.slane %v261, %v265
    %v268 = vadd.f32 %v239, %v266
    %v269 = vadd.f32 %v242, %v266
    %v270 = vadd.f32 %v247, %v266
    %v271 = vadd.f32 %v250, %v266
    %v272 = vadd.f32 %v255, %v266
    %v273 = vadd.f32 %v258, %v266
    %v274 = vld [vmem:[#allocation7] sm:$0xff]
    %v275 = vld [vmem:[#allocation7 + $0x8] sm:$0xff]
    %v276 = vld [vmem:[#allocation7 + $0x10] sm:$0xff]
    %v277 = vld [vmem:[#allocation7 + $0x18] sm:$0xff]
    %v278 = vld [vmem:[#allocation7 + $0x20] sm:$0xff]
    %v279 = vld [vmem:[#allocation7 + $0x28] sm:$0xff]
    %v280 = vadd.f32 %v268, %v274
    %v281 = vadd.f32 %v269, %v275
    %v282 = vadd.f32 %v270, %v276
    %v283 = vadd.f32 %v271, %v277
    %v284 = vadd.f32 %v272, %v278
    %v285 = vadd.f32 %v273, %v279
    %vm286 = vcmask 261120
    %287 = vst.msk [vmem:[#allocation13] sm:$0xff] %vm286, %v280
    %288 = vst.msk [vmem:[#allocation13 + $0x8] sm:$0xff] %vm286, %v281
    %289 = vst.msk [vmem:[#allocation13 + $0x10] sm:$0xff] %vm286, %v282
    %290 = vst.msk [vmem:[#allocation13 + $0x18] sm:$0xff] %vm286, %v283
    %291 = vst.msk [vmem:[#allocation13 + $0x20] sm:$0xff] %vm286, %v284
    %292 = vst.msk [vmem:[#allocation13 + $0x28] sm:$0xff] %vm286, %v285
    // Predicated region
    $region50: #{tfgridnet_forward.29} parent=1 // pred_check
      _
    $region51: #{tfgridnet_forward.29} parent=1 // pred_check_branch
      %294 = sbr.rel (0) target = $region53
    $region52: #{tfgridnet_forward.29} parent=1 // pred_region
      %s296 = ssub.s32 768, 768
      %297 = vsyncadd [#allocation4], %s296
      %s298 = sshll.u32 [#allocation13], 4
      %s299 = int_to_ptr.vmem [resolvable:$true] %s298
      %304 = dma.vmem_to_hbm [thread:$0]  %s299, 768, %s6, [#allocation4], 128, 128, 8
    $region53: #{tfgridnet_forward.29} parent=1 // pred_fallthru
      _
    // Predicated region
    $region54: #{tfgridnet_forward.29} parent=1 // pred_check
      _
    $region55: #{tfgridnet_forward.29} parent=1 // pred_check_branch
      %306 = sbr.rel (0) target = $region57
    $region56: #{tfgridnet_forward.29} parent=1 // pred_region
      %307 = dma.done [#allocation4], 768
    $region57: #{tfgridnet_forward.29} parent=1 // pred_fallthru
      _
    %308 = vsyncpa [#allocation3], 1
    %309 = vsyncpa [#allocation6], 1
    %310 = vsyncpa [#allocation9], 1
    %311 = vsyncpa [#allocation12], 1
    %312 = vsyncpa [#allocation4], 1

// kernel: tfgridnet_forward.31
$region0: #{tfgridnet_forward.31}
  #allocation0 [shape = 'u32[]', space=smem, size = 0x4, offset = 0x4, fixed_abs, tag = 'smem constant byte address 0x4 - core index']
  #allocation1 [shape = 'u32[144,128]{1,0:T(1,128)}', space=vmem, size = 0x12000, scoped, tag = 'internal scratch']
  #allocation2 [shape = 'f32[24,16]{1,0:T(8,128)}', space=vmem, size = 0x3000, scoped, tag = 'scratch operand']
  #allocation3 [shape = 'f32[24,8]{1,0:T(8,128)}', space=vmem, size = 0x3000, scoped, tag = 'scratch operand']
  #allocation4 [shape = 'f32[24,8]{1,0:T(8,128)}', space=vmem, size = 0x3000, scoped, tag = 'scratch operand']
  %s0 = inlined_call_operand.hbm [shape: f32[2,24,64], index: 0, kind: input, shape index: {}]
  %s1 = inlined_call_operand.hbm [shape: bf16[16,64], index: 1, kind: input, shape index: {}]
  %s2 = inlined_call_operand.hbm [shape: f32[2,24,8], index: 2, kind: output, shape index: {0}]
  %s3 = inlined_call_operand.hbm [shape: f32[2,24,8], index: 3, kind: output, shape index: {1}]
  %4 = xla_tuple %s2, %s3
  %s5 = sld [smem:[#allocation0]]
  $region41: #{tfgridnet_forward.31} parent=0
    _
  %s7 = ssub.s32 1, %s5
  %s8 = scalar_select 0, %s7, %s5
  $region1: #{tfgridnet_forward.31} parent=0
    #allocation5 [shape = 'u8[24576]{0}', space=vmem, size = 0x6000, scoped, tag = 'input window, operand 0, single buffered']
    #allocation6 [shape = 's32[1]{0}', space=sflag, size = 0x4, scoped, tag = 'scoped memory for tfgridnet_forward.31']
    #allocation7 [shape = 's32[1]{0}', space=sflag, size = 0x4, scoped, tag = 'scoped memory for tfgridnet_forward.31']
    #allocation8 [shape = 'u8[4096]{0}', space=vmem, size = 0x1000, scoped, tag = 'input window, operand 1, single buffered']
    #allocation9 [shape = 's32[1]{0}', space=sflag, size = 0x4, scoped, tag = 'scoped memory for tfgridnet_forward.31']
    #allocation10 [shape = 'u8[24576]{0}', space=vmem, size = 0x6000, scoped, tag = 'output window, operand 0, single buffered']
    #allocation11 [shape = 'u8[24576]{0}', space=vmem, size = 0x6000, scoped, tag = 'output window, operand 1, single buffered']
    #allocation12 [shape = 's32[1]{0}', space=sflag, size = 0x4, scoped, tag = 'scoped memory for tfgridnet_forward.31']
    %9 = vsyncpa [#allocation6], 0
    %10 = vsyncpa [#allocation9], 0
    %11 = vsyncpa [#allocation7], 0
    %12 = vsyncpa [#allocation12], 0
    // Predicated region
    $region2: #{tfgridnet_forward.31} parent=1 // pred_check
      _
    $region3: #{tfgridnet_forward.31} parent=1 // pred_check_branch
      %14 = sbr.rel (0) target = $region5
    $region4: #{tfgridnet_forward.31} parent=1 // pred_region
      %s16 = ssub.s32 768, 768
      %17 = vsyncadd [#allocation6], %s16
      %s18 = sshll.u32 [#allocation5], 4
      %s19 = int_to_ptr.vmem [resolvable:$true] %s18
      %24 = dma.hbm_to_vmem [thread:$0]  %s0, 768, %s19, [#allocation6], 128, 128, 8
    $region5: #{tfgridnet_forward.31} parent=1 // pred_fallthru
      _
    // Predicated region
    $region6: #{tfgridnet_forward.31} parent=1 // pred_check
      _
    $region7: #{tfgridnet_forward.31} parent=1 // pred_check_branch
      %26 = sbr.rel (0) target = $region9
    $region8: #{tfgridnet_forward.31} parent=1 // pred_region
      %s28 = ssub.s32 128, 128
      %29 = vsyncadd [#allocation9], %s28
      %s30 = sshll.u32 [#allocation8], 4
      %s31 = int_to_ptr.vmem [resolvable:$true] %s30
      %36 = dma.hbm_to_vmem [thread:$0]  %s1, 128, %s31, [#allocation9], 64, 64, 4
    $region9: #{tfgridnet_forward.31} parent=1 // pred_fallthru
      _
    // Predicated region
    $region10: #{tfgridnet_forward.31} parent=1 // pred_check
      _
    $region11: #{tfgridnet_forward.31} parent=1 // pred_check_branch
      %38 = sbr.rel (0) target = $region13
    $region12: #{tfgridnet_forward.31} parent=1 // pred_region
      %39 = dma.done [#allocation6], 768
    $region13: #{tfgridnet_forward.31} parent=1 // pred_fallthru
      _
    // Predicated region
    $region14: #{tfgridnet_forward.31} parent=1 // pred_check
      _
    $region15: #{tfgridnet_forward.31} parent=1 // pred_check_branch
      %41 = sbr.rel (0) target = $region17
    $region16: #{tfgridnet_forward.31} parent=1 // pred_region
      %42 = dma.done [#allocation9], 128
    $region17: #{tfgridnet_forward.31} parent=1 // pred_fallthru
      _
    %vm44 = vcmask 130048
    %45 = vst.msk [vmem:[#allocation2] sm:$0xff] %vm44, 0.0
    %46 = vst.msk [vmem:[#allocation2 + $0x8] sm:$0xff] %vm44, 0.0
    %47 = vst.msk [vmem:[#allocation2 + $0x10] sm:$0xff] %vm44, 0.0
    %vm48 = vcmask 64512
    %49 = vst.msk [vmem:[#allocation3] sm:$0xff] %vm48, 0.0
    %50 = vst.msk [vmem:[#allocation3 + $0x8] sm:$0xff] %vm48, 0.0
    %51 = vst.msk [vmem:[#allocation3 + $0x10] sm:$0xff] %vm48, 0.0
    %52 = vst.msk [vmem:[#allocation4] sm:$0xff] %vm48, 0.0
    %53 = vst.msk [vmem:[#allocation4 + $0x8] sm:$0xff] %vm48, 0.0
    %54 = vst.msk [vmem:[#allocation4 + $0x10] sm:$0xff] %vm48, 0.0
    loop: start=0, step=1, limit=2
    $region18: #{tfgridnet_forward.31} parent=1 // loop_pre_header
      _
    $region19: #{tfgridnet_forward.31} parent=1 // loop_header
      %s56 = sphi 0, %s60
      %p57 = scmp.ge.s32.totalorder %s56, 2
    $region20: #{tfgridnet_forward.31} parent=1 // loop_header_branch
      %59 = sbr.rel (%p57) target = $region24
    $region21: #{tfgridnet_forward.31} parent=1 // loop_body
      %v61 = vld [vmem:[#allocation2] sm:$0xff]
      %v62 = vld [vmem:[#allocation2 + $0x8] sm:$0xff]
      %v63 = vld [vmem:[#allocation2 + $0x10] sm:$0xff]
      %v64 = vpack.c.bf16 %v62, %v61
      %v65 = vpack.c.bf16 %v63, %v63
      %v66 = vld [vmem:[#allocation8] sm:$0xf]
      %v67 = vld [vmem:[#allocation8 + $0x4] sm:$0xf]
      %v70 = vunpack.c.l.b16 %v66
      %v71 = vunpack.c.l.b16 %v67
      %v72 = vpack.c.b16 %v71, %v70
      %v75 = vsel %vm44, %v64, 0
      %v78 = vsel %vm44, %v65, 0
      %80 = vmatprep.subr.bf16.mxu0 0
      %81 = vmatpush1.bf16.msra.mxu0 %v72
      %82 = vmatprep.subr.bf16.mxu0 0
      %83 = vmatpush1.bf16.msra.mxu0 0
      %84 = vmatprep.subr.bf16.mxu0 0
      %85 = vmatpush1.bf16.msra.mxu0 0
      %86 = vmatprep.subr.bf16.mxu0 0
      %87 = vmatpush1.bf16.msra.mxu0 0
      %88 = vmatprep.subr.bf16.mxu0 0
      %89 = vmatpush1.bf16.msra.mxu0 0
      %90 = vmatprep.subr.bf16.mxu0 0
      %91 = vmatpush1.bf16.msra.mxu0 0
      %92 = vmatprep.subr.bf16.mxu0 0
      %93 = vmatpush1.bf16.msra.mxu0 0
      %94 = vmatprep.subr.bf16.mxu0 0
      %95 = vmatpush1.bf16.msra.mxu0 0
      %96 = vmatprep.subr.bf16.mxu0 0
      %97 = vmatpush1.bf16.msra.mxu0 0
      %98 = vmatprep.subr.bf16.mxu0 0
      %99 = vmatpush1.bf16.msra.mxu0 0
      %100 = vmatprep.subr.bf16.mxu0 0
      %101 = vmatpush1.bf16.msra.mxu0 0
      %102 = vmatprep.subr.bf16.mxu0 0
      %103 = vmatpush1.bf16.msra.mxu0 0
      %104 = vmatprep.subr.bf16.mxu0 0
      %105 = vmatpush1.bf16.msra.mxu0 0
      %106 = vmatprep.subr.bf16.mxu0 0
      %107 = vmatpush1.bf16.msra.mxu0 0
      %108 = vmatprep.subr.bf16.mxu0 0
      %109 = vmatpush1.bf16.msra.mxu0 0
      %110 = vmatprep.subr.bf16.mxu0 0
      %111 = vmatpush1.bf16.msra.mxu0 0
      %112 = vmatprep.mubr.bf16.mxu0 0
      %113 = vmatmul.mubr.bf16.gmra.mrb[0].mxu0 %v75
      %v114 = vpop.f32.mrb[0].mxu0
      %v115 = vadd.f32 0.0, %v114
      %v116 = vpop.f32.mrb[0].mxu0
      %v117 = vpop.f32.mrb[0].mxu0
      %v118 = vadd.f32 0.0, %v117
      %v119 = vpop.f32.mrb[0].mxu0
      %120 = vmatprep.mubr.bf16.mxu0 0
      %121 = vmatmul.mubr.bf16.gmra.mrb[0].mxu0 %v78
      %v122 = vpop.f32.mrb[0].mxu0
      %v123 = vadd.f32 0.0, %v122
      %v124 = vpop.f32.mrb[0].mxu0
      %v125 = vpop.f32.mrb[0].mxu0
      %v126 = vpop.f32.mrb[0].mxu0
      %127 = vdwg.mxu0
      %s128 = smul.u32 %s56, 24
      %s129 = scalar_lea.vmem [#allocation5], %s128
      %v130 = vld [vmem:[%s129] sm:$0xff]
      %v131 = vld [vmem:[%s129 + $0x8] sm:$0xff]
      %v132 = vld [vmem:[%s129 + $0x10] sm:$0xff]
      %s133 = ssub.s32 1, %s56
      %s134 = smul.u32 %s133, 24
      %s135 = scalar_lea.vmem [#allocation5], %s134
      %v136 = vld [vmem:[%s135] sm:$0xff]
      %v137 = vld [vmem:[%s135 + $0x8] sm:$0xff]
      %v138 = vld [vmem:[%s135 + $0x10] sm:$0xff]
      %v139 = vadd.f32 %v115, %v130
      %v140 = vadd.f32 %v118, %v131
      %v141 = vadd.f32 %v123, %v132
      %v142 = vld [vmem:[#allocation3] sm:$0xff]
      %v143 = vld [vmem:[#allocation3 + $0x8] sm:$0xff]
      %v144 = vld [vmem:[#allocation3 + $0x10] sm:$0xff]
      %v145 = vxor.u32 %v139, 2147483648
      %v146 = vxor.u32 %v140, 2147483648
      %v147 = vxor.u32 %v141, 2147483648
      %v148 = vmul.f32 %v145, 1.442695
      %v149 = vpow.pop %v148
      %v150 = vmul.f32 %v146, 1.442695
      %v151 = vpow.pop %v150
      %v152 = vmul.f32 %v147, 1.442695
      %v153 = vpow.pop %v152
      %v154 = vadd.f32 %v149, 1.0
      %v155 = vadd.f32 %v151, 1.0
      %v156 = vadd.f32 %v153, 1.0
      %v157 = vrcp.pop %v154
      %v158 = vmul.f32 1.0, %v157
      %v159 = vrcp.pop %v155
      %v160 = vmul.f32 1.0, %v159
      %v161 = vrcp.pop %v156
      %v162 = vmul.f32 1.0, %v161
      %v163 = vtanh.pop %v139
      %v164 = vtanh.pop %v140
      %v165 = vtanh.pop %v141
      %169 = vrot.lane.b32.xlu0 %v142, 8
      %v170 = vpop.permute.xlu0 %169
      %171 = vrot.lane.b32.xlu0 %v143, 8
      %v172 = vpop.permute.xlu0 %171
      %173 = vrot.lane.b32.xlu0 %v144, 8
      %v174 = vpop.permute.xlu0 %173
      %v178 = vmul.f32 %v158, %v170
      %v179 = vmul.f32 %v160, %v172
      %v180 = vmul.f32 %v162, %v174
      %184 = vrot.lane.b32.xlu0 %v163, 112
      %v185 = vpop.permute.xlu0 %184
      %186 = vrot.lane.b32.xlu0 %v164, 112
      %v187 = vpop.permute.xlu0 %186
      %188 = vrot.lane.b32.xlu0 %v165, 112
      %v189 = vpop.permute.xlu0 %188
      %v193 = vmul.f32 %v158, %v185
      %v194 = vmul.f32 %v160, %v187
      %v195 = vmul.f32 %v162, %v189
      %199 = vrot.lane.b32.xlu0 %v193, 8
      %v200 = vpop.permute.xlu0 %199
      %201 = vrot.lane.b32.xlu0 %v194, 8
      %v202 = vpop.permute.xlu0 %201
      %203 = vrot.lane.b32.xlu0 %v195, 8
      %v204 = vpop.permute.xlu0 %203
      %v208 = vadd.f32 %v178, %v200
      %v209 = vadd.f32 %v179, %v202
      %v210 = vadd.f32 %v180, %v204
      %v211 = vtanh.pop %v208
      %v212 = vtanh.pop %v209
      %v213 = vtanh.pop %v210
      %217 = vrot.lane.b32.xlu0 %v211, 16
      %v218 = vpop.permute.xlu0 %217
      %219 = vrot.lane.b32.xlu0 %v212, 16
      %v220 = vpop.permute.xlu0 %219
      %221 = vrot.lane.b32.xlu0 %v213, 16
      %v222 = vpop.permute.xlu0 %221
      %v226 = vmul.f32 %v158, %v218
      %v227 = vmul.f32 %v160, %v220
      %v228 = vmul.f32 %v162, %v222
      %v229 = vadd.f32 %v115, %v136
      %v230 = vadd.f32 %v118, %v137
      %v231 = vadd.f32 %v123, %v138
      %v232 = vld [vmem:[#allocation4] sm:$0xff]
      %v233 = vld [vmem:[#allocation4 + $0x8] sm:$0xff]
      %v234 = vld [vmem:[#allocation4 + $0x10] sm:$0xff]
      %v235 = vxor.u32 %v229, 2147483648
      %v236 = vxor.u32 %v230, 2147483648
      %v237 = vxor.u32 %v231, 2147483648
      %v238 = vmul.f32 %v235, 1.442695
      %v239 = vpow.pop %v238
      %v240 = vmul.f32 %v236, 1.442695
      %v241 = vpow.pop %v240
      %v242 = vmul.f32 %v237, 1.442695
      %v243 = vpow.pop %v242
      %v244 = vadd.f32 %v239, 1.0
      %v245 = vadd.f32 %v241, 1.0
      %v246 = vadd.f32 %v243, 1.0
      %v247 = vrcp.pop %v244
      %v248 = vmul.f32 1.0, %v247
      %v249 = vrcp.pop %v245
      %v250 = vmul.f32 1.0, %v249
      %v251 = vrcp.pop %v246
      %v252 = vmul.f32 1.0, %v251
      %v253 = vtanh.pop %v229
      %v254 = vtanh.pop %v230
      %v255 = vtanh.pop %v231
      %259 = vrot.lane.b32.xlu0 %v232, 40
      %v260 = vpop.permute.xlu0 %259
      %261 = vrot.lane.b32.xlu0 %v233, 40
      %v262 = vpop.permute.xlu0 %261
      %263 = vrot.lane.b32.xlu0 %v234, 40
      %v264 = vpop.permute.xlu0 %263
      %v268 = vmul.f32 %v248, %v260
      %v269 = vmul.f32 %v250, %v262
      %v270 = vmul.f32 %v252, %v264
      %274 = vrot.lane.b32.xlu0 %v253, 112
      %v275 = vpop.permute.xlu0 %274
      %276 = vrot.lane.b32.xlu0 %v254, 112
      %v277 = vpop.permute.xlu0 %276
      %278 = vrot.lane.b32.xlu0 %v255, 112
      %v279 = vpop.permute.xlu0 %278
      %v283 = vmul.f32 %v248, %v275
      %v284 = vmul.f32 %v250, %v277
      %v285 = vmul.f32 %v252, %v279
      %289 = vrot.lane.b32.xlu0 %v283, 8
      %v290 = vpop.permute.xlu0 %289
      %291 = vrot.lane.b32.xlu0 %v284, 8
      %v292 = vpop.permute.xlu0 %291
      %293 = vrot.lane.b32.xlu0 %v285, 8
      %v294 = vpop.permute.xlu0 %293
      %v298 = vadd.f32 %v268, %v290
      %v299 = vadd.f32 %v269, %v292
      %v300 = vadd.f32 %v270, %v294
      %v301 = vtanh.pop %v298
      %v302 = vtanh.pop %v299
      %v303 = vtanh.pop %v300
      %307 = vrot.lane.b32.xlu0 %v301, 16
      %v308 = vpop.permute.xlu0 %307
      %309 = vrot.lane.b32.xlu0 %v302, 16
      %v310 = vpop.permute.xlu0 %309
      %311 = vrot.lane.b32.xlu0 %v303, 16
      %v312 = vpop.permute.xlu0 %311
      %v316 = vmul.f32 %v248, %v308
      %v317 = vmul.f32 %v250, %v310
      %v318 = vmul.f32 %v252, %v312
      %322 = vrot.lane.b32.xlu0 %v208, 120
      %v323 = vpop.permute.xlu0 %322
      %324 = vrot.lane.b32.xlu0 %v209, 120
      %v325 = vpop.permute.xlu0 %324
      %326 = vrot.lane.b32.xlu0 %v210, 120
      %v327 = vpop.permute.xlu0 %326
      %331 = vst.msk [vmem:[#allocation3] sm:$0xff] %vm48, %v323
      %332 = vst.msk [vmem:[#allocation3 + $0x8] sm:$0xff] %vm48, %v325
      %333 = vst.msk [vmem:[#allocation3 + $0x10] sm:$0xff] %vm48, %v327
      %337 = vrot.lane.b32.xlu0 %v298, 88
      %v338 = vpop.permute.xlu0 %337
      %339 = vrot.lane.b32.xlu0 %v299, 88
      %v340 = vpop.permute.xlu0 %339
      %341 = vrot.lane.b32.xlu0 %v300, 88
      %v342 = vpop.permute.xlu0 %341
      %346 = vst.msk [vmem:[#allocation4] sm:$0xff] %vm48, %v338
      %347 = vst.msk [vmem:[#allocation4 + $0x8] sm:$0xff] %vm48, %v340
      %348 = vst.msk [vmem:[#allocation4 + $0x10] sm:$0xff] %vm48, %v342
      %352 = vrot.lane.b32.xlu0 %v226, 104
      %v353 = vpop.permute.xlu0 %352
      %354 = vrot.lane.b32.xlu0 %v227, 104
      %v355 = vpop.permute.xlu0 %354
      %356 = vrot.lane.b32.xlu0 %v228, 104
      %v357 = vpop.permute.xlu0 %356
      %364 = vrot.lane.b32.xlu0 %v316, 80
      %v365 = vpop.permute.xlu0 %364
      %366 = vrot.lane.b32.xlu0 %v317, 80
      %v367 = vpop.permute.xlu0 %366
      %368 = vrot.lane.b32.xlu0 %v318, 80
      %v369 = vpop.permute.xlu0 %368
      %v373 = vsel %vm48, %v353, %v365
      %v374 = vsel %vm48, %v355, %v367
      %v375 = vsel %vm48, %v357, %v369
      %376 = vst.msk [vmem:[#allocation2] sm:$0xff] %vm44, %v373
      %377 = vst.msk [vmem:[#allocation2 + $0x8] sm:$0xff] %vm44, %v374
      %378 = vst.msk [vmem:[#allocation2 + $0x10] sm:$0xff] %vm44, %v375
      %s379 = scalar_lea.vmem [#allocation10], %s128
      %380 = vst.msk [vmem:[%s379] sm:$0xff] %vm48, %v353
      %381 = vst.msk [vmem:[%s379 + $0x8] sm:$0xff] %vm48, %v355
      %382 = vst.msk [vmem:[%s379 + $0x10] sm:$0xff] %vm48, %v357
      %383 = vrot.lane.b32.xlu0 %v316, 72
      %v384 = vpop.permute.xlu0 %383
      %385 = vrot.lane.b32.xlu0 %v317, 72
      %v386 = vpop.permute.xlu0 %385
      %387 = vrot.lane.b32.xlu0 %v318, 72
      %v388 = vpop.permute.xlu0 %387
      %s392 = scalar_lea.vmem [#allocation11], %s134
      %393 = vst.msk [vmem:[%s392] sm:$0xff] %vm48, %v384
      %394 = vst.msk [vmem:[%s392 + $0x8] sm:$0xff] %vm48, %v386
      %395 = vst.msk [vmem:[%s392 + $0x10] sm:$0xff] %vm48, %v388
    $region22: #{tfgridnet_forward.31} parent=1 // loop_footer
      %s60 = sadd.s32 1, %s56
    $region23: #{tfgridnet_forward.31} parent=1 // loop_footer_branch
      %55 = sbr.rel target = $region19
    $region24: #{tfgridnet_forward.31} parent=1 // loop_exit
      _
    // Predicated region
    $region25: #{tfgridnet_forward.31} parent=1 // pred_check
      _
    $region26: #{tfgridnet_forward.31} parent=1 // pred_check_branch
      %397 = sbr.rel (0) target = $region28
    $region27: #{tfgridnet_forward.31} parent=1 // pred_region
      %s399 = ssub.s32 768, 768
      %400 = vsyncadd [#allocation7], %s399
      %s401 = sshll.u32 [#allocation10], 4
      %s402 = int_to_ptr.vmem [resolvable:$true] %s401
      %407 = dma.vmem_to_hbm [thread:$0]  %s402, 768, %s2, [#allocation7], 128, 128, 8
    $region28: #{tfgridnet_forward.31} parent=1 // pred_fallthru
      _
    // Predicated region
    $region29: #{tfgridnet_forward.31} parent=1 // pred_check
      _
    $region30: #{tfgridnet_forward.31} parent=1 // pred_check_branch
      %409 = sbr.rel (0) target = $region32
    $region31: #{tfgridnet_forward.31} parent=1 // pred_region
      %s411 = ssub.s32 768, 768
      %412 = vsyncadd [#allocation12], %s411
      %s413 = sshll.u32 [#allocation11], 4
      %s414 = int_to_ptr.vmem [resolvable:$true] %s413
      %419 = dma.vmem_to_hbm [thread:$0]  %s414, 768, %s3, [#allocation12], 128, 128, 8
    $region32: #{tfgridnet_forward.31} parent=1 // pred_fallthru
      _
    // Predicated region
    $region33: #{tfgridnet_forward.31} parent=1 // pred_check
      _
    $region34: #{tfgridnet_forward.31} parent=1 // pred_check_branch
      %421 = sbr.rel (0) target = $region36
    $region35: #{tfgridnet_forward.31} parent=1 // pred_region
      %422 = dma.done [#allocation7], 768
    $region36: #{tfgridnet_forward.31} parent=1 // pred_fallthru
      _
    // Predicated region
    $region37: #{tfgridnet_forward.31} parent=1 // pred_check
      _
    $region38: #{tfgridnet_forward.31} parent=1 // pred_check_branch
      %424 = sbr.rel (0) target = $region40
    $region39: #{tfgridnet_forward.31} parent=1 // pred_region
      %425 = dma.done [#allocation12], 768
    $region40: #{tfgridnet_forward.31} parent=1 // pred_fallthru
      _
    %426 = vsyncpa [#allocation6], 1
    %427 = vsyncpa [#allocation9], 1
    %428 = vsyncpa [#allocation7], 1
    %429 = vsyncpa [#allocation12], 1

// kernel: tfgridnet_forward.33
$region0: #{tfgridnet_forward.33}
  #allocation0 [shape = 'u32[]', space=smem, size = 0x4, offset = 0x4, fixed_abs, tag = 'smem constant byte address 0x4 - core index']
  #allocation1 [shape = 'u32[144,128]{1,0:T(1,128)}', space=vmem, size = 0x12000, scoped, tag = 'internal scratch']
  %s0 = inlined_call_operand.hbm [shape: f32[144,8], index: 0, kind: input, shape index: {}]
  %s1 = inlined_call_operand.hbm [shape: bf16[8,16], index: 1, kind: input, shape index: {}]
  %s2 = inlined_call_operand.hbm [shape: f32[1,16], index: 2, kind: input, shape index: {}]
  %s3 = inlined_call_operand.hbm [shape: f32[144,16], index: 3, kind: output, shape index: {}]
  %s4 = sld [smem:[#allocation0]]
  $region34: #{tfgridnet_forward.33} parent=0
    _
  %s6 = ssub.s32 1, %s4
  %s7 = scalar_select 0, %s6, %s4
  $region1: #{tfgridnet_forward.33} parent=0
    #allocation2 [shape = 'u8[73728]{0}', space=vmem, size = 0x12000, scoped, tag = 'input window, operand 0, single buffered']
    #allocation3 [shape = 's32[1]{0}', space=sflag, size = 0x4, scoped, tag = 'scoped memory for tfgridnet_forward.33']
    #allocation4 [shape = 's32[1]{0}', space=sflag, size = 0x4, scoped, tag = 'scoped memory for tfgridnet_forward.33']
    #allocation5 [shape = 'u8[2048]{0}', space=vmem, size = 0x800, scoped, tag = 'input window, operand 1, single buffered']
    #allocation6 [shape = 's32[1]{0}', space=sflag, size = 0x4, scoped, tag = 'scoped memory for tfgridnet_forward.33']
    #allocation7 [shape = 'u8[512]{0}', space=vmem, size = 0x400, scoped, tag = 'input window, operand 2, single buffered']
    #allocation8 [shape = 'u8[73728]{0}', space=vmem, size = 0x12000, scoped, tag = 'output window, operand 0, single buffered']
    %8 = vsyncpa [#allocation3], 0
    %9 = vsyncpa [#allocation6], 0
    %10 = vsyncpa [#allocation4], 0
    // Predicated region
    $region2: #{tfgridnet_forward.33} parent=1 // pred_check
      _
    $region3: #{tfgridnet_forward.33} parent=1 // pred_check_branch
      %12 = sbr.rel (0) target = $region5
    $region4: #{tfgridnet_forward.33} parent=1 // pred_region
      %s14 = ssub.s32 2304, 2304
      %15 = vsyncadd [#allocation3], %s14
      %s16 = sshll.u32 [#allocation2], 4
      %s17 = int_to_ptr.vmem [resolvable:$true] %s16
      %22 = dma.hbm_to_vmem [thread:$0]  %s0, 2304, %s17, [#allocation3], 128, 128, 8
    $region5: #{tfgridnet_forward.33} parent=1 // pred_fallthru
      _
    // Predicated region
    $region6: #{tfgridnet_forward.33} parent=1 // pred_check
      _
    $region7: #{tfgridnet_forward.33} parent=1 // pred_check_branch
      %24 = sbr.rel (0) target = $region9
    $region8: #{tfgridnet_forward.33} parent=1 // pred_region
      %s26 = ssub.s32 64, 64
      %27 = vsyncadd [#allocation6], %s26
      %s29 = sshll.u32 [#allocation5], 4
      %s30 = int_to_ptr.vmem [resolvable:$true] %s29
      %32 = dma.hbm_to_vmem [thread:$0]  %s1, 64, %s30, [#allocation6]
    $region9: #{tfgridnet_forward.33} parent=1 // pred_fallthru
      _
    // Predicated region
    $region10: #{tfgridnet_forward.33} parent=1 // pred_check
      _
    $region11: #{tfgridnet_forward.33} parent=1 // pred_check_branch
      %34 = sbr.rel (0) target = $region13
    $region12: #{tfgridnet_forward.33} parent=1 // pred_region
      %s36 = ssub.s32 16, 16
      %37 = vsyncadd [#allocation6], %s36
      %s39 = sshll.u32 [#allocation7], 4
      %s40 = int_to_ptr.vmem [resolvable:$true] %s39
      %42 = dma.hbm_to_vmem [thread:$0]  %s2, 16, %s40, [#allocation6]
    $region13: #{tfgridnet_forward.33} parent=1 // pred_fallthru
      _
    // Predicated region
    $region14: #{tfgridnet_forward.33} parent=1 // pred_check
      _
    $region15: #{tfgridnet_forward.33} parent=1 // pred_check_branch
      %44 = sbr.rel (0) target = $region17
    $region16: #{tfgridnet_forward.33} parent=1 // pred_region
      %45 = dma.done [#allocation3], 2304
    $region17: #{tfgridnet_forward.33} parent=1 // pred_fallthru
      _
    // Predicated region
    $region18: #{tfgridnet_forward.33} parent=1 // pred_check
      _
    $region19: #{tfgridnet_forward.33} parent=1 // pred_check_branch
      %47 = sbr.rel (0) target = $region21
    $region20: #{tfgridnet_forward.33} parent=1 // pred_region
      %48 = dma.done [#allocation6], 64
    $region21: #{tfgridnet_forward.33} parent=1 // pred_fallthru
      _
    // Predicated region
    $region22: #{tfgridnet_forward.33} parent=1 // pred_check
      _
    $region23: #{tfgridnet_forward.33} parent=1 // pred_check_branch
      %50 = sbr.rel (0) target = $region25
    $region24: #{tfgridnet_forward.33} parent=1 // pred_region
      %51 = dma.done [#allocation6], 16
    $region25: #{tfgridnet_forward.33} parent=1 // pred_fallthru
      _
    %v53 = vld [vmem:[#allocation2] sm:$0xff]
    %v54 = vld [vmem:[#allocation2 + $0x8] sm:$0xff]
    %v55 = vld [vmem:[#allocation2 + $0x10] sm:$0xff]
    %v56 = vld [vmem:[#allocation2 + $0x18] sm:$0xff]
    %v57 = vld [vmem:[#allocation2 + $0x20] sm:$0xff]
    %v58 = vld [vmem:[#allocation2 + $0x28] sm:$0xff]
    %v59 = vld [vmem:[#allocation2 + $0x30] sm:$0xff]
    %v60 = vld [vmem:[#allocation2 + $0x38] sm:$0xff]
    %v61 = vld [vmem:[#allocation2 + $0x40] sm:$0xff]
    %v62 = vld [vmem:[#allocation2 + $0x48] sm:$0xff]
    %v63 = vld [vmem:[#allocation2 + $0x50] sm:$0xff]
    %v64 = vld [vmem:[#allocation2 + $0x58] sm:$0xff]
    %v65 = vld [vmem:[#allocation2 + $0x60] sm:$0xff]
    %v66 = vld [vmem:[#allocation2 + $0x68] sm:$0xff]
    %v67 = vld [vmem:[#allocation2 + $0x70] sm:$0xff]
    %v68 = vld [vmem:[#allocation2 + $0x78] sm:$0xff]
    %v69 = vld [vmem:[#allocation2 + $0x80] sm:$0xff]
    %v70 = vld [vmem:[#allocation2 + $0x88] sm:$0xff]
    %v71 = vpack.c.bf16 %v54, %v53
    %v72 = vpack.c.bf16 %v56, %v55
    %v73 = vpack.c.bf16 %v58, %v57
    %v74 = vpack.c.bf16 %v60, %v59
    %v75 = vpack.c.bf16 %v62, %v61
    %v76 = vpack.c.bf16 %v64, %v63
    %v77 = vpack.c.bf16 %v66, %v65
    %v78 = vpack.c.bf16 %v68, %v67
    %v79 = vpack.c.bf16 %v70, %v69
    %v80 = vld [vmem:[#allocation5] sm:$0xf]
    %v81 = vld [vmem:[#allocation7] sm:$0x1]
    %v83 = vlaneseq
    %v84 = vshrl.u32 %v83, 7
    %v85 = vsub.s32 0, %v84
    %v86 = vrot.slane %v81, %v85
    %vm88 = vcmask 64512
    %v90 = vsel %vm88, %v71, 0
    %v93 = vsel %vm88, %v72, 0
    %v96 = vsel %vm88, %v73, 0
    %v99 = vsel %vm88, %v74, 0
    %v102 = vsel %vm88, %v75, 0
    %v105 = vsel %vm88, %v76, 0
    %v108 = vsel %vm88, %v77, 0
    %v111 = vsel %vm88, %v78, 0
    %v114 = vsel %vm88, %v79, 0
    %vm116 = vcmask 1043456
    %v118 = vsel %vm116, %v80, 0
    %120 = vmatprep.subr.bf16.mxu0 0
    %121 = vmatpush1.bf16.msra.mxu0 %v118
    %122 = vmatprep.subr.bf16.mxu0 0
    %123 = vmatpush1.bf16.msra.mxu0 0
    %124 = vmatprep.subr.bf16.mxu0 0
    %125 = vmatpush1.bf16.msra.mxu0 0
    %126 = vmatprep.subr.bf16.mxu0 0
    %127 = vmatpush1.bf16.msra.mxu0 0
    %128 = vmatprep.subr.bf16.mxu0 0
    %129 = vmatpush1.bf16.msra.mxu0 0
    %130 = vmatprep.subr.bf16.mxu0 0
    %131 = vmatpush1.bf16.msra.mxu0 0
    %132 = vmatprep.subr.bf16.mxu0 0
    %133 = vmatpush1.bf16.msra.mxu0 0
    %134 = vmatprep.subr.bf16.mxu0 0
    %135 = vmatpush1.bf16.msra.mxu0 0
    %136 = vmatprep.subr.bf16.mxu0 0
    %137 = vmatpush1.bf16.msra.mxu0 0
    %138 = vmatprep.subr.bf16.mxu0 0
    %139 = vmatpush1.bf16.msra.mxu0 0
    %140 = vmatprep.subr.bf16.mxu0 0
    %141 = vmatpush1.bf16.msra.mxu0 0
    %142 = vmatprep.subr.bf16.mxu0 0
    %143 = vmatpush1.bf16.msra.mxu0 0
    %144 = vmatprep.subr.bf16.mxu0 0
    %145 = vmatpush1.bf16.msra.mxu0 0
    %146 = vmatprep.subr.bf16.mxu0 0
    %147 = vmatpush1.bf16.msra.mxu0 0
    %148 = vmatprep.subr.bf16.mxu0 0
    %149 = vmatpush1.bf16.msra.mxu0 0
    %150 = vmatprep.subr.bf16.mxu0 0
    %151 = vmatpush1.bf16.msra.mxu0 0
    %152 = vmatprep.mubr.bf16.mxu0 0
    %153 = vmatmul.mubr.bf16.gmra.mrb[0].mxu0 %v90
    %v154 = vpop.f32.mrb[0].mxu0
    %v155 = vadd.f32 %v86, %v154
    %v156 = vpop.f32.mrb[0].mxu0
    %v157 = vpop.f32.mrb[0].mxu0
    %v158 = vadd.f32 %v86, %v157
    %v159 = vpop.f32.mrb[0].mxu0
    %160 = vmatprep.mubr.bf16.mxu0 0
    %161 = vmatmul.mubr.bf16.gmra.mrb[0].mxu0 %v93
    %v162 = vpop.f32.mrb[0].mxu0
    %v163 = vadd.f32 %v86, %v162
    %v164 = vpop.f32.mrb[0].mxu0
    %v165 = vpop.f32.mrb[0].mxu0
    %v166 = vadd.f32 %v86, %v165
    %v167 = vpop.f32.mrb[0].mxu0
    %168 = vmatprep.mubr.bf16.mxu0 0
    %169 = vmatmul.mubr.bf16.gmra.mrb[0].mxu0 %v96
    %v170 = vpop.f32.mrb[0].mxu0
    %v171 = vadd.f32 %v86, %v170
    %v172 = vpop.f32.mrb[0].mxu0
    %v173 = vpop.f32.mrb[0].mxu0
    %v174 = vadd.f32 %v86, %v173
    %v175 = vpop.f32.mrb[0].mxu0
    %176 = vmatprep.mubr.bf16.mxu0 0
    %177 = vmatmul.mubr.bf16.gmra.mrb[0].mxu0 %v99
    %v178 = vpop.f32.mrb[0].mxu0
    %v179 = vadd.f32 %v86, %v178
    %v180 = vpop.f32.mrb[0].mxu0
    %v181 = vpop.f32.mrb[0].mxu0
    %v182 = vadd.f32 %v86, %v181
    %v183 = vpop.f32.mrb[0].mxu0
    %184 = vmatprep.mubr.bf16.mxu0 0
    %185 = vmatmul.mubr.bf16.gmra.mrb[0].mxu0 %v102
    %v186 = vpop.f32.mrb[0].mxu0
    %v187 = vadd.f32 %v86, %v186
    %v188 = vpop.f32.mrb[0].mxu0
    %v189 = vpop.f32.mrb[0].mxu0
    %v190 = vadd.f32 %v86, %v189
    %v191 = vpop.f32.mrb[0].mxu0
    %192 = vmatprep.mubr.bf16.mxu0 0
    %193 = vmatmul.mubr.bf16.gmra.mrb[0].mxu0 %v105
    %v194 = vpop.f32.mrb[0].mxu0
    %v195 = vadd.f32 %v86, %v194
    %v196 = vpop.f32.mrb[0].mxu0
    %v197 = vpop.f32.mrb[0].mxu0
    %v198 = vadd.f32 %v86, %v197
    %v199 = vpop.f32.mrb[0].mxu0
    %200 = vmatprep.mubr.bf16.mxu0 0
    %201 = vmatmul.mubr.bf16.gmra.mrb[0].mxu0 %v108
    %v202 = vpop.f32.mrb[0].mxu0
    %v203 = vadd.f32 %v86, %v202
    %v204 = vpop.f32.mrb[0].mxu0
    %v205 = vpop.f32.mrb[0].mxu0
    %v206 = vadd.f32 %v86, %v205
    %v207 = vpop.f32.mrb[0].mxu0
    %208 = vmatprep.mubr.bf16.mxu0 0
    %209 = vmatmul.mubr.bf16.gmra.mrb[0].mxu0 %v111
    %v210 = vpop.f32.mrb[0].mxu0
    %v211 = vadd.f32 %v86, %v210
    %v212 = vpop.f32.mrb[0].mxu0
    %v213 = vpop.f32.mrb[0].mxu0
    %v214 = vadd.f32 %v86, %v213
    %v215 = vpop.f32.mrb[0].mxu0
    %216 = vmatprep.mubr.bf16.mxu0 0
    %217 = vmatmul.mubr.bf16.gmra.mrb[0].mxu0 %v114
    %v218 = vpop.f32.mrb[0].mxu0
    %v219 = vadd.f32 %v86, %v218
    %v220 = vpop.f32.mrb[0].mxu0
    %v221 = vpop.f32.mrb[0].mxu0
    %v222 = vadd.f32 %v86, %v221
    %v223 = vpop.f32.mrb[0].mxu0
    %224 = vdwg.mxu0
    %vm225 = vcmask 130048
    %226 = vst.msk [vmem:[#allocation8] sm:$0xff] %vm225, %v155
    %227 = vst.msk [vmem:[#allocation8 + $0x8] sm:$0xff] %vm225, %v158
    %228 = vst.msk [vmem:[#allocation8 + $0x10] sm:$0xff] %vm225, %v163
    %229 = vst.msk [vmem:[#allocation8 + $0x18] sm:$0xff] %vm225, %v166
    %230 = vst.msk [vmem:[#allocation8 + $0x20] sm:$0xff] %vm225, %v171
    %231 = vst.msk [vmem:[#allocation8 + $0x28] sm:$0xff] %vm225, %v174
    %232 = vst.msk [vmem:[#allocation8 + $0x30] sm:$0xff] %vm225, %v179
    %233 = vst.msk [vmem:[#allocation8 + $0x38] sm:$0xff] %vm225, %v182
    %234 = vst.msk [vmem:[#allocation8 + $0x40] sm:$0xff] %vm225, %v187
    %235 = vst.msk [vmem:[#allocation8 + $0x48] sm:$0xff] %vm225, %v190
    %236 = vst.msk [vmem:[#allocation8 + $0x50] sm:$0xff] %vm225, %v195
    %237 = vst.msk [vmem:[#allocation8 + $0x58] sm:$0xff] %vm225, %v198
    %238 = vst.msk [vmem:[#allocation8 + $0x60] sm:$0xff] %vm225, %v203
    %239 = vst.msk [vmem:[#allocation8 + $0x68] sm:$0xff] %vm225, %v206
    %240 = vst.msk [vmem:[#allocation8 + $0x70] sm:$0xff] %vm225, %v211
    %241 = vst.msk [vmem:[#allocation8 + $0x78] sm:$0xff] %vm225, %v214
    %242 = vst.msk [vmem:[#allocation8 + $0x80] sm:$0xff] %vm225, %v219
    %243 = vst.msk [vmem:[#allocation8 + $0x88] sm:$0xff] %vm225, %v222
    // Predicated region
    $region26: #{tfgridnet_forward.33} parent=1 // pred_check
      _
    $region27: #{tfgridnet_forward.33} parent=1 // pred_check_branch
      %245 = sbr.rel (0) target = $region29
    $region28: #{tfgridnet_forward.33} parent=1 // pred_region
      %s247 = ssub.s32 2304, 2304
      %248 = vsyncadd [#allocation4], %s247
      %s249 = sshll.u32 [#allocation8], 4
      %s250 = int_to_ptr.vmem [resolvable:$true] %s249
      %255 = dma.vmem_to_hbm [thread:$0]  %s250, 2304, %s3, [#allocation4], 128, 128, 8
    $region29: #{tfgridnet_forward.33} parent=1 // pred_fallthru
      _
    // Predicated region
    $region30: #{tfgridnet_forward.33} parent=1 // pred_check
      _
    $region31: #{tfgridnet_forward.33} parent=1 // pred_check_branch
      %257 = sbr.rel (0) target = $region33
    $region32: #{tfgridnet_forward.33} parent=1 // pred_region
      %258 = dma.done [#allocation4], 2304
    $region33: #{tfgridnet_forward.33} parent=1 // pred_fallthru
      _
    %259 = vsyncpa [#allocation3], 1
    %260 = vsyncpa [#allocation6], 1
    %261 = vsyncpa [#allocation4], 1

// kernel: tfgridnet_forward.35
$region0: #{tfgridnet_forward.35}
  #allocation0 [shape = 'u32[]', space=smem, size = 0x4, offset = 0x4, fixed_abs, tag = 'smem constant byte address 0x4 - core index']
  #allocation1 [shape = 'u32[144,128]{1,0:T(1,128)}', space=vmem, size = 0x12000, scoped, tag = 'internal scratch']
  %s0 = inlined_call_operand.hbm [shape: f32[144,8], index: 0, kind: input, shape index: {}]
  %s1 = inlined_call_operand.hbm [shape: bf16[8,8], index: 1, kind: input, shape index: {}]
  %s2 = inlined_call_operand.hbm [shape: f32[1,8], index: 2, kind: input, shape index: {}]
  %s3 = inlined_call_operand.hbm [shape: f32[144,8], index: 3, kind: output, shape index: {}]
  %s4 = sld [smem:[#allocation0]]
  $region34: #{tfgridnet_forward.35} parent=0
    _
  %s6 = ssub.s32 1, %s4
  %s7 = scalar_select 0, %s6, %s4
  $region1: #{tfgridnet_forward.35} parent=0
    #allocation2 [shape = 'u8[73728]{0}', space=vmem, size = 0x12000, scoped, tag = 'input window, operand 0, single buffered']
    #allocation3 [shape = 's32[1]{0}', space=sflag, size = 0x4, scoped, tag = 'scoped memory for tfgridnet_forward.35']
    #allocation4 [shape = 's32[1]{0}', space=sflag, size = 0x4, scoped, tag = 'scoped memory for tfgridnet_forward.35']
    #allocation5 [shape = 'u8[2048]{0}', space=vmem, size = 0x800, scoped, tag = 'input window, operand 1, single buffered']
    #allocation6 [shape = 's32[1]{0}', space=sflag, size = 0x4, scoped, tag = 'scoped memory for tfgridnet_forward.35']
    #allocation7 [shape = 'u8[512]{0}', space=vmem, size = 0x400, scoped, tag = 'input window, operand 2, single buffered']
    #allocation8 [shape = 'u8[73728]{0}', space=vmem, size = 0x12000, scoped, tag = 'output window, operand 0, single buffered']
    %8 = vsyncpa [#allocation3], 0
    %9 = vsyncpa [#allocation6], 0
    %10 = vsyncpa [#allocation4], 0
    // Predicated region
    $region2: #{tfgridnet_forward.35} parent=1 // pred_check
      _
    $region3: #{tfgridnet_forward.35} parent=1 // pred_check_branch
      %12 = sbr.rel (0) target = $region5
    $region4: #{tfgridnet_forward.35} parent=1 // pred_region
      %s14 = ssub.s32 2304, 2304
      %15 = vsyncadd [#allocation3], %s14
      %s16 = sshll.u32 [#allocation2], 4
      %s17 = int_to_ptr.vmem [resolvable:$true] %s16
      %22 = dma.hbm_to_vmem [thread:$0]  %s0, 2304, %s17, [#allocation3], 128, 128, 8
    $region5: #{tfgridnet_forward.35} parent=1 // pred_fallthru
      _
    // Predicated region
    $region6: #{tfgridnet_forward.35} parent=1 // pred_check
      _
    $region7: #{tfgridnet_forward.35} parent=1 // pred_check_branch
      %24 = sbr.rel (0) target = $region9
    $region8: #{tfgridnet_forward.35} parent=1 // pred_region
      %s26 = ssub.s32 64, 64
      %27 = vsyncadd [#allocation6], %s26
      %s29 = sshll.u32 [#allocation5], 4
      %s30 = int_to_ptr.vmem [resolvable:$true] %s29
      %32 = dma.hbm_to_vmem [thread:$0]  %s1, 64, %s30, [#allocation6]
    $region9: #{tfgridnet_forward.35} parent=1 // pred_fallthru
      _
    // Predicated region
    $region10: #{tfgridnet_forward.35} parent=1 // pred_check
      _
    $region11: #{tfgridnet_forward.35} parent=1 // pred_check_branch
      %34 = sbr.rel (0) target = $region13
    $region12: #{tfgridnet_forward.35} parent=1 // pred_region
      %s36 = ssub.s32 16, 16
      %37 = vsyncadd [#allocation6], %s36
      %s39 = sshll.u32 [#allocation7], 4
      %s40 = int_to_ptr.vmem [resolvable:$true] %s39
      %42 = dma.hbm_to_vmem [thread:$0]  %s2, 16, %s40, [#allocation6]
    $region13: #{tfgridnet_forward.35} parent=1 // pred_fallthru
      _
    // Predicated region
    $region14: #{tfgridnet_forward.35} parent=1 // pred_check
      _
    $region15: #{tfgridnet_forward.35} parent=1 // pred_check_branch
      %44 = sbr.rel (0) target = $region17
    $region16: #{tfgridnet_forward.35} parent=1 // pred_region
      %45 = dma.done [#allocation3], 2304
    $region17: #{tfgridnet_forward.35} parent=1 // pred_fallthru
      _
    // Predicated region
    $region18: #{tfgridnet_forward.35} parent=1 // pred_check
      _
    $region19: #{tfgridnet_forward.35} parent=1 // pred_check_branch
      %47 = sbr.rel (0) target = $region21
    $region20: #{tfgridnet_forward.35} parent=1 // pred_region
      %48 = dma.done [#allocation6], 64
    $region21: #{tfgridnet_forward.35} parent=1 // pred_fallthru
      _
    // Predicated region
    $region22: #{tfgridnet_forward.35} parent=1 // pred_check
      _
    $region23: #{tfgridnet_forward.35} parent=1 // pred_check_branch
      %50 = sbr.rel (0) target = $region25
    $region24: #{tfgridnet_forward.35} parent=1 // pred_region
      %51 = dma.done [#allocation6], 16
    $region25: #{tfgridnet_forward.35} parent=1 // pred_fallthru
      _
    %v53 = vld [vmem:[#allocation2] sm:$0xff]
    %v54 = vld [vmem:[#allocation2 + $0x8] sm:$0xff]
    %v55 = vld [vmem:[#allocation2 + $0x10] sm:$0xff]
    %v56 = vld [vmem:[#allocation2 + $0x18] sm:$0xff]
    %v57 = vld [vmem:[#allocation2 + $0x20] sm:$0xff]
    %v58 = vld [vmem:[#allocation2 + $0x28] sm:$0xff]
    %v59 = vld [vmem:[#allocation2 + $0x30] sm:$0xff]
    %v60 = vld [vmem:[#allocation2 + $0x38] sm:$0xff]
    %v61 = vld [vmem:[#allocation2 + $0x40] sm:$0xff]
    %v62 = vld [vmem:[#allocation2 + $0x48] sm:$0xff]
    %v63 = vld [vmem:[#allocation2 + $0x50] sm:$0xff]
    %v64 = vld [vmem:[#allocation2 + $0x58] sm:$0xff]
    %v65 = vld [vmem:[#allocation2 + $0x60] sm:$0xff]
    %v66 = vld [vmem:[#allocation2 + $0x68] sm:$0xff]
    %v67 = vld [vmem:[#allocation2 + $0x70] sm:$0xff]
    %v68 = vld [vmem:[#allocation2 + $0x78] sm:$0xff]
    %v69 = vld [vmem:[#allocation2 + $0x80] sm:$0xff]
    %v70 = vld [vmem:[#allocation2 + $0x88] sm:$0xff]
    %v71 = vpack.c.bf16 %v54, %v53
    %v72 = vpack.c.bf16 %v56, %v55
    %v73 = vpack.c.bf16 %v58, %v57
    %v74 = vpack.c.bf16 %v60, %v59
    %v75 = vpack.c.bf16 %v62, %v61
    %v76 = vpack.c.bf16 %v64, %v63
    %v77 = vpack.c.bf16 %v66, %v65
    %v78 = vpack.c.bf16 %v68, %v67
    %v79 = vpack.c.bf16 %v70, %v69
    %v80 = vld [vmem:[#allocation5] sm:$0xf]
    %v81 = vld [vmem:[#allocation7] sm:$0x1]
    %v83 = vlaneseq
    %v84 = vshrl.u32 %v83, 7
    %v85 = vsub.s32 0, %v84
    %v86 = vrot.slane %v81, %v85
    %vm88 = vcmask 64512
    %v90 = vsel %vm88, %v71, 0
    %v93 = vsel %vm88, %v72, 0
    %v96 = vsel %vm88, %v73, 0
    %v99 = vsel %vm88, %v74, 0
    %v102 = vsel %vm88, %v75, 0
    %v105 = vsel %vm88, %v76, 0
    %v108 = vsel %vm88, %v77, 0
    %v111 = vsel %vm88, %v78, 0
    %v114 = vsel %vm88, %v79, 0
    %vm116 = vcmask 1043456
    %v118 = vsel %vm116, %v80, 0
    %120 = vmatprep.subr.bf16.mxu0 0
    %121 = vmatpush1.bf16.msra.mxu0 %v118
    %122 = vmatprep.subr.bf16.mxu0 0
    %123 = vmatpush1.bf16.msra.mxu0 0
    %124 = vmatprep.subr.bf16.mxu0 0
    %125 = vmatpush1.bf16.msra.mxu0 0
    %126 = vmatprep.subr.bf16.mxu0 0
    %127 = vmatpush1.bf16.msra.mxu0 0
    %128 = vmatprep.subr.bf16.mxu0 0
    %129 = vmatpush1.bf16.msra.mxu0 0
    %130 = vmatprep.subr.bf16.mxu0 0
    %131 = vmatpush1.bf16.msra.mxu0 0
    %132 = vmatprep.subr.bf16.mxu0 0
    %133 = vmatpush1.bf16.msra.mxu0 0
    %134 = vmatprep.subr.bf16.mxu0 0
    %135 = vmatpush1.bf16.msra.mxu0 0
    %136 = vmatprep.subr.bf16.mxu0 0
    %137 = vmatpush1.bf16.msra.mxu0 0
    %138 = vmatprep.subr.bf16.mxu0 0
    %139 = vmatpush1.bf16.msra.mxu0 0
    %140 = vmatprep.subr.bf16.mxu0 0
    %141 = vmatpush1.bf16.msra.mxu0 0
    %142 = vmatprep.subr.bf16.mxu0 0
    %143 = vmatpush1.bf16.msra.mxu0 0
    %144 = vmatprep.subr.bf16.mxu0 0
    %145 = vmatpush1.bf16.msra.mxu0 0
    %146 = vmatprep.subr.bf16.mxu0 0
    %147 = vmatpush1.bf16.msra.mxu0 0
    %148 = vmatprep.subr.bf16.mxu0 0
    %149 = vmatpush1.bf16.msra.mxu0 0
    %150 = vmatprep.subr.bf16.mxu0 0
    %151 = vmatpush1.bf16.msra.mxu0 0
    %152 = vmatprep.mubr.bf16.mxu0 0
    %153 = vmatmul.mubr.bf16.gmra.mrb[0].mxu0 %v90
    %v154 = vpop.f32.mrb[0].mxu0
    %v155 = vadd.f32 %v86, %v154
    %v156 = vpop.f32.mrb[0].mxu0
    %v157 = vpop.f32.mrb[0].mxu0
    %v158 = vadd.f32 %v86, %v157
    %v159 = vpop.f32.mrb[0].mxu0
    %160 = vmatprep.mubr.bf16.mxu0 0
    %161 = vmatmul.mubr.bf16.gmra.mrb[0].mxu0 %v93
    %v162 = vpop.f32.mrb[0].mxu0
    %v163 = vadd.f32 %v86, %v162
    %v164 = vpop.f32.mrb[0].mxu0
    %v165 = vpop.f32.mrb[0].mxu0
    %v166 = vadd.f32 %v86, %v165
    %v167 = vpop.f32.mrb[0].mxu0
    %168 = vmatprep.mubr.bf16.mxu0 0
    %169 = vmatmul.mubr.bf16.gmra.mrb[0].mxu0 %v96
    %v170 = vpop.f32.mrb[0].mxu0
    %v171 = vadd.f32 %v86, %v170
    %v172 = vpop.f32.mrb[0].mxu0
    %v173 = vpop.f32.mrb[0].mxu0
    %v174 = vadd.f32 %v86, %v173
    %v175 = vpop.f32.mrb[0].mxu0
    %176 = vmatprep.mubr.bf16.mxu0 0
    %177 = vmatmul.mubr.bf16.gmra.mrb[0].mxu0 %v99
    %v178 = vpop.f32.mrb[0].mxu0
    %v179 = vadd.f32 %v86, %v178
    %v180 = vpop.f32.mrb[0].mxu0
    %v181 = vpop.f32.mrb[0].mxu0
    %v182 = vadd.f32 %v86, %v181
    %v183 = vpop.f32.mrb[0].mxu0
    %184 = vmatprep.mubr.bf16.mxu0 0
    %185 = vmatmul.mubr.bf16.gmra.mrb[0].mxu0 %v102
    %v186 = vpop.f32.mrb[0].mxu0
    %v187 = vadd.f32 %v86, %v186
    %v188 = vpop.f32.mrb[0].mxu0
    %v189 = vpop.f32.mrb[0].mxu0
    %v190 = vadd.f32 %v86, %v189
    %v191 = vpop.f32.mrb[0].mxu0
    %192 = vmatprep.mubr.bf16.mxu0 0
    %193 = vmatmul.mubr.bf16.gmra.mrb[0].mxu0 %v105
    %v194 = vpop.f32.mrb[0].mxu0
    %v195 = vadd.f32 %v86, %v194
    %v196 = vpop.f32.mrb[0].mxu0
    %v197 = vpop.f32.mrb[0].mxu0
    %v198 = vadd.f32 %v86, %v197
    %v199 = vpop.f32.mrb[0].mxu0
    %200 = vmatprep.mubr.bf16.mxu0 0
    %201 = vmatmul.mubr.bf16.gmra.mrb[0].mxu0 %v108
    %v202 = vpop.f32.mrb[0].mxu0
    %v203 = vadd.f32 %v86, %v202
    %v204 = vpop.f32.mrb[0].mxu0
    %v205 = vpop.f32.mrb[0].mxu0
    %v206 = vadd.f32 %v86, %v205
    %v207 = vpop.f32.mrb[0].mxu0
    %208 = vmatprep.mubr.bf16.mxu0 0
    %209 = vmatmul.mubr.bf16.gmra.mrb[0].mxu0 %v111
    %v210 = vpop.f32.mrb[0].mxu0
    %v211 = vadd.f32 %v86, %v210
    %v212 = vpop.f32.mrb[0].mxu0
    %v213 = vpop.f32.mrb[0].mxu0
    %v214 = vadd.f32 %v86, %v213
    %v215 = vpop.f32.mrb[0].mxu0
    %216 = vmatprep.mubr.bf16.mxu0 0
    %217 = vmatmul.mubr.bf16.gmra.mrb[0].mxu0 %v114
    %v218 = vpop.f32.mrb[0].mxu0
    %v219 = vadd.f32 %v86, %v218
    %v220 = vpop.f32.mrb[0].mxu0
    %v221 = vpop.f32.mrb[0].mxu0
    %v222 = vadd.f32 %v86, %v221
    %v223 = vpop.f32.mrb[0].mxu0
    %224 = vdwg.mxu0
    %225 = vst.msk [vmem:[#allocation8] sm:$0xff] %vm88, %v155
    %226 = vst.msk [vmem:[#allocation8 + $0x8] sm:$0xff] %vm88, %v158
    %227 = vst.msk [vmem:[#allocation8 + $0x10] sm:$0xff] %vm88, %v163
    %228 = vst.msk [vmem:[#allocation8 + $0x18] sm:$0xff] %vm88, %v166
    %229 = vst.msk [vmem:[#allocation8 + $0x20] sm:$0xff] %vm88, %v171
    %230 = vst.msk [vmem:[#allocation8 + $0x28] sm:$0xff] %vm88, %v174
    %231 = vst.msk [vmem:[#allocation8 + $0x30] sm:$0xff] %vm88, %v179
    %232 = vst.msk [vmem:[#allocation8 + $0x38] sm:$0xff] %vm88, %v182
    %233 = vst.msk [vmem:[#allocation8 + $0x40] sm:$0xff] %vm88, %v187
    %234 = vst.msk [vmem:[#allocation8 + $0x48] sm:$0xff] %vm88, %v190
    %235 = vst.msk [vmem:[#allocation8 + $0x50] sm:$0xff] %vm88, %v195
    %236 = vst.msk [vmem:[#allocation8 + $0x58] sm:$0xff] %vm88, %v198
    %237 = vst.msk [vmem:[#allocation8 + $0x60] sm:$0xff] %vm88, %v203
    %238 = vst.msk [vmem:[#allocation8 + $0x68] sm:$0xff] %vm88, %v206
    %239 = vst.msk [vmem:[#allocation8 + $0x70] sm:$0xff] %vm88, %v211
    %240 = vst.msk [vmem:[#allocation8 + $0x78] sm:$0xff] %vm88, %v214
    %241 = vst.msk [vmem:[#allocation8 + $0x80] sm:$0xff] %vm88, %v219
    %242 = vst.msk [vmem:[#allocation8 + $0x88] sm:$0xff] %vm88, %v222
    // Predicated region
    $region26: #{tfgridnet_forward.35} parent=1 // pred_check
      _
    $region27: #{tfgridnet_forward.35} parent=1 // pred_check_branch
      %244 = sbr.rel (0) target = $region29
    $region28: #{tfgridnet_forward.35} parent=1 // pred_region
      %s246 = ssub.s32 2304, 2304
      %247 = vsyncadd [#allocation4], %s246
      %s248 = sshll.u32 [#allocation8], 4
      %s249 = int_to_ptr.vmem [resolvable:$true] %s248
      %254 = dma.vmem_to_hbm [thread:$0]  %s249, 2304, %s3, [#allocation4], 128, 128, 8
    $region29: #{tfgridnet_forward.35} parent=1 // pred_fallthru
      _
    // Predicated region
    $region30: #{tfgridnet_forward.35} parent=1 // pred_check
      _
    $region31: #{tfgridnet_forward.35} parent=1 // pred_check_branch
      %256 = sbr.rel (0) target = $region33
    $region32: #{tfgridnet_forward.35} parent=1 // pred_region
      %257 = dma.done [#allocation4], 2304
    $region33: #{tfgridnet_forward.35} parent=1 // pred_fallthru
      _
    %258 = vsyncpa [#allocation3], 1
    %259 = vsyncpa [#allocation6], 1
    %260 = vsyncpa [#allocation4], 1

// kernel: tfgridnet_forward.34
$region0: #{tfgridnet_forward.34}
  #allocation0 [shape = 'u32[]', space=smem, size = 0x4, offset = 0x4, fixed_abs, tag = 'smem constant byte address 0x4 - core index']
  #allocation1 [shape = 'u32[144,128]{1,0:T(1,128)}', space=vmem, size = 0x12000, scoped, tag = 'internal scratch']
  #allocation2 [shape = 'f32[8,18]{1,0:T(8,128)}', space=vmem, size = 0x1000, scoped, tag = 'scratch operand']
  #allocation3 [shape = 'f32[8,1]{1,0:T(8,128)}', space=vmem, size = 0x1000, scoped, tag = 'scratch operand']
  #allocation4 [shape = 'f32[8,1]{1,0:T(8,128)}', space=vmem, size = 0x1000, scoped, tag = 'scratch operand']
  #allocation5 [shape = 'f32[8,36]{1,0:T(8,128)}', space=vmem, size = 0x1000, scoped, tag = 'scratch operand']
  %s0 = inlined_call_operand.hbm [shape: f32[4,8,18], index: 0, kind: input, shape index: {}]
  %s1 = inlined_call_operand.hbm [shape: f32[4,8,18], index: 1, kind: input, shape index: {}]
  %s2 = inlined_call_operand.hbm [shape: f32[4,8,36], index: 2, kind: input, shape index: {}]
  %s3 = inlined_call_operand.hbm [shape: f32[2,2,18], index: 3, kind: input, shape index: {}]
  %s4 = inlined_call_operand.hbm [shape: f32[2,2,18], index: 4, kind: input, shape index: {}]
  %s5 = inlined_call_operand.hbm [shape: f32[2,2,36], index: 5, kind: input, shape index: {}]
  %s6 = inlined_call_operand.hbm [shape: f32[2,1,3], index: 6, kind: input, shape index: {}]
  %s7 = inlined_call_operand.hbm [shape: f32[4,8,36], index: 7, kind: output, shape index: {}]
  %s8 = sld [smem:[#allocation0]]
  $region97: #{tfgridnet_forward.34} parent=0
    _
  %s10 = ssub.s32 1, %s8
  %s11 = scalar_select 0, %s10, %s8
  $region1: #{tfgridnet_forward.34} parent=0
    #allocation6 [shape = 'u8[8192]{0}', space=vmem, size = 0x2000, scoped, tag = 'input window, operand 0']
    #allocation7 [shape = 's32[2]{0}', space=sflag, size = 0x8, scoped, tag = 'scoped memory for tfgridnet_forward.34']
    #allocation8 [shape = 's32[2]{0}', space=sflag, size = 0x8, scoped, tag = 'scoped memory for tfgridnet_forward.34']
    #allocation9 [shape = 'u8[8192]{0}', space=vmem, size = 0x2000, scoped, tag = 'input window, operand 1']
    #allocation10 [shape = 's32[2]{0}', space=sflag, size = 0x8, scoped, tag = 'scoped memory for tfgridnet_forward.34']
    #allocation11 [shape = 'u8[8192]{0}', space=vmem, size = 0x2000, scoped, tag = 'input window, operand 2']
    #allocation12 [shape = 'u8[2048]{0}', space=vmem, size = 0x800, scoped, tag = 'input window, operand 3']
    #allocation13 [shape = 's32[2]{0}', space=sflag, size = 0x8, scoped, tag = 'scoped memory for tfgridnet_forward.34']
    #allocation14 [shape = 'u8[2048]{0}', space=vmem, size = 0x800, scoped, tag = 'input window, operand 4']
    #allocation15 [shape = 'u8[2048]{0}', space=vmem, size = 0x800, scoped, tag = 'input window, operand 5']
    #allocation16 [shape = 's32[2]{0}', space=sflag, size = 0x8, scoped, tag = 'scoped memory for tfgridnet_forward.34']
    #allocation17 [shape = 'u8[1024]{0}', space=vmem, size = 0x400, scoped, tag = 'input window, operand 6']
    #allocation18 [shape = 'u8[8192]{0}', space=vmem, size = 0x2000, scoped, tag = 'output window, operand 0']
    %12 = vsyncpa [#allocation7], 0
    %s13 = scalar_lea.sflag [#allocation7], 1
    %14 = vsyncpa %s13, 0
    %15 = vsyncpa [#allocation10], 0
    %s16 = scalar_lea.sflag [#allocation10], 1
    %17 = vsyncpa %s16, 0
    %18 = vsyncpa [#allocation13], 0
    %s19 = scalar_lea.sflag [#allocation13], 1
    %20 = vsyncpa %s19, 0
    %21 = vsyncpa [#allocation16], 0
    %s22 = scalar_lea.sflag [#allocation16], 1
    %23 = vsyncpa %s22, 0
    %24 = vsyncpa [#allocation8], 0
    %s25 = scalar_lea.sflag [#allocation8], 1
    %26 = vsyncpa %s25, 0
    loop: start=0, step=1, limit=6
    $region2: #{tfgridnet_forward.34} parent=1 // loop_pre_header
      _
    $region3: #{tfgridnet_forward.34} parent=1 // loop_header
      %s28 = sphi 0, %s32
      %p29 = scmp.ge.s32.totalorder %s28, 6
      %s35 = sphi 0, %s54
      %s36 = sphi 0, %s50
      %s37 = sphi 0, %s46
      %s38 = sphi 0, %s35
      %s39 = sphi 0, %s36
      %s40 = sphi 0, %s37
      %s41 = sphi 0, %s38
      %s42 = sphi 0, %s39
      %s43 = sphi 0, %s40
      %s59 = sphi 0, %s61
      %s62 = sphi 0, %s59
      %s63 = sphi 0, %s62
      %s79 = sphi 0, %s63
      %s87 = sphi 0, %s89
      %s90 = sphi 0, %s87
      %s91 = sphi 0, %s90
      %s107 = sphi 0, %s91
      %s115 = sphi 0, %s117
      %s118 = sphi 0, %s115
      %s119 = sphi 0, %s118
      %s135 = sphi 0, %s119
      %s165 = sphi 0, %s167
      %s168 = sphi 0, %s165
      %s169 = sphi 0, %s168
      %s185 = sphi 0, %s169
      %s215 = sphi 0, %s217
      %s218 = sphi 0, %s215
      %s219 = sphi 0, %s218
      %s235 = sphi 0, %s219
      %s265 = sphi 0, %s267
      %s268 = sphi 0, %s265
      %s269 = sphi 0, %s268
      %s285 = sphi 0, %s269
      %s315 = sphi 0, %s317
      %s318 = sphi 0, %s315
      %s319 = sphi 0, %s318
      %s335 = sphi 0, %s319
      %s343 = sphi 0, %s345
      %s346 = sphi 0, %s343
      %s347 = sphi 0, %s346
      %s363 = sphi 0, %s347
    $region4: #{tfgridnet_forward.34} parent=1 // loop_header_branch
      %31 = sbr.rel (%p29) target = $region8
    $region5: #{tfgridnet_forward.34} parent=1 // loop_body
      %s33 = ssub.s32 %s28, 1
      %s34 = ssub.s32 %s28, 2
      %s44 = sadd.s32 1, %s37
      %p45 = scmp.ge.s32.totalorder %s44, 1
      %s46 = scalar_select %p45, 0, %s44
      %s47 = sadd.s32 1, %s36
      %s48 = scalar_select %p45, %s47, %s36
      %p49 = scmp.ge.s32.totalorder %s48, 1
      %s50 = scalar_select %p49, 0, %s48
      %s51 = sadd.s32 1, %s35
      %s52 = scalar_select %p49, %s51, %s35
      %p53 = scmp.ge.s32.totalorder %s52, 4
      %s54 = scalar_select %p53, 0, %s52
      %s55 = ssub.s32 %s35, %s54
      %s56 = ssub.s32 %s36, %s50
      %s57 = sor.u32 %s55, %s56
      %p58 = scmp.eq.s32.totalorder %s57, 0
      %s60 = sadd.s32 %s59, 1
      %s61 = scalar_select %p58, %s59, %s60
      %p64 = pneg %p58
      %p65 = scmp.eq.s32.totalorder %s28, 3
      %p66 = por %p64, %p65
      %p67 = scmp.ne.s32.totalorder %s59, %s62
      %p68 = scmp.eq.s32.totalorder %s28, 0
      %p69 = por %p67, %p68
      %p70 = scmp.ne.s32.totalorder %s59, %s62
      %p71 = scmp.eq.s32.totalorder %s33, 3
      %p72 = por %p70, %p71
      %p73 = scmp.ne.s32.totalorder %s62, %s63
      %p74 = scmp.eq.s32.totalorder %s33, 0
      %p75 = por %p73, %p74
      %p76 = scmp.ne.s32.totalorder %s62, %s63
      %p77 = scmp.eq.s32.totalorder %s34, 3
      %p78 = por %p76, %p77
      %p80 = scmp.ne.s32.totalorder %s63, %s79
      %p81 = scmp.eq.s32.totalorder %s34, 0
      %p82 = por %p80, %p81
      %s83 = ssub.s32 %s35, %s54
      %s84 = ssub.s32 %s37, %s46
      %s85 = sor.u32 %s83, %s84
      %p86 = scmp.eq.s32.totalorder %s85, 0
      %s88 = sadd.s32 %s87, 1
      %s89 = scalar_select %p86, %s87, %s88
      %p92 = pneg %p86
      %p93 = scmp.eq.s32.totalorder %s28, 3
      %p94 = por %p92, %p93
      %p95 = scmp.ne.s32.totalorder %s87, %s90
      %p96 = scmp.eq.s32.totalorder %s28, 0
      %p97 = por %p95, %p96
      %p98 = scmp.ne.s32.totalorder %s87, %s90
      %p99 = scmp.eq.s32.totalorder %s33, 3
      %p100 = por %p98, %p99
      %p101 = scmp.ne.s32.totalorder %s90, %s91
      %p102 = scmp.eq.s32.totalorder %s33, 0
      %p103 = por %p101, %p102
      %p104 = scmp.ne.s32.totalorder %s90, %s91
      %p105 = scmp.eq.s32.totalorder %s34, 3
      %p106 = por %p104, %p105
      %p108 = scmp.ne.s32.totalorder %s91, %s107
      %p109 = scmp.eq.s32.totalorder %s34, 0
      %p110 = por %p108, %p109
      %s111 = ssub.s32 %s35, %s54
      %s112 = ssub.s32 %s37, %s46
      %s113 = sor.u32 %s111, %s112
      %p114 = scmp.eq.s32.totalorder %s113, 0
      %s116 = sadd.s32 %s115, 1
      %s117 = scalar_select %p114, %s115, %s116
      %p120 = pneg %p114
      %p121 = scmp.eq.s32.totalorder %s28, 3
      %p122 = por %p120, %p121
      %p123 = scmp.ne.s32.totalorder %s115, %s118
      %p124 = scmp.eq.s32.totalorder %s28, 0
      %p125 = por %p123, %p124
      %p126 = scmp.ne.s32.totalorder %s115, %s118
      %p127 = scmp.eq.s32.totalorder %s33, 3
      %p128 = por %p126, %p127
      %p129 = scmp.ne.s32.totalorder %s118, %s119
      %p130 = scmp.eq.s32.totalorder %s33, 0
      %p131 = por %p129, %p130
      %p132 = scmp.ne.s32.totalorder %s118, %s119
      %p133 = scmp.eq.s32.totalorder %s34, 3
      %p134 = por %p132, %p133
      %p136 = scmp.ne.s32.totalorder %s119, %s135
      %p137 = scmp.eq.s32.totalorder %s34, 0
      %p138 = por %p136, %p137
      %p139 = scmp.lt.s32.totalorder %s35, 0
      %s140 = ssub.s32 0, %s35
      %s141 = scalar_select %p139, %s140, %s35
      %s142 = sand.u32 %s141, 1
      %s143 = ssub.s32 0, %s142
      %s144 = scalar_select %p139, %s143, %s142
      %p145 = scmp.ne.s32.totalorder %s144, 0
      %p146 = scmp.lt.s32.totalorder %s144, 0
      %p147 = pnand %p146, %p145
      %p148 = pneg %p147
      %s149 = sadd.s32 %s144, 2
      %s150 = scalar_select %p148, %s149, %s144
      %p151 = scmp.lt.s32.totalorder %s54, 0
      %s152 = ssub.s32 0, %s54
      %s153 = scalar_select %p151, %s152, %s54
      %s154 = sand.u32 %s153, 1
      %s155 = ssub.s32 0, %s154
      %s156 = scalar_select %p151, %s155, %s154
      %p157 = scmp.ne.s32.totalorder %s156, 0
      %p158 = scmp.lt.s32.totalorder %s156, 0
      %p159 = pnand %p158, %p157
      %p160 = pneg %p159
      %s161 = sadd.s32 %s156, 2
      %s162 = scalar_select %p160, %s161, %s156
      %s163 = ssub.s32 %s150, %s162
      %p164 = scmp.eq.s32.totalorder %s163, 0
      %s166 = sadd.s32 %s165, 1
      %s167 = scalar_select %p164, %s165, %s166
      %p170 = pneg %p164
      %p171 = scmp.eq.s32.totalorder %s28, 3
      %p172 = por %p170, %p171
      %p173 = scmp.ne.s32.totalorder %s165, %s168
      %p174 = scmp.eq.s32.totalorder %s28, 0
      %p175 = por %p173, %p174
      %p176 = scmp.ne.s32.totalorder %s165, %s168
      %p177 = scmp.eq.s32.totalorder %s33, 3
      %p178 = por %p176, %p177
      %p179 = scmp.ne.s32.totalorder %s168, %s169
      %p180 = scmp.eq.s32.totalorder %s33, 0
      %p181 = por %p179, %p180
      %p182 = scmp.ne.s32.totalorder %s168, %s169
      %p183 = scmp.eq.s32.totalorder %s34, 3
      %p184 = por %p182, %p183
      %p186 = scmp.ne.s32.totalorder %s169, %s185
      %p187 = scmp.eq.s32.totalorder %s34, 0
      %p188 = por %p186, %p187
      %p189 = scmp.lt.s32.totalorder %s35, 0
      %s190 = ssub.s32 0, %s35
      %s191 = scalar_select %p189, %s190, %s35
      %s192 = sand.u32 %s191, 1
      %s193 = ssub.s32 0, %s192
      %s194 = scalar_select %p189, %s193, %s192
      %p195 = scmp.ne.s32.totalorder %s194, 0
      %p196 = scmp.lt.s32.totalorder %s194, 0
      %p197 = pnand %p196, %p195
      %p198 = pneg %p197
      %s199 = sadd.s32 %s194, 2
      %s200 = scalar_select %p198, %s199, %s194
      %p201 = scmp.lt.s32.totalorder %s54, 0
      %s202 = ssub.s32 0, %s54
      %s203 = scalar_select %p201, %s202, %s54
      %s204 = sand.u32 %s203, 1
      %s205 = ssub.s32 0, %s204
      %s206 = scalar_select %p201, %s205, %s204
      %p207 = scmp.ne.s32.totalorder %s206, 0
      %p208 = scmp.lt.s32.totalorder %s206, 0
      %p209 = pnand %p208, %p207
      %p210 = pneg %p209
      %s211 = sadd.s32 %s206, 2
      %s212 = scalar_select %p210, %s211, %s206
      %s213 = ssub.s32 %s200, %s212
      %p214 = scmp.eq.s32.totalorder %s213, 0
      %s216 = sadd.s32 %s215, 1
      %s217 = scalar_select %p214, %s215, %s216
      %p220 = pneg %p214
      %p221 = scmp.eq.s32.totalorder %s28, 3
      %p222 = por %p220, %p221
      %p223 = scmp.ne.s32.totalorder %s215, %s218
      %p224 = scmp.eq.s32.totalorder %s28, 0
      %p225 = por %p223, %p224
      %p226 = scmp.ne.s32.totalorder %s215, %s218
      %p227 = scmp.eq.s32.totalorder %s33, 3
      %p228 = por %p226, %p227
      %p229 = scmp.ne.s32.totalorder %s218, %s219
      %p230 = scmp.eq.s32.totalorder %s33, 0
      %p231 = por %p229, %p230
      %p232 = scmp.ne.s32.totalorder %s218, %s219
      %p233 = scmp.eq.s32.totalorder %s34, 3
      %p234 = por %p232, %p233
      %p236 = scmp.ne.s32.totalorder %s219, %s235
      %p237 = scmp.eq.s32.totalorder %s34, 0
      %p238 = por %p236, %p237
      %p239 = scmp.lt.s32.totalorder %s35, 0
      %s240 = ssub.s32 0, %s35
      %s241 = scalar_select %p239, %s240, %s35
      %s242 = sand.u32 %s241, 1
      %s243 = ssub.s32 0, %s242
      %s244 = scalar_select %p239, %s243, %s242
      %p245 = scmp.ne.s32.totalorder %s244, 0
      %p246 = scmp.lt.s32.totalorder %s244, 0
      %p247 = pnand %p246, %p245
      %p248 = pneg %p247
      %s249 = sadd.s32 %s244, 2
      %s250 = scalar_select %p248, %s249, %s244
      %p251 = scmp.lt.s32.totalorder %s54, 0
      %s252 = ssub.s32 0, %s54
      %s253 = scalar_select %p251, %s252, %s54
      %s254 = sand.u32 %s253, 1
      %s255 = ssub.s32 0, %s254
      %s256 = scalar_select %p251, %s255, %s254
      %p257 = scmp.ne.s32.totalorder %s256, 0
      %p258 = scmp.lt.s32.totalorder %s256, 0
      %p259 = pnand %p258, %p257
      %p260 = pneg %p259
      %s261 = sadd.s32 %s256, 2
      %s262 = scalar_select %p260, %s261, %s256
      %s263 = ssub.s32 %s250, %s262
      %p264 = scmp.eq.s32.totalorder %s263, 0
      %s266 = sadd.s32 %s265, 1
      %s267 = scalar_select %p264, %s265, %s266
      %p270 = pneg %p264
      %p271 = scmp.eq.s32.totalorder %s28, 3
      %p272 = por %p270, %p271
      %p273 = scmp.ne.s32.totalorder %s265, %s268
      %p274 = scmp.eq.s32.totalorder %s28, 0
      %p275 = por %p273, %p274
      %p276 = scmp.ne.s32.totalorder %s265, %s268
      %p277 = scmp.eq.s32.totalorder %s33, 3
      %p278 = por %p276, %p277
      %p279 = scmp.ne.s32.totalorder %s268, %s269
      %p280 = scmp.eq.s32.totalorder %s33, 0
      %p281 = por %p279, %p280
      %p282 = scmp.ne.s32.totalorder %s268, %s269
      %p283 = scmp.eq.s32.totalorder %s34, 3
      %p284 = por %p282, %p283
      %p286 = scmp.ne.s32.totalorder %s269, %s285
      %p287 = scmp.eq.s32.totalorder %s34, 0
      %p288 = por %p286, %p287
      %p289 = scmp.lt.s32.totalorder %s35, 0
      %s290 = ssub.s32 0, %s35
      %s291 = scalar_select %p289, %s290, %s35
      %s292 = sand.u32 %s291, 1
      %s293 = ssub.s32 0, %s292
      %s294 = scalar_select %p289, %s293, %s292
      %p295 = scmp.ne.s32.totalorder %s294, 0
      %p296 = scmp.lt.s32.totalorder %s294, 0
      %p297 = pnand %p296, %p295
      %p298 = pneg %p297
      %s299 = sadd.s32 %s294, 2
      %s300 = scalar_select %p298, %s299, %s294
      %p301 = scmp.lt.s32.totalorder %s54, 0
      %s302 = ssub.s32 0, %s54
      %s303 = scalar_select %p301, %s302, %s54
      %s304 = sand.u32 %s303, 1
      %s305 = ssub.s32 0, %s304
      %s306 = scalar_select %p301, %s305, %s304
      %p307 = scmp.ne.s32.totalorder %s306, 0
      %p308 = scmp.lt.s32.totalorder %s306, 0
      %p309 = pnand %p308, %p307
      %p310 = pneg %p309
      %s311 = sadd.s32 %s306, 2
      %s312 = scalar_select %p310, %s311, %s306
      %s313 = ssub.s32 %s300, %s312
      %p314 = scmp.eq.s32.totalorder %s313, 0
      %s316 = sadd.s32 %s315, 1
      %s317 = scalar_select %p314, %s315, %s316
      %p320 = pneg %p314
      %p321 = scmp.eq.s32.totalorder %s28, 3
      %p322 = por %p320, %p321
      %p323 = scmp.ne.s32.totalorder %s315, %s318
      %p324 = scmp.eq.s32.totalorder %s28, 0
      %p325 = por %p323, %p324
      %p326 = scmp.ne.s32.totalorder %s315, %s318
      %p327 = scmp.eq.s32.totalorder %s33, 3
      %p328 = por %p326, %p327
      %p329 = scmp.ne.s32.totalorder %s318, %s319
      %p330 = scmp.eq.s32.totalorder %s33, 0
      %p331 = por %p329, %p330
      %p332 = scmp.ne.s32.totalorder %s318, %s319
      %p333 = scmp.eq.s32.totalorder %s34, 3
      %p334 = por %p332, %p333
      %p336 = scmp.ne.s32.totalorder %s319, %s335
      %p337 = scmp.eq.s32.totalorder %s34, 0
      %p338 = por %p336, %p337
      %s339 = ssub.s32 %s35, %s54
      %s340 = ssub.s32 %s36, %s50
      %s341 = sor.u32 %s339, %s340
      %p342 = scmp.eq.s32.totalorder %s341, 0
      %s344 = sadd.s32 %s343, 1
      %s345 = scalar_select %p342, %s343, %s344
      %p348 = pneg %p342
      %p349 = scmp.eq.s32.totalorder %s28, 3
      %p350 = por %p348, %p349
      %p351 = scmp.ne.s32.totalorder %s343, %s346
      %p352 = scmp.eq.s32.totalorder %s28, 0
      %p353 = por %p351, %p352
      %p354 = scmp.ne.s32.totalorder %s343, %s346
      %p355 = scmp.eq.s32.totalorder %s33, 3
      %p356 = por %p354, %p355
      %p357 = scmp.ne.s32.totalorder %s346, %s347
      %p358 = scmp.eq.s32.totalorder %s33, 0
      %p359 = por %p357, %p358
      %p360 = scmp.ne.s32.totalorder %s346, %s347
      %p361 = scmp.eq.s32.totalorder %s34, 3
      %p362 = por %p360, %p361
      %p364 = scmp.ne.s32.totalorder %s347, %s363
      %p365 = scmp.eq.s32.totalorder %s34, 0
      %p366 = por %p364, %p365
      %p367 = scmp.le.s32.totalorder 1, %s28
      %p368 = scmp.lt.s32.totalorder %s28, 5
      %p369 = pnand %p367, %p368
      %p370 = pneg %p369
      // Predicated region
      $region9: #{tfgridnet_forward.34} parent=5 // pred_check
        _
      $region10: #{tfgridnet_forward.34} parent=5 // pred_check_branch
        %372 = sbr.rel (%p369) target = $region12
      $region11: #{tfgridnet_forward.34} parent=5 // pred_region
        %s373 = ssub.s32 %s28, 1
      $region12: #{tfgridnet_forward.34} parent=5 // pred_fallthru
        _
      %p374 = scmp.lt.s32.totalorder %s28, 4
      // Predicated region
      $region13: #{tfgridnet_forward.34} parent=5 // pred_check
        %p375 = pneg %p374
      $region14: #{tfgridnet_forward.34} parent=5 // pred_check_branch
        %377 = sbr.rel (%p375) target = $region16
      $region15: #{tfgridnet_forward.34} parent=5 // pred_region
        // Predicated region
        $region17: #{tfgridnet_forward.34} parent=15 // pred_check
          %p378 = pneg %p69
        $region18: #{tfgridnet_forward.34} parent=15 // pred_check_branch
          %380 = sbr.rel (%p378) target = $region20
        $region19: #{tfgridnet_forward.34} parent=15 // pred_region
          %s381 = sand.u32 %s59, 1
          %s382 = scalar_lea.sflag [#allocation7], %s381
          %s383 = sand.u32 %s59, 1
          %s384 = smul.addr %s383, 8
          %s385 = scalar_lea.vmem [#allocation6], %s384
          %s387 = ssub.s32 128, 128
          %388 = vsyncadd %s382, %s387
          %s389 = sadd.s32 %s36, %s35
          %s390 = smul.addr %s389, 128
          %s391 = scalar_lea.hbm %s0, %s390
          %s393 = sshll.u32 %s385, 4
          %s394 = int_to_ptr.vmem [resolvable:$true] %s393
          %396 = dma.hbm_to_vmem [thread:$0]  %s391, 128, %s394, %s382
        $region20: #{tfgridnet_forward.34} parent=15 // pred_fallthru
          _
        // Predicated region
        $region21: #{tfgridnet_forward.34} parent=15 // pred_check
          %p397 = pneg %p97
        $region22: #{tfgridnet_forward.34} parent=15 // pred_check_branch
          %399 = sbr.rel (%p397) target = $region24
        $region23: #{tfgridnet_forward.34} parent=15 // pred_region
          %s400 = sand.u32 %s28, 1
          %s401 = scalar_lea.sflag [#allocation10], %s400
          %s402 = sand.u32 %s87, 1
          %s403 = smul.addr %s402, 8
          %s404 = scalar_lea.vmem [#allocation9], %s403
          %s406 = ssub.s32 128, 128
          %407 = vsyncadd %s401, %s406
          %s408 = sadd.s32 %s37, %s35
          %s409 = smul.addr %s408, 128
          %s410 = scalar_lea.hbm %s1, %s409
          %s412 = sshll.u32 %s404, 4
          %s413 = int_to_ptr.vmem [resolvable:$true] %s412
          %415 = dma.hbm_to_vmem [thread:$0]  %s410, 128, %s413, %s401
        $region24: #{tfgridnet_forward.34} parent=15 // pred_fallthru
          _
        // Predicated region
        $region25: #{tfgridnet_forward.34} parent=15 // pred_check
          %p416 = pneg %p125
        $region26: #{tfgridnet_forward.34} parent=15 // pred_check_branch
          %418 = sbr.rel (%p416) target = $region28
        $region27: #{tfgridnet_forward.34} parent=15 // pred_region
          %s419 = sand.u32 %s28, 1
          %s420 = scalar_lea.sflag [#allocation10], %s419
          %s421 = sand.u32 %s115, 1
          %s422 = smul.addr %s421, 8
          %s423 = scalar_lea.vmem [#allocation11], %s422
          %s425 = ssub.s32 128, 128
          %426 = vsyncadd %s420, %s425
          %s427 = sadd.s32 %s37, %s35
          %s428 = smul.addr %s427, 128
          %s429 = scalar_lea.hbm %s2, %s428
          %s431 = sshll.u32 %s423, 4
          %s432 = int_to_ptr.vmem [resolvable:$true] %s431
          %434 = dma.hbm_to_vmem [thread:$0]  %s429, 128, %s432, %s420
        $region28: #{tfgridnet_forward.34} parent=15 // pred_fallthru
          _
        // Predicated region
        $region29: #{tfgridnet_forward.34} parent=15 // pred_check
          %p435 = pneg %p175
        $region30: #{tfgridnet_forward.34} parent=15 // pred_check_branch
          %437 = sbr.rel (%p435) target = $region32
        $region31: #{tfgridnet_forward.34} parent=15 // pred_region
          %s438 = sand.u32 %s28, 1
          %s439 = scalar_lea.sflag [#allocation13], %s438
          %s440 = sand.u32 %s165, 1
          %s441 = smul.addr %s440, 2
          %s442 = scalar_lea.vmem [#allocation12], %s441
          %p443 = scmp.lt.s32.totalorder %s35, 0
          %s444 = ssub.s32 0, %s35
          %s445 = scalar_select %p443, %s444, %s35
          %s446 = sand.u32 %s445, 1
          %s447 = ssub.s32 0, %s446
          %s448 = scalar_select %p443, %s447, %s446
          %p449 = scmp.ne.s32.totalorder %s448, 0
          %p450 = scmp.lt.s32.totalorder %s448, 0
          %p451 = pnand %p450, %p449
          %p452 = pneg %p451
          %s453 = sadd.s32 %s448, 2
          %s454 = scalar_select %p452, %s453, %s448
          %s456 = ssub.s32 32, 32
          %457 = vsyncadd %s439, %s456
          %s458 = smul.addr %s454, 32
          %s459 = scalar_lea.hbm %s3, %s458
          %s461 = sshll.u32 %s442, 4
          %s462 = int_to_ptr.vmem [resolvable:$true] %s461
          %464 = dma.hbm_to_vmem [thread:$0]  %s459, 32, %s462, %s439
        $region32: #{tfgridnet_forward.34} parent=15 // pred_fallthru
          _
        // Predicated region
        $region33: #{tfgridnet_forward.34} parent=15 // pred_check
          %p465 = pneg %p225
        $region34: #{tfgridnet_forward.34} parent=15 // pred_check_branch
          %467 = sbr.rel (%p465) target = $region36
        $region35: #{tfgridnet_forward.34} parent=15 // pred_region
          %s468 = sand.u32 %s28, 1
          %s469 = scalar_lea.sflag [#allocation13], %s468
          %s470 = sand.u32 %s215, 1
          %s471 = smul.addr %s470, 2
          %s472 = scalar_lea.vmem [#allocation14], %s471
          %p473 = scmp.lt.s32.totalorder %s35, 0
          %s474 = ssub.s32 0, %s35
          %s475 = scalar_select %p473, %s474, %s35
          %s476 = sand.u32 %s475, 1
          %s477 = ssub.s32 0, %s476
          %s478 = scalar_select %p473, %s477, %s476
          %p479 = scmp.ne.s32.totalorder %s478, 0
          %p480 = scmp.lt.s32.totalorder %s478, 0
          %p481 = pnand %p480, %p479
          %p482 = pneg %p481
          %s483 = sadd.s32 %s478, 2
          %s484 = scalar_select %p482, %s483, %s478
          %s486 = ssub.s32 32, 32
          %487 = vsyncadd %s469, %s486
          %s488 = smul.addr %s484, 32
          %s489 = scalar_lea.hbm %s4, %s488
          %s491 = sshll.u32 %s472, 4
          %s492 = int_to_ptr.vmem [resolvable:$true] %s491
          %494 = dma.hbm_to_vmem [thread:$0]  %s489, 32, %s492, %s469
        $region36: #{tfgridnet_forward.34} parent=15 // pred_fallthru
          _
        // Predicated region
        $region37: #{tfgridnet_forward.34} parent=15 // pred_check
          %p495 = pneg %p275
        $region38: #{tfgridnet_forward.34} parent=15 // pred_check_branch
          %497 = sbr.rel (%p495) target = $region40
        $region39: #{tfgridnet_forward.34} parent=15 // pred_region
          %s498 = sand.u32 %s28, 1
          %s499 = scalar_lea.sflag [#allocation16], %s498
          %s500 = sand.u32 %s265, 1
          %s501 = smul.addr %s500, 2
          %s502 = scalar_lea.vmem [#allocation15], %s501
          %p503 = scmp.lt.s32.totalorder %s35, 0
          %s504 = ssub.s32 0, %s35
          %s505 = scalar_select %p503, %s504, %s35
          %s506 = sand.u32 %s505, 1
          %s507 = ssub.s32 0, %s506
          %s508 = scalar_select %p503, %s507, %s506
          %p509 = scmp.ne.s32.totalorder %s508, 0
          %p510 = scmp.lt.s32.totalorder %s508, 0
          %p511 = pnand %p510, %p509
          %p512 = pneg %p511
          %s513 = sadd.s32 %s508, 2
          %s514 = scalar_select %p512, %s513, %s508
          %s516 = ssub.s32 32, 32
          %517 = vsyncadd %s499, %s516
          %s518 = smul.addr %s514, 32
          %s519 = scalar_lea.hbm %s5, %s518
          %s521 = sshll.u32 %s502, 4
          %s522 = int_to_ptr.vmem [resolvable:$true] %s521
          %524 = dma.hbm_to_vmem [thread:$0]  %s519, 32, %s522, %s499
        $region40: #{tfgridnet_forward.34} parent=15 // pred_fallthru
          _
        // Predicated region
        $region41: #{tfgridnet_forward.34} parent=15 // pred_check
          %p525 = pneg %p325
        $region42: #{tfgridnet_forward.34} parent=15 // pred_check_branch
          %527 = sbr.rel (%p525) target = $region44
        $region43: #{tfgridnet_forward.34} parent=15 // pred_region
          %s528 = sand.u32 %s28, 1
          %s529 = scalar_lea.sflag [#allocation16], %s528
          %s530 = sand.u32 %s315, 1
          %s531 = scalar_lea.vmem [#allocation17], %s530
          %p532 = scmp.lt.s32.totalorder %s35, 0
          %s533 = ssub.s32 0, %s35
          %s534 = scalar_select %p532, %s533, %s35
          %s535 = sand.u32 %s534, 1
          %s536 = ssub.s32 0, %s535
          %s537 = scalar_select %p532, %s536, %s535
          %p538 = scmp.ne.s32.totalorder %s537, 0
          %p539 = scmp.lt.s32.totalorder %s537, 0
          %p540 = pnand %p539, %p538
          %p541 = pneg %p540
          %s542 = sadd.s32 %s537, 2
          %s543 = scalar_select %p541, %s542, %s537
          %s545 = ssub.s32 16, 16
          %546 = vsyncadd %s529, %s545
          %s547 = smul.addr %s543, 16
          %s548 = scalar_lea.hbm %s6, %s547
          %s550 = sshll.u32 %s531, 4
          %s551 = int_to_ptr.vmem [resolvable:$true] %s550
          %553 = dma.hbm_to_vmem [thread:$0]  %s548, 16, %s551, %s529
        $region44: #{tfgridnet_forward.34} parent=15 // pred_fallthru
          _
      $region16: #{tfgridnet_forward.34} parent=5 // pred_fallthru
        _
      %p554 = scmp.le.s32.totalorder 1, %s28
      %p555 = scmp.lt.s32.totalorder %s28, 5
      %p556 = pnand %p554, %p555
      %p557 = pneg %p556
      // Predicated region
      $region45: #{tfgridnet_forward.34} parent=5 // pred_check
        _
      $region46: #{tfgridnet_forward.34} parent=5 // pred_check_branch
        %559 = sbr.rel (%p556) target = $region48
      $region47: #{tfgridnet_forward.34} parent=5 // pred_region
        %s560 = ssub.s32 %s28, 1
        %s561 = sand.u32 %s62, 1
        %s562 = scalar_lea.sflag [#allocation7], %s561
        %s563 = sand.u32 %s62, 1
        %s564 = smul.addr %s563, 8
        %s565 = scalar_lea.vmem [#allocation6], %s564
        // Predicated region
        $region49: #{tfgridnet_forward.34} parent=47 // pred_check
          %p566 = pneg %p75
        $region50: #{tfgridnet_forward.34} parent=47 // pred_check_branch
          %568 = sbr.rel (%p566) target = $region52
        $region51: #{tfgridnet_forward.34} parent=47 // pred_region
          %569 = dma.done %s562, 128
        $region52: #{tfgridnet_forward.34} parent=47 // pred_fallthru
          _
        %s570 = sand.u32 %s33, 1
        %s571 = scalar_lea.sflag [#allocation10], %s570
        %s572 = sand.u32 %s90, 1
        %s573 = smul.addr %s572, 8
        %s574 = scalar_lea.vmem [#allocation9], %s573
        // Predicated region
        $region53: #{tfgridnet_forward.34} parent=47 // pred_check
          %p575 = pneg %p103
        $region54: #{tfgridnet_forward.34} parent=47 // pred_check_branch
          %577 = sbr.rel (%p575) target = $region56
        $region55: #{tfgridnet_forward.34} parent=47 // pred_region
          %578 = dma.done %s571, 128
        $region56: #{tfgridnet_forward.34} parent=47 // pred_fallthru
          _
        %s579 = sand.u32 %s33, 1
        %s580 = scalar_lea.sflag [#allocation10], %s579
        %s581 = sand.u32 %s118, 1
        %s582 = smul.addr %s581, 8
        %s583 = scalar_lea.vmem [#allocation11], %s582
        // Predicated region
        $region57: #{tfgridnet_forward.34} parent=47 // pred_check
          %p584 = pneg %p131
        $region58: #{tfgridnet_forward.34} parent=47 // pred_check_branch
          %586 = sbr.rel (%p584) target = $region60
        $region59: #{tfgridnet_forward.34} parent=47 // pred_region
          %587 = dma.done %s580, 128
        $region60: #{tfgridnet_forward.34} parent=47 // pred_fallthru
          _
        %s588 = sand.u32 %s33, 1
        %s589 = scalar_lea.sflag [#allocation13], %s588
        %s590 = sand.u32 %s168, 1
        %s591 = smul.addr %s590, 2
        %s592 = scalar_lea.vmem [#allocation12], %s591
        // Predicated region
        $region61: #{tfgridnet_forward.34} parent=47 // pred_check
          %p593 = pneg %p181
        $region62: #{tfgridnet_forward.34} parent=47 // pred_check_branch
          %595 = sbr.rel (%p593) target = $region64
        $region63: #{tfgridnet_forward.34} parent=47 // pred_region
          %596 = dma.done %s589, 32
        $region64: #{tfgridnet_forward.34} parent=47 // pred_fallthru
          _
        %s597 = sand.u32 %s33, 1
        %s598 = scalar_lea.sflag [#allocation13], %s597
        %s599 = sand.u32 %s218, 1
        %s600 = smul.addr %s599, 2
        %s601 = scalar_lea.vmem [#allocation14], %s600
        // Predicated region
        $region65: #{tfgridnet_forward.34} parent=47 // pred_check
          %p602 = pneg %p231
        $region66: #{tfgridnet_forward.34} parent=47 // pred_check_branch
          %604 = sbr.rel (%p602) target = $region68
        $region67: #{tfgridnet_forward.34} parent=47 // pred_region
          %605 = dma.done %s598, 32
        $region68: #{tfgridnet_forward.34} parent=47 // pred_fallthru
          _
        %s606 = sand.u32 %s33, 1
        %s607 = scalar_lea.sflag [#allocation16], %s606
        %s608 = sand.u32 %s268, 1
        %s609 = smul.addr %s608, 2
        %s610 = scalar_lea.vmem [#allocation15], %s609
        // Predicated region
        $region69: #{tfgridnet_forward.34} parent=47 // pred_check
          %p611 = pneg %p281
        $region70: #{tfgridnet_forward.34} parent=47 // pred_check_branch
          %613 = sbr.rel (%p611) target = $region72
        $region71: #{tfgridnet_forward.34} parent=47 // pred_region
          %614 = dma.done %s607, 32
        $region72: #{tfgridnet_forward.34} parent=47 // pred_fallthru
          _
        %s615 = sand.u32 %s33, 1
        %s616 = scalar_lea.sflag [#allocation16], %s615
        %s617 = sand.u32 %s318, 1
        %s618 = scalar_lea.vmem [#allocation17], %s617
        // Predicated region
        $region73: #{tfgridnet_forward.34} parent=47 // pred_check
          %p619 = pneg %p331
        $region74: #{tfgridnet_forward.34} parent=47 // pred_check_branch
          %621 = sbr.rel (%p619) target = $region76
        $region75: #{tfgridnet_forward.34} parent=47 // pred_region
          %622 = dma.done %s616, 16
        $region76: #{tfgridnet_forward.34} parent=47 // pred_fallthru
          _
        %s623 = sand.u32 %s62, 1
        %s624 = scalar_lea.sflag [#allocation7], %s623
        %s625 = sand.u32 %s62, 1
        %s626 = smul.addr %s625, 8
        %s627 = scalar_lea.vmem [#allocation6], %s626
        %p628 = pneg %p75
        %p629 = pneg %p72
        %s630 = sand.u32 %s33, 1
        %s631 = scalar_lea.sflag [#allocation10], %s630
        %s632 = sand.u32 %s90, 1
        %s633 = smul.addr %s632, 8
        %s634 = scalar_lea.vmem [#allocation9], %s633
        %p635 = pneg %p103
        %p636 = pneg %p100
        %s637 = sand.u32 %s33, 1
        %s638 = scalar_lea.sflag [#allocation10], %s637
        %s639 = sand.u32 %s118, 1
        %s640 = smul.addr %s639, 8
        %s641 = scalar_lea.vmem [#allocation11], %s640
        %p642 = pneg %p131
        %p643 = pneg %p128
        %s644 = sand.u32 %s33, 1
        %s645 = scalar_lea.sflag [#allocation13], %s644
        %s646 = sand.u32 %s168, 1
        %s647 = smul.addr %s646, 2
        %s648 = scalar_lea.vmem [#allocation12], %s647
        %p649 = pneg %p181
        %p650 = pneg %p178
        %s651 = sand.u32 %s33, 1
        %s652 = scalar_lea.sflag [#allocation13], %s651
        %s653 = sand.u32 %s218, 1
        %s654 = smul.addr %s653, 2
        %s655 = scalar_lea.vmem [#allocation14], %s654
        %p656 = pneg %p231
        %p657 = pneg %p228
        %s658 = sand.u32 %s33, 1
        %s659 = scalar_lea.sflag [#allocation16], %s658
        %s660 = sand.u32 %s268, 1
        %s661 = smul.addr %s660, 2
        %s662 = scalar_lea.vmem [#allocation15], %s661
        %p663 = pneg %p281
        %p664 = pneg %p278
        %s665 = sand.u32 %s33, 1
        %s666 = scalar_lea.sflag [#allocation16], %s665
        %s667 = sand.u32 %s318, 1
        %s668 = scalar_lea.vmem [#allocation17], %s667
        %p669 = pneg %p331
        %p670 = pneg %p328
        %p671 = pneg %p359
        %p672 = pneg %p356
        %s673 = sand.u32 %s346, 1
        %s674 = scalar_lea.sflag [#allocation8], %s673
        %s675 = sand.u32 %s346, 1
        %s676 = smul.addr %s675, 8
        %s677 = scalar_lea.vmem [#allocation18], %s676
        %p678 = scmp.lt.s32.totalorder %s38, 0
        %s679 = ssub.s32 0, %s38
        %s680 = scalar_select %p678, %s679, %s38
        %s681 = sand.u32 %s680, 1
        %s682 = ssub.s32 0, %s681
        %s683 = scalar_select %p678, %s682, %s681
        %p684 = scmp.ne.s32.totalorder %s683, 0
        %p685 = scmp.lt.s32.totalorder %s683, 0
        %p686 = pnand %p685, %p684
        %p687 = pneg %p686
        %s688 = sadd.s32 %s683, 2
        %s689 = scalar_select %p687, %s688, %s683
        %p690 = scmp.lt.s32.totalorder %s38, 0
        %s691 = ssub.s32 0, %s38
        %s692 = scalar_select %p690, %s691, %s38
        %s693 = sand.u32 %s692, 1
        %s694 = ssub.s32 0, %s693
        %s695 = scalar_select %p690, %s694, %s693
        %p696 = scmp.ne.s32.totalorder %s695, 0
        %p697 = scmp.lt.s32.totalorder %s695, 0
        %p698 = pnand %p697, %p696
        %p699 = pneg %p698
        %s700 = sadd.s32 %s695, 2
        %s701 = scalar_select %p699, %s700, %s695
        %p702 = scmp.lt.s32.totalorder %s38, 0
        %s703 = ssub.s32 0, %s38
        %s704 = scalar_select %p702, %s703, %s38
        %s705 = sand.u32 %s704, 1
        %s706 = ssub.s32 0, %s705
        %s707 = scalar_select %p702, %s706, %s705
        %p708 = scmp.ne.s32.totalorder %s707, 0
        %p709 = scmp.lt.s32.totalorder %s707, 0
        %p710 = pnand %p709, %p708
        %p711 = pneg %p710
        %s712 = sadd.s32 %s707, 2
        %s713 = scalar_select %p711, %s712, %s707
        %p714 = scmp.lt.s32.totalorder %s38, 0
        %s715 = ssub.s32 0, %s38
        %s716 = scalar_select %p714, %s715, %s38
        %s717 = sand.u32 %s716, 1
        %s718 = ssub.s32 0, %s717
        %s719 = scalar_select %p714, %s718, %s717
        %p720 = scmp.ne.s32.totalorder %s719, 0
        %p721 = scmp.lt.s32.totalorder %s719, 0
        %p722 = pnand %p721, %p720
        %p723 = pneg %p722
        %s724 = sadd.s32 %s719, 2
        %s725 = scalar_select %p723, %s724, %s719
        %v727 = vld [vmem:[%s618] sm:$0x1]
        %p728 = scmp.eq.s32.totalorder %s40, 0
        // Predicated region
        $region77: #{tfgridnet_forward.34} parent=47 // pred_check
          %p729 = pneg %p728
        $region78: #{tfgridnet_forward.34} parent=47 // pred_check_branch
          %731 = sbr.rel (%p729) target = $region80
        $region79: #{tfgridnet_forward.34} parent=47 // pred_region
          %v732 = vld [vmem:[%s592] sm:$0x3]
          %v733 = vld [vmem:[%s565] sm:$0xff]
          %vm734 = vcmp.ge.f32.partialorder %v733, 0.0
          %v736 = vlaneseq
          %v737 = vshrl.u32 %v736, 7
          %v738 = vsub.s32 0, %v737
          %v739 = vrot.slane %v727, %v738
          %740 = vset.pattern.permute.xlu0 0
          %741 = vperm.xlu0 %740, %v739
          %v742 = vpop.permute.xlu0 %741
          %v744 = vmul.f32 %v742, %v733
          %v745 = vsel %vm734, %v733, %v744
          %vm746 = vcmask 146432
          %v747 = vsel %vm746, %v745, 0.0
          %748 = vadd.xlane.f32.xlu0 %v747
          %v749 = vpop.xlane.xlu0 %748
          %v750 = vrcp.pop 18.0
          %v751 = vmul.f32 %v749, %v750
          %v752 = vsub.f32 %v745, %v751
          %v753 = vmul.f32 %v752, %v752
          %v754 = vsel %vm746, %v753, 0.0
          %755 = vadd.xlane.f32.xlu0 %v754
          %v756 = vpop.xlane.xlu0 %755
          %v757 = vmul.f32 %v756, %v750
          %v758 = vadd.f32 %v757, 1e-05
          %v759 = vrsqrt.pop %v758
          %v760 = vmul.f32 %v752, %v759
          %v761 = vlaneseq
          %v762 = vshrl.u32 %v761, 7
          %v763 = vsub.s32 0, %v762
          %v764 = vrot.slane %v732, %v763
          %v765 = vmul.f32 %v760, %v764
          %v766 = vlaneseq
          %v767 = vshrl.u32 %v766, 7
          %v768 = vsub.s32 1, %v767
          %v769 = vrot.slane %v732, %v768
          %v770 = vadd.f32 %v765, %v769
          %771 = vst.msk [vmem:[#allocation2] sm:$0xff] %vm746, %v770
          %vm772 = vcmask 7168
          %773 = vst.msk [vmem:[#allocation3] sm:$0xff] %vm772, -inf
          %774 = vst.msk [vmem:[#allocation4] sm:$0xff] %vm772, 0.0
          %vm775 = vcmask 293888
          %776 = vst.msk [vmem:[#allocation5] sm:$0xff] %vm775, 0.0
        $region80: #{tfgridnet_forward.34} parent=47 // pred_fallthru
          _
        %v777 = vld [vmem:[%s601] sm:$0x3]
        %v778 = vld [vmem:[%s610] sm:$0x3]
        %v779 = vld [vmem:[%s574] sm:$0xff]
        %vm780 = vcmp.ge.f32.partialorder %v779, 0.0
        %v782 = vlaneseq
        %v783 = vshrl.u32 %v782, 7
        %v784 = vsub.s32 0, %v783
        %v785 = vrot.slane %v727, %v784
        %786 = vset.pattern.permute.xlu0 1
        %787 = vperm.xlu0 %786, %v785
        %v788 = vpop.permute.xlu0 %787
        %v790 = vmul.f32 %v788, %v779
        %v791 = vsel %vm780, %v779, %v790
        %vm792 = vcmask 146432
        %v793 = vsel %vm792, %v791, 0.0
        %794 = vadd.xlane.f32.xlu0 %v793
        %v795 = vpop.xlane.xlu0 %794
        %v796 = vrcp.pop 18.0
        %v797 = vmul.f32 %v795, %v796
        %v798 = vsub.f32 %v791, %v797
        %v799 = vmul.f32 %v798, %v798
        %v800 = vsel %vm792, %v799, 0.0
        %801 = vadd.xlane.f32.xlu0 %v800
        %v802 = vpop.xlane.xlu0 %801
        %v803 = vmul.f32 %v802, %v796
        %v804 = vadd.f32 %v803, 1e-05
        %v805 = vrsqrt.pop %v804
        %v806 = vmul.f32 %v798, %v805
        %v807 = vlaneseq
        %v808 = vshrl.u32 %v807, 7
        %v809 = vsub.s32 0, %v808
        %v810 = vrot.slane %v777, %v809
        %v811 = vmul.f32 %v806, %v810
        %v812 = vlaneseq
        %v813 = vshrl.u32 %v812, 7
        %v814 = vsub.s32 1, %v813
        %v815 = vrot.slane %v777, %v814
        %v816 = vadd.f32 %v811, %v815
        %v817 = vld [vmem:[%s583] sm:$0xff]
        %vm818 = vcmp.ge.f32.partialorder %v817, 0.0
        %819 = vset.pattern.permute.xlu0 2
        %820 = vperm.xlu0 %819, %v785
        %v821 = vpop.permute.xlu0 %820
        %v823 = vmul.f32 %v821, %v817
        %v824 = vsel %vm818, %v817, %v823
        %vm825 = vcmask 293888
        %v826 = vsel %vm825, %v824, 0.0
        %827 = vadd.xlane.f32.xlu0 %v826
        %v828 = vpop.xlane.xlu0 %827
        %v829 = vrcp.pop 36.0
        %v830 = vmul.f32 %v828, %v829
        %v831 = vsub.f32 %v824, %v830
        %v832 = vmul.f32 %v831, %v831
        %v833 = vsel %vm825, %v832, 0.0
        %834 = vadd.xlane.f32.xlu0 %v833
        %v835 = vpop.xlane.xlu0 %834
        %v836 = vmul.f32 %v835, %v829
        %v837 = vadd.f32 %v836, 1e-05
        %v838 = vrsqrt.pop %v837
        %v839 = vmul.f32 %v831, %v838
        %v840 = vlaneseq
        %v841 = vshrl.u32 %v840, 7
        %v842 = vsub.s32 0, %v841
        %v843 = vrot.slane %v778, %v842
        %v844 = vmul.f32 %v839, %v843
        %v845 = vlaneseq
        %v846 = vshrl.u32 %v845, 7
        %v847 = vsub.s32 1, %v846
        %v848 = vrot.slane %v778, %v847
        %v849 = vadd.f32 %v844, %v848
        %v850 = vld [vmem:[#allocation2] sm:$0xff]
        %v851 = vpack.c.bf16 %v850, %v850
        %v852 = vpack.c.bf16 %v816, %v816
        %v854 = vsel %vm792, %v851, 0
        %v857 = vsel %vm792, %v852, 0
        %859 = vmatprep.subr.bf16.mxu0 0
        %860 = vmatpush1.bf16.xpose.msra.mxu0 %v857
        %861 = vmatprep.subr.bf16.mxu0 0
        %862 = vmatpush1.bf16.xpose.msra.mxu0 0
        %863 = vmatprep.subr.bf16.mxu0 0
        %864 = vmatpush1.bf16.xpose.msra.mxu0 0
        %865 = vmatprep.subr.bf16.mxu0 0
        %866 = vmatpush1.bf16.xpose.msra.mxu0 0
        %867 = vmatprep.subr.bf16.mxu0 0
        %868 = vmatpush1.bf16.xpose.msra.mxu0 0
        %869 = vmatprep.subr.bf16.mxu0 0
        %870 = vmatpush1.bf16.xpose.msra.mxu0 0
        %871 = vmatprep.subr.bf16.mxu0 0
        %872 = vmatpush1.bf16.xpose.msra.mxu0 0
        %873 = vmatprep.subr.bf16.mxu0 0
        %874 = vmatpush1.bf16.xpose.msra.mxu0 0
        %875 = vmatprep.subr.bf16.mxu0 0
        %876 = vmatpush1.bf16.xpose.msra.mxu0 0
        %877 = vmatprep.subr.bf16.mxu0 0
        %878 = vmatpush1.bf16.xpose.msra.mxu0 0
        %879 = vmatprep.subr.bf16.mxu0 0
        %880 = vmatpush1.bf16.xpose.msra.mxu0 0
        %881 = vmatprep.subr.bf16.mxu0 0
        %882 = vmatpush1.bf16.xpose.msra.mxu0 0
        %883 = vmatprep.subr.bf16.mxu0 0
        %884 = vmatpush1.bf16.xpose.msra.mxu0 0
        %885 = vmatprep.subr.bf16.mxu0 0
        %886 = vmatpush1.bf16.xpose.msra.mxu0 0
        %887 = vmatprep.subr.bf16.mxu0 0
        %888 = vmatpush1.bf16.xpose.msra.mxu0 0
        %889 = vmatprep.subr.bf16.mxu0 0
        %890 = vmatpush1.bf16.xpose.msra.mxu0 0
        %891 = vmatprep.mubr.bf16.mxu0 0
        %892 = vmatmul.mubr.bf16.gmra.mrb[0].mxu0 %v854
        %v893 = vpop.f32.mrb[0].mxu0
        %v894 = vadd.f32 0.0, %v893
        %v895 = vpop.f32.mrb[0].mxu0
        %v896 = vpop.f32.mrb[0].mxu0
        %v897 = vpop.f32.mrb[0].mxu0
        %898 = vdwg.mxu0
        %s899 = smul.u32 %s40, 8
        %v900 = vlaneseq
        %v901 = vand.u32 %v900, 127
        %v902 = vstv %s899
        %v903 = vadd.s32 %v902, %v901
        %vm904 = vcmp.lt.s32.totalorder %v903, 8
        %v905 = vsel %vm904, %v894, -inf
        %v906 = vld [vmem:[#allocation3] sm:$0xff]
        %vm907 = vcmask 64512
        %v908 = vsel %vm907, %v905, -inf
        %909 = vmax.xlane.f32.xlu0 %v908
        %v910 = vpop.xlane.xlu0 %909
        %v911 = vmax.f32 %v906, %v910
        %v912 = vsub.f32 %v906, %v911
        %v913 = vmul.f32 %v912, 1.442695
        %v914 = vpow.pop %v913
        %916 = vset.pattern.permute.xlu0 0
        %917 = vperm.xlu0 %916, %v911
        %v918 = vpop.permute.xlu0 %917
        %v920 = vsub.f32 %v905, %v918
        %v921 = vmul.f32 %v920, 1.442695
        %v922 = vpow.pop %v921
        %v923 = vld [vmem:[#allocation4] sm:$0xff]
        %v924 = vmul.f32 %v914, %v923
        %v925 = vsel %vm907, %v922, 0.0
        %926 = vadd.xlane.f32.xlu0 %v925
        %v927 = vpop.xlane.xlu0 %926
        %v928 = vadd.f32 %v924, %v927
        %vm929 = vcmask 7168
        %930 = vst.msk [vmem:[#allocation4] sm:$0xff] %vm929, %v928
        %v931 = vld [vmem:[#allocation5] sm:$0xff]
        %933 = vset.pattern.permute.xlu0 0
        %934 = vperm.xlu0 %933, %v914
        %v935 = vpop.permute.xlu0 %934
        %v937 = vmul.f32 %v935, %v931
        %v938 = vpack.c.bf16 %v922, %v922
        %v939 = vpack.c.bf16 %v849, %v849
        %v941 = vsel %vm907, %v938, 0
        %vm943 = vcmask 1043456
        %v945 = vsel %vm943, %v939, 0
        %947 = vmatprep.subr.bf16.mxu0 0
        %948 = vmatpush1.bf16.msra.mxu0 %v945
        %949 = vmatprep.subr.bf16.mxu0 0
        %950 = vmatpush1.bf16.msra.mxu0 0
        %951 = vmatprep.subr.bf16.mxu0 0
        %952 = vmatpush1.bf16.msra.mxu0 0
        %953 = vmatprep.subr.bf16.mxu0 0
        %954 = vmatpush1.bf16.msra.mxu0 0
        %955 = vmatprep.subr.bf16.mxu0 0
        %956 = vmatpush1.bf16.msra.mxu0 0
        %957 = vmatprep.subr.bf16.mxu0 0
        %958 = vmatpush1.bf16.msra.mxu0 0
        %959 = vmatprep.subr.bf16.mxu0 0
        %960 = vmatpush1.bf16.msra.mxu0 0
        %961 = vmatprep.subr.bf16.mxu0 0
        %962 = vmatpush1.bf16.msra.mxu0 0
        %963 = vmatprep.subr.bf16.mxu0 0
        %964 = vmatpush1.bf16.msra.mxu0 0
        %965 = vmatprep.subr.bf16.mxu0 0
        %966 = vmatpush1.bf16.msra.mxu0 0
        %967 = vmatprep.subr.bf16.mxu0 0
        %968 = vmatpush1.bf16.msra.mxu0 0
        %969 = vmatprep.subr.bf16.mxu0 0
        %970 = vmatpush1.bf16.msra.mxu0 0
        %971 = vmatprep.subr.bf16.mxu0 0
        %972 = vmatpush1.bf16.msra.mxu0 0
        %973 = vmatprep.subr.bf16.mxu0 0
        %974 = vmatpush1.bf16.msra.mxu0 0
        %975 = vmatprep.subr.bf16.mxu0 0
        %976 = vmatpush1.bf16.msra.mxu0 0
        %977 = vmatprep.subr.bf16.mxu0 0
        %978 = vmatpush1.bf16.msra.mxu0 0
        %979 = vmatprep.mubr.bf16.mxu0 0
        %980 = vmatmul.mubr.bf16.gmra.mrb[0].mxu0 %v941
        %v981 = vpop.f32.mrb[0].mxu0
        %v982 = vadd.f32 0.0, %v981
        %v983 = vpop.f32.mrb[0].mxu0
        %v984 = vpop.f32.mrb[0].mxu0
        %v985 = vpop.f32.mrb[0].mxu0
        %986 = vdwg.mxu0
        %v987 = vadd.f32 %v937, %v982
        %988 = vst.msk [vmem:[#allocation5] sm:$0xff] %vm825, %v987
        %989 = vst.msk [vmem:[#allocation3] sm:$0xff] %vm929, %v911
        // Predicated region
        $region81: #{tfgridnet_forward.34} parent=47 // pred_check
          %p990 = pneg %p728
        $region82: #{tfgridnet_forward.34} parent=47 // pred_check_branch
          %992 = sbr.rel (%p990) target = $region84
        $region83: #{tfgridnet_forward.34} parent=47 // pred_region
          %v993 = vld [vmem:[#allocation5] sm:$0xff]
          %v994 = vld [vmem:[#allocation4] sm:$0xff]
          %v995 = vrcp.pop %v994
          %997 = vset.pattern.permute.xlu0 0
          %998 = vperm.xlu0 %997, %v995
          %v999 = vpop.permute.xlu0 %998
          %v1001 = vmul.f32 %v993, %v999
          %1002 = vst.msk [vmem:[%s677] sm:$0xff] %vm825, %v1001
        $region84: #{tfgridnet_forward.34} parent=47 // pred_fallthru
          _
        %s1003 = sand.u32 %s346, 1
        %s1004 = scalar_lea.sflag [#allocation8], %s1003
        %s1005 = sand.u32 %s346, 1
        %s1006 = smul.addr %s1005, 8
        %s1007 = scalar_lea.vmem [#allocation18], %s1006
        // Predicated region
        $region85: #{tfgridnet_forward.34} parent=47 // pred_check
          %p1008 = pneg %p356
        $region86: #{tfgridnet_forward.34} parent=47 // pred_check_branch
          %1010 = sbr.rel (%p1008) target = $region88
        $region87: #{tfgridnet_forward.34} parent=47 // pred_region
          %s1012 = ssub.s32 128, 128
          %1013 = vsyncadd %s1004, %s1012
          %s1014 = sadd.s32 %s39, %s38
          %s1015 = smul.addr %s1014, 128
          %s1016 = scalar_lea.hbm %s7, %s1015
          %s1018 = sshll.u32 %s1007, 4
          %s1019 = int_to_ptr.vmem [resolvable:$true] %s1018
          %1021 = dma.vmem_to_hbm [thread:$0]  %s1019, 128, %s1016, %s1004
        $region88: #{tfgridnet_forward.34} parent=47 // pred_fallthru
          _
      $region48: #{tfgridnet_forward.34} parent=5 // pred_fallthru
        _
      %p1022 = scmp.le.s32.totalorder 2, %s28
      // Predicated region
      $region89: #{tfgridnet_forward.34} parent=5 // pred_check
        %p1023 = pneg %p1022
      $region90: #{tfgridnet_forward.34} parent=5 // pred_check_branch
        %1025 = sbr.rel (%p1023) target = $region92
      $region91: #{tfgridnet_forward.34} parent=5 // pred_region
        %s1026 = ssub.s32 %s28, 2
        // Predicated region
        $region93: #{tfgridnet_forward.34} parent=91 // pred_check
          %p1027 = pneg %p362
        $region94: #{tfgridnet_forward.34} parent=91 // pred_check_branch
          %1029 = sbr.rel (%p1027) target = $region96
        $region95: #{tfgridnet_forward.34} parent=91 // pred_region
          %s1030 = sand.u32 %s347, 1
          %s1031 = scalar_lea.sflag [#allocation8], %s1030
          %s1032 = sand.u32 %s347, 1
          %s1033 = smul.addr %s1032, 8
          %s1034 = scalar_lea.vmem [#allocation18], %s1033
          %1035 = dma.done %s1031, 128
        $region96: #{tfgridnet_forward.34} parent=91 // pred_fallthru
          _
      $region92: #{tfgridnet_forward.34} parent=5 // pred_fallthru
        _
    $region6: #{tfgridnet_forward.34} parent=1 // loop_footer
      %s32 = sadd.s32 1, %s28
    $region7: #{tfgridnet_forward.34} parent=1 // loop_footer_branch
      %27 = sbr.rel target = $region3
    $region8: #{tfgridnet_forward.34} parent=1 // loop_exit
      _
    %1036 = vsyncpa [#allocation7], 1
    %s1037 = scalar_lea.sflag [#allocation7], 1
    %1038 = vsyncpa %s1037, 1
    %1039 = vsyncpa [#allocation10], 1
    %s1040 = scalar_lea.sflag [#allocation10], 1
    %1041 = vsyncpa %s1040, 1
    %1042 = vsyncpa [#allocation13], 1
    %s1043 = scalar_lea.sflag [#allocation13], 1
    %1044 = vsyncpa %s1043, 1
    %1045 = vsyncpa [#allocation16], 1
    %s1046 = scalar_lea.sflag [#allocation16], 1
    %1047 = vsyncpa %s1046, 1
    %1048 = vsyncpa [#allocation8], 1
    %s1049 = scalar_lea.sflag [#allocation8], 1
    %1050 = vsyncpa %s1049, 1

// kernel: tfgridnet_forward.36
$region0: #{tfgridnet_forward.36}
  #allocation0 [shape = 'u32[]', space=smem, size = 0x4, offset = 0x4, fixed_abs, tag = 'smem constant byte address 0x4 - core index']
  #allocation1 [shape = 'u32[144,128]{1,0:T(1,128)}', space=vmem, size = 0x12000, scoped, tag = 'internal scratch']
  #allocation2 [shape = 'f32[1,1,1]{2,1,0:T(1,128)S(1)}', space=vmem, size = 0x200, scoped, tag = 'scoped memory for tfgridnet_forward.36']
  %s0 = inlined_call_operand.hbm [shape: f32[2,8,72], index: 0, kind: input, shape index: {}]
  %s1 = inlined_call_operand.<no memory space> [shape: f32[1,1,1], index: 1, kind: input, shape index: {}]
  %s2 = inlined_call_operand.hbm [shape: f32[1,1,72], index: 2, kind: input, shape index: {}]
  %s3 = inlined_call_operand.hbm [shape: f32[1,1,72], index: 3, kind: input, shape index: {}]
  %s4 = inlined_call_operand.hbm [shape: f32[2,8,72], index: 4, kind: input, shape index: {}, may-alias: {4,5}]
  %s5 = inlined_call_operand.hbm [shape: f32[2,8,72], index: 5, kind: output, shape index: {}, may-alias: {4,5}]
  %s6 = sld [smem:[#allocation0]]
  $region69: #{tfgridnet_forward.36} parent=0
    _
  %s8 = ssub.s32 1, %s6
  %s9 = scalar_select 0, %s8, %s6
  %v10 = vstv %s1
  %11 = vst [vmem:[#allocation2] sm:$0x1] %v10
  $region1: #{tfgridnet_forward.36} parent=0
    #allocation3 [shape = 'u8[8192]{0}', space=vmem, size = 0x2000, scoped, tag = 'input window, operand 0']
    #allocation4 [shape = 's32[2]{0}', space=sflag, size = 0x8, scoped, tag = 'scoped memory for tfgridnet_forward.36']
    #allocation5 [shape = 's32[2]{0}', space=sflag, size = 0x8, scoped, tag = 'scoped memory for tfgridnet_forward.36']
    #allocation6 [shape = 'u8[512]{0}', space=vmem, size = 0x400, scoped, tag = 'input window, operand 2, single buffered']
    #allocation7 [shape = 's32[1]{0}', space=sflag, size = 0x4, scoped, tag = 'scoped memory for tfgridnet_forward.36']
    #allocation8 [shape = 'u8[512]{0}', space=vmem, size = 0x400, scoped, tag = 'input window, operand 3, single buffered']
    #allocation9 [shape = 'u8[8192]{0}', space=vmem, size = 0x2000, scoped, tag = 'input window, operand 4']
    #allocation10 [shape = 's32[2]{0}', space=sflag, size = 0x8, scoped, tag = 'scoped memory for tfgridnet_forward.36']
    #allocation11 [shape = 'u8[8192]{0}', space=vmem, size = 0x2000, scoped, tag = 'output window, operand 0']
    %12 = vsyncpa [#allocation4], 0
    %s13 = scalar_lea.sflag [#allocation4], 1
    %14 = vsyncpa %s13, 0
    %15 = vsyncpa [#allocation7], 0
    %16 = vsyncpa [#allocation10], 0
    %s17 = scalar_lea.sflag [#allocation10], 1
    %18 = vsyncpa %s17, 0
    %19 = vsyncpa [#allocation5], 0
    %s20 = scalar_lea.sflag [#allocation5], 1
    %21 = vsyncpa %s20, 0
    loop: start=0, step=1, limit=4
    $region2: #{tfgridnet_forward.36} parent=1 // loop_pre_header
      _
    $region3: #{tfgridnet_forward.36} parent=1 // loop_header
      %s23 = sphi 0, %s27
      %p24 = scmp.ge.s32.totalorder %s23, 4
      %s30 = sphi 0, %s42
      %s31 = sphi 0, %s38
      %s32 = sphi 0, %s30
      %s33 = sphi 0, %s31
      %s34 = sphi 0, %s32
      %s35 = sphi 0, %s33
      %s47 = sphi 0, %s49
      %s50 = sphi 0, %s47
      %s51 = sphi 0, %s50
      %s67 = sphi 0, %s51
      %s71 = sphi 0, %s71
      %s73 = sphi 0, %s71
      %s74 = sphi 0, %s73
      %s88 = sphi 0, %s74
      %s92 = sphi 0, %s92
      %s94 = sphi 0, %s92
      %s95 = sphi 0, %s94
      %s109 = sphi 0, %s95
      %s113 = sphi 0, %s113
      %s115 = sphi 0, %s113
      %s116 = sphi 0, %s115
      %s130 = sphi 0, %s116
      %s138 = sphi 0, %s140
      %s141 = sphi 0, %s138
      %s142 = sphi 0, %s141
      %s158 = sphi 0, %s142
      %s166 = sphi 0, %s168
      %s169 = sphi 0, %s166
      %s170 = sphi 0, %s169
      %s186 = sphi 0, %s170
    $region4: #{tfgridnet_forward.36} parent=1 // loop_header_branch
      %26 = sbr.rel (%p24) target = $region8
    $region5: #{tfgridnet_forward.36} parent=1 // loop_body
      %s28 = ssub.s32 %s23, 1
      %s29 = ssub.s32 %s23, 2
      %s36 = sadd.s32 1, %s31
      %p37 = scmp.ge.s32.totalorder %s36, 1
      %s38 = scalar_select %p37, 0, %s36
      %s39 = sadd.s32 1, %s30
      %s40 = scalar_select %p37, %s39, %s30
      %p41 = scmp.ge.s32.totalorder %s40, 2
      %s42 = scalar_select %p41, 0, %s40
      %s43 = ssub.s32 %s30, %s42
      %s44 = ssub.s32 %s31, %s38
      %s45 = sor.u32 %s43, %s44
      %p46 = scmp.eq.s32.totalorder %s45, 0
      %s48 = sadd.s32 %s47, 1
      %s49 = scalar_select %p46, %s47, %s48
      %p52 = pneg %p46
      %p53 = scmp.eq.s32.totalorder %s23, 1
      %p54 = por %p52, %p53
      %p55 = scmp.ne.s32.totalorder %s47, %s50
      %p56 = scmp.eq.s32.totalorder %s23, 0
      %p57 = por %p55, %p56
      %p58 = scmp.ne.s32.totalorder %s47, %s50
      %p59 = scmp.eq.s32.totalorder %s28, 1
      %p60 = por %p58, %p59
      %p61 = scmp.ne.s32.totalorder %s50, %s51
      %p62 = scmp.eq.s32.totalorder %s28, 0
      %p63 = por %p61, %p62
      %p64 = scmp.ne.s32.totalorder %s50, %s51
      %p65 = scmp.eq.s32.totalorder %s29, 1
      %p66 = por %p64, %p65
      %p68 = scmp.ne.s32.totalorder %s51, %s67
      %p69 = scmp.eq.s32.totalorder %s29, 0
      %p70 = por %p68, %p69
      %s72 = sadd.s32 %s71, 1
      %p75 = scmp.eq.s32.totalorder %s23, 1
      %p76 = scmp.ne.s32.totalorder %s71, %s73
      %p77 = scmp.eq.s32.totalorder %s23, 0
      %p78 = por %p76, %p77
      %p79 = scmp.ne.s32.totalorder %s71, %s73
      %p80 = scmp.eq.s32.totalorder %s28, 1
      %p81 = por %p79, %p80
      %p82 = scmp.ne.s32.totalorder %s73, %s74
      %p83 = scmp.eq.s32.totalorder %s28, 0
      %p84 = por %p82, %p83
      %p85 = scmp.ne.s32.totalorder %s73, %s74
      %p86 = scmp.eq.s32.totalorder %s29, 1
      %p87 = por %p85, %p86
      %p89 = scmp.ne.s32.totalorder %s74, %s88
      %p90 = scmp.eq.s32.totalorder %s29, 0
      %p91 = por %p89, %p90
      %s93 = sadd.s32 %s92, 1
      %p96 = scmp.eq.s32.totalorder %s23, 1
      %p97 = scmp.ne.s32.totalorder %s92, %s94
      %p98 = scmp.eq.s32.totalorder %s23, 0
      %p99 = por %p97, %p98
      %p100 = scmp.ne.s32.totalorder %s92, %s94
      %p101 = scmp.eq.s32.totalorder %s28, 1
      %p102 = por %p100, %p101
      %p103 = scmp.ne.s32.totalorder %s94, %s95
      %p104 = scmp.eq.s32.totalorder %s28, 0
      %p105 = por %p103, %p104
      %p106 = scmp.ne.s32.totalorder %s94, %s95
      %p107 = scmp.eq.s32.totalorder %s29, 1
      %p108 = por %p106, %p107
      %p110 = scmp.ne.s32.totalorder %s95, %s109
      %p111 = scmp.eq.s32.totalorder %s29, 0
      %p112 = por %p110, %p111
      %s114 = sadd.s32 %s113, 1
      %p117 = scmp.eq.s32.totalorder %s23, 1
      %p118 = scmp.ne.s32.totalorder %s113, %s115
      %p119 = scmp.eq.s32.totalorder %s23, 0
      %p120 = por %p118, %p119
      %p121 = scmp.ne.s32.totalorder %s113, %s115
      %p122 = scmp.eq.s32.totalorder %s28, 1
      %p123 = por %p121, %p122
      %p124 = scmp.ne.s32.totalorder %s115, %s116
      %p125 = scmp.eq.s32.totalorder %s28, 0
      %p126 = por %p124, %p125
      %p127 = scmp.ne.s32.totalorder %s115, %s116
      %p128 = scmp.eq.s32.totalorder %s29, 1
      %p129 = por %p127, %p128
      %p131 = scmp.ne.s32.totalorder %s116, %s130
      %p132 = scmp.eq.s32.totalorder %s29, 0
      %p133 = por %p131, %p132
      %s134 = ssub.s32 %s30, %s42
      %s135 = ssub.s32 %s31, %s38
      %s136 = sor.u32 %s134, %s135
      %p137 = scmp.eq.s32.totalorder %s136, 0
      %s139 = sadd.s32 %s138, 1
      %s140 = scalar_select %p137, %s138, %s139
      %p143 = pneg %p137
      %p144 = scmp.eq.s32.totalorder %s23, 1
      %p145 = por %p143, %p144
      %p146 = scmp.ne.s32.totalorder %s138, %s141
      %p147 = scmp.eq.s32.totalorder %s23, 0
      %p148 = por %p146, %p147
      %p149 = scmp.ne.s32.totalorder %s138, %s141
      %p150 = scmp.eq.s32.totalorder %s28, 1
      %p151 = por %p149, %p150
      %p152 = scmp.ne.s32.totalorder %s141, %s142
      %p153 = scmp.eq.s32.totalorder %s28, 0
      %p154 = por %p152, %p153
      %p155 = scmp.ne.s32.totalorder %s141, %s142
      %p156 = scmp.eq.s32.totalorder %s29, 1
      %p157 = por %p155, %p156
      %p159 = scmp.ne.s32.totalorder %s142, %s158
      %p160 = scmp.eq.s32.totalorder %s29, 0
      %p161 = por %p159, %p160
      %s162 = ssub.s32 %s30, %s42
      %s163 = ssub.s32 %s31, %s38
      %s164 = sor.u32 %s162, %s163
      %p165 = scmp.eq.s32.totalorder %s164, 0
      %s167 = sadd.s32 %s166, 1
      %s168 = scalar_select %p165, %s166, %s167
      %p171 = pneg %p165
      %p172 = scmp.eq.s32.totalorder %s23, 1
      %p173 = por %p171, %p172
      %p174 = scmp.ne.s32.totalorder %s166, %s169
      %p175 = scmp.eq.s32.totalorder %s23, 0
      %p176 = por %p174, %p175
      %p177 = scmp.ne.s32.totalorder %s166, %s169
      %p178 = scmp.eq.s32.totalorder %s28, 1
      %p179 = por %p177, %p178
      %p180 = scmp.ne.s32.totalorder %s169, %s170
      %p181 = scmp.eq.s32.totalorder %s28, 0
      %p182 = por %p180, %p181
      %p183 = scmp.ne.s32.totalorder %s169, %s170
      %p184 = scmp.eq.s32.totalorder %s29, 1
      %p185 = por %p183, %p184
      %p187 = scmp.ne.s32.totalorder %s170, %s186
      %p188 = scmp.eq.s32.totalorder %s29, 0
      %p189 = por %p187, %p188
      %p190 = scmp.le.s32.totalorder 1, %s23
      %p191 = scmp.lt.s32.totalorder %s23, 3
      %p192 = pnand %p190, %p191
      %p193 = pneg %p192
      // Predicated region
      $region9: #{tfgridnet_forward.36} parent=5 // pred_check
        _
      $region10: #{tfgridnet_forward.36} parent=5 // pred_check_branch
        %195 = sbr.rel (%p192) target = $region12
      $region11: #{tfgridnet_forward.36} parent=5 // pred_region
        %s196 = ssub.s32 %s23, 1
        // Predicated region
        $region13: #{tfgridnet_forward.36} parent=11 // pred_check
          %p197 = pneg %p84
        $region14: #{tfgridnet_forward.36} parent=11 // pred_check_branch
          %199 = sbr.rel (%p197) target = $region16
        $region15: #{tfgridnet_forward.36} parent=11 // pred_region
          _
        $region16: #{tfgridnet_forward.36} parent=11 // pred_fallthru
          _
        // Predicated region
        $region17: #{tfgridnet_forward.36} parent=11 // pred_check
          %p200 = pneg %p105
        $region18: #{tfgridnet_forward.36} parent=11 // pred_check_branch
          %202 = sbr.rel (%p200) target = $region20
        $region19: #{tfgridnet_forward.36} parent=11 // pred_region
          %s204 = ssub.s32 16, 16
          %205 = vsyncadd [#allocation7], %s204
          %s207 = sshll.u32 [#allocation6], 4
          %s208 = int_to_ptr.vmem [resolvable:$true] %s207
          %210 = dma.hbm_to_vmem [thread:$0]  %s2, 16, %s208, [#allocation7]
        $region20: #{tfgridnet_forward.36} parent=11 // pred_fallthru
          _
        // Predicated region
        $region21: #{tfgridnet_forward.36} parent=11 // pred_check
          %p211 = pneg %p126
        $region22: #{tfgridnet_forward.36} parent=11 // pred_check_branch
          %213 = sbr.rel (%p211) target = $region24
        $region23: #{tfgridnet_forward.36} parent=11 // pred_region
          %s215 = ssub.s32 16, 16
          %216 = vsyncadd [#allocation7], %s215
          %s218 = sshll.u32 [#allocation8], 4
          %s219 = int_to_ptr.vmem [resolvable:$true] %s218
          %221 = dma.hbm_to_vmem [thread:$0]  %s3, 16, %s219, [#allocation7]
        $region24: #{tfgridnet_forward.36} parent=11 // pred_fallthru
          _
      $region12: #{tfgridnet_forward.36} parent=5 // pred_fallthru
        _
      %p222 = scmp.lt.s32.totalorder %s23, 2
      // Predicated region
      $region25: #{tfgridnet_forward.36} parent=5 // pred_check
        %p223 = pneg %p222
      $region26: #{tfgridnet_forward.36} parent=5 // pred_check_branch
        %225 = sbr.rel (%p223) target = $region28
      $region27: #{tfgridnet_forward.36} parent=5 // pred_region
        // Predicated region
        $region29: #{tfgridnet_forward.36} parent=27 // pred_check
          %p226 = pneg %p57
        $region30: #{tfgridnet_forward.36} parent=27 // pred_check_branch
          %228 = sbr.rel (%p226) target = $region32
        $region31: #{tfgridnet_forward.36} parent=27 // pred_region
          %s229 = sand.u32 %s47, 1
          %s230 = scalar_lea.sflag [#allocation4], %s229
          %s231 = sand.u32 %s47, 1
          %s232 = smul.addr %s231, 8
          %s233 = scalar_lea.vmem [#allocation3], %s232
          %s235 = ssub.s32 128, 128
          %236 = vsyncadd %s230, %s235
          %s237 = sadd.s32 %s31, %s30
          %s238 = smul.addr %s237, 128
          %s239 = scalar_lea.hbm %s0, %s238
          %s241 = sshll.u32 %s233, 4
          %s242 = int_to_ptr.vmem [resolvable:$true] %s241
          %244 = dma.hbm_to_vmem [thread:$0]  %s239, 128, %s242, %s230
        $region32: #{tfgridnet_forward.36} parent=27 // pred_fallthru
          _
        // Predicated region
        $region33: #{tfgridnet_forward.36} parent=27 // pred_check
          %p245 = pneg %p148
        $region34: #{tfgridnet_forward.36} parent=27 // pred_check_branch
          %247 = sbr.rel (%p245) target = $region36
        $region35: #{tfgridnet_forward.36} parent=27 // pred_region
          %s248 = sand.u32 %s138, 1
          %s249 = scalar_lea.sflag [#allocation10], %s248
          %s250 = sand.u32 %s138, 1
          %s251 = smul.addr %s250, 8
          %s252 = scalar_lea.vmem [#allocation9], %s251
          %s254 = ssub.s32 128, 128
          %255 = vsyncadd %s249, %s254
          %s256 = sadd.s32 %s31, %s30
          %s257 = smul.addr %s256, 128
          %s258 = scalar_lea.hbm %s4, %s257
          %s260 = sshll.u32 %s252, 4
          %s261 = int_to_ptr.vmem [resolvable:$true] %s260
          %263 = dma.hbm_to_vmem [thread:$0]  %s258, 128, %s261, %s249
        $region36: #{tfgridnet_forward.36} parent=27 // pred_fallthru
          _
      $region28: #{tfgridnet_forward.36} parent=5 // pred_fallthru
        _
      %p264 = scmp.le.s32.totalorder 1, %s23
      %p265 = scmp.lt.s32.totalorder %s23, 3
      %p266 = pnand %p264, %p265
      %p267 = pneg %p266
      // Predicated region
      $region37: #{tfgridnet_forward.36} parent=5 // pred_check
        _
      $region38: #{tfgridnet_forward.36} parent=5 // pred_check_branch
        %269 = sbr.rel (%p266) target = $region40
      $region39: #{tfgridnet_forward.36} parent=5 // pred_region
        %s270 = ssub.s32 %s23, 1
        %s271 = sand.u32 %s50, 1
        %s272 = scalar_lea.sflag [#allocation4], %s271
        %s273 = sand.u32 %s50, 1
        %s274 = smul.addr %s273, 8
        %s275 = scalar_lea.vmem [#allocation3], %s274
        // Predicated region
        $region41: #{tfgridnet_forward.36} parent=39 // pred_check
          %p276 = pneg %p63
        $region42: #{tfgridnet_forward.36} parent=39 // pred_check_branch
          %278 = sbr.rel (%p276) target = $region44
        $region43: #{tfgridnet_forward.36} parent=39 // pred_region
          %279 = dma.done %s272, 128
        $region44: #{tfgridnet_forward.36} parent=39 // pred_fallthru
          _
        // Predicated region
        $region45: #{tfgridnet_forward.36} parent=39 // pred_check
          %p280 = pneg %p105
        $region46: #{tfgridnet_forward.36} parent=39 // pred_check_branch
          %282 = sbr.rel (%p280) target = $region48
        $region47: #{tfgridnet_forward.36} parent=39 // pred_region
          %283 = dma.done [#allocation7], 16
        $region48: #{tfgridnet_forward.36} parent=39 // pred_fallthru
          _
        // Predicated region
        $region49: #{tfgridnet_forward.36} parent=39 // pred_check
          %p284 = pneg %p126
        $region50: #{tfgridnet_forward.36} parent=39 // pred_check_branch
          %286 = sbr.rel (%p284) target = $region52
        $region51: #{tfgridnet_forward.36} parent=39 // pred_region
          %287 = dma.done [#allocation7], 16
        $region52: #{tfgridnet_forward.36} parent=39 // pred_fallthru
          _
        %s288 = sand.u32 %s141, 1
        %s289 = scalar_lea.sflag [#allocation10], %s288
        %s290 = sand.u32 %s141, 1
        %s291 = smul.addr %s290, 8
        %s292 = scalar_lea.vmem [#allocation9], %s291
        // Predicated region
        $region53: #{tfgridnet_forward.36} parent=39 // pred_check
          %p293 = pneg %p154
        $region54: #{tfgridnet_forward.36} parent=39 // pred_check_branch
          %295 = sbr.rel (%p293) target = $region56
        $region55: #{tfgridnet_forward.36} parent=39 // pred_region
          %296 = dma.done %s289, 128
        $region56: #{tfgridnet_forward.36} parent=39 // pred_fallthru
          _
        %s297 = sand.u32 %s50, 1
        %s298 = scalar_lea.sflag [#allocation4], %s297
        %s299 = sand.u32 %s50, 1
        %s300 = smul.addr %s299, 8
        %s301 = scalar_lea.vmem [#allocation3], %s300
        %p302 = pneg %p63
        %p303 = pneg %p60
        %p304 = pneg %p84
        %p305 = pneg %p81
        %p306 = pneg %p105
        %p307 = pneg %p102
        %p308 = pneg %p126
        %p309 = pneg %p123
        %s310 = sand.u32 %s141, 1
        %s311 = scalar_lea.sflag [#allocation10], %s310
        %s312 = sand.u32 %s141, 1
        %s313 = smul.addr %s312, 8
        %s314 = scalar_lea.vmem [#allocation9], %s313
        %p315 = pneg %p154
        %p316 = pneg %p151
        %p317 = pneg %p182
        %p318 = pneg %p179
        %s319 = sand.u32 %s169, 1
        %s320 = scalar_lea.sflag [#allocation5], %s319
        %s321 = sand.u32 %s169, 1
        %s322 = smul.addr %s321, 8
        %s323 = scalar_lea.vmem [#allocation11], %s322
        %v324 = vld [vmem:[%s275] sm:$0xff]
        %vm325 = vcmp.ge.f32.partialorder %v324, 0.0
        %v326 = vld [vmem:[#allocation2] sm:$0x1]
        %v328 = vlaneseq
        %v329 = vshrl.u32 %v328, 7
        %v330 = vsub.s32 0, %v329
        %v331 = vrot.slane %v326, %v330
        %332 = vset.pattern.permute.xlu0 0
        %333 = vperm.xlu0 %332, %v331
        %v334 = vpop.permute.xlu0 %333
        %v336 = vmul.f32 %v334, %v324
        %v337 = vsel %vm325, %v324, %v336
        %vm338 = vcmask 588800
        %v339 = vsel %vm338, %v337, 0.0
        %340 = vadd.xlane.f32.xlu0 %v339
        %v341 = vpop.xlane.xlu0 %340
        %v342 = vrcp.pop 72.0
        %v343 = vmul.f32 %v341, %v342
        %v344 = vsub.f32 %v337, %v343
        %v345 = vmul.f32 %v344, %v344
        %v346 = vsel %vm338, %v345, 0.0
        %347 = vadd.xlane.f32.xlu0 %v346
        %v348 = vpop.xlane.xlu0 %347
        %v349 = vmul.f32 %v348, %v342
        %v350 = vadd.f32 %v349, 1e-05
        %v351 = vrsqrt.pop %v350
        %v352 = vmul.f32 %v344, %v351
        %v353 = vld [vmem:[#allocation6] sm:$0x1]
        %v355 = vlaneseq
        %v356 = vshrl.u32 %v355, 7
        %v357 = vsub.s32 0, %v356
        %v358 = vrot.slane %v353, %v357
        %v360 = vmul.f32 %v352, %v358
        %v361 = vld [vmem:[#allocation8] sm:$0x1]
        %v363 = vlaneseq
        %v364 = vshrl.u32 %v363, 7
        %v365 = vsub.s32 0, %v364
        %v366 = vrot.slane %v361, %v365
        %v368 = vadd.f32 %v360, %v366
        %v369 = vld [vmem:[%s292] sm:$0xff]
        %v370 = vadd.f32 %v368, %v369
        %371 = vst.msk [vmem:[%s323] sm:$0xff] %vm338, %v370
        %s372 = sand.u32 %s169, 1
        %s373 = scalar_lea.sflag [#allocation5], %s372
        %s374 = sand.u32 %s169, 1
        %s375 = smul.addr %s374, 8
        %s376 = scalar_lea.vmem [#allocation11], %s375
        // Predicated region
        $region57: #{tfgridnet_forward.36} parent=39 // pred_check
          %p377 = pneg %p179
        $region58: #{tfgridnet_forward.36} parent=39 // pred_check_branch
          %379 = sbr.rel (%p377) target = $region60
        $region59: #{tfgridnet_forward.36} parent=39 // pred_region
          %s381 = ssub.s32 128, 128
          %382 = vsyncadd %s373, %s381
          %s383 = sadd.s32 %s33, %s32
          %s384 = smul.addr %s383, 128
          %s385 = scalar_lea.hbm %s5, %s384
          %s387 = sshll.u32 %s376, 4
          %s388 = int_to_ptr.vmem [resolvable:$true] %s387
          %390 = dma.vmem_to_hbm [thread:$0]  %s388, 128, %s385, %s373
        $region60: #{tfgridnet_forward.36} parent=39 // pred_fallthru
          _
      $region40: #{tfgridnet_forward.36} parent=5 // pred_fallthru
        _
      %p391 = scmp.le.s32.totalorder 2, %s23
      // Predicated region
      $region61: #{tfgridnet_forward.36} parent=5 // pred_check
        %p392 = pneg %p391
      $region62: #{tfgridnet_forward.36} parent=5 // pred_check_branch
        %394 = sbr.rel (%p392) target = $region64
      $region63: #{tfgridnet_forward.36} parent=5 // pred_region
        %s395 = ssub.s32 %s23, 2
        // Predicated region
        $region65: #{tfgridnet_forward.36} parent=63 // pred_check
          %p396 = pneg %p185
        $region66: #{tfgridnet_forward.36} parent=63 // pred_check_branch
          %398 = sbr.rel (%p396) target = $region68
        $region67: #{tfgridnet_forward.36} parent=63 // pred_region
          %s399 = sand.u32 %s170, 1
          %s400 = scalar_lea.sflag [#allocation5], %s399
          %s401 = sand.u32 %s170, 1
          %s402 = smul.addr %s401, 8
          %s403 = scalar_lea.vmem [#allocation11], %s402
          %404 = dma.done %s400, 128
        $region68: #{tfgridnet_forward.36} parent=63 // pred_fallthru
          _
      $region64: #{tfgridnet_forward.36} parent=5 // pred_fallthru
        _
    $region6: #{tfgridnet_forward.36} parent=1 // loop_footer
      %s27 = sadd.s32 1, %s23
    $region7: #{tfgridnet_forward.36} parent=1 // loop_footer_branch
      %22 = sbr.rel target = $region3
    $region8: #{tfgridnet_forward.36} parent=1 // loop_exit
      _
    %405 = vsyncpa [#allocation4], 1
    %s406 = scalar_lea.sflag [#allocation4], 1
    %407 = vsyncpa %s406, 1
    %408 = vsyncpa [#allocation7], 1
    %409 = vsyncpa [#allocation10], 1
    %s410 = scalar_lea.sflag [#allocation10], 1
    %411 = vsyncpa %s410, 1
    %412 = vsyncpa [#allocation5], 1
    %s413 = scalar_lea.sflag [#allocation5], 1
    %414 = vsyncpa %s413, 1

// kernel: tfgridnet_forward.47
$region0: #{tfgridnet_forward.47}
  #allocation0 [shape = 'u32[]', space=smem, size = 0x4, offset = 0x4, fixed_abs, tag = 'smem constant byte address 0x4 - core index']
  #allocation1 [shape = 'u32[144,128]{1,0:T(1,128)}', space=vmem, size = 0x12000, scoped, tag = 'internal scratch']
  %s0 = inlined_call_operand.hbm [shape: f32[144,8], index: 0, kind: input, shape index: {}]
  %s1 = inlined_call_operand.hbm [shape: bf16[8,18], index: 1, kind: input, shape index: {}]
  %s2 = inlined_call_operand.hbm [shape: f32[1,18], index: 2, kind: input, shape index: {}]
  %s3 = inlined_call_operand.hbm [shape: f32[144,18], index: 3, kind: output, shape index: {}]
  %s4 = sld [smem:[#allocation0]]
  $region34: #{tfgridnet_forward.47} parent=0
    _
  %s6 = ssub.s32 1, %s4
  %s7 = scalar_select 0, %s6, %s4
  $region1: #{tfgridnet_forward.47} parent=0
    #allocation2 [shape = 'u8[73728]{0}', space=vmem, size = 0x12000, scoped, tag = 'input window, operand 0, single buffered']
    #allocation3 [shape = 's32[1]{0}', space=sflag, size = 0x4, scoped, tag = 'scoped memory for tfgridnet_forward.47']
    #allocation4 [shape = 's32[1]{0}', space=sflag, size = 0x4, scoped, tag = 'scoped memory for tfgridnet_forward.47']
    #allocation5 [shape = 'u8[2048]{0}', space=vmem, size = 0x800, scoped, tag = 'input window, operand 1, single buffered']
    #allocation6 [shape = 's32[1]{0}', space=sflag, size = 0x4, scoped, tag = 'scoped memory for tfgridnet_forward.47']
    #allocation7 [shape = 'u8[512]{0}', space=vmem, size = 0x400, scoped, tag = 'input window, operand 2, single buffered']
    #allocation8 [shape = 'u8[73728]{0}', space=vmem, size = 0x12000, scoped, tag = 'output window, operand 0, single buffered']
    %8 = vsyncpa [#allocation3], 0
    %9 = vsyncpa [#allocation6], 0
    %10 = vsyncpa [#allocation4], 0
    // Predicated region
    $region2: #{tfgridnet_forward.47} parent=1 // pred_check
      _
    $region3: #{tfgridnet_forward.47} parent=1 // pred_check_branch
      %12 = sbr.rel (0) target = $region5
    $region4: #{tfgridnet_forward.47} parent=1 // pred_region
      %s14 = ssub.s32 2304, 2304
      %15 = vsyncadd [#allocation3], %s14
      %s16 = sshll.u32 [#allocation2], 4
      %s17 = int_to_ptr.vmem [resolvable:$true] %s16
      %22 = dma.hbm_to_vmem [thread:$0]  %s0, 2304, %s17, [#allocation3], 128, 128, 8
    $region5: #{tfgridnet_forward.47} parent=1 // pred_fallthru
      _
    // Predicated region
    $region6: #{tfgridnet_forward.47} parent=1 // pred_check
      _
    $region7: #{tfgridnet_forward.47} parent=1 // pred_check_branch
      %24 = sbr.rel (0) target = $region9
    $region8: #{tfgridnet_forward.47} parent=1 // pred_region
      %s26 = ssub.s32 64, 64
      %27 = vsyncadd [#allocation6], %s26
      %s29 = sshll.u32 [#allocation5], 4
      %s30 = int_to_ptr.vmem [resolvable:$true] %s29
      %32 = dma.hbm_to_vmem [thread:$0]  %s1, 64, %s30, [#allocation6]
    $region9: #{tfgridnet_forward.47} parent=1 // pred_fallthru
      _
    // Predicated region
    $region10: #{tfgridnet_forward.47} parent=1 // pred_check
      _
    $region11: #{tfgridnet_forward.47} parent=1 // pred_check_branch
      %34 = sbr.rel (0) target = $region13
    $region12: #{tfgridnet_forward.47} parent=1 // pred_region
      %s36 = ssub.s32 16, 16
      %37 = vsyncadd [#allocation6], %s36
      %s39 = sshll.u32 [#allocation7], 4
      %s40 = int_to_ptr.vmem [resolvable:$true] %s39
      %42 = dma.hbm_to_vmem [thread:$0]  %s2, 16, %s40, [#allocation6]
    $region13: #{tfgridnet_forward.47} parent=1 // pred_fallthru
      _
    // Predicated region
    $region14: #{tfgridnet_forward.47} parent=1 // pred_check
      _
    $region15: #{tfgridnet_forward.47} parent=1 // pred_check_branch
      %44 = sbr.rel (0) target = $region17
    $region16: #{tfgridnet_forward.47} parent=1 // pred_region
      %45 = dma.done [#allocation3], 2304
    $region17: #{tfgridnet_forward.47} parent=1 // pred_fallthru
      _
    // Predicated region
    $region18: #{tfgridnet_forward.47} parent=1 // pred_check
      _
    $region19: #{tfgridnet_forward.47} parent=1 // pred_check_branch
      %47 = sbr.rel (0) target = $region21
    $region20: #{tfgridnet_forward.47} parent=1 // pred_region
      %48 = dma.done [#allocation6], 64
    $region21: #{tfgridnet_forward.47} parent=1 // pred_fallthru
      _
    // Predicated region
    $region22: #{tfgridnet_forward.47} parent=1 // pred_check
      _
    $region23: #{tfgridnet_forward.47} parent=1 // pred_check_branch
      %50 = sbr.rel (0) target = $region25
    $region24: #{tfgridnet_forward.47} parent=1 // pred_region
      %51 = dma.done [#allocation6], 16
    $region25: #{tfgridnet_forward.47} parent=1 // pred_fallthru
      _
    %v53 = vld [vmem:[#allocation2] sm:$0xff]
    %v54 = vld [vmem:[#allocation2 + $0x8] sm:$0xff]
    %v55 = vld [vmem:[#allocation2 + $0x10] sm:$0xff]
    %v56 = vld [vmem:[#allocation2 + $0x18] sm:$0xff]
    %v57 = vld [vmem:[#allocation2 + $0x20] sm:$0xff]
    %v58 = vld [vmem:[#allocation2 + $0x28] sm:$0xff]
    %v59 = vld [vmem:[#allocation2 + $0x30] sm:$0xff]
    %v60 = vld [vmem:[#allocation2 + $0x38] sm:$0xff]
    %v61 = vld [vmem:[#allocation2 + $0x40] sm:$0xff]
    %v62 = vld [vmem:[#allocation2 + $0x48] sm:$0xff]
    %v63 = vld [vmem:[#allocation2 + $0x50] sm:$0xff]
    %v64 = vld [vmem:[#allocation2 + $0x58] sm:$0xff]
    %v65 = vld [vmem:[#allocation2 + $0x60] sm:$0xff]
    %v66 = vld [vmem:[#allocation2 + $0x68] sm:$0xff]
    %v67 = vld [vmem:[#allocation2 + $0x70] sm:$0xff]
    %v68 = vld [vmem:[#allocation2 + $0x78] sm:$0xff]
    %v69 = vld [vmem:[#allocation2 + $0x80] sm:$0xff]
    %v70 = vld [vmem:[#allocation2 + $0x88] sm:$0xff]
    %v71 = vpack.c.bf16 %v54, %v53
    %v72 = vpack.c.bf16 %v56, %v55
    %v73 = vpack.c.bf16 %v58, %v57
    %v74 = vpack.c.bf16 %v60, %v59
    %v75 = vpack.c.bf16 %v62, %v61
    %v76 = vpack.c.bf16 %v64, %v63
    %v77 = vpack.c.bf16 %v66, %v65
    %v78 = vpack.c.bf16 %v68, %v67
    %v79 = vpack.c.bf16 %v70, %v69
    %v80 = vld [vmem:[#allocation5] sm:$0xf]
    %v81 = vld [vmem:[#allocation7] sm:$0x1]
    %v83 = vlaneseq
    %v84 = vshrl.u32 %v83, 7
    %v85 = vsub.s32 0, %v84
    %v86 = vrot.slane %v81, %v85
    %vm88 = vcmask 64512
    %v90 = vsel %vm88, %v71, 0
    %v93 = vsel %vm88, %v72, 0
    %v96 = vsel %vm88, %v73, 0
    %v99 = vsel %vm88, %v74, 0
    %v102 = vsel %vm88, %v75, 0
    %v105 = vsel %vm88, %v76, 0
    %v108 = vsel %vm88, %v77, 0
    %v111 = vsel %vm88, %v78, 0
    %v114 = vsel %vm88, %v79, 0
    %vm116 = vcmask 1043456
    %v118 = vsel %vm116, %v80, 0
    %120 = vmatprep.subr.bf16.mxu0 0
    %121 = vmatpush1.bf16.msra.mxu0 %v118
    %122 = vmatprep.subr.bf16.mxu0 0
    %123 = vmatpush1.bf16.msra.mxu0 0
    %124 = vmatprep.subr.bf16.mxu0 0
    %125 = vmatpush1.bf16.msra.mxu0 0
    %126 = vmatprep.subr.bf16.mxu0 0
    %127 = vmatpush1.bf16.msra.mxu0 0
    %128 = vmatprep.subr.bf16.mxu0 0
    %129 = vmatpush1.bf16.msra.mxu0 0
    %130 = vmatprep.subr.bf16.mxu0 0
    %131 = vmatpush1.bf16.msra.mxu0 0
    %132 = vmatprep.subr.bf16.mxu0 0
    %133 = vmatpush1.bf16.msra.mxu0 0
    %134 = vmatprep.subr.bf16.mxu0 0
    %135 = vmatpush1.bf16.msra.mxu0 0
    %136 = vmatprep.subr.bf16.mxu0 0
    %137 = vmatpush1.bf16.msra.mxu0 0
    %138 = vmatprep.subr.bf16.mxu0 0
    %139 = vmatpush1.bf16.msra.mxu0 0
    %140 = vmatprep.subr.bf16.mxu0 0
    %141 = vmatpush1.bf16.msra.mxu0 0
    %142 = vmatprep.subr.bf16.mxu0 0
    %143 = vmatpush1.bf16.msra.mxu0 0
    %144 = vmatprep.subr.bf16.mxu0 0
    %145 = vmatpush1.bf16.msra.mxu0 0
    %146 = vmatprep.subr.bf16.mxu0 0
    %147 = vmatpush1.bf16.msra.mxu0 0
    %148 = vmatprep.subr.bf16.mxu0 0
    %149 = vmatpush1.bf16.msra.mxu0 0
    %150 = vmatprep.subr.bf16.mxu0 0
    %151 = vmatpush1.bf16.msra.mxu0 0
    %152 = vmatprep.mubr.bf16.mxu0 0
    %153 = vmatmul.mubr.bf16.gmra.mrb[0].mxu0 %v90
    %v154 = vpop.f32.mrb[0].mxu0
    %v155 = vadd.f32 %v86, %v154
    %v156 = vpop.f32.mrb[0].mxu0
    %v157 = vpop.f32.mrb[0].mxu0
    %v158 = vadd.f32 %v86, %v157
    %v159 = vpop.f32.mrb[0].mxu0
    %160 = vmatprep.mubr.bf16.mxu0 0
    %161 = vmatmul.mubr.bf16.gmra.mrb[0].mxu0 %v93
    %v162 = vpop.f32.mrb[0].mxu0
    %v163 = vadd.f32 %v86, %v162
    %v164 = vpop.f32.mrb[0].mxu0
    %v165 = vpop.f32.mrb[0].mxu0
    %v166 = vadd.f32 %v86, %v165
    %v167 = vpop.f32.mrb[0].mxu0
    %168 = vmatprep.mubr.bf16.mxu0 0
    %169 = vmatmul.mubr.bf16.gmra.mrb[0].mxu0 %v96
    %v170 = vpop.f32.mrb[0].mxu0
    %v171 = vadd.f32 %v86, %v170
    %v172 = vpop.f32.mrb[0].mxu0
    %v173 = vpop.f32.mrb[0].mxu0
    %v174 = vadd.f32 %v86, %v173
    %v175 = vpop.f32.mrb[0].mxu0
    %176 = vmatprep.mubr.bf16.mxu0 0
    %177 = vmatmul.mubr.bf16.gmra.mrb[0].mxu0 %v99
    %v178 = vpop.f32.mrb[0].mxu0
    %v179 = vadd.f32 %v86, %v178
    %v180 = vpop.f32.mrb[0].mxu0
    %v181 = vpop.f32.mrb[0].mxu0
    %v182 = vadd.f32 %v86, %v181
    %v183 = vpop.f32.mrb[0].mxu0
    %184 = vmatprep.mubr.bf16.mxu0 0
    %185 = vmatmul.mubr.bf16.gmra.mrb[0].mxu0 %v102
    %v186 = vpop.f32.mrb[0].mxu0
    %v187 = vadd.f32 %v86, %v186
    %v188 = vpop.f32.mrb[0].mxu0
    %v189 = vpop.f32.mrb[0].mxu0
    %v190 = vadd.f32 %v86, %v189
    %v191 = vpop.f32.mrb[0].mxu0
    %192 = vmatprep.mubr.bf16.mxu0 0
    %193 = vmatmul.mubr.bf16.gmra.mrb[0].mxu0 %v105
    %v194 = vpop.f32.mrb[0].mxu0
    %v195 = vadd.f32 %v86, %v194
    %v196 = vpop.f32.mrb[0].mxu0
    %v197 = vpop.f32.mrb[0].mxu0
    %v198 = vadd.f32 %v86, %v197
    %v199 = vpop.f32.mrb[0].mxu0
    %200 = vmatprep.mubr.bf16.mxu0 0
    %201 = vmatmul.mubr.bf16.gmra.mrb[0].mxu0 %v108
    %v202 = vpop.f32.mrb[0].mxu0
    %v203 = vadd.f32 %v86, %v202
    %v204 = vpop.f32.mrb[0].mxu0
    %v205 = vpop.f32.mrb[0].mxu0
    %v206 = vadd.f32 %v86, %v205
    %v207 = vpop.f32.mrb[0].mxu0
    %208 = vmatprep.mubr.bf16.mxu0 0
    %209 = vmatmul.mubr.bf16.gmra.mrb[0].mxu0 %v111
    %v210 = vpop.f32.mrb[0].mxu0
    %v211 = vadd.f32 %v86, %v210
    %v212 = vpop.f32.mrb[0].mxu0
    %v213 = vpop.f32.mrb[0].mxu0
    %v214 = vadd.f32 %v86, %v213
    %v215 = vpop.f32.mrb[0].mxu0
    %216 = vmatprep.mubr.bf16.mxu0 0
    %217 = vmatmul.mubr.bf16.gmra.mrb[0].mxu0 %v114
    %v218 = vpop.f32.mrb[0].mxu0
    %v219 = vadd.f32 %v86, %v218
    %v220 = vpop.f32.mrb[0].mxu0
    %v221 = vpop.f32.mrb[0].mxu0
    %v222 = vadd.f32 %v86, %v221
    %v223 = vpop.f32.mrb[0].mxu0
    %224 = vdwg.mxu0
    %vm225 = vcmask 146432
    %226 = vst.msk [vmem:[#allocation8] sm:$0xff] %vm225, %v155
    %227 = vst.msk [vmem:[#allocation8 + $0x8] sm:$0xff] %vm225, %v158
    %228 = vst.msk [vmem:[#allocation8 + $0x10] sm:$0xff] %vm225, %v163
    %229 = vst.msk [vmem:[#allocation8 + $0x18] sm:$0xff] %vm225, %v166
    %230 = vst.msk [vmem:[#allocation8 + $0x20] sm:$0xff] %vm225, %v171
    %231 = vst.msk [vmem:[#allocation8 + $0x28] sm:$0xff] %vm225, %v174
    %232 = vst.msk [vmem:[#allocation8 + $0x30] sm:$0xff] %vm225, %v179
    %233 = vst.msk [vmem:[#allocation8 + $0x38] sm:$0xff] %vm225, %v182
    %234 = vst.msk [vmem:[#allocation8 + $0x40] sm:$0xff] %vm225, %v187
    %235 = vst.msk [vmem:[#allocation8 + $0x48] sm:$0xff] %vm225, %v190
    %236 = vst.msk [vmem:[#allocation8 + $0x50] sm:$0xff] %vm225, %v195
    %237 = vst.msk [vmem:[#allocation8 + $0x58] sm:$0xff] %vm225, %v198
    %238 = vst.msk [vmem:[#allocation8 + $0x60] sm:$0xff] %vm225, %v203
    %239 = vst.msk [vmem:[#allocation8 + $0x68] sm:$0xff] %vm225, %v206
    %240 = vst.msk [vmem:[#allocation8 + $0x70] sm:$0xff] %vm225, %v211
    %241 = vst.msk [vmem:[#allocation8 + $0x78] sm:$0xff] %vm225, %v214
    %242 = vst.msk [vmem:[#allocation8 + $0x80] sm:$0xff] %vm225, %v219
    %243 = vst.msk [vmem:[#allocation8 + $0x88] sm:$0xff] %vm225, %v222
    // Predicated region
    $region26: #{tfgridnet_forward.47} parent=1 // pred_check
      _
    $region27: #{tfgridnet_forward.47} parent=1 // pred_check_branch
      %245 = sbr.rel (0) target = $region29
    $region28: #{tfgridnet_forward.47} parent=1 // pred_region
      %s247 = ssub.s32 2304, 2304
      %248 = vsyncadd [#allocation4], %s247
      %s249 = sshll.u32 [#allocation8], 4
      %s250 = int_to_ptr.vmem [resolvable:$true] %s249
      %255 = dma.vmem_to_hbm [thread:$0]  %s250, 2304, %s3, [#allocation4], 128, 128, 8
    $region29: #{tfgridnet_forward.47} parent=1 // pred_fallthru
      _
    // Predicated region
    $region30: #{tfgridnet_forward.47} parent=1 // pred_check
      _
    $region31: #{tfgridnet_forward.47} parent=1 // pred_check_branch
      %257 = sbr.rel (0) target = $region33
    $region32: #{tfgridnet_forward.47} parent=1 // pred_region
      %258 = dma.done [#allocation4], 2304
    $region33: #{tfgridnet_forward.47} parent=1 // pred_fallthru
      _
    %259 = vsyncpa [#allocation3], 1
    %260 = vsyncpa [#allocation6], 1
    %261 = vsyncpa [#allocation4], 1

// kernel: custom-call.2
$region0: #{custom-call.2}
  %s0 = inlined_call_operand.vmem [shape: f32[2,1,9,8], index: 0, kind: input, shape index: {}]
  %s1 = inlined_call_operand.vmem [shape: f32[2,1,9,8], index: 1, kind: input, shape index: {}]
  %s2 = inlined_call_operand.hbm [shape: c64[2,1,9,8], index: 2, kind: output, shape index: {}]
  %s3 = scalar_lea.hbm %s2, 256
  $region1: #{custom-call.2} parent=0
    #allocation0 [shape = 's32[1]{0}', space=sflag, size = 0x4, scoped, tag = 'scoped memory for custom-call.2']
    %4 = vsyncpa [#allocation0], 0
    %s5 = sshll.u32 %s0, 4
    %s6 = int_to_ptr.vmem [resolvable:$true] %s5
    %8 = dma.vmem_to_hbm [thread:$0]  %s6, 256, %s2, [#allocation0]
    %9 = dma.done [#allocation0], 256
    %10 = vsyncpa [#allocation0], 1
  $region2: #{custom-call.2} parent=0
    #allocation1 [shape = 's32[1]{0}', space=sflag, size = 0x4, scoped, tag = 'scoped memory for custom-call.2']
    %11 = vsyncpa [#allocation1], 0
    %s12 = sshll.u32 %s1, 4
    %s13 = int_to_ptr.vmem [resolvable:$true] %s12
    %15 = dma.vmem_to_hbm [thread:$0]  %s13, 256, %s3, [#allocation1]
    %16 = dma.done [#allocation1], 256
    %17 = vsyncpa [#allocation1], 1

</llo_original>
